<compile_context>
chip_gen: v7x
topology: tpu7x:2x2x1
jax: 0.10.0
libtpu: 0.0.40
codegen_flags: <defaults>
</compile_context>

<pallas_src>
import jax
import jax.numpy as jnp
from jax import lax
from jax.experimental import pallas as pl
from jax.experimental.pallas import tpu as pltpu

EPS = 1e-5


# ------------------------------- Pallas kernel ------------------------------ #
def _make_dense_block_kernel(H, W, C0, G, L, upsample, compute_dtype):
    """Builds the fused DenseBlock kernel for static (H, W, C0, G, L)."""
    C_total = C0 + G * L
    c_start = C0 if upsample else 0            # upsample: SE over the new features only
    C_out = C_total - c_start

    def kernel(*refs):
        x_ref = refs[0]                                  # (1, H, W, C0)
        layer_refs = refs[1:1 + 4 * L]                   # per layer: scale, shift, w, b
        se_w1_ref, se_b1_ref, se_w2_ref, se_b2_ref = refs[1 + 4 * L:5 + 4 * L]
        o_ref = refs[5 + 4 * L]                          # (1, H, W, C_out)
        buf_ref = refs[6 + 4 * L]                        # VMEM scratch (H+2, W+2, C_total)

        # Interior mask (True inside the original HxW image, False on the 1-px halo).
        row = lax.broadcasted_iota(jnp.int32, (H + 2, W + 2, 1), 0)
        col = lax.broadcasted_iota(jnp.int32, (H + 2, W + 2, 1), 1)
        interior = (row >= 1) & (row <= H) & (col >= 1) & (col <= W)

        # Feature buffer: raw (pre-BN) concatenated features, kept resident in VMEM.
        buf_ref[...] = jnp.zeros(buf_ref.shape, buf_ref.dtype)
        buf_ref[1:H + 1, 1:W + 1, 0:C0] = x_ref[0].astype(buf_ref.dtype)

        for i in range(L):
            scale_ref, shift_ref, w_ref, b_ref = layer_refs[4 * i:4 * i + 4]
            cin = C0 + i * G
            # BN (eval, folded) + ReLU on the padded slab; halo forced to exact zero.
            feat = buf_ref[:, :, 0:cin]
            bn = feat * scale_ref[...].reshape(1, 1, cin) + shift_ref[...].reshape(1, 1, cin)
            act = jnp.where(interior, jnp.maximum(bn, 0.0), 0.0).astype(compute_dtype)
            # im2col: one (H*W, 9*cin) @ (9*cin, G) MXU matmul replaces 9 tiny K=cin dots.
            patches = jnp.concatenate(
                [act[ky:ky + H, kx:kx + W, :] for ky in range(3) for kx in range(3)],
                axis=-1).reshape(H * W, 9 * cin)
            out = jnp.dot(patches, w_ref[...],
                          preferred_element_type=jnp.float32) + b_ref[...]
            # Dense concat == write into the next channel slice of the resident buffer.
            buf_ref[1:H + 1, 1:W + 1, cin:cin + G] = (
                out.reshape(H, W, G).astype(buf_ref.dtype))
            # TODO(synk): Dropout2d(0.2) is identity in eval mode; train-mode channel
            #             dropout is not implemented.

        # Squeeze-excite: global avg pool -> 1x1 -> ReLU -> 1x1 -> sigmoid -> scale.
        y = buf_ref[1:H + 1, 1:W + 1, c_start:C_total]              # (H, W, C_out) f32
        y_flat = y.reshape(H * W, C_out)
        pooled = jnp.mean(y_flat, axis=0, keepdims=True)            # (1, C_out)
        h = jnp.maximum(
            jnp.dot(pooled, se_w1_ref[...], preferred_element_type=jnp.float32)
            + se_b1_ref[...], 0.0)
        s = jax.nn.sigmoid(
            jnp.dot(h, se_w2_ref[...], preferred_element_type=jnp.float32)
            + se_b2_ref[...])
        o_ref[0] = (y * s.reshape(1, 1, C_out)).astype(o_ref.dtype)

    return kernel


# ------------------------------ params & wrapper ----------------------------- #
def prepare_params(params, upsample, compute_dtype=jnp.float32):
    """One-time parameter preparation (hoisted out of the kernel / per-image work):
    BN folded to per-channel scale/shift, conv weights reshaped to im2col matrices
    (9*Cin, G), SE 1x1-conv weights transposed to (in, out)."""
    layers = []
    for p in params["layers"]:
        scale = p["gamma"].astype(jnp.float32) * lax.rsqrt(p["var"].astype(jnp.float32) + EPS)
        shift = p["beta"].astype(jnp.float32) - p["mean"].astype(jnp.float32) * scale
        G, cin = p["w"].shape[:2]
        # OIHW -> (ky, kx, ci, co) -> (9*cin, G); row index = (ky*3+kx)*cin + ci
        w_mat = jnp.transpose(p["w"], (2, 3, 1, 0)).reshape(9 * cin, G)
        layers.append(dict(scale=scale.reshape(1, cin),
                           shift=shift.reshape(1, cin),
                           w=w_mat.astype(compute_dtype),
                           b=p["b"].reshape(1, G).astype(jnp.float32)))
    if upsample:
        w1, b1, w2, b2 = (params["seu1_w"], params["seu1_b"],
                          params["seu2_w"], params["seu2_b"])
    else:
        w1, b1, w2, b2 = (params["se1_w"], params["se1_b"],
                          params["se2_w"], params["se2_b"])
    se = dict(w1=w1.T.astype(jnp.float32), b1=b1.reshape(1, -1).astype(jnp.float32),
              w2=w2.T.astype(jnp.float32), b2=b2.reshape(1, -1).astype(jnp.float32))
    return layers, se


def _full_spec(arr):
    zeros = (0,) * arr.ndim
    return pl.BlockSpec(arr.shape, lambda n, _z=zeros: _z)


def dense_block_forward(x_nchw, params, upsample=False, compute_dtype=jnp.float32):
    """Pallas implementation of DenseBlock.forward (eval mode). Input/output are NCHW."""
    N, C0, H, W = x_nchw.shape
    L = len(params["layers"])
    G = params["layers"][0]["w"].shape[0]
    C_total = C0 + G * L
    C_out = G * L if upsample else C_total

    layers, se = prepare_params(params, upsample, compute_dtype)
    x = jnp.transpose(x_nchw, (0, 2, 3, 1)).astype(compute_dtype)       # -> NHWC

    kernel = _make_dense_block_kernel(H, W, C0, G, L, upsample, compute_dtype)

    operands = [x]
    in_specs = [pl.BlockSpec((1, H, W, C0), lambda n: (n, 0, 0, 0))]
    for lp in layers:
        for key in ("scale", "shift", "w", "b"):
            operands.append(lp[key])
            in_specs.append(_full_spec(lp[key]))
    for key in ("w1", "b1", "w2", "b2"):
        operands.append(se[key])
        in_specs.append(_full_spec(se[key]))

    out = pl.pallas_call(
        kernel,
        out_shape=jax.ShapeDtypeStruct((N, H, W, C_out), x.dtype),
        grid_spec=pltpu.PrefetchScalarGridSpec(
            num_scalar_prefetch=0,
            grid=(N,),
            in_specs=in_specs,
            out_specs=pl.BlockSpec((1, H, W, C_out), lambda n: (n, 0, 0, 0)),
            # padded feature buffer kept f32 for robust/efficient strided slice access
            scratch_shapes=[pltpu.VMEM((H + 2, W + 2, C_total), jnp.float32)],
        ),
        # Batch axis is "parallel": shards the grid across v7x's 2 TensorCores.
        compiler_params=pltpu.CompilerParams(dimension_semantics=("parallel",)),
    )(*operands)
    return jnp.transpose(out, (0, 3, 1, 2))                             # -> NCHW


# ------------------------------ params & reference --------------------------- #
def init_params(key, in_channels, growth_rate, n_layers):
    C = in_channels + growth_rate * n_layers
    gn = growth_rate * n_layers
    params = {"layers": []}
    for i in range(n_layers):
        cin = in_channels + i * growth_rate
        key, k0, k1, k2, k3, k4, k5 = jax.random.split(key, 7)
        params["layers"].append(dict(
            gamma=jax.random.uniform(k0, (cin,), minval=0.5, maxval=1.5),
            beta=0.1 * jax.random.normal(k1, (cin,)),
            mean=0.1 * jax.random.normal(k2, (cin,)),
            var=jax.random.uniform(k3, (cin,), minval=0.5, maxval=1.5),
            w=0.1 * jax.random.normal(k4, (growth_rate, cin, 3, 3)),   # OIHW
            b=0.05 * jax.random.normal(k5, (growth_rate,)),
        ))
    key, k1, k2, k3, k4, k5, k6, k7, k8 = jax.random.split(key, 9)
    params["se1_w"] = 0.1 * jax.random.normal(k1, (C // 16, C))        # (out, in) 1x1 conv
    params["se1_b"] = 0.05 * jax.random.normal(k2, (C // 16,))
    params["se2_w"] = 0.1 * jax.random.normal(k3, (C, C // 16))
    params["se2_b"] = 0.05 * jax.random.normal(k4, (C,))
    params["seu1_w"] = 0.1 * jax.random.normal(k5, (gn // 16, gn))
    params["seu1_b"] = 0.05 * jax.random.normal(k6, (gn // 16,))
    params["seu2_w"] = 0.1 * jax.random.normal(k7, (gn, gn // 16))
    params["seu2_b"] = 0.05 * jax.random.normal(k8, (gn,))
    return params


def ref_forward(x, params, upsample=False):
    """Plain-JAX NCHW reference (matches PyTorch eval-mode semantics)."""
    bc = lambda v: v[None, :, None, None]
    feats = []
    for p in params["layers"]:
        inv = lax.rsqrt(p["var"] + EPS)
        a = jnp.maximum((x - bc(p["mean"])) * bc(inv * p["gamma"]) + bc(p["beta"]), 0.0)
        out = lax.conv_general_dilated(a, p["w"], (1, 1), [(1, 1), (1, 1)],
                                       dimension_numbers=("NCHW", "OIHW", "NCHW"))
        out = out + bc(p["b"])
        feats.append(out)
        x = jnp.concatenate([x, out], axis=1)
    if upsample:
        y = jnp.concatenate(feats, axis=1)
        w1, b1, w2, b2 = (params["seu1_w"], params["seu1_b"],
                          params["seu2_w"], params["seu2_b"])
    else:
        y = x
        w1, b1, w2, b2 = (params["se1_w"], params["se1_b"],
                          params["se2_w"], params["se2_b"])
    pooled = jnp.mean(y, axis=(2, 3))                                  # avg_pool2d(fm_size)
    h = jnp.maximum(pooled @ w1.T + b1, 0.0)
    s = jax.nn.sigmoid(h @ w2.T + b2)
    return y * s[:, :, None, None]


# ----------------------------------- main ------------------------------------ #
if __name__ == "__main__":
    in_channels, growth_rate, n_layers = 16, 8, 4       # C_total = 16 + 32 = 48
    N, H, W = 2, 16, 16
    key = jax.random.PRNGKey(0)
    kx, kp = jax.random.split(key)
    x = jax.random.normal(kx, (N, in_channels, H, W), dtype=jnp.float32)
    params = init_params(kp, in_channels, growth_rate, n_layers)

    # f32 path: tight check vs. plain-JAX reference (standard DenseBlock).
    out = jax.block_until_ready(dense_block_forward(x, params, upsample=False))
    ref = ref_forward(x, params, upsample=False)
    assert out.shape == ref.shape == (N, in_channels + growth_rate * n_layers, H, W)
    assert jnp.allclose(out, ref, atol=1e-4, rtol=1e-4), float(jnp.max(jnp.abs(out - ref)))

    # f32 path: upsample branch (SE over the newly produced features only).
    out_u = jax.block_until_ready(dense_block_forward(x, params, upsample=True))
    ref_u = ref_forward(x, params, upsample=True)
    assert out_u.shape == (N, growth_rate * n_layers, H, W)
    assert jnp.allclose(out_u, ref_u, atol=1e-4, rtol=1e-4)

    # bf16 operand path (v6e/v7x MXU-native, f32 accumulation): loose tolerance.
    out_bf = jax.block_until_ready(
        dense_block_forward(x, params, upsample=False, compute_dtype=jnp.bfloat16))
    assert jnp.allclose(out_bf.astype(jnp.float32), ref, atol=0.25, rtol=0.1)

    print("KERNEL_OK")
</pallas_src>

<mosaic_0001>
module attributes {stable_mosaic.version = 11 : i64} {
  func.func @kernel(%arg0: i32, %arg1: memref<1x16x16x16xf32, #tpu.memory_space<vmem>>, %arg2: memref<1x16xf32, #tpu.memory_space<vmem>>, %arg3: memref<1x16xf32, #tpu.memory_space<vmem>>, %arg4: memref<144x8xf32, #tpu.memory_space<vmem>>, %arg5: memref<1x8xf32, #tpu.memory_space<vmem>>, %arg6: memref<1x24xf32, #tpu.memory_space<vmem>>, %arg7: memref<1x24xf32, #tpu.memory_space<vmem>>, %arg8: memref<216x8xf32, #tpu.memory_space<vmem>>, %arg9: memref<1x8xf32, #tpu.memory_space<vmem>>, %arg10: memref<1x32xf32, #tpu.memory_space<vmem>>, %arg11: memref<1x32xf32, #tpu.memory_space<vmem>>, %arg12: memref<288x8xf32, #tpu.memory_space<vmem>>, %arg13: memref<1x8xf32, #tpu.memory_space<vmem>>, %arg14: memref<1x40xf32, #tpu.memory_space<vmem>>, %arg15: memref<1x40xf32, #tpu.memory_space<vmem>>, %arg16: memref<360x8xf32, #tpu.memory_space<vmem>>, %arg17: memref<1x8xf32, #tpu.memory_space<vmem>>, %arg18: memref<48x3xf32, #tpu.memory_space<vmem>>, %arg19: memref<1x3xf32, #tpu.memory_space<vmem>>, %arg20: memref<3x48xf32, #tpu.memory_space<vmem>>, %arg21: memref<1x48xf32, #tpu.memory_space<vmem>>, %arg22: memref<1x16x16x48xf32, #tpu.memory_space<vmem>>, %arg23: memref<18x18x48xf32, #tpu.memory_space<vmem>>) attributes {dimension_semantics = [#tpu.dimension_semantics<parallel>], iteration_bounds = array<i64: 2>, scalar_prefetch = 0 : i64, scratch_operands = 1 : i64, tpu.core_type = #tpu.core_type<tc>, window_params = [{transform_indices = @transform_0, window_bounds = array<i64: 1, 16, 16, 16>}, {pipeline_mode = #tpu.pipeline_mode<synchronous>, transform_indices = @transform_1, window_bounds = array<i64: 1, 16>}, {pipeline_mode = #tpu.pipeline_mode<synchronous>, transform_indices = @transform_2, window_bounds = array<i64: 1, 16>}, {pipeline_mode = #tpu.pipeline_mode<synchronous>, transform_indices = @transform_3, window_bounds = array<i64: 144, 8>}, {pipeline_mode = #tpu.pipeline_mode<synchronous>, transform_indices = @transform_4, window_bounds = array<i64: 1, 8>}, {pipeline_mode = #tpu.pipeline_mode<synchronous>, transform_indices = @transform_5, window_bounds = array<i64: 1, 24>}, {pipeline_mode = #tpu.pipeline_mode<synchronous>, transform_indices = @transform_6, window_bounds = array<i64: 1, 24>}, {pipeline_mode = #tpu.pipeline_mode<synchronous>, transform_indices = @transform_7, window_bounds = array<i64: 216, 8>}, {pipeline_mode = #tpu.pipeline_mode<synchronous>, transform_indices = @transform_8, window_bounds = array<i64: 1, 8>}, {pipeline_mode = #tpu.pipeline_mode<synchronous>, transform_indices = @transform_9, window_bounds = array<i64: 1, 32>}, {pipeline_mode = #tpu.pipeline_mode<synchronous>, transform_indices = @transform_10, window_bounds = array<i64: 1, 32>}, {pipeline_mode = #tpu.pipeline_mode<synchronous>, transform_indices = @transform_11, window_bounds = array<i64: 288, 8>}, {pipeline_mode = #tpu.pipeline_mode<synchronous>, transform_indices = @transform_12, window_bounds = array<i64: 1, 8>}, {pipeline_mode = #tpu.pipeline_mode<synchronous>, transform_indices = @transform_13, window_bounds = array<i64: 1, 40>}, {pipeline_mode = #tpu.pipeline_mode<synchronous>, transform_indices = @transform_14, window_bounds = array<i64: 1, 40>}, {pipeline_mode = #tpu.pipeline_mode<synchronous>, transform_indices = @transform_15, window_bounds = array<i64: 360, 8>}, {pipeline_mode = #tpu.pipeline_mode<synchronous>, transform_indices = @transform_16, window_bounds = array<i64: 1, 8>}, {pipeline_mode = #tpu.pipeline_mode<synchronous>, transform_indices = @transform_17, window_bounds = array<i64: 48, 3>}, {pipeline_mode = #tpu.pipeline_mode<synchronous>, transform_indices = @transform_18, window_bounds = array<i64: 1, 3>}, {pipeline_mode = #tpu.pipeline_mode<synchronous>, transform_indices = @transform_19, window_bounds = array<i64: 3, 48>}, {pipeline_mode = #tpu.pipeline_mode<synchronous>, transform_indices = @transform_20, window_bounds = array<i64: 1, 48>}, {transform_indices = @transform_21, window_bounds = array<i64: 1, 16, 16, 48>}]} {
    %0 = tpu.iota {dimensions = array<i32: 0>} : vector<18x18x1xi32>
    %1 = tpu.iota {dimensions = array<i32: 1>} : vector<18x18x1xi32>
    %c1_i32 = arith.constant 1 : i32
    %2 = vector.broadcast %c1_i32 : i32 to vector<18x18x1xi32>
    %3 = arith.cmpi sge, %0, %2 : vector<18x18x1xi32>
    %c16_i32 = arith.constant 16 : i32
    %4 = vector.broadcast %c16_i32 : i32 to vector<18x18x1xi32>
    %5 = arith.cmpi sle, %0, %4 : vector<18x18x1xi32>
    %6 = arith.andi %3, %5 : vector<18x18x1xi1>
    %c1_i32_0 = arith.constant 1 : i32
    %7 = vector.broadcast %c1_i32_0 : i32 to vector<18x18x1xi32>
    %8 = arith.cmpi sge, %1, %7 : vector<18x18x1xi32>
    %9 = arith.andi %6, %8 : vector<18x18x1xi1>
    %c16_i32_1 = arith.constant 16 : i32
    %10 = vector.broadcast %c16_i32_1 : i32 to vector<18x18x1xi32>
    %11 = arith.cmpi sle, %1, %10 : vector<18x18x1xi32>
    %12 = arith.andi %9, %11 : vector<18x18x1xi1>
    %cst = arith.constant 0.000000e+00 : f32
    %13 = vector.broadcast %cst : f32 to vector<18x18x48xf32>
    %c0 = arith.constant 0 : index
    %c0_2 = arith.constant 0 : index
    %c0_3 = arith.constant 0 : index
    %14 = vector.load %arg23[%c0, %c0_2, %c0_3] : memref<18x18x48xf32, #tpu.memory_space<vmem>>, vector<18x18x48xf32>
    tpu.vector_store %arg23[%c0, %c0_2, %c0_3], %13 {strides = array<i32>} : memref<18x18x48xf32, #tpu.memory_space<vmem>>, vector<18x18x48xf32>,
    %c0_4 = arith.constant 0 : index
    %c0_5 = arith.constant 0 : index
    %c0_6 = arith.constant 0 : index
    %c0_7 = arith.constant 0 : index
    %15 = vector.load %arg1[%c0_4, %c0_5, %c0_6, %c0_7] : memref<1x16x16x16xf32, #tpu.memory_space<vmem>>, vector<1x16x16x16xf32>
    %16 = vector.shape_cast %15 : vector<1x16x16x16xf32> to vector<16x16x16xf32>
    %c1 = arith.constant 1 : index
    %c1_8 = arith.constant 1 : index
    %c0_9 = arith.constant 0 : index
    %17 = vector.load %arg23[%c1, %c1_8, %c0_9] : memref<18x18x48xf32, #tpu.memory_space<vmem>>, vector<16x16x16xf32>
    tpu.vector_store %arg23[%c1, %c1_8, %c0_9], %16 {strides = array<i32>} : memref<18x18x48xf32, #tpu.memory_space<vmem>>, vector<16x16x16xf32>,
    %c0_10 = arith.constant 0 : index
    %c0_11 = arith.constant 0 : index
    %c0_12 = arith.constant 0 : index
    %18 = vector.load %arg23[%c0_10, %c0_11, %c0_12] : memref<18x18x48xf32, #tpu.memory_space<vmem>>, vector<18x18x16xf32>
    %c0_13 = arith.constant 0 : index
    %c0_14 = arith.constant 0 : index
    %19 = vector.load %arg2[%c0_13, %c0_14] : memref<1x16xf32, #tpu.memory_space<vmem>>, vector<1x16xf32>
    %20 = vector.shape_cast %19 : vector<1x16xf32> to vector<1x1x16xf32>
    %21 = vector.broadcast %20 : vector<1x1x16xf32> to vector<18x18x16xf32>
    %22 = arith.mulf %18, %21 : vector<18x18x16xf32>
    %c0_15 = arith.constant 0 : index
    %c0_16 = arith.constant 0 : index
    %23 = vector.load %arg3[%c0_15, %c0_16] : memref<1x16xf32, #tpu.memory_space<vmem>>, vector<1x16xf32>
    %24 = vector.shape_cast %23 : vector<1x16xf32> to vector<1x1x16xf32>
    %25 = vector.broadcast %24 : vector<1x1x16xf32> to vector<18x18x16xf32>
    %26 = arith.addf %22, %25 : vector<18x18x16xf32>
    %cst_17 = arith.constant 0.000000e+00 : f32
    %27 = vector.broadcast %cst_17 : f32 to vector<18x18x16xf32>
    %28 = arith.maximumf %26, %27 : vector<18x18x16xf32>
    %cst_18 = arith.constant 0.000000e+00 : f32
    %29 = vector.shape_cast %12 : vector<18x18x1xi1> to vector<18x18x1xi1>
    %30 = vector.broadcast %29 : vector<18x18x1xi1> to vector<18x18x16xi1>
    %31 = vector.broadcast %cst_18 : f32 to vector<18x18x16xf32>
    %32 = arith.select %30, %28, %31 : vector<18x18x16xi1>, vector<18x18x16xf32>
    %33 = vector.extract_strided_slice %32 {offsets = [0, 0, 0], sizes = [16, 16, 16], strides = [1, 1, 1]} : vector<18x18x16xf32> to vector<16x16x16xf32>
    %34 = vector.extract_strided_slice %32 {offsets = [0, 1, 0], sizes = [16, 16, 16], strides = [1, 1, 1]} : vector<18x18x16xf32> to vector<16x16x16xf32>
    %35 = vector.extract_strided_slice %32 {offsets = [0, 2, 0], sizes = [16, 16, 16], strides = [1, 1, 1]} : vector<18x18x16xf32> to vector<16x16x16xf32>
    %36 = vector.extract_strided_slice %32 {offsets = [1, 0, 0], sizes = [16, 16, 16], strides = [1, 1, 1]} : vector<18x18x16xf32> to vector<16x16x16xf32>
    %37 = vector.extract_strided_slice %32 {offsets = [1, 1, 0], sizes = [16, 16, 16], strides = [1, 1, 1]} : vector<18x18x16xf32> to vector<16x16x16xf32>
    %38 = vector.extract_strided_slice %32 {offsets = [1, 2, 0], sizes = [16, 16, 16], strides = [1, 1, 1]} : vector<18x18x16xf32> to vector<16x16x16xf32>
    %39 = vector.extract_strided_slice %32 {offsets = [2, 0, 0], sizes = [16, 16, 16], strides = [1, 1, 1]} : vector<18x18x16xf32> to vector<16x16x16xf32>
    %40 = vector.extract_strided_slice %32 {offsets = [2, 1, 0], sizes = [16, 16, 16], strides = [1, 1, 1]} : vector<18x18x16xf32> to vector<16x16x16xf32>
    %41 = vector.extract_strided_slice %32 {offsets = [2, 2, 0], sizes = [16, 16, 16], strides = [1, 1, 1]} : vector<18x18x16xf32> to vector<16x16x16xf32>
    %42 = tpu.concatenate %33, %34, %35, %36, %37, %38, %39, %40, %41 in 2 : vector<16x16x16xf32>, vector<16x16x16xf32>, vector<16x16x16xf32>, vector<16x16x16xf32>, vector<16x16x16xf32>, vector<16x16x16xf32>, vector<16x16x16xf32>, vector<16x16x16xf32>, vector<16x16x16xf32> -> vector<16x16x144xf32>
    %43 = vector.shape_cast %42 : vector<16x16x144xf32> to vector<256x144xf32>
    %c0_19 = arith.constant 0 : index
    %c0_20 = arith.constant 0 : index
    %44 = vector.load %arg4[%c0_19, %c0_20] : memref<144x8xf32, #tpu.memory_space<vmem>>, vector<144x8xf32>
    %cst_21 = arith.constant dense<0.000000e+00> : vector<256x8xf32>
    %45 = tpu.matmul %43, %44, %cst_21 {dimension_numbers = #tpu.dot_dimension_numbers<[1], [0], [0], [1], [0, 0, 1, 1], [], []>} : vector<256x144xf32>, vector<144x8xf32>, vector<256x8xf32> -> vector<256x8xf32>
    %c0_22 = arith.constant 0 : index
    %c0_23 = arith.constant 0 : index
    %46 = vector.load %arg5[%c0_22, %c0_23] : memref<1x8xf32, #tpu.memory_space<vmem>>, vector<1x8xf32>
    %47 = vector.broadcast %46 : vector<1x8xf32> to vector<256x8xf32>
    %48 = arith.addf %45, %47 : vector<256x8xf32>
    %49 = vector.shape_cast %48 : vector<256x8xf32> to vector<16x16x8xf32>
    %c1_24 = arith.constant 1 : index
    %c1_25 = arith.constant 1 : index
    %c16 = arith.constant 16 : index
    %50 = vector.load %arg23[%c1_24, %c1_25, %c16] : memref<18x18x48xf32, #tpu.memory_space<vmem>>, vector<16x16x8xf32>
    tpu.vector_store %arg23[%c1_24, %c1_25, %c16], %49 {strides = array<i32>} : memref<18x18x48xf32, #tpu.memory_space<vmem>>, vector<16x16x8xf32>,
    %c0_26 = arith.constant 0 : index
    %c0_27 = arith.constant 0 : index
    %c0_28 = arith.constant 0 : index
    %51 = vector.load %arg23[%c0_26, %c0_27, %c0_28] : memref<18x18x48xf32, #tpu.memory_space<vmem>>, vector<18x18x24xf32>
    %c0_29 = arith.constant 0 : index
    %c0_30 = arith.constant 0 : index
    %52 = vector.load %arg6[%c0_29, %c0_30] : memref<1x24xf32, #tpu.memory_space<vmem>>, vector<1x24xf32>
    %53 = vector.shape_cast %52 : vector<1x24xf32> to vector<1x1x24xf32>
    %54 = vector.broadcast %53 : vector<1x1x24xf32> to vector<18x18x24xf32>
    %55 = arith.mulf %51, %54 : vector<18x18x24xf32>
    %c0_31 = arith.constant 0 : index
    %c0_32 = arith.constant 0 : index
    %56 = vector.load %arg7[%c0_31, %c0_32] : memref<1x24xf32, #tpu.memory_space<vmem>>, vector<1x24xf32>
    %57 = vector.shape_cast %56 : vector<1x24xf32> to vector<1x1x24xf32>
    %58 = vector.broadcast %57 : vector<1x1x24xf32> to vector<18x18x24xf32>
    %59 = arith.addf %55, %58 : vector<18x18x24xf32>
    %cst_33 = arith.constant 0.000000e+00 : f32
    %60 = vector.broadcast %cst_33 : f32 to vector<18x18x24xf32>
    %61 = arith.maximumf %59, %60 : vector<18x18x24xf32>
    %cst_34 = arith.constant 0.000000e+00 : f32
    %62 = vector.shape_cast %12 : vector<18x18x1xi1> to vector<18x18x1xi1>
    %63 = vector.broadcast %62 : vector<18x18x1xi1> to vector<18x18x24xi1>
    %64 = vector.broadcast %cst_34 : f32 to vector<18x18x24xf32>
    %65 = arith.select %63, %61, %64 : vector<18x18x24xi1>, vector<18x18x24xf32>
    %66 = vector.extract_strided_slice %65 {offsets = [0, 0, 0], sizes = [16, 16, 24], strides = [1, 1, 1]} : vector<18x18x24xf32> to vector<16x16x24xf32>
    %67 = vector.extract_strided_slice %65 {offsets = [0, 1, 0], sizes = [16, 16, 24], strides = [1, 1, 1]} : vector<18x18x24xf32> to vector<16x16x24xf32>
    %68 = vector.extract_strided_slice %65 {offsets = [0, 2, 0], sizes = [16, 16, 24], strides = [1, 1, 1]} : vector<18x18x24xf32> to vector<16x16x24xf32>
    %69 = vector.extract_strided_slice %65 {offsets = [1, 0, 0], sizes = [16, 16, 24], strides = [1, 1, 1]} : vector<18x18x24xf32> to vector<16x16x24xf32>
    %70 = vector.extract_strided_slice %65 {offsets = [1, 1, 0], sizes = [16, 16, 24], strides = [1, 1, 1]} : vector<18x18x24xf32> to vector<16x16x24xf32>
    %71 = vector.extract_strided_slice %65 {offsets = [1, 2, 0], sizes = [16, 16, 24], strides = [1, 1, 1]} : vector<18x18x24xf32> to vector<16x16x24xf32>
    %72 = vector.extract_strided_slice %65 {offsets = [2, 0, 0], sizes = [16, 16, 24], strides = [1, 1, 1]} : vector<18x18x24xf32> to vector<16x16x24xf32>
    %73 = vector.extract_strided_slice %65 {offsets = [2, 1, 0], sizes = [16, 16, 24], strides = [1, 1, 1]} : vector<18x18x24xf32> to vector<16x16x24xf32>
    %74 = vector.extract_strided_slice %65 {offsets = [2, 2, 0], sizes = [16, 16, 24], strides = [1, 1, 1]} : vector<18x18x24xf32> to vector<16x16x24xf32>
    %75 = tpu.concatenate %66, %67, %68, %69, %70, %71, %72, %73, %74 in 2 : vector<16x16x24xf32>, vector<16x16x24xf32>, vector<16x16x24xf32>, vector<16x16x24xf32>, vector<16x16x24xf32>, vector<16x16x24xf32>, vector<16x16x24xf32>, vector<16x16x24xf32>, vector<16x16x24xf32> -> vector<16x16x216xf32>
    %76 = vector.shape_cast %75 : vector<16x16x216xf32> to vector<256x216xf32>
    %c0_35 = arith.constant 0 : index
    %c0_36 = arith.constant 0 : index
    %77 = vector.load %arg8[%c0_35, %c0_36] : memref<216x8xf32, #tpu.memory_space<vmem>>, vector<216x8xf32>
    %cst_37 = arith.constant dense<0.000000e+00> : vector<256x8xf32>
    %78 = tpu.matmul %76, %77, %cst_37 {dimension_numbers = #tpu.dot_dimension_numbers<[1], [0], [0], [1], [0, 0, 1, 1], [], []>} : vector<256x216xf32>, vector<216x8xf32>, vector<256x8xf32> -> vector<256x8xf32>
    %c0_38 = arith.constant 0 : index
    %c0_39 = arith.constant 0 : index
    %79 = vector.load %arg9[%c0_38, %c0_39] : memref<1x8xf32, #tpu.memory_space<vmem>>, vector<1x8xf32>
    %80 = vector.broadcast %79 : vector<1x8xf32> to vector<256x8xf32>
    %81 = arith.addf %78, %80 : vector<256x8xf32>
    %82 = vector.shape_cast %81 : vector<256x8xf32> to vector<16x16x8xf32>
    %c1_40 = arith.constant 1 : index
    %c1_41 = arith.constant 1 : index
    %c24 = arith.constant 24 : index
    %83 = vector.load %arg23[%c1_40, %c1_41, %c24] : memref<18x18x48xf32, #tpu.memory_space<vmem>>, vector<16x16x8xf32>
    tpu.vector_store %arg23[%c1_40, %c1_41, %c24], %82 {strides = array<i32>} : memref<18x18x48xf32, #tpu.memory_space<vmem>>, vector<16x16x8xf32>,
    %c0_42 = arith.constant 0 : index
    %c0_43 = arith.constant 0 : index
    %c0_44 = arith.constant 0 : index
    %84 = vector.load %arg23[%c0_42, %c0_43, %c0_44] : memref<18x18x48xf32, #tpu.memory_space<vmem>>, vector<18x18x32xf32>
    %c0_45 = arith.constant 0 : index
    %c0_46 = arith.constant 0 : index
    %85 = vector.load %arg10[%c0_45, %c0_46] : memref<1x32xf32, #tpu.memory_space<vmem>>, vector<1x32xf32>
    %86 = vector.shape_cast %85 : vector<1x32xf32> to vector<1x1x32xf32>
    %87 = vector.broadcast %86 : vector<1x1x32xf32> to vector<18x18x32xf32>
    %88 = arith.mulf %84, %87 : vector<18x18x32xf32>
    %c0_47 = arith.constant 0 : index
    %c0_48 = arith.constant 0 : index
    %89 = vector.load %arg11[%c0_47, %c0_48] : memref<1x32xf32, #tpu.memory_space<vmem>>, vector<1x32xf32>
    %90 = vector.shape_cast %89 : vector<1x32xf32> to vector<1x1x32xf32>
    %91 = vector.broadcast %90 : vector<1x1x32xf32> to vector<18x18x32xf32>
    %92 = arith.addf %88, %91 : vector<18x18x32xf32>
    %cst_49 = arith.constant 0.000000e+00 : f32
    %93 = vector.broadcast %cst_49 : f32 to vector<18x18x32xf32>
    %94 = arith.maximumf %92, %93 : vector<18x18x32xf32>
    %cst_50 = arith.constant 0.000000e+00 : f32
    %95 = vector.shape_cast %12 : vector<18x18x1xi1> to vector<18x18x1xi1>
    %96 = vector.broadcast %95 : vector<18x18x1xi1> to vector<18x18x32xi1>
    %97 = vector.broadcast %cst_50 : f32 to vector<18x18x32xf32>
    %98 = arith.select %96, %94, %97 : vector<18x18x32xi1>, vector<18x18x32xf32>
    %99 = vector.extract_strided_slice %98 {offsets = [0, 0, 0], sizes = [16, 16, 32], strides = [1, 1, 1]} : vector<18x18x32xf32> to vector<16x16x32xf32>
    %100 = vector.extract_strided_slice %98 {offsets = [0, 1, 0], sizes = [16, 16, 32], strides = [1, 1, 1]} : vector<18x18x32xf32> to vector<16x16x32xf32>
    %101 = vector.extract_strided_slice %98 {offsets = [0, 2, 0], sizes = [16, 16, 32], strides = [1, 1, 1]} : vector<18x18x32xf32> to vector<16x16x32xf32>
    %102 = vector.extract_strided_slice %98 {offsets = [1, 0, 0], sizes = [16, 16, 32], strides = [1, 1, 1]} : vector<18x18x32xf32> to vector<16x16x32xf32>
    %103 = vector.extract_strided_slice %98 {offsets = [1, 1, 0], sizes = [16, 16, 32], strides = [1, 1, 1]} : vector<18x18x32xf32> to vector<16x16x32xf32>
    %104 = vector.extract_strided_slice %98 {offsets = [1, 2, 0], sizes = [16, 16, 32], strides = [1, 1, 1]} : vector<18x18x32xf32> to vector<16x16x32xf32>
    %105 = vector.extract_strided_slice %98 {offsets = [2, 0, 0], sizes = [16, 16, 32], strides = [1, 1, 1]} : vector<18x18x32xf32> to vector<16x16x32xf32>
    %106 = vector.extract_strided_slice %98 {offsets = [2, 1, 0], sizes = [16, 16, 32], strides = [1, 1, 1]} : vector<18x18x32xf32> to vector<16x16x32xf32>
    %107 = vector.extract_strided_slice %98 {offsets = [2, 2, 0], sizes = [16, 16, 32], strides = [1, 1, 1]} : vector<18x18x32xf32> to vector<16x16x32xf32>
    %108 = tpu.concatenate %99, %100, %101, %102, %103, %104, %105, %106, %107 in 2 : vector<16x16x32xf32>, vector<16x16x32xf32>, vector<16x16x32xf32>, vector<16x16x32xf32>, vector<16x16x32xf32>, vector<16x16x32xf32>, vector<16x16x32xf32>, vector<16x16x32xf32>, vector<16x16x32xf32> -> vector<16x16x288xf32>
    %109 = vector.shape_cast %108 : vector<16x16x288xf32> to vector<256x288xf32>
    %c0_51 = arith.constant 0 : index
    %c0_52 = arith.constant 0 : index
    %110 = vector.load %arg12[%c0_51, %c0_52] : memref<288x8xf32, #tpu.memory_space<vmem>>, vector<288x8xf32>
    %cst_53 = arith.constant dense<0.000000e+00> : vector<256x8xf32>
    %111 = tpu.matmul %109, %110, %cst_53 {dimension_numbers = #tpu.dot_dimension_numbers<[1], [0], [0], [1], [0, 0, 1, 1], [], []>} : vector<256x288xf32>, vector<288x8xf32>, vector<256x8xf32> -> vector<256x8xf32>
    %c0_54 = arith.constant 0 : index
    %c0_55 = arith.constant 0 : index
    %112 = vector.load %arg13[%c0_54, %c0_55] : memref<1x8xf32, #tpu.memory_space<vmem>>, vector<1x8xf32>
    %113 = vector.broadcast %112 : vector<1x8xf32> to vector<256x8xf32>
    %114 = arith.addf %111, %113 : vector<256x8xf32>
    %115 = vector.shape_cast %114 : vector<256x8xf32> to vector<16x16x8xf32>
    %c1_56 = arith.constant 1 : index
    %c1_57 = arith.constant 1 : index
    %c32 = arith.constant 32 : index
    %116 = vector.load %arg23[%c1_56, %c1_57, %c32] : memref<18x18x48xf32, #tpu.memory_space<vmem>>, vector<16x16x8xf32>
    tpu.vector_store %arg23[%c1_56, %c1_57, %c32], %115 {strides = array<i32>} : memref<18x18x48xf32, #tpu.memory_space<vmem>>, vector<16x16x8xf32>,
    %c0_58 = arith.constant 0 : index
    %c0_59 = arith.constant 0 : index
    %c0_60 = arith.constant 0 : index
    %117 = vector.load %arg23[%c0_58, %c0_59, %c0_60] : memref<18x18x48xf32, #tpu.memory_space<vmem>>, vector<18x18x40xf32>
    %c0_61 = arith.constant 0 : index
    %c0_62 = arith.constant 0 : index
    %118 = vector.load %arg14[%c0_61, %c0_62] : memref<1x40xf32, #tpu.memory_space<vmem>>, vector<1x40xf32>
    %119 = vector.shape_cast %118 : vector<1x40xf32> to vector<1x1x40xf32>
    %120 = vector.broadcast %119 : vector<1x1x40xf32> to vector<18x18x40xf32>
    %121 = arith.mulf %117, %120 : vector<18x18x40xf32>
    %c0_63 = arith.constant 0 : index
    %c0_64 = arith.constant 0 : index
    %122 = vector.load %arg15[%c0_63, %c0_64] : memref<1x40xf32, #tpu.memory_space<vmem>>, vector<1x40xf32>
    %123 = vector.shape_cast %122 : vector<1x40xf32> to vector<1x1x40xf32>
    %124 = vector.broadcast %123 : vector<1x1x40xf32> to vector<18x18x40xf32>
    %125 = arith.addf %121, %124 : vector<18x18x40xf32>
    %cst_65 = arith.constant 0.000000e+00 : f32
    %126 = vector.broadcast %cst_65 : f32 to vector<18x18x40xf32>
    %127 = arith.maximumf %125, %126 : vector<18x18x40xf32>
    %cst_66 = arith.constant 0.000000e+00 : f32
    %128 = vector.shape_cast %12 : vector<18x18x1xi1> to vector<18x18x1xi1>
    %129 = vector.broadcast %128 : vector<18x18x1xi1> to vector<18x18x40xi1>
    %130 = vector.broadcast %cst_66 : f32 to vector<18x18x40xf32>
    %131 = arith.select %129, %127, %130 : vector<18x18x40xi1>, vector<18x18x40xf32>
    %132 = vector.extract_strided_slice %131 {offsets = [0, 0, 0], sizes = [16, 16, 40], strides = [1, 1, 1]} : vector<18x18x40xf32> to vector<16x16x40xf32>
    %133 = vector.extract_strided_slice %131 {offsets = [0, 1, 0], sizes = [16, 16, 40], strides = [1, 1, 1]} : vector<18x18x40xf32> to vector<16x16x40xf32>
    %134 = vector.extract_strided_slice %131 {offsets = [0, 2, 0], sizes = [16, 16, 40], strides = [1, 1, 1]} : vector<18x18x40xf32> to vector<16x16x40xf32>
    %135 = vector.extract_strided_slice %131 {offsets = [1, 0, 0], sizes = [16, 16, 40], strides = [1, 1, 1]} : vector<18x18x40xf32> to vector<16x16x40xf32>
    %136 = vector.extract_strided_slice %131 {offsets = [1, 1, 0], sizes = [16, 16, 40], strides = [1, 1, 1]} : vector<18x18x40xf32> to vector<16x16x40xf32>
    %137 = vector.extract_strided_slice %131 {offsets = [1, 2, 0], sizes = [16, 16, 40], strides = [1, 1, 1]} : vector<18x18x40xf32> to vector<16x16x40xf32>
    %138 = vector.extract_strided_slice %131 {offsets = [2, 0, 0], sizes = [16, 16, 40], strides = [1, 1, 1]} : vector<18x18x40xf32> to vector<16x16x40xf32>
    %139 = vector.extract_strided_slice %131 {offsets = [2, 1, 0], sizes = [16, 16, 40], strides = [1, 1, 1]} : vector<18x18x40xf32> to vector<16x16x40xf32>
    %140 = vector.extract_strided_slice %131 {offsets = [2, 2, 0], sizes = [16, 16, 40], strides = [1, 1, 1]} : vector<18x18x40xf32> to vector<16x16x40xf32>
    %141 = tpu.concatenate %132, %133, %134, %135, %136, %137, %138, %139, %140 in 2 : vector<16x16x40xf32>, vector<16x16x40xf32>, vector<16x16x40xf32>, vector<16x16x40xf32>, vector<16x16x40xf32>, vector<16x16x40xf32>, vector<16x16x40xf32>, vector<16x16x40xf32>, vector<16x16x40xf32> -> vector<16x16x360xf32>
    %142 = vector.shape_cast %141 : vector<16x16x360xf32> to vector<256x360xf32>
    %c0_67 = arith.constant 0 : index
    %c0_68 = arith.constant 0 : index
    %143 = vector.load %arg16[%c0_67, %c0_68] : memref<360x8xf32, #tpu.memory_space<vmem>>, vector<360x8xf32>
    %cst_69 = arith.constant dense<0.000000e+00> : vector<256x8xf32>
    %144 = tpu.matmul %142, %143, %cst_69 {dimension_numbers = #tpu.dot_dimension_numbers<[1], [0], [0], [1], [0, 0, 1, 1], [], []>} : vector<256x360xf32>, vector<360x8xf32>, vector<256x8xf32> -> vector<256x8xf32>
    %c0_70 = arith.constant 0 : index
    %c0_71 = arith.constant 0 : index
    %145 = vector.load %arg17[%c0_70, %c0_71] : memref<1x8xf32, #tpu.memory_space<vmem>>, vector<1x8xf32>
    %146 = vector.broadcast %145 : vector<1x8xf32> to vector<256x8xf32>
    %147 = arith.addf %144, %146 : vector<256x8xf32>
    %148 = vector.shape_cast %147 : vector<256x8xf32> to vector<16x16x8xf32>
    %c1_72 = arith.constant 1 : index
    %c1_73 = arith.constant 1 : index
    %c40 = arith.constant 40 : index
    %149 = vector.load %arg23[%c1_72, %c1_73, %c40] : memref<18x18x48xf32, #tpu.memory_space<vmem>>, vector<16x16x8xf32>
    tpu.vector_store %arg23[%c1_72, %c1_73, %c40], %148 {strides = array<i32>} : memref<18x18x48xf32, #tpu.memory_space<vmem>>, vector<16x16x8xf32>,
    %c1_74 = arith.constant 1 : index
    %c1_75 = arith.constant 1 : index
    %c0_76 = arith.constant 0 : index
    %150 = vector.load %arg23[%c1_74, %c1_75, %c0_76] : memref<18x18x48xf32, #tpu.memory_space<vmem>>, vector<16x16x48xf32>
    %151 = vector.shape_cast %150 : vector<16x16x48xf32> to vector<256x48xf32>
    %cst_77 = arith.constant dense<0.000000e+00> : vector<48xf32>
    %152 = vector.multi_reduction <add>, %151, %cst_77 [0] : vector<256x48xf32> to vector<48xf32>
    %153 = vector.shape_cast %152 : vector<48xf32> to vector<1x48xf32>
    %cst_78 = arith.constant 2.560000e+02 : f32
    %154 = vector.broadcast %cst_78 : f32 to vector<1x48xf32>
    %155 = arith.divf %153, %154 : vector<1x48xf32>
    %c0_79 = arith.constant 0 : index
    %c0_80 = arith.constant 0 : index
    %156 = vector.load %arg18[%c0_79, %c0_80] : memref<48x3xf32, #tpu.memory_space<vmem>>, vector<48x3xf32>
    %cst_81 = arith.constant dense<0.000000e+00> : vector<1x3xf32>
    %157 = tpu.matmul %155, %156, %cst_81 {dimension_numbers = #tpu.dot_dimension_numbers<[1], [0], [0], [1], [0, 0, 1, 1], [], []>} : vector<1x48xf32>, vector<48x3xf32>, vector<1x3xf32> -> vector<1x3xf32>
    %c0_82 = arith.constant 0 : index
    %c0_83 = arith.constant 0 : index
    %158 = vector.load %arg19[%c0_82, %c0_83] : memref<1x3xf32, #tpu.memory_space<vmem>>, vector<1x3xf32>
    %159 = arith.addf %157, %158 : vector<1x3xf32>
    %cst_84 = arith.constant 0.000000e+00 : f32
    %160 = vector.broadcast %cst_84 : f32 to vector<1x3xf32>
    %161 = arith.maximumf %159, %160 : vector<1x3xf32>
    %c0_85 = arith.constant 0 : index
    %c0_86 = arith.constant 0 : index
    %162 = vector.load %arg20[%c0_85, %c0_86] : memref<3x48xf32, #tpu.memory_space<vmem>>, vector<3x48xf32>
    %cst_87 = arith.constant dense<0.000000e+00> : vector<1x48xf32>
    %163 = tpu.matmul %161, %162, %cst_87 {dimension_numbers = #tpu.dot_dimension_numbers<[1], [0], [0], [1], [0, 0, 1, 1], [], []>} : vector<1x3xf32>, vector<3x48xf32>, vector<1x48xf32> -> vector<1x48xf32>
    %c0_88 = arith.constant 0 : index
    %c0_89 = arith.constant 0 : index
    %164 = vector.load %arg21[%c0_88, %c0_89] : memref<1x48xf32, #tpu.memory_space<vmem>>, vector<1x48xf32>
    %165 = arith.addf %163, %164 : vector<1x48xf32>
    %166 = arith.negf %165 : vector<1x48xf32>
    %167 = math.exp %166 : vector<1x48xf32>
    %cst_90 = arith.constant 1.000000e+00 : f32
    %168 = vector.broadcast %cst_90 : f32 to vector<1x48xf32>
    %169 = arith.addf %168, %167 : vector<1x48xf32>
    %170 = arith.divf %168, %169 : vector<1x48xf32>
    %171 = vector.shape_cast %170 : vector<1x48xf32> to vector<1x1x48xf32>
    %172 = vector.broadcast %171 : vector<1x1x48xf32> to vector<16x16x48xf32>
    %173 = arith.mulf %150, %172 : vector<16x16x48xf32>
    %c0_91 = arith.constant 0 : index
    %c0_92 = arith.constant 0 : index
    %c0_93 = arith.constant 0 : index
    %c0_94 = arith.constant 0 : index
    %174 = vector.load %arg22[%c0_91, %c0_92, %c0_93, %c0_94] : memref<1x16x16x48xf32, #tpu.memory_space<vmem>>, vector<1x16x16x48xf32>
    %175 = vector.shape_cast %174 : vector<1x16x16x48xf32> to vector<16x16x48xf32>
    %176 = vector.shape_cast %173 : vector<16x16x48xf32> to vector<1x16x16x48xf32>
    tpu.vector_store %arg22[%c0_91, %c0_92, %c0_93, %c0_94], %176 {strides = array<i32>} : memref<1x16x16x48xf32, #tpu.memory_space<vmem>>, vector<1x16x16x48xf32>,
    return
  }
  func.func @transform_0(%arg0: i32) -> (i32, i32, i32, i32) {
    %c0_i32 = arith.constant 0 : i32
    %c0_i32_0 = arith.constant 0 : i32
    %c0_i32_1 = arith.constant 0 : i32
    %c0_i32_2 = arith.constant 0 : i32
    return %arg0, %c0_i32, %c0_i32_0, %c0_i32_1 : i32, i32, i32, i32
  }
  func.func @transform_1(%arg0: i32) -> (i32, i32) {
    %c0_i32 = arith.constant 0 : i32
    %c0_i32_0 = arith.constant 0 : i32
    %c0_i32_1 = arith.constant 0 : i32
    return %c0_i32, %c0_i32_0 : i32, i32
  }
  func.func @transform_2(%arg0: i32) -> (i32, i32) {
    %c0_i32 = arith.constant 0 : i32
    %c0_i32_0 = arith.constant 0 : i32
    %c0_i32_1 = arith.constant 0 : i32
    return %c0_i32, %c0_i32_0 : i32, i32
  }
  func.func @transform_3(%arg0: i32) -> (i32, i32) {
    %c0_i32 = arith.constant 0 : i32
    %c0_i32_0 = arith.constant 0 : i32
    %c0_i32_1 = arith.constant 0 : i32
    return %c0_i32, %c0_i32_0 : i32, i32
  }
  func.func @transform_4(%arg0: i32) -> (i32, i32) {
    %c0_i32 = arith.constant 0 : i32
    %c0_i32_0 = arith.constant 0 : i32
    %c0_i32_1 = arith.constant 0 : i32
    return %c0_i32, %c0_i32_0 : i32, i32
  }
  func.func @transform_5(%arg0: i32) -> (i32, i32) {
    %c0_i32 = arith.constant 0 : i32
    %c0_i32_0 = arith.constant 0 : i32
    %c0_i32_1 = arith.constant 0 : i32
    return %c0_i32, %c0_i32_0 : i32, i32
  }
  func.func @transform_6(%arg0: i32) -> (i32, i32) {
    %c0_i32 = arith.constant 0 : i32
    %c0_i32_0 = arith.constant 0 : i32
    %c0_i32_1 = arith.constant 0 : i32
    return %c0_i32, %c0_i32_0 : i32, i32
  }
  func.func @transform_7(%arg0: i32) -> (i32, i32) {
    %c0_i32 = arith.constant 0 : i32
    %c0_i32_0 = arith.constant 0 : i32
    %c0_i32_1 = arith.constant 0 : i32
    return %c0_i32, %c0_i32_0 : i32, i32
  }
  func.func @transform_8(%arg0: i32) -> (i32, i32) {
    %c0_i32 = arith.constant 0 : i32
    %c0_i32_0 = arith.constant 0 : i32
    %c0_i32_1 = arith.constant 0 : i32
    return %c0_i32, %c0_i32_0 : i32, i32
  }
  func.func @transform_9(%arg0: i32) -> (i32, i32) {
    %c0_i32 = arith.constant 0 : i32
    %c0_i32_0 = arith.constant 0 : i32
    %c0_i32_1 = arith.constant 0 : i32
    return %c0_i32, %c0_i32_0 : i32, i32
  }
  func.func @transform_10(%arg0: i32) -> (i32, i32) {
    %c0_i32 = arith.constant 0 : i32
    %c0_i32_0 = arith.constant 0 : i32
    %c0_i32_1 = arith.constant 0 : i32
    return %c0_i32, %c0_i32_0 : i32, i32
  }
  func.func @transform_11(%arg0: i32) -> (i32, i32) {
    %c0_i32 = arith.constant 0 : i32
    %c0_i32_0 = arith.constant 0 : i32
    %c0_i32_1 = arith.constant 0 : i32
    return %c0_i32, %c0_i32_0 : i32, i32
  }
  func.func @transform_12(%arg0: i32) -> (i32, i32) {
    %c0_i32 = arith.constant 0 : i32
    %c0_i32_0 = arith.constant 0 : i32
    %c0_i32_1 = arith.constant 0 : i32
    return %c0_i32, %c0_i32_0 : i32, i32
  }
  func.func @transform_13(%arg0: i32) -> (i32, i32) {
    %c0_i32 = arith.constant 0 : i32
    %c0_i32_0 = arith.constant 0 : i32
    %c0_i32_1 = arith.constant 0 : i32
    return %c0_i32, %c0_i32_0 : i32, i32
  }
  func.func @transform_14(%arg0: i32) -> (i32, i32) {
    %c0_i32 = arith.constant 0 : i32
    %c0_i32_0 = arith.constant 0 : i32
    %c0_i32_1 = arith.constant 0 : i32
    return %c0_i32, %c0_i32_0 : i32, i32
  }
  func.func @transform_15(%arg0: i32) -> (i32, i32) {
    %c0_i32 = arith.constant 0 : i32
    %c0_i32_0 = arith.constant 0 : i32
    %c0_i32_1 = arith.constant 0 : i32
    return %c0_i32, %c0_i32_0 : i32, i32
  }
  func.func @transform_16(%arg0: i32) -> (i32, i32) {
    %c0_i32 = arith.constant 0 : i32
    %c0_i32_0 = arith.constant 0 : i32
    %c0_i32_1 = arith.constant 0 : i32
    return %c0_i32, %c0_i32_0 : i32, i32
  }
  func.func @transform_17(%arg0: i32) -> (i32, i32) {
    %c0_i32 = arith.constant 0 : i32
    %c0_i32_0 = arith.constant 0 : i32
    %c0_i32_1 = arith.constant 0 : i32
    return %c0_i32, %c0_i32_0 : i32, i32
  }
  func.func @transform_18(%arg0: i32) -> (i32, i32) {
    %c0_i32 = arith.constant 0 : i32
    %c0_i32_0 = arith.constant 0 : i32
    %c0_i32_1 = arith.constant 0 : i32
    return %c0_i32, %c0_i32_0 : i32, i32
  }
  func.func @transform_19(%arg0: i32) -> (i32, i32) {
    %c0_i32 = arith.constant 0 : i32
    %c0_i32_0 = arith.constant 0 : i32
    %c0_i32_1 = arith.constant 0 : i32
    return %c0_i32, %c0_i32_0 : i32, i32
  }
  func.func @transform_20(%arg0: i32) -> (i32, i32) {
    %c0_i32 = arith.constant 0 : i32
    %c0_i32_0 = arith.constant 0 : i32
    %c0_i32_1 = arith.constant 0 : i32
    return %c0_i32, %c0_i32_0 : i32, i32
  }
  func.func @transform_21(%arg0: i32) -> (i32, i32, i32, i32) {
    %c0_i32 = arith.constant 0 : i32
    %c0_i32_0 = arith.constant 0 : i32
    %c0_i32_1 = arith.constant 0 : i32
    %c0_i32_2 = arith.constant 0 : i32
    return %arg0, %c0_i32, %c0_i32_0, %c0_i32_1 : i32, i32, i32, i32
  }
}

</mosaic_0001>

<llo_original>
// kernel: tpu_custom_call.1
$region0: #{tpu_custom_call.1}
  #allocation0 [shape = 'u32[]', space=smem, size = 0x4, offset = 0x4, fixed_abs, tag = 'smem constant byte address 0x4 - core index']
  #allocation1 [shape = 'u32[144,128]{1,0:T(1,128)}', space=vmem, size = 0x12000, scoped, tag = 'internal scratch']
  #allocation2 [shape = 'f32[18,18,48]{2,1,0:T(8,128)}', space=vmem, size = 0x36000, scoped, tag = 'scratch operand']
  %s0 = inlined_call_operand.vmem [shape: f32[2,16,16,16], index: 0, kind: input, shape index: {}]
  %s1 = inlined_call_operand.vmem [shape: f32[1,16], index: 1, kind: input, shape index: {}]
  %s2 = inlined_call_operand.vmem [shape: f32[1,16], index: 2, kind: input, shape index: {}]
  %s3 = inlined_call_operand.vmem [shape: f32[144,8], index: 3, kind: input, shape index: {}]
  %s4 = inlined_call_operand.vmem [shape: f32[1,8], index: 4, kind: input, shape index: {}]
  %s5 = inlined_call_operand.vmem [shape: f32[1,24], index: 5, kind: input, shape index: {}]
  %s6 = inlined_call_operand.vmem [shape: f32[1,24], index: 6, kind: input, shape index: {}]
  %s7 = inlined_call_operand.vmem [shape: f32[216,8], index: 7, kind: input, shape index: {}]
  %s8 = inlined_call_operand.vmem [shape: f32[1,8], index: 8, kind: input, shape index: {}]
  %s9 = inlined_call_operand.vmem [shape: f32[1,32], index: 9, kind: input, shape index: {}]
  %s10 = inlined_call_operand.vmem [shape: f32[1,32], index: 10, kind: input, shape index: {}]
  %s11 = inlined_call_operand.vmem [shape: f32[288,8], index: 11, kind: input, shape index: {}]
  %s12 = inlined_call_operand.vmem [shape: f32[1,8], index: 12, kind: input, shape index: {}]
  %s13 = inlined_call_operand.vmem [shape: f32[1,40], index: 13, kind: input, shape index: {}]
  %s14 = inlined_call_operand.vmem [shape: f32[1,40], index: 14, kind: input, shape index: {}]
  %s15 = inlined_call_operand.vmem [shape: f32[360,8], index: 15, kind: input, shape index: {}]
  %s16 = inlined_call_operand.vmem [shape: f32[1,8], index: 16, kind: input, shape index: {}]
  %s17 = inlined_call_operand.vmem [shape: f32[48,3], index: 17, kind: input, shape index: {}]
  %s18 = inlined_call_operand.vmem [shape: f32[1,3], index: 18, kind: input, shape index: {}]
  %s19 = inlined_call_operand.vmem [shape: f32[3,48], index: 19, kind: input, shape index: {}]
  %s20 = inlined_call_operand.vmem [shape: f32[1,48], index: 20, kind: input, shape index: {}]
  %s21 = inlined_call_operand.hbm [shape: f32[2,16,16,48], index: 21, kind: output, shape index: {}]
  %s22 = sld [smem:[#allocation0]]
  $region117: #{tpu_custom_call.1} parent=0
    _
  %s24 = ssub.s32 1, %s22
  %s25 = scalar_select 0, %s24, %s22
  $region1: #{tpu_custom_call.1} parent=0
    #allocation3 [shape = 'u8[262144]{0}', space=vmem, size = 0x40000, scoped, tag = 'output window, operand 0']
    #allocation4 [shape = 's32[2]{0}', space=sflag, size = 0x8, scoped, tag = 'scoped memory for tpu_custom_call.1']
    %26 = vsyncpa [#allocation4], 0
    %s27 = scalar_lea.sflag [#allocation4], 1
    %28 = vsyncpa %s27, 0
    loop: start=0, step=1, limit=4
    $region2: #{tpu_custom_call.1} parent=1 // loop_pre_header
      _
    $region3: #{tpu_custom_call.1} parent=1 // loop_header
      %s30 = sphi 0, %s34
      %p31 = scmp.ge.s32.totalorder %s30, 4
      %s40 = sphi 0, %s42
      %s43 = sphi 0, %s40
      %s44 = sphi 0, %s43
      %s60 = sphi 0, %s44
      %s64 = sphi 0, %s64
      %s66 = sphi 0, %s64
      %s67 = sphi 0, %s66
      %s81 = sphi 0, %s67
      %s85 = sphi 0, %s85
      %s87 = sphi 0, %s85
      %s88 = sphi 0, %s87
      %s102 = sphi 0, %s88
      %s106 = sphi 0, %s106
      %s108 = sphi 0, %s106
      %s109 = sphi 0, %s108
      %s123 = sphi 0, %s109
      %s127 = sphi 0, %s127
      %s129 = sphi 0, %s127
      %s130 = sphi 0, %s129
      %s144 = sphi 0, %s130
      %s148 = sphi 0, %s148
      %s150 = sphi 0, %s148
      %s151 = sphi 0, %s150
      %s165 = sphi 0, %s151
      %s169 = sphi 0, %s169
      %s171 = sphi 0, %s169
      %s172 = sphi 0, %s171
      %s186 = sphi 0, %s172
      %s190 = sphi 0, %s190
      %s192 = sphi 0, %s190
      %s193 = sphi 0, %s192
      %s207 = sphi 0, %s193
      %s211 = sphi 0, %s211
      %s213 = sphi 0, %s211
      %s214 = sphi 0, %s213
      %s228 = sphi 0, %s214
      %s232 = sphi 0, %s232
      %s234 = sphi 0, %s232
      %s235 = sphi 0, %s234
      %s249 = sphi 0, %s235
      %s253 = sphi 0, %s253
      %s255 = sphi 0, %s253
      %s256 = sphi 0, %s255
      %s270 = sphi 0, %s256
      %s274 = sphi 0, %s274
      %s276 = sphi 0, %s274
      %s277 = sphi 0, %s276
      %s291 = sphi 0, %s277
      %s295 = sphi 0, %s295
      %s297 = sphi 0, %s295
      %s298 = sphi 0, %s297
      %s312 = sphi 0, %s298
      %s316 = sphi 0, %s316
      %s318 = sphi 0, %s316
      %s319 = sphi 0, %s318
      %s333 = sphi 0, %s319
      %s337 = sphi 0, %s337
      %s339 = sphi 0, %s337
      %s340 = sphi 0, %s339
      %s354 = sphi 0, %s340
      %s358 = sphi 0, %s358
      %s360 = sphi 0, %s358
      %s361 = sphi 0, %s360
      %s375 = sphi 0, %s361
      %s379 = sphi 0, %s379
      %s381 = sphi 0, %s379
      %s382 = sphi 0, %s381
      %s396 = sphi 0, %s382
      %s400 = sphi 0, %s400
      %s402 = sphi 0, %s400
      %s403 = sphi 0, %s402
      %s417 = sphi 0, %s403
      %s421 = sphi 0, %s421
      %s423 = sphi 0, %s421
      %s424 = sphi 0, %s423
      %s438 = sphi 0, %s424
      %s442 = sphi 0, %s442
      %s444 = sphi 0, %s442
      %s445 = sphi 0, %s444
      %s459 = sphi 0, %s445
      %s463 = sphi 0, %s463
      %s465 = sphi 0, %s463
      %s466 = sphi 0, %s465
      %s480 = sphi 0, %s466
      %s486 = sphi 0, %s488
      %s489 = sphi 0, %s486
      %s490 = sphi 0, %s489
      %s506 = sphi 0, %s490
    $region4: #{tpu_custom_call.1} parent=1 // loop_header_branch
      %33 = sbr.rel (%p31) target = $region8
    $region5: #{tpu_custom_call.1} parent=1 // loop_body
      %s35 = ssub.s32 %s30, 1
      %s36 = ssub.s32 %s30, 2
      %s37 = sadd.s32 %s30, 1
      %s38 = ssub.s32 %s30, %s37
      %p39 = scmp.eq.s32.totalorder %s38, 0
      %s41 = sadd.s32 %s40, 1
      %s42 = scalar_select %p39, %s40, %s41
      %p45 = pneg %p39
      %p46 = scmp.eq.s32.totalorder %s30, 1
      %p47 = por %p45, %p46
      %p48 = scmp.ne.s32.totalorder %s40, %s43
      %p49 = scmp.eq.s32.totalorder %s30, 0
      %p50 = por %p48, %p49
      %p51 = scmp.ne.s32.totalorder %s40, %s43
      %p52 = scmp.eq.s32.totalorder %s35, 1
      %p53 = por %p51, %p52
      %p54 = scmp.ne.s32.totalorder %s43, %s44
      %p55 = scmp.eq.s32.totalorder %s35, 0
      %p56 = por %p54, %p55
      %p57 = scmp.ne.s32.totalorder %s43, %s44
      %p58 = scmp.eq.s32.totalorder %s36, 1
      %p59 = por %p57, %p58
      %p61 = scmp.ne.s32.totalorder %s44, %s60
      %p62 = scmp.eq.s32.totalorder %s36, 0
      %p63 = por %p61, %p62
      %s65 = sadd.s32 %s64, 1
      %p68 = scmp.eq.s32.totalorder %s30, 1
      %p69 = scmp.ne.s32.totalorder %s64, %s66
      %p70 = scmp.eq.s32.totalorder %s30, 0
      %p71 = por %p69, %p70
      %p72 = scmp.ne.s32.totalorder %s64, %s66
      %p73 = scmp.eq.s32.totalorder %s35, 1
      %p74 = por %p72, %p73
      %p75 = scmp.ne.s32.totalorder %s66, %s67
      %p76 = scmp.eq.s32.totalorder %s35, 0
      %p77 = por %p75, %p76
      %p78 = scmp.ne.s32.totalorder %s66, %s67
      %p79 = scmp.eq.s32.totalorder %s36, 1
      %p80 = por %p78, %p79
      %p82 = scmp.ne.s32.totalorder %s67, %s81
      %p83 = scmp.eq.s32.totalorder %s36, 0
      %p84 = por %p82, %p83
      %s86 = sadd.s32 %s85, 1
      %p89 = scmp.eq.s32.totalorder %s30, 1
      %p90 = scmp.ne.s32.totalorder %s85, %s87
      %p91 = scmp.eq.s32.totalorder %s30, 0
      %p92 = por %p90, %p91
      %p93 = scmp.ne.s32.totalorder %s85, %s87
      %p94 = scmp.eq.s32.totalorder %s35, 1
      %p95 = por %p93, %p94
      %p96 = scmp.ne.s32.totalorder %s87, %s88
      %p97 = scmp.eq.s32.totalorder %s35, 0
      %p98 = por %p96, %p97
      %p99 = scmp.ne.s32.totalorder %s87, %s88
      %p100 = scmp.eq.s32.totalorder %s36, 1
      %p101 = por %p99, %p100
      %p103 = scmp.ne.s32.totalorder %s88, %s102
      %p104 = scmp.eq.s32.totalorder %s36, 0
      %p105 = por %p103, %p104
      %s107 = sadd.s32 %s106, 1
      %p110 = scmp.eq.s32.totalorder %s30, 1
      %p111 = scmp.ne.s32.totalorder %s106, %s108
      %p112 = scmp.eq.s32.totalorder %s30, 0
      %p113 = por %p111, %p112
      %p114 = scmp.ne.s32.totalorder %s106, %s108
      %p115 = scmp.eq.s32.totalorder %s35, 1
      %p116 = por %p114, %p115
      %p117 = scmp.ne.s32.totalorder %s108, %s109
      %p118 = scmp.eq.s32.totalorder %s35, 0
      %p119 = por %p117, %p118
      %p120 = scmp.ne.s32.totalorder %s108, %s109
      %p121 = scmp.eq.s32.totalorder %s36, 1
      %p122 = por %p120, %p121
      %p124 = scmp.ne.s32.totalorder %s109, %s123
      %p125 = scmp.eq.s32.totalorder %s36, 0
      %p126 = por %p124, %p125
      %s128 = sadd.s32 %s127, 1
      %p131 = scmp.eq.s32.totalorder %s30, 1
      %p132 = scmp.ne.s32.totalorder %s127, %s129
      %p133 = scmp.eq.s32.totalorder %s30, 0
      %p134 = por %p132, %p133
      %p135 = scmp.ne.s32.totalorder %s127, %s129
      %p136 = scmp.eq.s32.totalorder %s35, 1
      %p137 = por %p135, %p136
      %p138 = scmp.ne.s32.totalorder %s129, %s130
      %p139 = scmp.eq.s32.totalorder %s35, 0
      %p140 = por %p138, %p139
      %p141 = scmp.ne.s32.totalorder %s129, %s130
      %p142 = scmp.eq.s32.totalorder %s36, 1
      %p143 = por %p141, %p142
      %p145 = scmp.ne.s32.totalorder %s130, %s144
      %p146 = scmp.eq.s32.totalorder %s36, 0
      %p147 = por %p145, %p146
      %s149 = sadd.s32 %s148, 1
      %p152 = scmp.eq.s32.totalorder %s30, 1
      %p153 = scmp.ne.s32.totalorder %s148, %s150
      %p154 = scmp.eq.s32.totalorder %s30, 0
      %p155 = por %p153, %p154
      %p156 = scmp.ne.s32.totalorder %s148, %s150
      %p157 = scmp.eq.s32.totalorder %s35, 1
      %p158 = por %p156, %p157
      %p159 = scmp.ne.s32.totalorder %s150, %s151
      %p160 = scmp.eq.s32.totalorder %s35, 0
      %p161 = por %p159, %p160
      %p162 = scmp.ne.s32.totalorder %s150, %s151
      %p163 = scmp.eq.s32.totalorder %s36, 1
      %p164 = por %p162, %p163
      %p166 = scmp.ne.s32.totalorder %s151, %s165
      %p167 = scmp.eq.s32.totalorder %s36, 0
      %p168 = por %p166, %p167
      %s170 = sadd.s32 %s169, 1
      %p173 = scmp.eq.s32.totalorder %s30, 1
      %p174 = scmp.ne.s32.totalorder %s169, %s171
      %p175 = scmp.eq.s32.totalorder %s30, 0
      %p176 = por %p174, %p175
      %p177 = scmp.ne.s32.totalorder %s169, %s171
      %p178 = scmp.eq.s32.totalorder %s35, 1
      %p179 = por %p177, %p178
      %p180 = scmp.ne.s32.totalorder %s171, %s172
      %p181 = scmp.eq.s32.totalorder %s35, 0
      %p182 = por %p180, %p181
      %p183 = scmp.ne.s32.totalorder %s171, %s172
      %p184 = scmp.eq.s32.totalorder %s36, 1
      %p185 = por %p183, %p184
      %p187 = scmp.ne.s32.totalorder %s172, %s186
      %p188 = scmp.eq.s32.totalorder %s36, 0
      %p189 = por %p187, %p188
      %s191 = sadd.s32 %s190, 1
      %p194 = scmp.eq.s32.totalorder %s30, 1
      %p195 = scmp.ne.s32.totalorder %s190, %s192
      %p196 = scmp.eq.s32.totalorder %s30, 0
      %p197 = por %p195, %p196
      %p198 = scmp.ne.s32.totalorder %s190, %s192
      %p199 = scmp.eq.s32.totalorder %s35, 1
      %p200 = por %p198, %p199
      %p201 = scmp.ne.s32.totalorder %s192, %s193
      %p202 = scmp.eq.s32.totalorder %s35, 0
      %p203 = por %p201, %p202
      %p204 = scmp.ne.s32.totalorder %s192, %s193
      %p205 = scmp.eq.s32.totalorder %s36, 1
      %p206 = por %p204, %p205
      %p208 = scmp.ne.s32.totalorder %s193, %s207
      %p209 = scmp.eq.s32.totalorder %s36, 0
      %p210 = por %p208, %p209
      %s212 = sadd.s32 %s211, 1
      %p215 = scmp.eq.s32.totalorder %s30, 1
      %p216 = scmp.ne.s32.totalorder %s211, %s213
      %p217 = scmp.eq.s32.totalorder %s30, 0
      %p218 = por %p216, %p217
      %p219 = scmp.ne.s32.totalorder %s211, %s213
      %p220 = scmp.eq.s32.totalorder %s35, 1
      %p221 = por %p219, %p220
      %p222 = scmp.ne.s32.totalorder %s213, %s214
      %p223 = scmp.eq.s32.totalorder %s35, 0
      %p224 = por %p222, %p223
      %p225 = scmp.ne.s32.totalorder %s213, %s214
      %p226 = scmp.eq.s32.totalorder %s36, 1
      %p227 = por %p225, %p226
      %p229 = scmp.ne.s32.totalorder %s214, %s228
      %p230 = scmp.eq.s32.totalorder %s36, 0
      %p231 = por %p229, %p230
      %s233 = sadd.s32 %s232, 1
      %p236 = scmp.eq.s32.totalorder %s30, 1
      %p237 = scmp.ne.s32.totalorder %s232, %s234
      %p238 = scmp.eq.s32.totalorder %s30, 0
      %p239 = por %p237, %p238
      %p240 = scmp.ne.s32.totalorder %s232, %s234
      %p241 = scmp.eq.s32.totalorder %s35, 1
      %p242 = por %p240, %p241
      %p243 = scmp.ne.s32.totalorder %s234, %s235
      %p244 = scmp.eq.s32.totalorder %s35, 0
      %p245 = por %p243, %p244
      %p246 = scmp.ne.s32.totalorder %s234, %s235
      %p247 = scmp.eq.s32.totalorder %s36, 1
      %p248 = por %p246, %p247
      %p250 = scmp.ne.s32.totalorder %s235, %s249
      %p251 = scmp.eq.s32.totalorder %s36, 0
      %p252 = por %p250, %p251
      %s254 = sadd.s32 %s253, 1
      %p257 = scmp.eq.s32.totalorder %s30, 1
      %p258 = scmp.ne.s32.totalorder %s253, %s255
      %p259 = scmp.eq.s32.totalorder %s30, 0
      %p260 = por %p258, %p259
      %p261 = scmp.ne.s32.totalorder %s253, %s255
      %p262 = scmp.eq.s32.totalorder %s35, 1
      %p263 = por %p261, %p262
      %p264 = scmp.ne.s32.totalorder %s255, %s256
      %p265 = scmp.eq.s32.totalorder %s35, 0
      %p266 = por %p264, %p265
      %p267 = scmp.ne.s32.totalorder %s255, %s256
      %p268 = scmp.eq.s32.totalorder %s36, 1
      %p269 = por %p267, %p268
      %p271 = scmp.ne.s32.totalorder %s256, %s270
      %p272 = scmp.eq.s32.totalorder %s36, 0
      %p273 = por %p271, %p272
      %s275 = sadd.s32 %s274, 1
      %p278 = scmp.eq.s32.totalorder %s30, 1
      %p279 = scmp.ne.s32.totalorder %s274, %s276
      %p280 = scmp.eq.s32.totalorder %s30, 0
      %p281 = por %p279, %p280
      %p282 = scmp.ne.s32.totalorder %s274, %s276
      %p283 = scmp.eq.s32.totalorder %s35, 1
      %p284 = por %p282, %p283
      %p285 = scmp.ne.s32.totalorder %s276, %s277
      %p286 = scmp.eq.s32.totalorder %s35, 0
      %p287 = por %p285, %p286
      %p288 = scmp.ne.s32.totalorder %s276, %s277
      %p289 = scmp.eq.s32.totalorder %s36, 1
      %p290 = por %p288, %p289
      %p292 = scmp.ne.s32.totalorder %s277, %s291
      %p293 = scmp.eq.s32.totalorder %s36, 0
      %p294 = por %p292, %p293
      %s296 = sadd.s32 %s295, 1
      %p299 = scmp.eq.s32.totalorder %s30, 1
      %p300 = scmp.ne.s32.totalorder %s295, %s297
      %p301 = scmp.eq.s32.totalorder %s30, 0
      %p302 = por %p300, %p301
      %p303 = scmp.ne.s32.totalorder %s295, %s297
      %p304 = scmp.eq.s32.totalorder %s35, 1
      %p305 = por %p303, %p304
      %p306 = scmp.ne.s32.totalorder %s297, %s298
      %p307 = scmp.eq.s32.totalorder %s35, 0
      %p308 = por %p306, %p307
      %p309 = scmp.ne.s32.totalorder %s297, %s298
      %p310 = scmp.eq.s32.totalorder %s36, 1
      %p311 = por %p309, %p310
      %p313 = scmp.ne.s32.totalorder %s298, %s312
      %p314 = scmp.eq.s32.totalorder %s36, 0
      %p315 = por %p313, %p314
      %s317 = sadd.s32 %s316, 1
      %p320 = scmp.eq.s32.totalorder %s30, 1
      %p321 = scmp.ne.s32.totalorder %s316, %s318
      %p322 = scmp.eq.s32.totalorder %s30, 0
      %p323 = por %p321, %p322
      %p324 = scmp.ne.s32.totalorder %s316, %s318
      %p325 = scmp.eq.s32.totalorder %s35, 1
      %p326 = por %p324, %p325
      %p327 = scmp.ne.s32.totalorder %s318, %s319
      %p328 = scmp.eq.s32.totalorder %s35, 0
      %p329 = por %p327, %p328
      %p330 = scmp.ne.s32.totalorder %s318, %s319
      %p331 = scmp.eq.s32.totalorder %s36, 1
      %p332 = por %p330, %p331
      %p334 = scmp.ne.s32.totalorder %s319, %s333
      %p335 = scmp.eq.s32.totalorder %s36, 0
      %p336 = por %p334, %p335
      %s338 = sadd.s32 %s337, 1
      %p341 = scmp.eq.s32.totalorder %s30, 1
      %p342 = scmp.ne.s32.totalorder %s337, %s339
      %p343 = scmp.eq.s32.totalorder %s30, 0
      %p344 = por %p342, %p343
      %p345 = scmp.ne.s32.totalorder %s337, %s339
      %p346 = scmp.eq.s32.totalorder %s35, 1
      %p347 = por %p345, %p346
      %p348 = scmp.ne.s32.totalorder %s339, %s340
      %p349 = scmp.eq.s32.totalorder %s35, 0
      %p350 = por %p348, %p349
      %p351 = scmp.ne.s32.totalorder %s339, %s340
      %p352 = scmp.eq.s32.totalorder %s36, 1
      %p353 = por %p351, %p352
      %p355 = scmp.ne.s32.totalorder %s340, %s354
      %p356 = scmp.eq.s32.totalorder %s36, 0
      %p357 = por %p355, %p356
      %s359 = sadd.s32 %s358, 1
      %p362 = scmp.eq.s32.totalorder %s30, 1
      %p363 = scmp.ne.s32.totalorder %s358, %s360
      %p364 = scmp.eq.s32.totalorder %s30, 0
      %p365 = por %p363, %p364
      %p366 = scmp.ne.s32.totalorder %s358, %s360
      %p367 = scmp.eq.s32.totalorder %s35, 1
      %p368 = por %p366, %p367
      %p369 = scmp.ne.s32.totalorder %s360, %s361
      %p370 = scmp.eq.s32.totalorder %s35, 0
      %p371 = por %p369, %p370
      %p372 = scmp.ne.s32.totalorder %s360, %s361
      %p373 = scmp.eq.s32.totalorder %s36, 1
      %p374 = por %p372, %p373
      %p376 = scmp.ne.s32.totalorder %s361, %s375
      %p377 = scmp.eq.s32.totalorder %s36, 0
      %p378 = por %p376, %p377
      %s380 = sadd.s32 %s379, 1
      %p383 = scmp.eq.s32.totalorder %s30, 1
      %p384 = scmp.ne.s32.totalorder %s379, %s381
      %p385 = scmp.eq.s32.totalorder %s30, 0
      %p386 = por %p384, %p385
      %p387 = scmp.ne.s32.totalorder %s379, %s381
      %p388 = scmp.eq.s32.totalorder %s35, 1
      %p389 = por %p387, %p388
      %p390 = scmp.ne.s32.totalorder %s381, %s382
      %p391 = scmp.eq.s32.totalorder %s35, 0
      %p392 = por %p390, %p391
      %p393 = scmp.ne.s32.totalorder %s381, %s382
      %p394 = scmp.eq.s32.totalorder %s36, 1
      %p395 = por %p393, %p394
      %p397 = scmp.ne.s32.totalorder %s382, %s396
      %p398 = scmp.eq.s32.totalorder %s36, 0
      %p399 = por %p397, %p398
      %s401 = sadd.s32 %s400, 1
      %p404 = scmp.eq.s32.totalorder %s30, 1
      %p405 = scmp.ne.s32.totalorder %s400, %s402
      %p406 = scmp.eq.s32.totalorder %s30, 0
      %p407 = por %p405, %p406
      %p408 = scmp.ne.s32.totalorder %s400, %s402
      %p409 = scmp.eq.s32.totalorder %s35, 1
      %p410 = por %p408, %p409
      %p411 = scmp.ne.s32.totalorder %s402, %s403
      %p412 = scmp.eq.s32.totalorder %s35, 0
      %p413 = por %p411, %p412
      %p414 = scmp.ne.s32.totalorder %s402, %s403
      %p415 = scmp.eq.s32.totalorder %s36, 1
      %p416 = por %p414, %p415
      %p418 = scmp.ne.s32.totalorder %s403, %s417
      %p419 = scmp.eq.s32.totalorder %s36, 0
      %p420 = por %p418, %p419
      %s422 = sadd.s32 %s421, 1
      %p425 = scmp.eq.s32.totalorder %s30, 1
      %p426 = scmp.ne.s32.totalorder %s421, %s423
      %p427 = scmp.eq.s32.totalorder %s30, 0
      %p428 = por %p426, %p427
      %p429 = scmp.ne.s32.totalorder %s421, %s423
      %p430 = scmp.eq.s32.totalorder %s35, 1
      %p431 = por %p429, %p430
      %p432 = scmp.ne.s32.totalorder %s423, %s424
      %p433 = scmp.eq.s32.totalorder %s35, 0
      %p434 = por %p432, %p433
      %p435 = scmp.ne.s32.totalorder %s423, %s424
      %p436 = scmp.eq.s32.totalorder %s36, 1
      %p437 = por %p435, %p436
      %p439 = scmp.ne.s32.totalorder %s424, %s438
      %p440 = scmp.eq.s32.totalorder %s36, 0
      %p441 = por %p439, %p440
      %s443 = sadd.s32 %s442, 1
      %p446 = scmp.eq.s32.totalorder %s30, 1
      %p447 = scmp.ne.s32.totalorder %s442, %s444
      %p448 = scmp.eq.s32.totalorder %s30, 0
      %p449 = por %p447, %p448
      %p450 = scmp.ne.s32.totalorder %s442, %s444
      %p451 = scmp.eq.s32.totalorder %s35, 1
      %p452 = por %p450, %p451
      %p453 = scmp.ne.s32.totalorder %s444, %s445
      %p454 = scmp.eq.s32.totalorder %s35, 0
      %p455 = por %p453, %p454
      %p456 = scmp.ne.s32.totalorder %s444, %s445
      %p457 = scmp.eq.s32.totalorder %s36, 1
      %p458 = por %p456, %p457
      %p460 = scmp.ne.s32.totalorder %s445, %s459
      %p461 = scmp.eq.s32.totalorder %s36, 0
      %p462 = por %p460, %p461
      %s464 = sadd.s32 %s463, 1
      %p467 = scmp.eq.s32.totalorder %s30, 1
      %p468 = scmp.ne.s32.totalorder %s463, %s465
      %p469 = scmp.eq.s32.totalorder %s30, 0
      %p470 = por %p468, %p469
      %p471 = scmp.ne.s32.totalorder %s463, %s465
      %p472 = scmp.eq.s32.totalorder %s35, 1
      %p473 = por %p471, %p472
      %p474 = scmp.ne.s32.totalorder %s465, %s466
      %p475 = scmp.eq.s32.totalorder %s35, 0
      %p476 = por %p474, %p475
      %p477 = scmp.ne.s32.totalorder %s465, %s466
      %p478 = scmp.eq.s32.totalorder %s36, 1
      %p479 = por %p477, %p478
      %p481 = scmp.ne.s32.totalorder %s466, %s480
      %p482 = scmp.eq.s32.totalorder %s36, 0
      %p483 = por %p481, %p482
      %s484 = ssub.s32 %s30, %s37
      %p485 = scmp.eq.s32.totalorder %s484, 0
      %s487 = sadd.s32 %s486, 1
      %s488 = scalar_select %p485, %s486, %s487
      %p491 = pneg %p485
      %p492 = scmp.eq.s32.totalorder %s30, 1
      %p493 = por %p491, %p492
      %p494 = scmp.ne.s32.totalorder %s486, %s489
      %p495 = scmp.eq.s32.totalorder %s30, 0
      %p496 = por %p494, %p495
      %p497 = scmp.ne.s32.totalorder %s486, %s489
      %p498 = scmp.eq.s32.totalorder %s35, 1
      %p499 = por %p497, %p498
      %p500 = scmp.ne.s32.totalorder %s489, %s490
      %p501 = scmp.eq.s32.totalorder %s35, 0
      %p502 = por %p500, %p501
      %p503 = scmp.ne.s32.totalorder %s489, %s490
      %p504 = scmp.eq.s32.totalorder %s36, 1
      %p505 = por %p503, %p504
      %p507 = scmp.ne.s32.totalorder %s490, %s506
      %p508 = scmp.eq.s32.totalorder %s36, 0
      %p509 = por %p507, %p508
      %p510 = scmp.le.s32.totalorder 1, %s30
      %p511 = scmp.lt.s32.totalorder %s30, 3
      %p512 = pnand %p510, %p511
      %p513 = pneg %p512
      // Predicated region
      $region9: #{tpu_custom_call.1} parent=5 // pred_check
        _
      $region10: #{tpu_custom_call.1} parent=5 // pred_check_branch
        %515 = sbr.rel (%p512) target = $region12
      $region11: #{tpu_custom_call.1} parent=5 // pred_region
        %s516 = ssub.s32 %s30, 1
        // Predicated region
        $region13: #{tpu_custom_call.1} parent=11 // pred_check
          %p517 = pneg %p77
        $region14: #{tpu_custom_call.1} parent=11 // pred_check_branch
          %519 = sbr.rel (%p517) target = $region16
        $region15: #{tpu_custom_call.1} parent=11 // pred_region
          _
        $region16: #{tpu_custom_call.1} parent=11 // pred_fallthru
          _
        // Predicated region
        $region17: #{tpu_custom_call.1} parent=11 // pred_check
          %p520 = pneg %p98
        $region18: #{tpu_custom_call.1} parent=11 // pred_check_branch
          %522 = sbr.rel (%p520) target = $region20
        $region19: #{tpu_custom_call.1} parent=11 // pred_region
          _
        $region20: #{tpu_custom_call.1} parent=11 // pred_fallthru
          _
        // Predicated region
        $region21: #{tpu_custom_call.1} parent=11 // pred_check
          %p523 = pneg %p119
        $region22: #{tpu_custom_call.1} parent=11 // pred_check_branch
          %525 = sbr.rel (%p523) target = $region24
        $region23: #{tpu_custom_call.1} parent=11 // pred_region
          _
        $region24: #{tpu_custom_call.1} parent=11 // pred_fallthru
          _
        // Predicated region
        $region25: #{tpu_custom_call.1} parent=11 // pred_check
          %p526 = pneg %p140
        $region26: #{tpu_custom_call.1} parent=11 // pred_check_branch
          %528 = sbr.rel (%p526) target = $region28
        $region27: #{tpu_custom_call.1} parent=11 // pred_region
          _
        $region28: #{tpu_custom_call.1} parent=11 // pred_fallthru
          _
        // Predicated region
        $region29: #{tpu_custom_call.1} parent=11 // pred_check
          %p529 = pneg %p161
        $region30: #{tpu_custom_call.1} parent=11 // pred_check_branch
          %531 = sbr.rel (%p529) target = $region32
        $region31: #{tpu_custom_call.1} parent=11 // pred_region
          _
        $region32: #{tpu_custom_call.1} parent=11 // pred_fallthru
          _
        // Predicated region
        $region33: #{tpu_custom_call.1} parent=11 // pred_check
          %p532 = pneg %p182
        $region34: #{tpu_custom_call.1} parent=11 // pred_check_branch
          %534 = sbr.rel (%p532) target = $region36
        $region35: #{tpu_custom_call.1} parent=11 // pred_region
          _
        $region36: #{tpu_custom_call.1} parent=11 // pred_fallthru
          _
        // Predicated region
        $region37: #{tpu_custom_call.1} parent=11 // pred_check
          %p535 = pneg %p203
        $region38: #{tpu_custom_call.1} parent=11 // pred_check_branch
          %537 = sbr.rel (%p535) target = $region40
        $region39: #{tpu_custom_call.1} parent=11 // pred_region
          _
        $region40: #{tpu_custom_call.1} parent=11 // pred_fallthru
          _
        // Predicated region
        $region41: #{tpu_custom_call.1} parent=11 // pred_check
          %p538 = pneg %p224
        $region42: #{tpu_custom_call.1} parent=11 // pred_check_branch
          %540 = sbr.rel (%p538) target = $region44
        $region43: #{tpu_custom_call.1} parent=11 // pred_region
          _
        $region44: #{tpu_custom_call.1} parent=11 // pred_fallthru
          _
        // Predicated region
        $region45: #{tpu_custom_call.1} parent=11 // pred_check
          %p541 = pneg %p245
        $region46: #{tpu_custom_call.1} parent=11 // pred_check_branch
          %543 = sbr.rel (%p541) target = $region48
        $region47: #{tpu_custom_call.1} parent=11 // pred_region
          _
        $region48: #{tpu_custom_call.1} parent=11 // pred_fallthru
          _
        // Predicated region
        $region49: #{tpu_custom_call.1} parent=11 // pred_check
          %p544 = pneg %p266
        $region50: #{tpu_custom_call.1} parent=11 // pred_check_branch
          %546 = sbr.rel (%p544) target = $region52
        $region51: #{tpu_custom_call.1} parent=11 // pred_region
          _
        $region52: #{tpu_custom_call.1} parent=11 // pred_fallthru
          _
        // Predicated region
        $region53: #{tpu_custom_call.1} parent=11 // pred_check
          %p547 = pneg %p287
        $region54: #{tpu_custom_call.1} parent=11 // pred_check_branch
          %549 = sbr.rel (%p547) target = $region56
        $region55: #{tpu_custom_call.1} parent=11 // pred_region
          _
        $region56: #{tpu_custom_call.1} parent=11 // pred_fallthru
          _
        // Predicated region
        $region57: #{tpu_custom_call.1} parent=11 // pred_check
          %p550 = pneg %p308
        $region58: #{tpu_custom_call.1} parent=11 // pred_check_branch
          %552 = sbr.rel (%p550) target = $region60
        $region59: #{tpu_custom_call.1} parent=11 // pred_region
          _
        $region60: #{tpu_custom_call.1} parent=11 // pred_fallthru
          _
        // Predicated region
        $region61: #{tpu_custom_call.1} parent=11 // pred_check
          %p553 = pneg %p329
        $region62: #{tpu_custom_call.1} parent=11 // pred_check_branch
          %555 = sbr.rel (%p553) target = $region64
        $region63: #{tpu_custom_call.1} parent=11 // pred_region
          _
        $region64: #{tpu_custom_call.1} parent=11 // pred_fallthru
          _
        // Predicated region
        $region65: #{tpu_custom_call.1} parent=11 // pred_check
          %p556 = pneg %p350
        $region66: #{tpu_custom_call.1} parent=11 // pred_check_branch
          %558 = sbr.rel (%p556) target = $region68
        $region67: #{tpu_custom_call.1} parent=11 // pred_region
          _
        $region68: #{tpu_custom_call.1} parent=11 // pred_fallthru
          _
        // Predicated region
        $region69: #{tpu_custom_call.1} parent=11 // pred_check
          %p559 = pneg %p371
        $region70: #{tpu_custom_call.1} parent=11 // pred_check_branch
          %561 = sbr.rel (%p559) target = $region72
        $region71: #{tpu_custom_call.1} parent=11 // pred_region
          _
        $region72: #{tpu_custom_call.1} parent=11 // pred_fallthru
          _
        // Predicated region
        $region73: #{tpu_custom_call.1} parent=11 // pred_check
          %p562 = pneg %p392
        $region74: #{tpu_custom_call.1} parent=11 // pred_check_branch
          %564 = sbr.rel (%p562) target = $region76
        $region75: #{tpu_custom_call.1} parent=11 // pred_region
          _
        $region76: #{tpu_custom_call.1} parent=11 // pred_fallthru
          _
        // Predicated region
        $region77: #{tpu_custom_call.1} parent=11 // pred_check
          %p565 = pneg %p413
        $region78: #{tpu_custom_call.1} parent=11 // pred_check_branch
          %567 = sbr.rel (%p565) target = $region80
        $region79: #{tpu_custom_call.1} parent=11 // pred_region
          _
        $region80: #{tpu_custom_call.1} parent=11 // pred_fallthru
          _
        // Predicated region
        $region81: #{tpu_custom_call.1} parent=11 // pred_check
          %p568 = pneg %p434
        $region82: #{tpu_custom_call.1} parent=11 // pred_check_branch
          %570 = sbr.rel (%p568) target = $region84
        $region83: #{tpu_custom_call.1} parent=11 // pred_region
          _
        $region84: #{tpu_custom_call.1} parent=11 // pred_fallthru
          _
        // Predicated region
        $region85: #{tpu_custom_call.1} parent=11 // pred_check
          %p571 = pneg %p455
        $region86: #{tpu_custom_call.1} parent=11 // pred_check_branch
          %573 = sbr.rel (%p571) target = $region88
        $region87: #{tpu_custom_call.1} parent=11 // pred_region
          _
        $region88: #{tpu_custom_call.1} parent=11 // pred_fallthru
          _
        // Predicated region
        $region89: #{tpu_custom_call.1} parent=11 // pred_check
          %p574 = pneg %p476
        $region90: #{tpu_custom_call.1} parent=11 // pred_check_branch
          %576 = sbr.rel (%p574) target = $region92
        $region91: #{tpu_custom_call.1} parent=11 // pred_region
          _
        $region92: #{tpu_custom_call.1} parent=11 // pred_fallthru
          _
      $region12: #{tpu_custom_call.1} parent=5 // pred_fallthru
        _
      %p577 = scmp.lt.s32.totalorder %s30, 2
      // Predicated region
      $region93: #{tpu_custom_call.1} parent=5 // pred_check
        %p578 = pneg %p577
      $region94: #{tpu_custom_call.1} parent=5 // pred_check_branch
        %580 = sbr.rel (%p578) target = $region96
      $region95: #{tpu_custom_call.1} parent=5 // pred_region
        // Predicated region
        $region97: #{tpu_custom_call.1} parent=95 // pred_check
          %p581 = pneg %p50
        $region98: #{tpu_custom_call.1} parent=95 // pred_check_branch
          %583 = sbr.rel (%p581) target = $region100
        $region99: #{tpu_custom_call.1} parent=95 // pred_region
          %p584 = scmp.lt.s32.totalorder %s30, 1
          %s585 = scalar_select %p584, %s30, 1
          %s586 = smul.addr %s585, 32
          %s587 = smul.addr %s586, 8
          %s588 = scalar_lea.vmem %s0, %s587
        $region100: #{tpu_custom_call.1} parent=95 // pred_fallthru
          _
      $region96: #{tpu_custom_call.1} parent=5 // pred_fallthru
        _
      %p589 = scmp.le.s32.totalorder 1, %s30
      %p590 = scmp.lt.s32.totalorder %s30, 3
      %p591 = pnand %p589, %p590
      %p592 = pneg %p591
      // Predicated region
      $region101: #{tpu_custom_call.1} parent=5 // pred_check
        _
      $region102: #{tpu_custom_call.1} parent=5 // pred_check_branch
        %594 = sbr.rel (%p591) target = $region104
      $region103: #{tpu_custom_call.1} parent=5 // pred_region
        %s595 = ssub.s32 %s30, 1
        %p596 = scmp.lt.s32.totalorder %s35, 1
        %s597 = scalar_select %p596, %s35, 1
        %s598 = smul.addr %s597, 32
        %s599 = smul.addr %s598, 8
        %s600 = scalar_lea.vmem %s0, %s599
        %p601 = pneg %p56
        %p602 = pneg %p53
        %p603 = pneg %p77
        %p604 = pneg %p74
        %p605 = pneg %p98
        %p606 = pneg %p95
        %p607 = pneg %p119
        %p608 = pneg %p116
        %p609 = pneg %p140
        %p610 = pneg %p137
        %p611 = pneg %p161
        %p612 = pneg %p158
        %p613 = pneg %p182
        %p614 = pneg %p179
        %p615 = pneg %p203
        %p616 = pneg %p200
        %p617 = pneg %p224
        %p618 = pneg %p221
        %p619 = pneg %p245
        %p620 = pneg %p242
        %p621 = pneg %p266
        %p622 = pneg %p263
        %p623 = pneg %p287
        %p624 = pneg %p284
        %p625 = pneg %p308
        %p626 = pneg %p305
        %p627 = pneg %p329
        %p628 = pneg %p326
        %p629 = pneg %p350
        %p630 = pneg %p347
        %p631 = pneg %p371
        %p632 = pneg %p368
        %p633 = pneg %p392
        %p634 = pneg %p389
        %p635 = pneg %p413
        %p636 = pneg %p410
        %p637 = pneg %p434
        %p638 = pneg %p431
        %p639 = pneg %p455
        %p640 = pneg %p452
        %p641 = pneg %p476
        %p642 = pneg %p473
        %p643 = pneg %p502
        %p644 = pneg %p499
        %s645 = sand.u32 %s489, 1
        %s646 = scalar_lea.sflag [#allocation4], %s645
        %s647 = sand.u32 %s489, 1
        %s648 = smul.addr %s647, 256
        %s649 = scalar_lea.vmem [#allocation3], %s648
        %p650 = scmp.lt.s32.totalorder %s35, 1
        %s651 = scalar_select %p650, %s35, 1
        %s652 = smul.addr %s651, 32
        %s653 = smul.addr %s652, 8
        %s654 = scalar_lea.vmem %s0, %s653
        %v655 = vlaneseq
        %v656 = vshrl.u32 %v655, 7
        %v657 = vadd.s32 %v656, 8
        %v658 = vadd.s32 %v656, 16
        %vm659 = vcmp.ge.s32.totalorder %v656, 1
        %vm660 = vcmp.ge.s32.totalorder %v657, 1
        %vm661 = vcmp.ge.s32.totalorder %v658, 1
        %vm662 = vmand 0, %vm659
        %vm663 = vmand 0, %vm660
        %vm664 = vmand 0, %vm661
        %vm665 = vmand 1, %vm659
        %vm666 = vmand 1, %vm660
        %vm667 = vmand 1, %vm661
        %vm668 = vcmp.le.s32.totalorder %v656, 16
        %vm669 = vcmp.le.s32.totalorder %v657, 16
        %vm670 = vcmp.le.s32.totalorder %v658, 16
        %vm671 = vmand %vm662, %vm668
        %vm672 = vmand %vm663, %vm669
        %vm673 = vmand %vm664, %vm670
        %vm674 = vmand %vm665, %vm668
        %vm675 = vmand %vm666, %vm669
        %vm676 = vmand %vm667, %vm670
        %vm677 = vcmask 392192
        %678 = vst.msk [vmem:[#allocation2] sm:$0xff] %vm677, 0.0
        %679 = vst.msk [vmem:[#allocation2 + $0x8] sm:$0xff] %vm677, 0.0
        %vm680 = vcmask 386048
        %681 = vst.msk [vmem:[#allocation2 + $0x10] sm:$0x3] %vm680, 0.0
        %682 = vst.msk [vmem:[#allocation2 + $0x18] sm:$0xff] %vm677, 0.0
        %683 = vst.msk [vmem:[#allocation2 + $0x20] sm:$0xff] %vm677, 0.0
        %684 = vst.msk [vmem:[#allocation2 + $0x28] sm:$0x3] %vm680, 0.0
        %685 = vst.msk [vmem:[#allocation2 + $0x30] sm:$0xff] %vm677, 0.0
        %686 = vst.msk [vmem:[#allocation2 + $0x38] sm:$0xff] %vm677, 0.0
        %687 = vst.msk [vmem:[#allocation2 + $0x40] sm:$0x3] %vm680, 0.0
        %688 = vst.msk [vmem:[#allocation2 + $0x48] sm:$0xff] %vm677, 0.0
        %689 = vst.msk [vmem:[#allocation2 + $0x50] sm:$0xff] %vm677, 0.0
        %690 = vst.msk [vmem:[#allocation2 + $0x58] sm:$0x3] %vm680, 0.0
        %691 = vst.msk [vmem:[#allocation2 + $0x60] sm:$0xff] %vm677, 0.0
        %692 = vst.msk [vmem:[#allocation2 + $0x68] sm:$0xff] %vm677, 0.0
        %693 = vst.msk [vmem:[#allocation2 + $0x70] sm:$0x3] %vm680, 0.0
        %694 = vst.msk [vmem:[#allocation2 + $0x78] sm:$0xff] %vm677, 0.0
        %695 = vst.msk [vmem:[#allocation2 + $0x80] sm:$0xff] %vm677, 0.0
        %696 = vst.msk [vmem:[#allocation2 + $0x88] sm:$0x3] %vm680, 0.0
        %697 = vst.msk [vmem:[#allocation2 + $0x90] sm:$0xff] %vm677, 0.0
        %698 = vst.msk [vmem:[#allocation2 + $0x98] sm:$0xff] %vm677, 0.0
        %699 = vst.msk [vmem:[#allocation2 + $0xa0] sm:$0x3] %vm680, 0.0
        %700 = vst.msk [vmem:[#allocation2 + $0xa8] sm:$0xff] %vm677, 0.0
        %701 = vst.msk [vmem:[#allocation2 + $0xb0] sm:$0xff] %vm677, 0.0
        %702 = vst.msk [vmem:[#allocation2 + $0xb8] sm:$0x3] %vm680, 0.0
        %703 = vst.msk [vmem:[#allocation2 + $0xc0] sm:$0xff] %vm677, 0.0
        %704 = vst.msk [vmem:[#allocation2 + $0xc8] sm:$0xff] %vm677, 0.0
        %705 = vst.msk [vmem:[#allocation2 + $0xd0] sm:$0x3] %vm680, 0.0
        %706 = vst.msk [vmem:[#allocation2 + $0xd8] sm:$0xff] %vm677, 0.0
        %707 = vst.msk [vmem:[#allocation2 + $0xe0] sm:$0xff] %vm677, 0.0
        %708 = vst.msk [vmem:[#allocation2 + $0xe8] sm:$0x3] %vm680, 0.0
        %709 = vst.msk [vmem:[#allocation2 + $0xf0] sm:$0xff] %vm677, 0.0
        %710 = vst.msk [vmem:[#allocation2 + $0xf8] sm:$0xff] %vm677, 0.0
        %711 = vst.msk [vmem:[#allocation2 + $0x100] sm:$0x3] %vm680, 0.0
        %712 = vst.msk [vmem:[#allocation2 + $0x108] sm:$0xff] %vm677, 0.0
        %713 = vst.msk [vmem:[#allocation2 + $0x110] sm:$0xff] %vm677, 0.0
        %714 = vst.msk [vmem:[#allocation2 + $0x118] sm:$0x3] %vm680, 0.0
        %715 = vst.msk [vmem:[#allocation2 + $0x120] sm:$0xff] %vm677, 0.0
        %716 = vst.msk [vmem:[#allocation2 + $0x128] sm:$0xff] %vm677, 0.0
        %717 = vst.msk [vmem:[#allocation2 + $0x130] sm:$0x3] %vm680, 0.0
        %718 = vst.msk [vmem:[#allocation2 + $0x138] sm:$0xff] %vm677, 0.0
        %719 = vst.msk [vmem:[#allocation2 + $0x140] sm:$0xff] %vm677, 0.0
        %720 = vst.msk [vmem:[#allocation2 + $0x148] sm:$0x3] %vm680, 0.0
        %721 = vst.msk [vmem:[#allocation2 + $0x150] sm:$0xff] %vm677, 0.0
        %722 = vst.msk [vmem:[#allocation2 + $0x158] sm:$0xff] %vm677, 0.0
        %723 = vst.msk [vmem:[#allocation2 + $0x160] sm:$0x3] %vm680, 0.0
        %724 = vst.msk [vmem:[#allocation2 + $0x168] sm:$0xff] %vm677, 0.0
        %725 = vst.msk [vmem:[#allocation2 + $0x170] sm:$0xff] %vm677, 0.0
        %726 = vst.msk [vmem:[#allocation2 + $0x178] sm:$0x3] %vm680, 0.0
        %727 = vst.msk [vmem:[#allocation2 + $0x180] sm:$0xff] %vm677, 0.0
        %728 = vst.msk [vmem:[#allocation2 + $0x188] sm:$0xff] %vm677, 0.0
        %729 = vst.msk [vmem:[#allocation2 + $0x190] sm:$0x3] %vm680, 0.0
        %730 = vst.msk [vmem:[#allocation2 + $0x198] sm:$0xff] %vm677, 0.0
        %731 = vst.msk [vmem:[#allocation2 + $0x1a0] sm:$0xff] %vm677, 0.0
        %732 = vst.msk [vmem:[#allocation2 + $0x1a8] sm:$0x3] %vm680, 0.0
        %v733 = vld [vmem:[%s654] sm:$0xff]
        %v734 = vld [vmem:[%s654 + $0x8] sm:$0xff]
        %v735 = vld [vmem:[%s654 + $0x10] sm:$0xff]
        %v736 = vld [vmem:[%s654 + $0x18] sm:$0xff]
        %v737 = vld [vmem:[%s654 + $0x20] sm:$0xff]
        %v738 = vld [vmem:[%s654 + $0x28] sm:$0xff]
        %v739 = vld [vmem:[%s654 + $0x30] sm:$0xff]
        %v740 = vld [vmem:[%s654 + $0x38] sm:$0xff]
        %v741 = vld [vmem:[%s654 + $0x40] sm:$0xff]
        %v742 = vld [vmem:[%s654 + $0x48] sm:$0xff]
        %v743 = vld [vmem:[%s654 + $0x50] sm:$0xff]
        %v744 = vld [vmem:[%s654 + $0x58] sm:$0xff]
        %v745 = vld [vmem:[%s654 + $0x60] sm:$0xff]
        %v746 = vld [vmem:[%s654 + $0x68] sm:$0xff]
        %v747 = vld [vmem:[%s654 + $0x70] sm:$0xff]
        %v748 = vld [vmem:[%s654 + $0x78] sm:$0xff]
        %v749 = vld [vmem:[%s654 + $0x80] sm:$0xff]
        %v750 = vld [vmem:[%s654 + $0x88] sm:$0xff]
        %v751 = vld [vmem:[%s654 + $0x90] sm:$0xff]
        %v752 = vld [vmem:[%s654 + $0x98] sm:$0xff]
        %v753 = vld [vmem:[%s654 + $0xa0] sm:$0xff]
        %v754 = vld [vmem:[%s654 + $0xa8] sm:$0xff]
        %v755 = vld [vmem:[%s654 + $0xb0] sm:$0xff]
        %v756 = vld [vmem:[%s654 + $0xb8] sm:$0xff]
        %v757 = vld [vmem:[%s654 + $0xc0] sm:$0xff]
        %v758 = vld [vmem:[%s654 + $0xc8] sm:$0xff]
        %v759 = vld [vmem:[%s654 + $0xd0] sm:$0xff]
        %v760 = vld [vmem:[%s654 + $0xd8] sm:$0xff]
        %v761 = vld [vmem:[%s654 + $0xe0] sm:$0xff]
        %v762 = vld [vmem:[%s654 + $0xe8] sm:$0xff]
        %v763 = vld [vmem:[%s654 + $0xf0] sm:$0xff]
        %v764 = vld [vmem:[%s654 + $0xf8] sm:$0xff]
        %s765 = scalar_lea.vmem [#allocation2], 24
        %vm766 = vcmask 130048
        %767 = vst.msk [vmem:[%s765 + $0x1] sm:$0xff] %vm766, %v733
        %768 = vst.msk [vmem:[%s765 + $0x9] sm:$0xff] %vm766, %v734
        %769 = vst.msk [vmem:[%s765 + $0x19] sm:$0xff] %vm766, %v735
        %770 = vst.msk [vmem:[%s765 + $0x21] sm:$0xff] %vm766, %v736
        %771 = vst.msk [vmem:[%s765 + $0x31] sm:$0xff] %vm766, %v737
        %772 = vst.msk [vmem:[%s765 + $0x39] sm:$0xff] %vm766, %v738
        %773 = vst.msk [vmem:[%s765 + $0x49] sm:$0xff] %vm766, %v739
        %774 = vst.msk [vmem:[%s765 + $0x51] sm:$0xff] %vm766, %v740
        %775 = vst.msk [vmem:[%s765 + $0x61] sm:$0xff] %vm766, %v741
        %776 = vst.msk [vmem:[%s765 + $0x69] sm:$0xff] %vm766, %v742
        %777 = vst.msk [vmem:[%s765 + $0x79] sm:$0xff] %vm766, %v743
        %778 = vst.msk [vmem:[%s765 + $0x81] sm:$0xff] %vm766, %v744
        %779 = vst.msk [vmem:[%s765 + $0x91] sm:$0xff] %vm766, %v745
        %780 = vst.msk [vmem:[%s765 + $0x99] sm:$0xff] %vm766, %v746
        %781 = vst.msk [vmem:[%s765 + $0xa9] sm:$0xff] %vm766, %v747
        %782 = vst.msk [vmem:[%s765 + $0xb1] sm:$0xff] %vm766, %v748
        %783 = vst.msk [vmem:[%s765 + $0xc1] sm:$0xff] %vm766, %v749
        %784 = vst.msk [vmem:[%s765 + $0xc9] sm:$0xff] %vm766, %v750
        %785 = vst.msk [vmem:[%s765 + $0xd9] sm:$0xff] %vm766, %v751
        %786 = vst.msk [vmem:[%s765 + $0xe1] sm:$0xff] %vm766, %v752
        %787 = vst.msk [vmem:[%s765 + $0xf1] sm:$0xff] %vm766, %v753
        %788 = vst.msk [vmem:[%s765 + $0xf9] sm:$0xff] %vm766, %v754
        %789 = vst.msk [vmem:[%s765 + $0x109] sm:$0xff] %vm766, %v755
        %790 = vst.msk [vmem:[%s765 + $0x111] sm:$0xff] %vm766, %v756
        %791 = vst.msk [vmem:[%s765 + $0x121] sm:$0xff] %vm766, %v757
        %792 = vst.msk [vmem:[%s765 + $0x129] sm:$0xff] %vm766, %v758
        %793 = vst.msk [vmem:[%s765 + $0x139] sm:$0xff] %vm766, %v759
        %794 = vst.msk [vmem:[%s765 + $0x141] sm:$0xff] %vm766, %v760
        %795 = vst.msk [vmem:[%s765 + $0x151] sm:$0xff] %vm766, %v761
        %796 = vst.msk [vmem:[%s765 + $0x159] sm:$0xff] %vm766, %v762
        %797 = vst.msk [vmem:[%s765 + $0x169] sm:$0xff] %vm766, %v763
        %798 = vst.msk [vmem:[%s765 + $0x171] sm:$0xff] %vm766, %v764
        %v799 = vld [vmem:[#allocation2] sm:$0xff]
        %v800 = vld [vmem:[#allocation2 + $0x8] sm:$0xff]
        %v801 = vld [vmem:[#allocation2 + $0x10] sm:$0x3]
        %v802 = vld [vmem:[#allocation2 + $0x18] sm:$0xff]
        %v803 = vld [vmem:[#allocation2 + $0x20] sm:$0xff]
        %v804 = vld [vmem:[#allocation2 + $0x28] sm:$0x3]
        %v805 = vld [vmem:[#allocation2 + $0x30] sm:$0xff]
        %v806 = vld [vmem:[#allocation2 + $0x38] sm:$0xff]
        %v807 = vld [vmem:[#allocation2 + $0x40] sm:$0x3]
        %v808 = vld [vmem:[#allocation2 + $0x48] sm:$0xff]
        %v809 = vld [vmem:[#allocation2 + $0x50] sm:$0xff]
        %v810 = vld [vmem:[#allocation2 + $0x58] sm:$0x3]
        %v811 = vld [vmem:[#allocation2 + $0x60] sm:$0xff]
        %v812 = vld [vmem:[#allocation2 + $0x68] sm:$0xff]
        %v813 = vld [vmem:[#allocation2 + $0x70] sm:$0x3]
        %v814 = vld [vmem:[#allocation2 + $0x78] sm:$0xff]
        %v815 = vld [vmem:[#allocation2 + $0x80] sm:$0xff]
        %v816 = vld [vmem:[#allocation2 + $0x88] sm:$0x3]
        %v817 = vld [vmem:[#allocation2 + $0x90] sm:$0xff]
        %v818 = vld [vmem:[#allocation2 + $0x98] sm:$0xff]
        %v819 = vld [vmem:[#allocation2 + $0xa0] sm:$0x3]
        %v820 = vld [vmem:[#allocation2 + $0xa8] sm:$0xff]
        %v821 = vld [vmem:[#allocation2 + $0xb0] sm:$0xff]
        %v822 = vld [vmem:[#allocation2 + $0xb8] sm:$0x3]
        %v823 = vld [vmem:[#allocation2 + $0xc0] sm:$0xff]
        %v824 = vld [vmem:[#allocation2 + $0xc8] sm:$0xff]
        %v825 = vld [vmem:[#allocation2 + $0xd0] sm:$0x3]
        %v826 = vld [vmem:[#allocation2 + $0xd8] sm:$0xff]
        %v827 = vld [vmem:[#allocation2 + $0xe0] sm:$0xff]
        %v828 = vld [vmem:[#allocation2 + $0xe8] sm:$0x3]
        %v829 = vld [vmem:[#allocation2 + $0xf0] sm:$0xff]
        %v830 = vld [vmem:[#allocation2 + $0xf8] sm:$0xff]
        %v831 = vld [vmem:[#allocation2 + $0x100] sm:$0x3]
        %v832 = vld [vmem:[#allocation2 + $0x108] sm:$0xff]
        %v833 = vld [vmem:[#allocation2 + $0x110] sm:$0xff]
        %v834 = vld [vmem:[#allocation2 + $0x118] sm:$0x3]
        %v835 = vld [vmem:[#allocation2 + $0x120] sm:$0xff]
        %v836 = vld [vmem:[#allocation2 + $0x128] sm:$0xff]
        %v837 = vld [vmem:[#allocation2 + $0x130] sm:$0x3]
        %v838 = vld [vmem:[#allocation2 + $0x138] sm:$0xff]
        %v839 = vld [vmem:[#allocation2 + $0x140] sm:$0xff]
        %v840 = vld [vmem:[#allocation2 + $0x148] sm:$0x3]
        %v841 = vld [vmem:[#allocation2 + $0x150] sm:$0xff]
        %v842 = vld [vmem:[#allocation2 + $0x158] sm:$0xff]
        %v843 = vld [vmem:[#allocation2 + $0x160] sm:$0x3]
        %v844 = vld [vmem:[#allocation2 + $0x168] sm:$0xff]
        %v845 = vld [vmem:[#allocation2 + $0x170] sm:$0xff]
        %v846 = vld [vmem:[#allocation2 + $0x178] sm:$0x3]
        %v847 = vld [vmem:[#allocation2 + $0x180] sm:$0xff]
        %v848 = vld [vmem:[#allocation2 + $0x188] sm:$0xff]
        %v849 = vld [vmem:[#allocation2 + $0x190] sm:$0x3]
        %v850 = vld [vmem:[#allocation2 + $0x198] sm:$0xff]
        %v851 = vld [vmem:[#allocation2 + $0x1a0] sm:$0xff]
        %v852 = vld [vmem:[#allocation2 + $0x1a8] sm:$0x3]
        %v853 = vld [vmem:[%s1] sm:$0x1]
        %v855 = vlaneseq
        %v856 = vshrl.u32 %v855, 7
        %v857 = vsub.s32 0, %v856
        %v858 = vrot.slane %v853, %v857
        %v860 = vmul.f32 %v799, %v858
        %v861 = vmul.f32 %v800, %v858
        %v862 = vmul.f32 %v801, %v858
        %v863 = vmul.f32 %v802, %v858
        %v864 = vmul.f32 %v803, %v858
        %v865 = vmul.f32 %v804, %v858
        %v866 = vmul.f32 %v805, %v858
        %v867 = vmul.f32 %v806, %v858
        %v868 = vmul.f32 %v807, %v858
        %v869 = vmul.f32 %v808, %v858
        %v870 = vmul.f32 %v809, %v858
        %v871 = vmul.f32 %v810, %v858
        %v872 = vmul.f32 %v811, %v858
        %v873 = vmul.f32 %v812, %v858
        %v874 = vmul.f32 %v813, %v858
        %v875 = vmul.f32 %v814, %v858
        %v876 = vmul.f32 %v815, %v858
        %v877 = vmul.f32 %v816, %v858
        %v878 = vmul.f32 %v817, %v858
        %v879 = vmul.f32 %v818, %v858
        %v880 = vmul.f32 %v819, %v858
        %v881 = vmul.f32 %v820, %v858
        %v882 = vmul.f32 %v821, %v858
        %v883 = vmul.f32 %v822, %v858
        %v884 = vmul.f32 %v823, %v858
        %v885 = vmul.f32 %v824, %v858
        %v886 = vmul.f32 %v825, %v858
        %v887 = vmul.f32 %v826, %v858
        %v888 = vmul.f32 %v827, %v858
        %v889 = vmul.f32 %v828, %v858
        %v890 = vmul.f32 %v829, %v858
        %v891 = vmul.f32 %v830, %v858
        %v892 = vmul.f32 %v831, %v858
        %v893 = vmul.f32 %v832, %v858
        %v894 = vmul.f32 %v833, %v858
        %v895 = vmul.f32 %v834, %v858
        %v896 = vmul.f32 %v835, %v858
        %v897 = vmul.f32 %v836, %v858
        %v898 = vmul.f32 %v837, %v858
        %v899 = vmul.f32 %v838, %v858
        %v900 = vmul.f32 %v839, %v858
        %v901 = vmul.f32 %v840, %v858
        %v902 = vmul.f32 %v841, %v858
        %v903 = vmul.f32 %v842, %v858
        %v904 = vmul.f32 %v843, %v858
        %v905 = vmul.f32 %v844, %v858
        %v906 = vmul.f32 %v845, %v858
        %v907 = vmul.f32 %v846, %v858
        %v908 = vmul.f32 %v847, %v858
        %v909 = vmul.f32 %v848, %v858
        %v910 = vmul.f32 %v849, %v858
        %v911 = vmul.f32 %v850, %v858
        %v912 = vmul.f32 %v851, %v858
        %v913 = vmul.f32 %v852, %v858
        %v914 = vld [vmem:[%s2] sm:$0x1]
        %v916 = vlaneseq
        %v917 = vshrl.u32 %v916, 7
        %v918 = vsub.s32 0, %v917
        %v919 = vrot.slane %v914, %v918
        %v921 = vadd.f32 %v860, %v919
        %v922 = vadd.f32 %v861, %v919
        %v923 = vadd.f32 %v862, %v919
        %v924 = vadd.f32 %v863, %v919
        %v925 = vadd.f32 %v864, %v919
        %v926 = vadd.f32 %v865, %v919
        %v927 = vadd.f32 %v866, %v919
        %v928 = vadd.f32 %v867, %v919
        %v929 = vadd.f32 %v868, %v919
        %v930 = vadd.f32 %v869, %v919
        %v931 = vadd.f32 %v870, %v919
        %v932 = vadd.f32 %v871, %v919
        %v933 = vadd.f32 %v872, %v919
        %v934 = vadd.f32 %v873, %v919
        %v935 = vadd.f32 %v874, %v919
        %v936 = vadd.f32 %v875, %v919
        %v937 = vadd.f32 %v876, %v919
        %v938 = vadd.f32 %v877, %v919
        %v939 = vadd.f32 %v878, %v919
        %v940 = vadd.f32 %v879, %v919
        %v941 = vadd.f32 %v880, %v919
        %v942 = vadd.f32 %v881, %v919
        %v943 = vadd.f32 %v882, %v919
        %v944 = vadd.f32 %v883, %v919
        %v945 = vadd.f32 %v884, %v919
        %v946 = vadd.f32 %v885, %v919
        %v947 = vadd.f32 %v886, %v919
        %v948 = vadd.f32 %v887, %v919
        %v949 = vadd.f32 %v888, %v919
        %v950 = vadd.f32 %v889, %v919
        %v951 = vadd.f32 %v890, %v919
        %v952 = vadd.f32 %v891, %v919
        %v953 = vadd.f32 %v892, %v919
        %v954 = vadd.f32 %v893, %v919
        %v955 = vadd.f32 %v894, %v919
        %v956 = vadd.f32 %v895, %v919
        %v957 = vadd.f32 %v896, %v919
        %v958 = vadd.f32 %v897, %v919
        %v959 = vadd.f32 %v898, %v919
        %v960 = vadd.f32 %v899, %v919
        %v961 = vadd.f32 %v900, %v919
        %v962 = vadd.f32 %v901, %v919
        %v963 = vadd.f32 %v902, %v919
        %v964 = vadd.f32 %v903, %v919
        %v965 = vadd.f32 %v904, %v919
        %v966 = vadd.f32 %v905, %v919
        %v967 = vadd.f32 %v906, %v919
        %v968 = vadd.f32 %v907, %v919
        %v969 = vadd.f32 %v908, %v919
        %v970 = vadd.f32 %v909, %v919
        %v971 = vadd.f32 %v910, %v919
        %v972 = vadd.f32 %v911, %v919
        %v973 = vadd.f32 %v912, %v919
        %v974 = vadd.f32 %v913, %v919
        %v975 = vmax.f32 %v921, 0.0
        %v976 = vmax.f32 %v922, 0.0
        %v977 = vmax.f32 %v923, 0.0
        %v978 = vmax.f32 %v924, 0.0
        %v979 = vmax.f32 %v925, 0.0
        %v980 = vmax.f32 %v926, 0.0
        %v981 = vmax.f32 %v927, 0.0
        %v982 = vmax.f32 %v928, 0.0
        %v983 = vmax.f32 %v929, 0.0
        %v984 = vmax.f32 %v930, 0.0
        %v985 = vmax.f32 %v931, 0.0
        %v986 = vmax.f32 %v932, 0.0
        %v987 = vmax.f32 %v933, 0.0
        %v988 = vmax.f32 %v934, 0.0
        %v989 = vmax.f32 %v935, 0.0
        %v990 = vmax.f32 %v936, 0.0
        %v991 = vmax.f32 %v937, 0.0
        %v992 = vmax.f32 %v938, 0.0
        %v993 = vmax.f32 %v939, 0.0
        %v994 = vmax.f32 %v940, 0.0
        %v995 = vmax.f32 %v941, 0.0
        %v996 = vmax.f32 %v942, 0.0
        %v997 = vmax.f32 %v943, 0.0
        %v998 = vmax.f32 %v944, 0.0
        %v999 = vmax.f32 %v945, 0.0
        %v1000 = vmax.f32 %v946, 0.0
        %v1001 = vmax.f32 %v947, 0.0
        %v1002 = vmax.f32 %v948, 0.0
        %v1003 = vmax.f32 %v949, 0.0
        %v1004 = vmax.f32 %v950, 0.0
        %v1005 = vmax.f32 %v951, 0.0
        %v1006 = vmax.f32 %v952, 0.0
        %v1007 = vmax.f32 %v953, 0.0
        %v1008 = vmax.f32 %v954, 0.0
        %v1009 = vmax.f32 %v955, 0.0
        %v1010 = vmax.f32 %v956, 0.0
        %v1011 = vmax.f32 %v957, 0.0
        %v1012 = vmax.f32 %v958, 0.0
        %v1013 = vmax.f32 %v959, 0.0
        %v1014 = vmax.f32 %v960, 0.0
        %v1015 = vmax.f32 %v961, 0.0
        %v1016 = vmax.f32 %v962, 0.0
        %v1017 = vmax.f32 %v963, 0.0
        %v1018 = vmax.f32 %v964, 0.0
        %v1019 = vmax.f32 %v965, 0.0
        %v1020 = vmax.f32 %v966, 0.0
        %v1021 = vmax.f32 %v967, 0.0
        %v1022 = vmax.f32 %v968, 0.0
        %v1023 = vmax.f32 %v969, 0.0
        %v1024 = vmax.f32 %v970, 0.0
        %v1025 = vmax.f32 %v971, 0.0
        %v1026 = vmax.f32 %v972, 0.0
        %v1027 = vmax.f32 %v973, 0.0
        %v1028 = vmax.f32 %v974, 0.0
        %v1029 = vsel %vm671, 1, 0
        %v1030 = vsel %vm672, 1, 0
        %v1031 = vsel %vm673, 1, 0
        %v1032 = vsel %vm674, 1, 0
        %v1033 = vsel %vm675, 1, 0
        %v1034 = vsel %vm676, 1, 0
        %vm1035 = vcmp.eq.s32.totalorder %v1029, 1
        %vm1036 = vcmp.eq.s32.totalorder %v1030, 1
        %vm1037 = vcmp.eq.s32.totalorder %v1031, 1
        %vm1038 = vcmp.eq.s32.totalorder %v1032, 1
        %vm1039 = vcmp.eq.s32.totalorder %v1033, 1
        %vm1040 = vcmp.eq.s32.totalorder %v1034, 1
        %v1041 = vsel %vm1035, %v975, 0.0
        %v1042 = vsel %vm1036, %v976, 0.0
        %v1043 = vsel %vm1037, %v977, 0.0
        %v1044 = vsel %vm1038, %v978, 0.0
        %v1045 = vsel %vm1039, %v979, 0.0
        %v1046 = vsel %vm1040, %v980, 0.0
        %v1047 = vsel %vm1038, %v981, 0.0
        %v1048 = vsel %vm1039, %v982, 0.0
        %v1049 = vsel %vm1040, %v983, 0.0
        %v1050 = vsel %vm1038, %v984, 0.0
        %v1051 = vsel %vm1039, %v985, 0.0
        %v1052 = vsel %vm1040, %v986, 0.0
        %v1053 = vsel %vm1038, %v987, 0.0
        %v1054 = vsel %vm1039, %v988, 0.0
        %v1055 = vsel %vm1040, %v989, 0.0
        %v1056 = vsel %vm1038, %v990, 0.0
        %v1057 = vsel %vm1039, %v991, 0.0
        %v1058 = vsel %vm1040, %v992, 0.0
        %v1059 = vsel %vm1038, %v993, 0.0
        %v1060 = vsel %vm1039, %v994, 0.0
        %v1061 = vsel %vm1040, %v995, 0.0
        %v1062 = vsel %vm1038, %v996, 0.0
        %v1063 = vsel %vm1039, %v997, 0.0
        %v1064 = vsel %vm1040, %v998, 0.0
        %v1065 = vsel %vm1038, %v999, 0.0
        %v1066 = vsel %vm1039, %v1000, 0.0
        %v1067 = vsel %vm1040, %v1001, 0.0
        %v1068 = vsel %vm1038, %v1002, 0.0
        %v1069 = vsel %vm1039, %v1003, 0.0
        %v1070 = vsel %vm1040, %v1004, 0.0
        %v1071 = vsel %vm1038, %v1005, 0.0
        %v1072 = vsel %vm1039, %v1006, 0.0
        %v1073 = vsel %vm1040, %v1007, 0.0
        %v1074 = vsel %vm1038, %v1008, 0.0
        %v1075 = vsel %vm1039, %v1009, 0.0
        %v1076 = vsel %vm1040, %v1010, 0.0
        %v1077 = vsel %vm1038, %v1011, 0.0
        %v1078 = vsel %vm1039, %v1012, 0.0
        %v1079 = vsel %vm1040, %v1013, 0.0
        %v1080 = vsel %vm1038, %v1014, 0.0
        %v1081 = vsel %vm1039, %v1015, 0.0
        %v1082 = vsel %vm1040, %v1016, 0.0
        %v1083 = vsel %vm1038, %v1017, 0.0
        %v1084 = vsel %vm1039, %v1018, 0.0
        %v1085 = vsel %vm1040, %v1019, 0.0
        %v1086 = vsel %vm1038, %v1020, 0.0
        %v1087 = vsel %vm1039, %v1021, 0.0
        %v1088 = vsel %vm1040, %v1022, 0.0
        %v1089 = vsel %vm1038, %v1023, 0.0
        %v1090 = vsel %vm1039, %v1024, 0.0
        %v1091 = vsel %vm1040, %v1025, 0.0
        %v1092 = vsel %vm1035, %v1026, 0.0
        %v1093 = vsel %vm1036, %v1027, 0.0
        %v1094 = vsel %vm1037, %v1028, 0.0
        %vm1143 = vcmask 1046528
        %v1144 = vrot.slane %v1041, 1
        %v1145 = vrot.slane %v1042, 1
        %v1146 = vsel %vm1143, %v1144, %v1145
        %v1147 = vrot.slane %v1043, 1
        %v1148 = vsel %vm1143, %v1145, %v1147
        %v1149 = vrot.slane %v1044, 1
        %v1150 = vrot.slane %v1045, 1
        %v1151 = vsel %vm1143, %v1149, %v1150
        %v1152 = vrot.slane %v1046, 1
        %v1153 = vsel %vm1143, %v1150, %v1152
        %v1154 = vrot.slane %v1047, 1
        %v1155 = vrot.slane %v1048, 1
        %v1156 = vsel %vm1143, %v1154, %v1155
        %v1157 = vrot.slane %v1049, 1
        %v1158 = vsel %vm1143, %v1155, %v1157
        %v1159 = vrot.slane %v1050, 1
        %v1160 = vrot.slane %v1051, 1
        %v1161 = vsel %vm1143, %v1159, %v1160
        %v1162 = vrot.slane %v1052, 1
        %v1163 = vsel %vm1143, %v1160, %v1162
        %v1164 = vrot.slane %v1053, 1
        %v1165 = vrot.slane %v1054, 1
        %v1166 = vsel %vm1143, %v1164, %v1165
        %v1167 = vrot.slane %v1055, 1
        %v1168 = vsel %vm1143, %v1165, %v1167
        %v1169 = vrot.slane %v1056, 1
        %v1170 = vrot.slane %v1057, 1
        %v1171 = vsel %vm1143, %v1169, %v1170
        %v1172 = vrot.slane %v1058, 1
        %v1173 = vsel %vm1143, %v1170, %v1172
        %v1174 = vrot.slane %v1059, 1
        %v1175 = vrot.slane %v1060, 1
        %v1176 = vsel %vm1143, %v1174, %v1175
        %v1177 = vrot.slane %v1061, 1
        %v1178 = vsel %vm1143, %v1175, %v1177
        %v1179 = vrot.slane %v1062, 1
        %v1180 = vrot.slane %v1063, 1
        %v1181 = vsel %vm1143, %v1179, %v1180
        %v1182 = vrot.slane %v1064, 1
        %v1183 = vsel %vm1143, %v1180, %v1182
        %v1184 = vrot.slane %v1065, 1
        %v1185 = vrot.slane %v1066, 1
        %v1186 = vsel %vm1143, %v1184, %v1185
        %v1187 = vrot.slane %v1067, 1
        %v1188 = vsel %vm1143, %v1185, %v1187
        %v1189 = vrot.slane %v1068, 1
        %v1190 = vrot.slane %v1069, 1
        %v1191 = vsel %vm1143, %v1189, %v1190
        %v1192 = vrot.slane %v1070, 1
        %v1193 = vsel %vm1143, %v1190, %v1192
        %v1194 = vrot.slane %v1071, 1
        %v1195 = vrot.slane %v1072, 1
        %v1196 = vsel %vm1143, %v1194, %v1195
        %v1197 = vrot.slane %v1073, 1
        %v1198 = vsel %vm1143, %v1195, %v1197
        %v1199 = vrot.slane %v1074, 1
        %v1200 = vrot.slane %v1075, 1
        %v1201 = vsel %vm1143, %v1199, %v1200
        %v1202 = vrot.slane %v1076, 1
        %v1203 = vsel %vm1143, %v1200, %v1202
        %v1204 = vrot.slane %v1077, 1
        %v1205 = vrot.slane %v1078, 1
        %v1206 = vsel %vm1143, %v1204, %v1205
        %v1207 = vrot.slane %v1079, 1
        %v1208 = vsel %vm1143, %v1205, %v1207
        %v1209 = vrot.slane %v1080, 1
        %v1210 = vrot.slane %v1081, 1
        %v1211 = vsel %vm1143, %v1209, %v1210
        %v1212 = vrot.slane %v1082, 1
        %v1213 = vsel %vm1143, %v1210, %v1212
        %v1214 = vrot.slane %v1083, 1
        %v1215 = vrot.slane %v1084, 1
        %v1216 = vsel %vm1143, %v1214, %v1215
        %v1217 = vrot.slane %v1085, 1
        %v1218 = vsel %vm1143, %v1215, %v1217
        %v1219 = vrot.slane %v1086, 1
        %v1220 = vrot.slane %v1087, 1
        %v1221 = vsel %vm1143, %v1219, %v1220
        %v1222 = vrot.slane %v1088, 1
        %v1223 = vsel %vm1143, %v1220, %v1222
        %1224 = vrot.lane.b32.xlu0 %v1146, 16
        %v1225 = vpop.permute.xlu0 %1224
        %1226 = vrot.lane.b32.xlu0 %v1148, 16
        %v1227 = vpop.permute.xlu0 %1226
        %1228 = vrot.lane.b32.xlu0 %v1151, 16
        %v1229 = vpop.permute.xlu0 %1228
        %1230 = vrot.lane.b32.xlu0 %v1153, 16
        %v1231 = vpop.permute.xlu0 %1230
        %1232 = vrot.lane.b32.xlu0 %v1156, 16
        %v1233 = vpop.permute.xlu0 %1232
        %1234 = vrot.lane.b32.xlu0 %v1158, 16
        %v1235 = vpop.permute.xlu0 %1234
        %1236 = vrot.lane.b32.xlu0 %v1161, 16
        %v1237 = vpop.permute.xlu0 %1236
        %1238 = vrot.lane.b32.xlu0 %v1163, 16
        %v1239 = vpop.permute.xlu0 %1238
        %1240 = vrot.lane.b32.xlu0 %v1166, 16
        %v1241 = vpop.permute.xlu0 %1240
        %1242 = vrot.lane.b32.xlu0 %v1168, 16
        %v1243 = vpop.permute.xlu0 %1242
        %1244 = vrot.lane.b32.xlu0 %v1171, 16
        %v1245 = vpop.permute.xlu0 %1244
        %1246 = vrot.lane.b32.xlu0 %v1173, 16
        %v1247 = vpop.permute.xlu0 %1246
        %1248 = vrot.lane.b32.xlu0 %v1176, 16
        %v1249 = vpop.permute.xlu0 %1248
        %1250 = vrot.lane.b32.xlu0 %v1178, 16
        %v1251 = vpop.permute.xlu0 %1250
        %1252 = vrot.lane.b32.xlu0 %v1181, 16
        %v1253 = vpop.permute.xlu0 %1252
        %1254 = vrot.lane.b32.xlu0 %v1183, 16
        %v1255 = vpop.permute.xlu0 %1254
        %1256 = vrot.lane.b32.xlu0 %v1186, 16
        %v1257 = vpop.permute.xlu0 %1256
        %1258 = vrot.lane.b32.xlu0 %v1188, 16
        %v1259 = vpop.permute.xlu0 %1258
        %1260 = vrot.lane.b32.xlu0 %v1191, 16
        %v1261 = vpop.permute.xlu0 %1260
        %1262 = vrot.lane.b32.xlu0 %v1193, 16
        %v1263 = vpop.permute.xlu0 %1262
        %1264 = vrot.lane.b32.xlu0 %v1196, 16
        %v1265 = vpop.permute.xlu0 %1264
        %1266 = vrot.lane.b32.xlu0 %v1198, 16
        %v1267 = vpop.permute.xlu0 %1266
        %1268 = vrot.lane.b32.xlu0 %v1201, 16
        %v1269 = vpop.permute.xlu0 %1268
        %1270 = vrot.lane.b32.xlu0 %v1203, 16
        %v1271 = vpop.permute.xlu0 %1270
        %1272 = vrot.lane.b32.xlu0 %v1206, 16
        %v1273 = vpop.permute.xlu0 %1272
        %1274 = vrot.lane.b32.xlu0 %v1208, 16
        %v1275 = vpop.permute.xlu0 %1274
        %1276 = vrot.lane.b32.xlu0 %v1211, 16
        %v1277 = vpop.permute.xlu0 %1276
        %1278 = vrot.lane.b32.xlu0 %v1213, 16
        %v1279 = vpop.permute.xlu0 %1278
        %1280 = vrot.lane.b32.xlu0 %v1216, 16
        %v1281 = vpop.permute.xlu0 %1280
        %1282 = vrot.lane.b32.xlu0 %v1218, 16
        %v1283 = vpop.permute.xlu0 %1282
        %1284 = vrot.lane.b32.xlu0 %v1221, 16
        %v1285 = vpop.permute.xlu0 %1284
        %1286 = vrot.lane.b32.xlu0 %v1223, 16
        %v1287 = vpop.permute.xlu0 %1286
        %vm1320 = vcmask 1045504
        %v1321 = vrot.slane %v1041, 2
        %v1322 = vrot.slane %v1042, 2
        %v1323 = vsel %vm1320, %v1321, %v1322
        %v1324 = vrot.slane %v1043, 2
        %v1325 = vsel %vm1320, %v1322, %v1324
        %v1326 = vrot.slane %v1044, 2
        %v1327 = vrot.slane %v1045, 2
        %v1328 = vsel %vm1320, %v1326, %v1327
        %v1329 = vrot.slane %v1046, 2
        %v1330 = vsel %vm1320, %v1327, %v1329
        %v1331 = vrot.slane %v1047, 2
        %v1332 = vrot.slane %v1048, 2
        %v1333 = vsel %vm1320, %v1331, %v1332
        %v1334 = vrot.slane %v1049, 2
        %v1335 = vsel %vm1320, %v1332, %v1334
        %v1336 = vrot.slane %v1050, 2
        %v1337 = vrot.slane %v1051, 2
        %v1338 = vsel %vm1320, %v1336, %v1337
        %v1339 = vrot.slane %v1052, 2
        %v1340 = vsel %vm1320, %v1337, %v1339
        %v1341 = vrot.slane %v1053, 2
        %v1342 = vrot.slane %v1054, 2
        %v1343 = vsel %vm1320, %v1341, %v1342
        %v1344 = vrot.slane %v1055, 2
        %v1345 = vsel %vm1320, %v1342, %v1344
        %v1346 = vrot.slane %v1056, 2
        %v1347 = vrot.slane %v1057, 2
        %v1348 = vsel %vm1320, %v1346, %v1347
        %v1349 = vrot.slane %v1058, 2
        %v1350 = vsel %vm1320, %v1347, %v1349
        %v1351 = vrot.slane %v1059, 2
        %v1352 = vrot.slane %v1060, 2
        %v1353 = vsel %vm1320, %v1351, %v1352
        %v1354 = vrot.slane %v1061, 2
        %v1355 = vsel %vm1320, %v1352, %v1354
        %v1356 = vrot.slane %v1062, 2
        %v1357 = vrot.slane %v1063, 2
        %v1358 = vsel %vm1320, %v1356, %v1357
        %v1359 = vrot.slane %v1064, 2
        %v1360 = vsel %vm1320, %v1357, %v1359
        %v1361 = vrot.slane %v1065, 2
        %v1362 = vrot.slane %v1066, 2
        %v1363 = vsel %vm1320, %v1361, %v1362
        %v1364 = vrot.slane %v1067, 2
        %v1365 = vsel %vm1320, %v1362, %v1364
        %v1366 = vrot.slane %v1068, 2
        %v1367 = vrot.slane %v1069, 2
        %v1368 = vsel %vm1320, %v1366, %v1367
        %v1369 = vrot.slane %v1070, 2
        %v1370 = vsel %vm1320, %v1367, %v1369
        %v1371 = vrot.slane %v1071, 2
        %v1372 = vrot.slane %v1072, 2
        %v1373 = vsel %vm1320, %v1371, %v1372
        %v1374 = vrot.slane %v1073, 2
        %v1375 = vsel %vm1320, %v1372, %v1374
        %v1376 = vrot.slane %v1074, 2
        %v1377 = vrot.slane %v1075, 2
        %v1378 = vsel %vm1320, %v1376, %v1377
        %v1379 = vrot.slane %v1076, 2
        %v1380 = vsel %vm1320, %v1377, %v1379
        %v1381 = vrot.slane %v1077, 2
        %v1382 = vrot.slane %v1078, 2
        %v1383 = vsel %vm1320, %v1381, %v1382
        %v1384 = vrot.slane %v1079, 2
        %v1385 = vsel %vm1320, %v1382, %v1384
        %v1386 = vrot.slane %v1080, 2
        %v1387 = vrot.slane %v1081, 2
        %v1388 = vsel %vm1320, %v1386, %v1387
        %v1389 = vrot.slane %v1082, 2
        %v1390 = vsel %vm1320, %v1387, %v1389
        %v1391 = vrot.slane %v1083, 2
        %v1392 = vrot.slane %v1084, 2
        %v1393 = vsel %vm1320, %v1391, %v1392
        %v1394 = vrot.slane %v1085, 2
        %v1395 = vsel %vm1320, %v1392, %v1394
        %v1396 = vrot.slane %v1086, 2
        %v1397 = vrot.slane %v1087, 2
        %v1398 = vsel %vm1320, %v1396, %v1397
        %v1399 = vrot.slane %v1088, 2
        %v1400 = vsel %vm1320, %v1397, %v1399
        %1401 = vrot.lane.b32.xlu0 %v1323, 32
        %v1402 = vpop.permute.xlu0 %1401
        %1403 = vrot.lane.b32.xlu0 %v1325, 32
        %v1404 = vpop.permute.xlu0 %1403
        %1405 = vrot.lane.b32.xlu0 %v1328, 32
        %v1406 = vpop.permute.xlu0 %1405
        %1407 = vrot.lane.b32.xlu0 %v1330, 32
        %v1408 = vpop.permute.xlu0 %1407
        %1409 = vrot.lane.b32.xlu0 %v1333, 32
        %v1410 = vpop.permute.xlu0 %1409
        %1411 = vrot.lane.b32.xlu0 %v1335, 32
        %v1412 = vpop.permute.xlu0 %1411
        %1413 = vrot.lane.b32.xlu0 %v1338, 32
        %v1414 = vpop.permute.xlu0 %1413
        %1415 = vrot.lane.b32.xlu0 %v1340, 32
        %v1416 = vpop.permute.xlu0 %1415
        %1417 = vrot.lane.b32.xlu0 %v1343, 32
        %v1418 = vpop.permute.xlu0 %1417
        %1419 = vrot.lane.b32.xlu0 %v1345, 32
        %v1420 = vpop.permute.xlu0 %1419
        %1421 = vrot.lane.b32.xlu0 %v1348, 32
        %v1422 = vpop.permute.xlu0 %1421
        %1423 = vrot.lane.b32.xlu0 %v1350, 32
        %v1424 = vpop.permute.xlu0 %1423
        %1425 = vrot.lane.b32.xlu0 %v1353, 32
        %v1426 = vpop.permute.xlu0 %1425
        %1427 = vrot.lane.b32.xlu0 %v1355, 32
        %v1428 = vpop.permute.xlu0 %1427
        %1429 = vrot.lane.b32.xlu0 %v1358, 32
        %v1430 = vpop.permute.xlu0 %1429
        %1431 = vrot.lane.b32.xlu0 %v1360, 32
        %v1432 = vpop.permute.xlu0 %1431
        %1433 = vrot.lane.b32.xlu0 %v1363, 32
        %v1434 = vpop.permute.xlu0 %1433
        %1435 = vrot.lane.b32.xlu0 %v1365, 32
        %v1436 = vpop.permute.xlu0 %1435
        %1437 = vrot.lane.b32.xlu0 %v1368, 32
        %v1438 = vpop.permute.xlu0 %1437
        %1439 = vrot.lane.b32.xlu0 %v1370, 32
        %v1440 = vpop.permute.xlu0 %1439
        %1441 = vrot.lane.b32.xlu0 %v1373, 32
        %v1442 = vpop.permute.xlu0 %1441
        %1443 = vrot.lane.b32.xlu0 %v1375, 32
        %v1444 = vpop.permute.xlu0 %1443
        %1445 = vrot.lane.b32.xlu0 %v1378, 32
        %v1446 = vpop.permute.xlu0 %1445
        %1447 = vrot.lane.b32.xlu0 %v1380, 32
        %v1448 = vpop.permute.xlu0 %1447
        %1449 = vrot.lane.b32.xlu0 %v1383, 32
        %v1450 = vpop.permute.xlu0 %1449
        %1451 = vrot.lane.b32.xlu0 %v1385, 32
        %v1452 = vpop.permute.xlu0 %1451
        %1453 = vrot.lane.b32.xlu0 %v1388, 32
        %v1454 = vpop.permute.xlu0 %1453
        %1455 = vrot.lane.b32.xlu0 %v1390, 32
        %v1456 = vpop.permute.xlu0 %1455
        %1457 = vrot.lane.b32.xlu0 %v1393, 32
        %v1458 = vpop.permute.xlu0 %1457
        %1459 = vrot.lane.b32.xlu0 %v1395, 32
        %v1460 = vpop.permute.xlu0 %1459
        %1461 = vrot.lane.b32.xlu0 %v1398, 32
        %v1462 = vpop.permute.xlu0 %1461
        %1463 = vrot.lane.b32.xlu0 %v1400, 32
        %v1464 = vpop.permute.xlu0 %1463
        %1499 = vrot.lane.b32.xlu0 %v1044, 48
        %v1500 = vpop.permute.xlu0 %1499
        %1501 = vrot.lane.b32.xlu0 %v1045, 48
        %v1502 = vpop.permute.xlu0 %1501
        %1503 = vrot.lane.b32.xlu0 %v1047, 48
        %v1504 = vpop.permute.xlu0 %1503
        %1505 = vrot.lane.b32.xlu0 %v1048, 48
        %v1506 = vpop.permute.xlu0 %1505
        %1507 = vrot.lane.b32.xlu0 %v1050, 48
        %v1508 = vpop.permute.xlu0 %1507
        %1509 = vrot.lane.b32.xlu0 %v1051, 48
        %v1510 = vpop.permute.xlu0 %1509
        %1511 = vrot.lane.b32.xlu0 %v1053, 48
        %v1512 = vpop.permute.xlu0 %1511
        %1513 = vrot.lane.b32.xlu0 %v1054, 48
        %v1514 = vpop.permute.xlu0 %1513
        %1515 = vrot.lane.b32.xlu0 %v1056, 48
        %v1516 = vpop.permute.xlu0 %1515
        %1517 = vrot.lane.b32.xlu0 %v1057, 48
        %v1518 = vpop.permute.xlu0 %1517
        %1519 = vrot.lane.b32.xlu0 %v1059, 48
        %v1520 = vpop.permute.xlu0 %1519
        %1521 = vrot.lane.b32.xlu0 %v1060, 48
        %v1522 = vpop.permute.xlu0 %1521
        %1523 = vrot.lane.b32.xlu0 %v1062, 48
        %v1524 = vpop.permute.xlu0 %1523
        %1525 = vrot.lane.b32.xlu0 %v1063, 48
        %v1526 = vpop.permute.xlu0 %1525
        %1527 = vrot.lane.b32.xlu0 %v1065, 48
        %v1528 = vpop.permute.xlu0 %1527
        %1529 = vrot.lane.b32.xlu0 %v1066, 48
        %v1530 = vpop.permute.xlu0 %1529
        %1531 = vrot.lane.b32.xlu0 %v1068, 48
        %v1532 = vpop.permute.xlu0 %1531
        %1533 = vrot.lane.b32.xlu0 %v1069, 48
        %v1534 = vpop.permute.xlu0 %1533
        %1535 = vrot.lane.b32.xlu0 %v1071, 48
        %v1536 = vpop.permute.xlu0 %1535
        %1537 = vrot.lane.b32.xlu0 %v1072, 48
        %v1538 = vpop.permute.xlu0 %1537
        %1539 = vrot.lane.b32.xlu0 %v1074, 48
        %v1540 = vpop.permute.xlu0 %1539
        %1541 = vrot.lane.b32.xlu0 %v1075, 48
        %v1542 = vpop.permute.xlu0 %1541
        %1543 = vrot.lane.b32.xlu0 %v1077, 48
        %v1544 = vpop.permute.xlu0 %1543
        %1545 = vrot.lane.b32.xlu0 %v1078, 48
        %v1546 = vpop.permute.xlu0 %1545
        %1547 = vrot.lane.b32.xlu0 %v1080, 48
        %v1548 = vpop.permute.xlu0 %1547
        %1549 = vrot.lane.b32.xlu0 %v1081, 48
        %v1550 = vpop.permute.xlu0 %1549
        %1551 = vrot.lane.b32.xlu0 %v1083, 48
        %v1552 = vpop.permute.xlu0 %1551
        %1553 = vrot.lane.b32.xlu0 %v1084, 48
        %v1554 = vpop.permute.xlu0 %1553
        %1555 = vrot.lane.b32.xlu0 %v1086, 48
        %v1556 = vpop.permute.xlu0 %1555
        %1557 = vrot.lane.b32.xlu0 %v1087, 48
        %v1558 = vpop.permute.xlu0 %1557
        %1559 = vrot.lane.b32.xlu0 %v1089, 48
        %v1560 = vpop.permute.xlu0 %1559
        %1561 = vrot.lane.b32.xlu0 %v1090, 48
        %v1562 = vpop.permute.xlu0 %1561
        %v1596 = vrot.slane %v1089, 1
        %v1597 = vrot.slane %v1090, 1
        %v1598 = vsel %vm1143, %v1596, %v1597
        %v1599 = vrot.slane %v1091, 1
        %v1600 = vsel %vm1143, %v1597, %v1599
        %1601 = vrot.lane.b32.xlu0 %v1151, 64
        %v1602 = vpop.permute.xlu0 %1601
        %1603 = vrot.lane.b32.xlu0 %v1153, 64
        %v1604 = vpop.permute.xlu0 %1603
        %1605 = vrot.lane.b32.xlu0 %v1156, 64
        %v1606 = vpop.permute.xlu0 %1605
        %1607 = vrot.lane.b32.xlu0 %v1158, 64
        %v1608 = vpop.permute.xlu0 %1607
        %1609 = vrot.lane.b32.xlu0 %v1161, 64
        %v1610 = vpop.permute.xlu0 %1609
        %1611 = vrot.lane.b32.xlu0 %v1163, 64
        %v1612 = vpop.permute.xlu0 %1611
        %1613 = vrot.lane.b32.xlu0 %v1166, 64
        %v1614 = vpop.permute.xlu0 %1613
        %1615 = vrot.lane.b32.xlu0 %v1168, 64
        %v1616 = vpop.permute.xlu0 %1615
        %1617 = vrot.lane.b32.xlu0 %v1171, 64
        %v1618 = vpop.permute.xlu0 %1617
        %1619 = vrot.lane.b32.xlu0 %v1173, 64
        %v1620 = vpop.permute.xlu0 %1619
        %1621 = vrot.lane.b32.xlu0 %v1176, 64
        %v1622 = vpop.permute.xlu0 %1621
        %1623 = vrot.lane.b32.xlu0 %v1178, 64
        %v1624 = vpop.permute.xlu0 %1623
        %1625 = vrot.lane.b32.xlu0 %v1181, 64
        %v1626 = vpop.permute.xlu0 %1625
        %1627 = vrot.lane.b32.xlu0 %v1183, 64
        %v1628 = vpop.permute.xlu0 %1627
        %1629 = vrot.lane.b32.xlu0 %v1186, 64
        %v1630 = vpop.permute.xlu0 %1629
        %1631 = vrot.lane.b32.xlu0 %v1188, 64
        %v1632 = vpop.permute.xlu0 %1631
        %1633 = vrot.lane.b32.xlu0 %v1191, 64
        %v1634 = vpop.permute.xlu0 %1633
        %1635 = vrot.lane.b32.xlu0 %v1193, 64
        %v1636 = vpop.permute.xlu0 %1635
        %1637 = vrot.lane.b32.xlu0 %v1196, 64
        %v1638 = vpop.permute.xlu0 %1637
        %1639 = vrot.lane.b32.xlu0 %v1198, 64
        %v1640 = vpop.permute.xlu0 %1639
        %1641 = vrot.lane.b32.xlu0 %v1201, 64
        %v1642 = vpop.permute.xlu0 %1641
        %1643 = vrot.lane.b32.xlu0 %v1203, 64
        %v1644 = vpop.permute.xlu0 %1643
        %1645 = vrot.lane.b32.xlu0 %v1206, 64
        %v1646 = vpop.permute.xlu0 %1645
        %1647 = vrot.lane.b32.xlu0 %v1208, 64
        %v1648 = vpop.permute.xlu0 %1647
        %1649 = vrot.lane.b32.xlu0 %v1211, 64
        %v1650 = vpop.permute.xlu0 %1649
        %1651 = vrot.lane.b32.xlu0 %v1213, 64
        %v1652 = vpop.permute.xlu0 %1651
        %1653 = vrot.lane.b32.xlu0 %v1216, 64
        %v1654 = vpop.permute.xlu0 %1653
        %1655 = vrot.lane.b32.xlu0 %v1218, 64
        %v1656 = vpop.permute.xlu0 %1655
        %1657 = vrot.lane.b32.xlu0 %v1221, 64
        %v1658 = vpop.permute.xlu0 %1657
        %1659 = vrot.lane.b32.xlu0 %v1223, 64
        %v1660 = vpop.permute.xlu0 %1659
        %1661 = vrot.lane.b32.xlu0 %v1598, 64
        %v1662 = vpop.permute.xlu0 %1661
        %1663 = vrot.lane.b32.xlu0 %v1600, 64
        %v1664 = vpop.permute.xlu0 %1663
        %v1697 = vrot.slane %v1089, 2
        %v1698 = vrot.slane %v1090, 2
        %v1699 = vsel %vm1320, %v1697, %v1698
        %v1700 = vrot.slane %v1091, 2
        %v1701 = vsel %vm1320, %v1698, %v1700
        %1702 = vrot.lane.b32.xlu0 %v1328, 80
        %v1703 = vpop.permute.xlu0 %1702
        %1704 = vrot.lane.b32.xlu0 %v1330, 80
        %v1705 = vpop.permute.xlu0 %1704
        %1706 = vrot.lane.b32.xlu0 %v1333, 80
        %v1707 = vpop.permute.xlu0 %1706
        %1708 = vrot.lane.b32.xlu0 %v1335, 80
        %v1709 = vpop.permute.xlu0 %1708
        %1710 = vrot.lane.b32.xlu0 %v1338, 80
        %v1711 = vpop.permute.xlu0 %1710
        %1712 = vrot.lane.b32.xlu0 %v1340, 80
        %v1713 = vpop.permute.xlu0 %1712
        %1714 = vrot.lane.b32.xlu0 %v1343, 80
        %v1715 = vpop.permute.xlu0 %1714
        %1716 = vrot.lane.b32.xlu0 %v1345, 80
        %v1717 = vpop.permute.xlu0 %1716
        %1718 = vrot.lane.b32.xlu0 %v1348, 80
        %v1719 = vpop.permute.xlu0 %1718
        %1720 = vrot.lane.b32.xlu0 %v1350, 80
        %v1721 = vpop.permute.xlu0 %1720
        %1722 = vrot.lane.b32.xlu0 %v1353, 80
        %v1723 = vpop.permute.xlu0 %1722
        %1724 = vrot.lane.b32.xlu0 %v1355, 80
        %v1725 = vpop.permute.xlu0 %1724
        %1726 = vrot.lane.b32.xlu0 %v1358, 80
        %v1727 = vpop.permute.xlu0 %1726
        %1728 = vrot.lane.b32.xlu0 %v1360, 80
        %v1729 = vpop.permute.xlu0 %1728
        %1730 = vrot.lane.b32.xlu0 %v1363, 80
        %v1731 = vpop.permute.xlu0 %1730
        %1732 = vrot.lane.b32.xlu0 %v1365, 80
        %v1733 = vpop.permute.xlu0 %1732
        %1734 = vrot.lane.b32.xlu0 %v1368, 80
        %v1735 = vpop.permute.xlu0 %1734
        %1736 = vrot.lane.b32.xlu0 %v1370, 80
        %v1737 = vpop.permute.xlu0 %1736
        %1738 = vrot.lane.b32.xlu0 %v1373, 80
        %v1739 = vpop.permute.xlu0 %1738
        %1740 = vrot.lane.b32.xlu0 %v1375, 80
        %v1741 = vpop.permute.xlu0 %1740
        %1742 = vrot.lane.b32.xlu0 %v1378, 80
        %v1743 = vpop.permute.xlu0 %1742
        %1744 = vrot.lane.b32.xlu0 %v1380, 80
        %v1745 = vpop.permute.xlu0 %1744
        %1746 = vrot.lane.b32.xlu0 %v1383, 80
        %v1747 = vpop.permute.xlu0 %1746
        %1748 = vrot.lane.b32.xlu0 %v1385, 80
        %v1749 = vpop.permute.xlu0 %1748
        %1750 = vrot.lane.b32.xlu0 %v1388, 80
        %v1751 = vpop.permute.xlu0 %1750
        %1752 = vrot.lane.b32.xlu0 %v1390, 80
        %v1753 = vpop.permute.xlu0 %1752
        %1754 = vrot.lane.b32.xlu0 %v1393, 80
        %v1755 = vpop.permute.xlu0 %1754
        %1756 = vrot.lane.b32.xlu0 %v1395, 80
        %v1757 = vpop.permute.xlu0 %1756
        %1758 = vrot.lane.b32.xlu0 %v1398, 80
        %v1759 = vpop.permute.xlu0 %1758
        %1760 = vrot.lane.b32.xlu0 %v1400, 80
        %v1761 = vpop.permute.xlu0 %1760
        %1762 = vrot.lane.b32.xlu0 %v1699, 80
        %v1763 = vpop.permute.xlu0 %1762
        %1764 = vrot.lane.b32.xlu0 %v1701, 80
        %v1765 = vpop.permute.xlu0 %1764
        %1800 = vrot.lane.b32.xlu0 %v1047, 96
        %v1801 = vpop.permute.xlu0 %1800
        %1802 = vrot.lane.b32.xlu0 %v1048, 96
        %v1803 = vpop.permute.xlu0 %1802
        %1804 = vrot.lane.b32.xlu0 %v1050, 96
        %v1805 = vpop.permute.xlu0 %1804
        %1806 = vrot.lane.b32.xlu0 %v1051, 96
        %v1807 = vpop.permute.xlu0 %1806
        %1808 = vrot.lane.b32.xlu0 %v1053, 96
        %v1809 = vpop.permute.xlu0 %1808
        %1810 = vrot.lane.b32.xlu0 %v1054, 96
        %v1811 = vpop.permute.xlu0 %1810
        %1812 = vrot.lane.b32.xlu0 %v1056, 96
        %v1813 = vpop.permute.xlu0 %1812
        %1814 = vrot.lane.b32.xlu0 %v1057, 96
        %v1815 = vpop.permute.xlu0 %1814
        %1816 = vrot.lane.b32.xlu0 %v1059, 96
        %v1817 = vpop.permute.xlu0 %1816
        %1818 = vrot.lane.b32.xlu0 %v1060, 96
        %v1819 = vpop.permute.xlu0 %1818
        %1820 = vrot.lane.b32.xlu0 %v1062, 96
        %v1821 = vpop.permute.xlu0 %1820
        %1822 = vrot.lane.b32.xlu0 %v1063, 96
        %v1823 = vpop.permute.xlu0 %1822
        %1824 = vrot.lane.b32.xlu0 %v1065, 96
        %v1825 = vpop.permute.xlu0 %1824
        %1826 = vrot.lane.b32.xlu0 %v1066, 96
        %v1827 = vpop.permute.xlu0 %1826
        %1828 = vrot.lane.b32.xlu0 %v1068, 96
        %v1829 = vpop.permute.xlu0 %1828
        %1830 = vrot.lane.b32.xlu0 %v1069, 96
        %v1831 = vpop.permute.xlu0 %1830
        %1832 = vrot.lane.b32.xlu0 %v1071, 96
        %v1833 = vpop.permute.xlu0 %1832
        %1834 = vrot.lane.b32.xlu0 %v1072, 96
        %v1835 = vpop.permute.xlu0 %1834
        %1836 = vrot.lane.b32.xlu0 %v1074, 96
        %v1837 = vpop.permute.xlu0 %1836
        %1838 = vrot.lane.b32.xlu0 %v1075, 96
        %v1839 = vpop.permute.xlu0 %1838
        %1840 = vrot.lane.b32.xlu0 %v1077, 96
        %v1841 = vpop.permute.xlu0 %1840
        %1842 = vrot.lane.b32.xlu0 %v1078, 96
        %v1843 = vpop.permute.xlu0 %1842
        %1844 = vrot.lane.b32.xlu0 %v1080, 96
        %v1845 = vpop.permute.xlu0 %1844
        %1846 = vrot.lane.b32.xlu0 %v1081, 96
        %v1847 = vpop.permute.xlu0 %1846
        %1848 = vrot.lane.b32.xlu0 %v1083, 96
        %v1849 = vpop.permute.xlu0 %1848
        %1850 = vrot.lane.b32.xlu0 %v1084, 96
        %v1851 = vpop.permute.xlu0 %1850
        %1852 = vrot.lane.b32.xlu0 %v1086, 96
        %v1853 = vpop.permute.xlu0 %1852
        %1854 = vrot.lane.b32.xlu0 %v1087, 96
        %v1855 = vpop.permute.xlu0 %1854
        %1856 = vrot.lane.b32.xlu0 %v1089, 96
        %v1857 = vpop.permute.xlu0 %1856
        %1858 = vrot.lane.b32.xlu0 %v1090, 96
        %v1859 = vpop.permute.xlu0 %1858
        %1860 = vrot.lane.b32.xlu0 %v1092, 96
        %v1861 = vpop.permute.xlu0 %1860
        %1862 = vrot.lane.b32.xlu0 %v1093, 96
        %v1863 = vpop.permute.xlu0 %1862
        %v1897 = vrot.slane %v1092, 1
        %v1898 = vrot.slane %v1093, 1
        %v1899 = vsel %vm1143, %v1897, %v1898
        %v1900 = vrot.slane %v1094, 1
        %v1901 = vsel %vm1143, %v1898, %v1900
        %1902 = vrot.lane.b32.xlu0 %v1156, 112
        %v1903 = vpop.permute.xlu0 %1902
        %1904 = vrot.lane.b32.xlu0 %v1158, 112
        %v1905 = vpop.permute.xlu0 %1904
        %1906 = vrot.lane.b32.xlu0 %v1161, 112
        %v1907 = vpop.permute.xlu0 %1906
        %1908 = vrot.lane.b32.xlu0 %v1163, 112
        %v1909 = vpop.permute.xlu0 %1908
        %1910 = vrot.lane.b32.xlu0 %v1166, 112
        %v1911 = vpop.permute.xlu0 %1910
        %1912 = vrot.lane.b32.xlu0 %v1168, 112
        %v1913 = vpop.permute.xlu0 %1912
        %1914 = vrot.lane.b32.xlu0 %v1171, 112
        %v1915 = vpop.permute.xlu0 %1914
        %1916 = vrot.lane.b32.xlu0 %v1173, 112
        %v1917 = vpop.permute.xlu0 %1916
        %1918 = vrot.lane.b32.xlu0 %v1176, 112
        %v1919 = vpop.permute.xlu0 %1918
        %1920 = vrot.lane.b32.xlu0 %v1178, 112
        %v1921 = vpop.permute.xlu0 %1920
        %1922 = vrot.lane.b32.xlu0 %v1181, 112
        %v1923 = vpop.permute.xlu0 %1922
        %1924 = vrot.lane.b32.xlu0 %v1183, 112
        %v1925 = vpop.permute.xlu0 %1924
        %1926 = vrot.lane.b32.xlu0 %v1186, 112
        %v1927 = vpop.permute.xlu0 %1926
        %1928 = vrot.lane.b32.xlu0 %v1188, 112
        %v1929 = vpop.permute.xlu0 %1928
        %1930 = vrot.lane.b32.xlu0 %v1191, 112
        %v1931 = vpop.permute.xlu0 %1930
        %1932 = vrot.lane.b32.xlu0 %v1193, 112
        %v1933 = vpop.permute.xlu0 %1932
        %1934 = vrot.lane.b32.xlu0 %v1196, 112
        %v1935 = vpop.permute.xlu0 %1934
        %1936 = vrot.lane.b32.xlu0 %v1198, 112
        %v1937 = vpop.permute.xlu0 %1936
        %1938 = vrot.lane.b32.xlu0 %v1201, 112
        %v1939 = vpop.permute.xlu0 %1938
        %1940 = vrot.lane.b32.xlu0 %v1203, 112
        %v1941 = vpop.permute.xlu0 %1940
        %1942 = vrot.lane.b32.xlu0 %v1206, 112
        %v1943 = vpop.permute.xlu0 %1942
        %1944 = vrot.lane.b32.xlu0 %v1208, 112
        %v1945 = vpop.permute.xlu0 %1944
        %1946 = vrot.lane.b32.xlu0 %v1211, 112
        %v1947 = vpop.permute.xlu0 %1946
        %1948 = vrot.lane.b32.xlu0 %v1213, 112
        %v1949 = vpop.permute.xlu0 %1948
        %1950 = vrot.lane.b32.xlu0 %v1216, 112
        %v1951 = vpop.permute.xlu0 %1950
        %1952 = vrot.lane.b32.xlu0 %v1218, 112
        %v1953 = vpop.permute.xlu0 %1952
        %1954 = vrot.lane.b32.xlu0 %v1221, 112
        %v1955 = vpop.permute.xlu0 %1954
        %1956 = vrot.lane.b32.xlu0 %v1223, 112
        %v1957 = vpop.permute.xlu0 %1956
        %1958 = vrot.lane.b32.xlu0 %v1598, 112
        %v1959 = vpop.permute.xlu0 %1958
        %1960 = vrot.lane.b32.xlu0 %v1600, 112
        %v1961 = vpop.permute.xlu0 %1960
        %1962 = vrot.lane.b32.xlu0 %v1899, 112
        %v1963 = vpop.permute.xlu0 %1962
        %1964 = vrot.lane.b32.xlu0 %v1901, 112
        %v1965 = vpop.permute.xlu0 %1964
        %v1998 = vrot.slane %v1092, 2
        %v1999 = vrot.slane %v1093, 2
        %v2000 = vsel %vm1320, %v1998, %v1999
        %v2001 = vrot.slane %v1094, 2
        %v2002 = vsel %vm1320, %v1999, %v2001
        %v2003 = vsel %vm766, %v1041, %v1225
        %v2004 = vsel %vm766, %v1042, %v1227
        %v2005 = vsel %vm766, %v1044, %v1229
        %v2006 = vsel %vm766, %v1045, %v1231
        %v2007 = vsel %vm766, %v1047, %v1233
        %v2008 = vsel %vm766, %v1048, %v1235
        %v2009 = vsel %vm766, %v1050, %v1237
        %v2010 = vsel %vm766, %v1051, %v1239
        %v2011 = vsel %vm766, %v1053, %v1241
        %v2012 = vsel %vm766, %v1054, %v1243
        %v2013 = vsel %vm766, %v1056, %v1245
        %v2014 = vsel %vm766, %v1057, %v1247
        %v2015 = vsel %vm766, %v1059, %v1249
        %v2016 = vsel %vm766, %v1060, %v1251
        %v2017 = vsel %vm766, %v1062, %v1253
        %v2018 = vsel %vm766, %v1063, %v1255
        %v2019 = vsel %vm766, %v1065, %v1257
        %v2020 = vsel %vm766, %v1066, %v1259
        %v2021 = vsel %vm766, %v1068, %v1261
        %v2022 = vsel %vm766, %v1069, %v1263
        %v2023 = vsel %vm766, %v1071, %v1265
        %v2024 = vsel %vm766, %v1072, %v1267
        %v2025 = vsel %vm766, %v1074, %v1269
        %v2026 = vsel %vm766, %v1075, %v1271
        %v2027 = vsel %vm766, %v1077, %v1273
        %v2028 = vsel %vm766, %v1078, %v1275
        %v2029 = vsel %vm766, %v1080, %v1277
        %v2030 = vsel %vm766, %v1081, %v1279
        %v2031 = vsel %vm766, %v1083, %v1281
        %v2032 = vsel %vm766, %v1084, %v1283
        %v2033 = vsel %vm766, %v1086, %v1285
        %v2034 = vsel %vm766, %v1087, %v1287
        %vm2035 = vcmask 261120
        %v2036 = vsel %vm2035, %v2003, %v1402
        %v2037 = vsel %vm2035, %v2004, %v1404
        %v2038 = vsel %vm2035, %v2005, %v1406
        %v2039 = vsel %vm2035, %v2006, %v1408
        %v2040 = vsel %vm2035, %v2007, %v1410
        %v2041 = vsel %vm2035, %v2008, %v1412
        %v2042 = vsel %vm2035, %v2009, %v1414
        %v2043 = vsel %vm2035, %v2010, %v1416
        %v2044 = vsel %vm2035, %v2011, %v1418
        %v2045 = vsel %vm2035, %v2012, %v1420
        %v2046 = vsel %vm2035, %v2013, %v1422
        %v2047 = vsel %vm2035, %v2014, %v1424
        %v2048 = vsel %vm2035, %v2015, %v1426
        %v2049 = vsel %vm2035, %v2016, %v1428
        %v2050 = vsel %vm2035, %v2017, %v1430
        %v2051 = vsel %vm2035, %v2018, %v1432
        %v2052 = vsel %vm2035, %v2019, %v1434
        %v2053 = vsel %vm2035, %v2020, %v1436
        %v2054 = vsel %vm2035, %v2021, %v1438
        %v2055 = vsel %vm2035, %v2022, %v1440
        %v2056 = vsel %vm2035, %v2023, %v1442
        %v2057 = vsel %vm2035, %v2024, %v1444
        %v2058 = vsel %vm2035, %v2025, %v1446
        %v2059 = vsel %vm2035, %v2026, %v1448
        %v2060 = vsel %vm2035, %v2027, %v1450
        %v2061 = vsel %vm2035, %v2028, %v1452
        %v2062 = vsel %vm2035, %v2029, %v1454
        %v2063 = vsel %vm2035, %v2030, %v1456
        %v2064 = vsel %vm2035, %v2031, %v1458
        %v2065 = vsel %vm2035, %v2032, %v1460
        %v2066 = vsel %vm2035, %v2033, %v1462
        %v2067 = vsel %vm2035, %v2034, %v1464
        %v2068 = vsel %vm677, %v2036, %v1500
        %v2069 = vsel %vm677, %v2037, %v1502
        %v2070 = vsel %vm677, %v2038, %v1504
        %v2071 = vsel %vm677, %v2039, %v1506
        %v2072 = vsel %vm677, %v2040, %v1508
        %v2073 = vsel %vm677, %v2041, %v1510
        %v2074 = vsel %vm677, %v2042, %v1512
        %v2075 = vsel %vm677, %v2043, %v1514
        %v2076 = vsel %vm677, %v2044, %v1516
        %v2077 = vsel %vm677, %v2045, %v1518
        %v2078 = vsel %vm677, %v2046, %v1520
        %v2079 = vsel %vm677, %v2047, %v1522
        %v2080 = vsel %vm677, %v2048, %v1524
        %v2081 = vsel %vm677, %v2049, %v1526
        %v2082 = vsel %vm677, %v2050, %v1528
        %v2083 = vsel %vm677, %v2051, %v1530
        %v2084 = vsel %vm677, %v2052, %v1532
        %v2085 = vsel %vm677, %v2053, %v1534
        %v2086 = vsel %vm677, %v2054, %v1536
        %v2087 = vsel %vm677, %v2055, %v1538
        %v2088 = vsel %vm677, %v2056, %v1540
        %v2089 = vsel %vm677, %v2057, %v1542
        %v2090 = vsel %vm677, %v2058, %v1544
        %v2091 = vsel %vm677, %v2059, %v1546
        %v2092 = vsel %vm677, %v2060, %v1548
        %v2093 = vsel %vm677, %v2061, %v1550
        %v2094 = vsel %vm677, %v2062, %v1552
        %v2095 = vsel %vm677, %v2063, %v1554
        %v2096 = vsel %vm677, %v2064, %v1556
        %v2097 = vsel %vm677, %v2065, %v1558
        %v2098 = vsel %vm677, %v2066, %v1560
        %v2099 = vsel %vm677, %v2067, %v1562
        %vm2100 = vcmask 523264
        %v2101 = vsel %vm2100, %v2068, %v1602
        %v2102 = vsel %vm2100, %v2069, %v1604
        %v2103 = vsel %vm2100, %v2070, %v1606
        %v2104 = vsel %vm2100, %v2071, %v1608
        %v2105 = vsel %vm2100, %v2072, %v1610
        %v2106 = vsel %vm2100, %v2073, %v1612
        %v2107 = vsel %vm2100, %v2074, %v1614
        %v2108 = vsel %vm2100, %v2075, %v1616
        %v2109 = vsel %vm2100, %v2076, %v1618
        %v2110 = vsel %vm2100, %v2077, %v1620
        %v2111 = vsel %vm2100, %v2078, %v1622
        %v2112 = vsel %vm2100, %v2079, %v1624
        %v2113 = vsel %vm2100, %v2080, %v1626
        %v2114 = vsel %vm2100, %v2081, %v1628
        %v2115 = vsel %vm2100, %v2082, %v1630
        %v2116 = vsel %vm2100, %v2083, %v1632
        %v2117 = vsel %vm2100, %v2084, %v1634
        %v2118 = vsel %vm2100, %v2085, %v1636
        %v2119 = vsel %vm2100, %v2086, %v1638
        %v2120 = vsel %vm2100, %v2087, %v1640
        %v2121 = vsel %vm2100, %v2088, %v1642
        %v2122 = vsel %vm2100, %v2089, %v1644
        %v2123 = vsel %vm2100, %v2090, %v1646
        %v2124 = vsel %vm2100, %v2091, %v1648
        %v2125 = vsel %vm2100, %v2092, %v1650
        %v2126 = vsel %vm2100, %v2093, %v1652
        %v2127 = vsel %vm2100, %v2094, %v1654
        %v2128 = vsel %vm2100, %v2095, %v1656
        %v2129 = vsel %vm2100, %v2096, %v1658
        %v2130 = vsel %vm2100, %v2097, %v1660
        %v2131 = vsel %vm2100, %v2098, %v1662
        %v2132 = vsel %vm2100, %v2099, %v1664
        %vm2133 = vcmask 654336
        %v2134 = vsel %vm2133, %v2101, %v1703
        %v2135 = vsel %vm2133, %v2102, %v1705
        %v2136 = vsel %vm2133, %v2103, %v1707
        %v2137 = vsel %vm2133, %v2104, %v1709
        %v2138 = vsel %vm2133, %v2105, %v1711
        %v2139 = vsel %vm2133, %v2106, %v1713
        %v2140 = vsel %vm2133, %v2107, %v1715
        %v2141 = vsel %vm2133, %v2108, %v1717
        %v2142 = vsel %vm2133, %v2109, %v1719
        %v2143 = vsel %vm2133, %v2110, %v1721
        %v2144 = vsel %vm2133, %v2111, %v1723
        %v2145 = vsel %vm2133, %v2112, %v1725
        %v2146 = vsel %vm2133, %v2113, %v1727
        %v2147 = vsel %vm2133, %v2114, %v1729
        %v2148 = vsel %vm2133, %v2115, %v1731
        %v2149 = vsel %vm2133, %v2116, %v1733
        %v2150 = vsel %vm2133, %v2117, %v1735
        %v2151 = vsel %vm2133, %v2118, %v1737
        %v2152 = vsel %vm2133, %v2119, %v1739
        %v2153 = vsel %vm2133, %v2120, %v1741
        %v2154 = vsel %vm2133, %v2121, %v1743
        %v2155 = vsel %vm2133, %v2122, %v1745
        %v2156 = vsel %vm2133, %v2123, %v1747
        %v2157 = vsel %vm2133, %v2124, %v1749
        %v2158 = vsel %vm2133, %v2125, %v1751
        %v2159 = vsel %vm2133, %v2126, %v1753
        %v2160 = vsel %vm2133, %v2127, %v1755
        %v2161 = vsel %vm2133, %v2128, %v1757
        %v2162 = vsel %vm2133, %v2129, %v1759
        %v2163 = vsel %vm2133, %v2130, %v1761
        %v2164 = vsel %vm2133, %v2131, %v1763
        %v2165 = vsel %vm2133, %v2132, %v1765
        %vm2166 = vcmask 785408
        %v2167 = vsel %vm2166, %v2134, %v1801
        %v2168 = vsel %vm2166, %v2135, %v1803
        %v2169 = vsel %vm2166, %v2136, %v1805
        %v2170 = vsel %vm2166, %v2137, %v1807
        %v2171 = vsel %vm2166, %v2138, %v1809
        %v2172 = vsel %vm2166, %v2139, %v1811
        %v2173 = vsel %vm2166, %v2140, %v1813
        %v2174 = vsel %vm2166, %v2141, %v1815
        %v2175 = vsel %vm2166, %v2142, %v1817
        %v2176 = vsel %vm2166, %v2143, %v1819
        %v2177 = vsel %vm2166, %v2144, %v1821
        %v2178 = vsel %vm2166, %v2145, %v1823
        %v2179 = vsel %vm2166, %v2146, %v1825
        %v2180 = vsel %vm2166, %v2147, %v1827
        %v2181 = vsel %vm2166, %v2148, %v1829
        %v2182 = vsel %vm2166, %v2149, %v1831
        %v2183 = vsel %vm2166, %v2150, %v1833
        %v2184 = vsel %vm2166, %v2151, %v1835
        %v2185 = vsel %vm2166, %v2152, %v1837
        %v2186 = vsel %vm2166, %v2153, %v1839
        %v2187 = vsel %vm2166, %v2154, %v1841
        %v2188 = vsel %vm2166, %v2155, %v1843
        %v2189 = vsel %vm2166, %v2156, %v1845
        %v2190 = vsel %vm2166, %v2157, %v1847
        %v2191 = vsel %vm2166, %v2158, %v1849
        %v2192 = vsel %vm2166, %v2159, %v1851
        %v2193 = vsel %vm2166, %v2160, %v1853
        %v2194 = vsel %vm2166, %v2161, %v1855
        %v2195 = vsel %vm2166, %v2162, %v1857
        %v2196 = vsel %vm2166, %v2163, %v1859
        %v2197 = vsel %vm2166, %v2164, %v1861
        %v2198 = vsel %vm2166, %v2165, %v1863
        %vm2199 = vcmask 916480
        %v2200 = vsel %vm2199, %v2167, %v1903
        %v2201 = vsel %vm2199, %v2168, %v1905
        %v2202 = vsel %vm2199, %v2169, %v1907
        %v2203 = vsel %vm2199, %v2170, %v1909
        %v2204 = vsel %vm2199, %v2171, %v1911
        %v2205 = vsel %vm2199, %v2172, %v1913
        %v2206 = vsel %vm2199, %v2173, %v1915
        %v2207 = vsel %vm2199, %v2174, %v1917
        %v2208 = vsel %vm2199, %v2175, %v1919
        %v2209 = vsel %vm2199, %v2176, %v1921
        %v2210 = vsel %vm2199, %v2177, %v1923
        %v2211 = vsel %vm2199, %v2178, %v1925
        %v2212 = vsel %vm2199, %v2179, %v1927
        %v2213 = vsel %vm2199, %v2180, %v1929
        %v2214 = vsel %vm2199, %v2181, %v1931
        %v2215 = vsel %vm2199, %v2182, %v1933
        %v2216 = vsel %vm2199, %v2183, %v1935
        %v2217 = vsel %vm2199, %v2184, %v1937
        %v2218 = vsel %vm2199, %v2185, %v1939
        %v2219 = vsel %vm2199, %v2186, %v1941
        %v2220 = vsel %vm2199, %v2187, %v1943
        %v2221 = vsel %vm2199, %v2188, %v1945
        %v2222 = vsel %vm2199, %v2189, %v1947
        %v2223 = vsel %vm2199, %v2190, %v1949
        %v2224 = vsel %vm2199, %v2191, %v1951
        %v2225 = vsel %vm2199, %v2192, %v1953
        %v2226 = vsel %vm2199, %v2193, %v1955
        %v2227 = vsel %vm2199, %v2194, %v1957
        %v2228 = vsel %vm2199, %v2195, %v1959
        %v2229 = vsel %vm2199, %v2196, %v1961
        %v2230 = vsel %vm2199, %v2197, %v1963
        %v2231 = vsel %vm2199, %v2198, %v1965
        %v2232 = vld [vmem:[%s3] sm:$0xff]
        %v2233 = vld [vmem:[%s3 + $0x8] sm:$0xff]
        %v2234 = vld [vmem:[%s3 + $0x10] sm:$0xff]
        %v2235 = vld [vmem:[%s3 + $0x18] sm:$0xff]
        %v2236 = vld [vmem:[%s3 + $0x20] sm:$0xff]
        %v2237 = vld [vmem:[%s3 + $0x28] sm:$0xff]
        %v2238 = vld [vmem:[%s3 + $0x30] sm:$0xff]
        %v2239 = vld [vmem:[%s3 + $0x38] sm:$0xff]
        %v2240 = vld [vmem:[%s3 + $0x40] sm:$0xff]
        %v2241 = vld [vmem:[%s3 + $0x48] sm:$0xff]
        %v2242 = vld [vmem:[%s3 + $0x50] sm:$0xff]
        %v2243 = vld [vmem:[%s3 + $0x58] sm:$0xff]
        %v2244 = vld [vmem:[%s3 + $0x60] sm:$0xff]
        %v2245 = vld [vmem:[%s3 + $0x68] sm:$0xff]
        %v2246 = vld [vmem:[%s3 + $0x70] sm:$0xff]
        %v2247 = vld [vmem:[%s3 + $0x78] sm:$0xff]
        %v2248 = vld [vmem:[%s3 + $0x80] sm:$0xff]
        %v2249 = vld [vmem:[%s3 + $0x88] sm:$0xff]
        %v2250 = vld [vmem:[%s4] sm:$0x1]
        %v2252 = vlaneseq
        %v2253 = vshrl.u32 %v2252, 7
        %v2254 = vsub.s32 0, %v2253
        %v2255 = vrot.slane %v2250, %v2254
        %v2257 = vsel %vm766, %v1333, 0
        %v2259 = vsel %vm766, %v1335, 0
        %v2261 = vsel %vm766, %v1338, 0
        %v2263 = vsel %vm766, %v1340, 0
        %v2265 = vsel %vm766, %v1343, 0
        %v2267 = vsel %vm766, %v1345, 0
        %v2269 = vsel %vm766, %v1348, 0
        %v2271 = vsel %vm766, %v1350, 0
        %v2273 = vsel %vm766, %v1353, 0
        %v2275 = vsel %vm766, %v1355, 0
        %v2277 = vsel %vm766, %v1358, 0
        %v2279 = vsel %vm766, %v1360, 0
        %v2281 = vsel %vm766, %v1363, 0
        %v2283 = vsel %vm766, %v1365, 0
        %v2285 = vsel %vm766, %v1368, 0
        %v2287 = vsel %vm766, %v1370, 0
        %v2289 = vsel %vm766, %v1373, 0
        %v2291 = vsel %vm766, %v1375, 0
        %v2293 = vsel %vm766, %v1378, 0
        %v2295 = vsel %vm766, %v1380, 0
        %v2297 = vsel %vm766, %v1383, 0
        %v2299 = vsel %vm766, %v1385, 0
        %v2301 = vsel %vm766, %v1388, 0
        %v2303 = vsel %vm766, %v1390, 0
        %v2305 = vsel %vm766, %v1393, 0
        %v2307 = vsel %vm766, %v1395, 0
        %v2309 = vsel %vm766, %v1398, 0
        %v2311 = vsel %vm766, %v1400, 0
        %v2313 = vsel %vm766, %v1699, 0
        %v2315 = vsel %vm766, %v1701, 0
        %v2317 = vsel %vm766, %v2000, 0
        %v2319 = vsel %vm766, %v2002, 0
        %2321 = vmatprep.subr.mxu0 0.0
        %2322 = vmatpush1.msra.mxu0 %v2232
        %2323 = vmatprep.subr.mxu0 0.0
        %2324 = vmatpush1.msra.mxu0 %v2233
        %2325 = vmatprep.subr.mxu0 0.0
        %2326 = vmatpush1.msra.mxu0 %v2234
        %2327 = vmatprep.subr.mxu0 0.0
        %2328 = vmatpush1.msra.mxu0 %v2235
        %2329 = vmatprep.subr.mxu0 0.0
        %2330 = vmatpush1.msra.mxu0 %v2236
        %2331 = vmatprep.subr.mxu0 0.0
        %2332 = vmatpush1.msra.mxu0 %v2237
        %2333 = vmatprep.subr.mxu0 0.0
        %2334 = vmatpush1.msra.mxu0 %v2238
        %2335 = vmatprep.subr.mxu0 0.0
        %2336 = vmatpush1.msra.mxu0 %v2239
        %2337 = vmatprep.subr.mxu0 0.0
        %2338 = vmatpush1.msra.mxu0 %v2240
        %2339 = vmatprep.subr.mxu0 0.0
        %2340 = vmatpush1.msra.mxu0 %v2241
        %2341 = vmatprep.subr.mxu0 0.0
        %2342 = vmatpush1.msra.mxu0 %v2242
        %2343 = vmatprep.subr.mxu0 0.0
        %2344 = vmatpush1.msra.mxu0 %v2243
        %2345 = vmatprep.subr.mxu0 0.0
        %2346 = vmatpush1.msra.mxu0 %v2244
        %2347 = vmatprep.subr.mxu0 0.0
        %2348 = vmatpush1.msra.mxu0 %v2245
        %2349 = vmatprep.subr.mxu0 0.0
        %2350 = vmatpush1.msra.mxu0 %v2246
        %2351 = vmatprep.subr.mxu0 0.0
        %2352 = vmatpush1.msra.mxu0 %v2247
        %2353 = vmatprep.subr.mxu0 0.0
        %2354 = vmatpush1.msra.mxu0 %v2248
        %2355 = vmatprep.subr.mxu0 0.0
        %2356 = vmatpush1.msra.mxu0 %v2249
        %2357 = vmatprep.subr.mxu0 0.0
        %2358 = vmatpush1.msra.mxu0 0.0
        %2359 = vmatprep.subr.mxu0 0.0
        %2360 = vmatpush1.msra.mxu0 0.0
        %2361 = vmatprep.subr.mxu0 0.0
        %2362 = vmatpush1.msra.mxu0 0.0
        %2363 = vmatprep.subr.mxu0 0.0
        %2364 = vmatpush1.msra.mxu0 0.0
        %2365 = vmatprep.subr.mxu0 0.0
        %2366 = vmatpush1.msra.mxu0 0.0
        %2367 = vmatprep.subr.mxu0 0.0
        %2368 = vmatpush1.msra.mxu0 0.0
        %2369 = vmatprep.subr.mxu0 0.0
        %2370 = vmatpush1.msra.mxu0 0.0
        %2371 = vmatprep.subr.mxu0 0.0
        %2372 = vmatpush1.msra.mxu0 0.0
        %2373 = vmatprep.subr.mxu0 0.0
        %2374 = vmatpush1.msra.mxu0 0.0
        %2375 = vmatprep.subr.mxu0 0.0
        %2376 = vmatpush1.msra.mxu0 0.0
        %2377 = vmatprep.subr.mxu0 0.0
        %2378 = vmatpush1.msra.mxu0 0.0
        %2379 = vmatprep.subr.mxu0 0.0
        %2380 = vmatpush1.msra.mxu0 0.0
        %2381 = vmatprep.subr.mxu0 0.0
        %2382 = vmatpush1.msra.mxu0 0.0
        %2383 = vmatprep.subr.mxu0 0.0
        %2384 = vmatpush1.msra.mxu0 0.0
        %2385 = vmatprep.mubr.f32.mxu0 %v2257
        %2386 = vmatmul.mubr.f32.gmra.mrb[0].mxu0 %v2200
        %v2387 = vpop.f32.mrb[0].mxu0
        %v2388 = vadd.f32 %v2255, %v2387
        %v2389 = vpop.f32.mrb[0].mxu0
        %2390 = vmatprep.mubr.f32.mxu0 %v2259
        %2391 = vmatmul.mubr.f32.gmra.mrb[0].mxu0 %v2201
        %v2392 = vpop.f32.mrb[0].mxu0
        %v2393 = vadd.f32 %v2255, %v2392
        %v2394 = vpop.f32.mrb[0].mxu0
        %2395 = vmatprep.mubr.f32.mxu0 %v2261
        %2396 = vmatmul.mubr.f32.gmra.mrb[0].mxu0 %v2202
        %v2397 = vpop.f32.mrb[0].mxu0
        %v2398 = vadd.f32 %v2255, %v2397
        %v2399 = vpop.f32.mrb[0].mxu0
        %2400 = vmatprep.mubr.f32.mxu0 %v2263
        %2401 = vmatmul.mubr.f32.gmra.mrb[0].mxu0 %v2203
        %v2402 = vpop.f32.mrb[0].mxu0
        %v2403 = vadd.f32 %v2255, %v2402
        %v2404 = vpop.f32.mrb[0].mxu0
        %2405 = vmatprep.mubr.f32.mxu0 %v2265
        %2406 = vmatmul.mubr.f32.gmra.mrb[0].mxu0 %v2204
        %v2407 = vpop.f32.mrb[0].mxu0
        %v2408 = vadd.f32 %v2255, %v2407
        %v2409 = vpop.f32.mrb[0].mxu0
        %2410 = vmatprep.mubr.f32.mxu0 %v2267
        %2411 = vmatmul.mubr.f32.gmra.mrb[0].mxu0 %v2205
        %v2412 = vpop.f32.mrb[0].mxu0
        %v2413 = vadd.f32 %v2255, %v2412
        %v2414 = vpop.f32.mrb[0].mxu0
        %2415 = vmatprep.mubr.f32.mxu0 %v2269
        %2416 = vmatmul.mubr.f32.gmra.mrb[0].mxu0 %v2206
        %v2417 = vpop.f32.mrb[0].mxu0
        %v2418 = vadd.f32 %v2255, %v2417
        %v2419 = vpop.f32.mrb[0].mxu0
        %2420 = vmatprep.mubr.f32.mxu0 %v2271
        %2421 = vmatmul.mubr.f32.gmra.mrb[0].mxu0 %v2207
        %v2422 = vpop.f32.mrb[0].mxu0
        %v2423 = vadd.f32 %v2255, %v2422
        %v2424 = vpop.f32.mrb[0].mxu0
        %2425 = vmatprep.mubr.f32.mxu0 %v2273
        %2426 = vmatmul.mubr.f32.gmra.mrb[0].mxu0 %v2208
        %v2427 = vpop.f32.mrb[0].mxu0
        %v2428 = vadd.f32 %v2255, %v2427
        %v2429 = vpop.f32.mrb[0].mxu0
        %2430 = vmatprep.mubr.f32.mxu0 %v2275
        %2431 = vmatmul.mubr.f32.gmra.mrb[0].mxu0 %v2209
        %v2432 = vpop.f32.mrb[0].mxu0
        %v2433 = vadd.f32 %v2255, %v2432
        %v2434 = vpop.f32.mrb[0].mxu0
        %2435 = vmatprep.mubr.f32.mxu0 %v2277
        %2436 = vmatmul.mubr.f32.gmra.mrb[0].mxu0 %v2210
        %v2437 = vpop.f32.mrb[0].mxu0
        %v2438 = vadd.f32 %v2255, %v2437
        %v2439 = vpop.f32.mrb[0].mxu0
        %2440 = vmatprep.mubr.f32.mxu0 %v2279
        %2441 = vmatmul.mubr.f32.gmra.mrb[0].mxu0 %v2211
        %v2442 = vpop.f32.mrb[0].mxu0
        %v2443 = vadd.f32 %v2255, %v2442
        %v2444 = vpop.f32.mrb[0].mxu0
        %2445 = vmatprep.mubr.f32.mxu0 %v2281
        %2446 = vmatmul.mubr.f32.gmra.mrb[0].mxu0 %v2212
        %v2447 = vpop.f32.mrb[0].mxu0
        %v2448 = vadd.f32 %v2255, %v2447
        %v2449 = vpop.f32.mrb[0].mxu0
        %2450 = vmatprep.mubr.f32.mxu0 %v2283
        %2451 = vmatmul.mubr.f32.gmra.mrb[0].mxu0 %v2213
        %v2452 = vpop.f32.mrb[0].mxu0
        %v2453 = vadd.f32 %v2255, %v2452
        %v2454 = vpop.f32.mrb[0].mxu0
        %2455 = vmatprep.mubr.f32.mxu0 %v2285
        %2456 = vmatmul.mubr.f32.gmra.mrb[0].mxu0 %v2214
        %v2457 = vpop.f32.mrb[0].mxu0
        %v2458 = vadd.f32 %v2255, %v2457
        %v2459 = vpop.f32.mrb[0].mxu0
        %2460 = vmatprep.mubr.f32.mxu0 %v2287
        %2461 = vmatmul.mubr.f32.gmra.mrb[0].mxu0 %v2215
        %v2462 = vpop.f32.mrb[0].mxu0
        %v2463 = vadd.f32 %v2255, %v2462
        %v2464 = vpop.f32.mrb[0].mxu0
        %2465 = vmatprep.mubr.f32.mxu0 %v2289
        %2466 = vmatmul.mubr.f32.gmra.mrb[0].mxu0 %v2216
        %v2467 = vpop.f32.mrb[0].mxu0
        %v2468 = vadd.f32 %v2255, %v2467
        %v2469 = vpop.f32.mrb[0].mxu0
        %2470 = vmatprep.mubr.f32.mxu0 %v2291
        %2471 = vmatmul.mubr.f32.gmra.mrb[0].mxu0 %v2217
        %v2472 = vpop.f32.mrb[0].mxu0
        %v2473 = vadd.f32 %v2255, %v2472
        %v2474 = vpop.f32.mrb[0].mxu0
        %2475 = vmatprep.mubr.f32.mxu0 %v2293
        %2476 = vmatmul.mubr.f32.gmra.mrb[0].mxu0 %v2218
        %v2477 = vpop.f32.mrb[0].mxu0
        %v2478 = vadd.f32 %v2255, %v2477
        %v2479 = vpop.f32.mrb[0].mxu0
        %2480 = vmatprep.mubr.f32.mxu0 %v2295
        %2481 = vmatmul.mubr.f32.gmra.mrb[0].mxu0 %v2219
        %v2482 = vpop.f32.mrb[0].mxu0
        %v2483 = vadd.f32 %v2255, %v2482
        %v2484 = vpop.f32.mrb[0].mxu0
        %2485 = vmatprep.mubr.f32.mxu0 %v2297
        %2486 = vmatmul.mubr.f32.gmra.mrb[0].mxu0 %v2220
        %v2487 = vpop.f32.mrb[0].mxu0
        %v2488 = vadd.f32 %v2255, %v2487
        %v2489 = vpop.f32.mrb[0].mxu0
        %2490 = vmatprep.mubr.f32.mxu0 %v2299
        %2491 = vmatmul.mubr.f32.gmra.mrb[0].mxu0 %v2221
        %v2492 = vpop.f32.mrb[0].mxu0
        %v2493 = vadd.f32 %v2255, %v2492
        %v2494 = vpop.f32.mrb[0].mxu0
        %2495 = vmatprep.mubr.f32.mxu0 %v2301
        %2496 = vmatmul.mubr.f32.gmra.mrb[0].mxu0 %v2222
        %v2497 = vpop.f32.mrb[0].mxu0
        %v2498 = vadd.f32 %v2255, %v2497
        %v2499 = vpop.f32.mrb[0].mxu0
        %2500 = vmatprep.mubr.f32.mxu0 %v2303
        %2501 = vmatmul.mubr.f32.gmra.mrb[0].mxu0 %v2223
        %v2502 = vpop.f32.mrb[0].mxu0
        %v2503 = vadd.f32 %v2255, %v2502
        %v2504 = vpop.f32.mrb[0].mxu0
        %2505 = vmatprep.mubr.f32.mxu0 %v2305
        %2506 = vmatmul.mubr.f32.gmra.mrb[0].mxu0 %v2224
        %v2507 = vpop.f32.mrb[0].mxu0
        %v2508 = vadd.f32 %v2255, %v2507
        %v2509 = vpop.f32.mrb[0].mxu0
        %2510 = vmatprep.mubr.f32.mxu0 %v2307
        %2511 = vmatmul.mubr.f32.gmra.mrb[0].mxu0 %v2225
        %v2512 = vpop.f32.mrb[0].mxu0
        %v2513 = vadd.f32 %v2255, %v2512
        %v2514 = vpop.f32.mrb[0].mxu0
        %2515 = vmatprep.mubr.f32.mxu0 %v2309
        %2516 = vmatmul.mubr.f32.gmra.mrb[0].mxu0 %v2226
        %v2517 = vpop.f32.mrb[0].mxu0
        %v2518 = vadd.f32 %v2255, %v2517
        %v2519 = vpop.f32.mrb[0].mxu0
        %2520 = vmatprep.mubr.f32.mxu0 %v2311
        %2521 = vmatmul.mubr.f32.gmra.mrb[0].mxu0 %v2227
        %v2522 = vpop.f32.mrb[0].mxu0
        %v2523 = vadd.f32 %v2255, %v2522
        %v2524 = vpop.f32.mrb[0].mxu0
        %2525 = vmatprep.mubr.f32.mxu0 %v2313
        %2526 = vmatmul.mubr.f32.gmra.mrb[0].mxu0 %v2228
        %v2527 = vpop.f32.mrb[0].mxu0
        %v2528 = vadd.f32 %v2255, %v2527
        %v2529 = vpop.f32.mrb[0].mxu0
        %2530 = vmatprep.mubr.f32.mxu0 %v2315
        %2531 = vmatmul.mubr.f32.gmra.mrb[0].mxu0 %v2229
        %v2532 = vpop.f32.mrb[0].mxu0
        %v2533 = vadd.f32 %v2255, %v2532
        %v2534 = vpop.f32.mrb[0].mxu0
        %2535 = vmatprep.mubr.f32.mxu0 %v2317
        %2536 = vmatmul.mubr.f32.gmra.mrb[0].mxu0 %v2230
        %v2537 = vpop.f32.mrb[0].mxu0
        %v2538 = vadd.f32 %v2255, %v2537
        %v2539 = vpop.f32.mrb[0].mxu0
        %2540 = vmatprep.mubr.f32.mxu0 %v2319
        %2541 = vmatmul.mubr.f32.gmra.mrb[0].mxu0 %v2231
        %v2542 = vpop.f32.mrb[0].mxu0
        %v2543 = vadd.f32 %v2255, %v2542
        %v2544 = vpop.f32.mrb[0].mxu0
        %2545 = vdwg.mxu0
        %2578 = vrot.lane.b32.xlu0 %v2388, 16
        %v2579 = vpop.permute.xlu0 %2578
        %2580 = vrot.lane.b32.xlu0 %v2393, 16
        %v2581 = vpop.permute.xlu0 %2580
        %2582 = vrot.lane.b32.xlu0 %v2398, 16
        %v2583 = vpop.permute.xlu0 %2582
        %2584 = vrot.lane.b32.xlu0 %v2403, 16
        %v2585 = vpop.permute.xlu0 %2584
        %2586 = vrot.lane.b32.xlu0 %v2408, 16
        %v2587 = vpop.permute.xlu0 %2586
        %2588 = vrot.lane.b32.xlu0 %v2413, 16
        %v2589 = vpop.permute.xlu0 %2588
        %2590 = vrot.lane.b32.xlu0 %v2418, 16
        %v2591 = vpop.permute.xlu0 %2590
        %2592 = vrot.lane.b32.xlu0 %v2423, 16
        %v2593 = vpop.permute.xlu0 %2592
        %2594 = vrot.lane.b32.xlu0 %v2428, 16
        %v2595 = vpop.permute.xlu0 %2594
        %2596 = vrot.lane.b32.xlu0 %v2433, 16
        %v2597 = vpop.permute.xlu0 %2596
        %2598 = vrot.lane.b32.xlu0 %v2438, 16
        %v2599 = vpop.permute.xlu0 %2598
        %2600 = vrot.lane.b32.xlu0 %v2443, 16
        %v2601 = vpop.permute.xlu0 %2600
        %2602 = vrot.lane.b32.xlu0 %v2448, 16
        %v2603 = vpop.permute.xlu0 %2602
        %2604 = vrot.lane.b32.xlu0 %v2453, 16
        %v2605 = vpop.permute.xlu0 %2604
        %2606 = vrot.lane.b32.xlu0 %v2458, 16
        %v2607 = vpop.permute.xlu0 %2606
        %2608 = vrot.lane.b32.xlu0 %v2463, 16
        %v2609 = vpop.permute.xlu0 %2608
        %2610 = vrot.lane.b32.xlu0 %v2468, 16
        %v2611 = vpop.permute.xlu0 %2610
        %2612 = vrot.lane.b32.xlu0 %v2473, 16
        %v2613 = vpop.permute.xlu0 %2612
        %2614 = vrot.lane.b32.xlu0 %v2478, 16
        %v2615 = vpop.permute.xlu0 %2614
        %2616 = vrot.lane.b32.xlu0 %v2483, 16
        %v2617 = vpop.permute.xlu0 %2616
        %2618 = vrot.lane.b32.xlu0 %v2488, 16
        %v2619 = vpop.permute.xlu0 %2618
        %2620 = vrot.lane.b32.xlu0 %v2493, 16
        %v2621 = vpop.permute.xlu0 %2620
        %2622 = vrot.lane.b32.xlu0 %v2498, 16
        %v2623 = vpop.permute.xlu0 %2622
        %2624 = vrot.lane.b32.xlu0 %v2503, 16
        %v2625 = vpop.permute.xlu0 %2624
        %2626 = vrot.lane.b32.xlu0 %v2508, 16
        %v2627 = vpop.permute.xlu0 %2626
        %2628 = vrot.lane.b32.xlu0 %v2513, 16
        %v2629 = vpop.permute.xlu0 %2628
        %2630 = vrot.lane.b32.xlu0 %v2518, 16
        %v2631 = vpop.permute.xlu0 %2630
        %2632 = vrot.lane.b32.xlu0 %v2523, 16
        %v2633 = vpop.permute.xlu0 %2632
        %2634 = vrot.lane.b32.xlu0 %v2528, 16
        %v2635 = vpop.permute.xlu0 %2634
        %2636 = vrot.lane.b32.xlu0 %v2533, 16
        %v2637 = vpop.permute.xlu0 %2636
        %2638 = vrot.lane.b32.xlu0 %v2538, 16
        %v2639 = vpop.permute.xlu0 %2638
        %2640 = vrot.lane.b32.xlu0 %v2543, 16
        %v2641 = vpop.permute.xlu0 %2640
        %vm2674 = vcmask 195712
        %2675 = vst.msk [vmem:[%s765 + $0x1] sm:$0xff] %vm2674, %v2579
        %2676 = vst.msk [vmem:[%s765 + $0x9] sm:$0xff] %vm2674, %v2581
        %2677 = vst.msk [vmem:[%s765 + $0x19] sm:$0xff] %vm2674, %v2583
        %2678 = vst.msk [vmem:[%s765 + $0x21] sm:$0xff] %vm2674, %v2585
        %2679 = vst.msk [vmem:[%s765 + $0x31] sm:$0xff] %vm2674, %v2587
        %2680 = vst.msk [vmem:[%s765 + $0x39] sm:$0xff] %vm2674, %v2589
        %2681 = vst.msk [vmem:[%s765 + $0x49] sm:$0xff] %vm2674, %v2591
        %2682 = vst.msk [vmem:[%s765 + $0x51] sm:$0xff] %vm2674, %v2593
        %2683 = vst.msk [vmem:[%s765 + $0x61] sm:$0xff] %vm2674, %v2595
        %2684 = vst.msk [vmem:[%s765 + $0x69] sm:$0xff] %vm2674, %v2597
        %2685 = vst.msk [vmem:[%s765 + $0x79] sm:$0xff] %vm2674, %v2599
        %2686 = vst.msk [vmem:[%s765 + $0x81] sm:$0xff] %vm2674, %v2601
        %2687 = vst.msk [vmem:[%s765 + $0x91] sm:$0xff] %vm2674, %v2603
        %2688 = vst.msk [vmem:[%s765 + $0x99] sm:$0xff] %vm2674, %v2605
        %2689 = vst.msk [vmem:[%s765 + $0xa9] sm:$0xff] %vm2674, %v2607
        %2690 = vst.msk [vmem:[%s765 + $0xb1] sm:$0xff] %vm2674, %v2609
        %2691 = vst.msk [vmem:[%s765 + $0xc1] sm:$0xff] %vm2674, %v2611
        %2692 = vst.msk [vmem:[%s765 + $0xc9] sm:$0xff] %vm2674, %v2613
        %2693 = vst.msk [vmem:[%s765 + $0xd9] sm:$0xff] %vm2674, %v2615
        %2694 = vst.msk [vmem:[%s765 + $0xe1] sm:$0xff] %vm2674, %v2617
        %2695 = vst.msk [vmem:[%s765 + $0xf1] sm:$0xff] %vm2674, %v2619
        %2696 = vst.msk [vmem:[%s765 + $0xf9] sm:$0xff] %vm2674, %v2621
        %2697 = vst.msk [vmem:[%s765 + $0x109] sm:$0xff] %vm2674, %v2623
        %2698 = vst.msk [vmem:[%s765 + $0x111] sm:$0xff] %vm2674, %v2625
        %2699 = vst.msk [vmem:[%s765 + $0x121] sm:$0xff] %vm2674, %v2627
        %2700 = vst.msk [vmem:[%s765 + $0x129] sm:$0xff] %vm2674, %v2629
        %2701 = vst.msk [vmem:[%s765 + $0x139] sm:$0xff] %vm2674, %v2631
        %2702 = vst.msk [vmem:[%s765 + $0x141] sm:$0xff] %vm2674, %v2633
        %2703 = vst.msk [vmem:[%s765 + $0x151] sm:$0xff] %vm2674, %v2635
        %2704 = vst.msk [vmem:[%s765 + $0x159] sm:$0xff] %vm2674, %v2637
        %2705 = vst.msk [vmem:[%s765 + $0x169] sm:$0xff] %vm2674, %v2639
        %2706 = vst.msk [vmem:[%s765 + $0x171] sm:$0xff] %vm2674, %v2641
        %v2707 = vld [vmem:[#allocation2] sm:$0xff]
        %v2708 = vld [vmem:[#allocation2 + $0x8] sm:$0xff]
        %v2709 = vld [vmem:[#allocation2 + $0x10] sm:$0x3]
        %v2710 = vld [vmem:[#allocation2 + $0x18] sm:$0xff]
        %v2711 = vld [vmem:[#allocation2 + $0x20] sm:$0xff]
        %v2712 = vld [vmem:[#allocation2 + $0x28] sm:$0x3]
        %v2713 = vld [vmem:[#allocation2 + $0x30] sm:$0xff]
        %v2714 = vld [vmem:[#allocation2 + $0x38] sm:$0xff]
        %v2715 = vld [vmem:[#allocation2 + $0x40] sm:$0x3]
        %v2716 = vld [vmem:[#allocation2 + $0x48] sm:$0xff]
        %v2717 = vld [vmem:[#allocation2 + $0x50] sm:$0xff]
        %v2718 = vld [vmem:[#allocation2 + $0x58] sm:$0x3]
        %v2719 = vld [vmem:[#allocation2 + $0x60] sm:$0xff]
        %v2720 = vld [vmem:[#allocation2 + $0x68] sm:$0xff]
        %v2721 = vld [vmem:[#allocation2 + $0x70] sm:$0x3]
        %v2722 = vld [vmem:[#allocation2 + $0x78] sm:$0xff]
        %v2723 = vld [vmem:[#allocation2 + $0x80] sm:$0xff]
        %v2724 = vld [vmem:[#allocation2 + $0x88] sm:$0x3]
        %v2725 = vld [vmem:[#allocation2 + $0x90] sm:$0xff]
        %v2726 = vld [vmem:[#allocation2 + $0x98] sm:$0xff]
        %v2727 = vld [vmem:[#allocation2 + $0xa0] sm:$0x3]
        %v2728 = vld [vmem:[#allocation2 + $0xa8] sm:$0xff]
        %v2729 = vld [vmem:[#allocation2 + $0xb0] sm:$0xff]
        %v2730 = vld [vmem:[#allocation2 + $0xb8] sm:$0x3]
        %v2731 = vld [vmem:[#allocation2 + $0xc0] sm:$0xff]
        %v2732 = vld [vmem:[#allocation2 + $0xc8] sm:$0xff]
        %v2733 = vld [vmem:[#allocation2 + $0xd0] sm:$0x3]
        %v2734 = vld [vmem:[#allocation2 + $0xd8] sm:$0xff]
        %v2735 = vld [vmem:[#allocation2 + $0xe0] sm:$0xff]
        %v2736 = vld [vmem:[#allocation2 + $0xe8] sm:$0x3]
        %v2737 = vld [vmem:[#allocation2 + $0xf0] sm:$0xff]
        %v2738 = vld [vmem:[#allocation2 + $0xf8] sm:$0xff]
        %v2739 = vld [vmem:[#allocation2 + $0x100] sm:$0x3]
        %v2740 = vld [vmem:[#allocation2 + $0x108] sm:$0xff]
        %v2741 = vld [vmem:[#allocation2 + $0x110] sm:$0xff]
        %v2742 = vld [vmem:[#allocation2 + $0x118] sm:$0x3]
        %v2743 = vld [vmem:[#allocation2 + $0x120] sm:$0xff]
        %v2744 = vld [vmem:[#allocation2 + $0x128] sm:$0xff]
        %v2745 = vld [vmem:[#allocation2 + $0x130] sm:$0x3]
        %v2746 = vld [vmem:[#allocation2 + $0x138] sm:$0xff]
        %v2747 = vld [vmem:[#allocation2 + $0x140] sm:$0xff]
        %v2748 = vld [vmem:[#allocation2 + $0x148] sm:$0x3]
        %v2749 = vld [vmem:[#allocation2 + $0x150] sm:$0xff]
        %v2750 = vld [vmem:[#allocation2 + $0x158] sm:$0xff]
        %v2751 = vld [vmem:[#allocation2 + $0x160] sm:$0x3]
        %v2752 = vld [vmem:[#allocation2 + $0x168] sm:$0xff]
        %v2753 = vld [vmem:[#allocation2 + $0x170] sm:$0xff]
        %v2754 = vld [vmem:[#allocation2 + $0x178] sm:$0x3]
        %v2755 = vld [vmem:[#allocation2 + $0x180] sm:$0xff]
        %v2756 = vld [vmem:[#allocation2 + $0x188] sm:$0xff]
        %v2757 = vld [vmem:[#allocation2 + $0x190] sm:$0x3]
        %v2758 = vld [vmem:[#allocation2 + $0x198] sm:$0xff]
        %v2759 = vld [vmem:[#allocation2 + $0x1a0] sm:$0xff]
        %v2760 = vld [vmem:[#allocation2 + $0x1a8] sm:$0x3]
        %v2761 = vld [vmem:[%s5] sm:$0x1]
        %v2763 = vlaneseq
        %v2764 = vshrl.u32 %v2763, 7
        %v2765 = vsub.s32 0, %v2764
        %v2766 = vrot.slane %v2761, %v2765
        %v2768 = vmul.f32 %v2707, %v2766
        %v2769 = vmul.f32 %v2708, %v2766
        %v2770 = vmul.f32 %v2709, %v2766
        %v2771 = vmul.f32 %v2710, %v2766
        %v2772 = vmul.f32 %v2711, %v2766
        %v2773 = vmul.f32 %v2712, %v2766
        %v2774 = vmul.f32 %v2713, %v2766
        %v2775 = vmul.f32 %v2714, %v2766
        %v2776 = vmul.f32 %v2715, %v2766
        %v2777 = vmul.f32 %v2716, %v2766
        %v2778 = vmul.f32 %v2717, %v2766
        %v2779 = vmul.f32 %v2718, %v2766
        %v2780 = vmul.f32 %v2719, %v2766
        %v2781 = vmul.f32 %v2720, %v2766
        %v2782 = vmul.f32 %v2721, %v2766
        %v2783 = vmul.f32 %v2722, %v2766
        %v2784 = vmul.f32 %v2723, %v2766
        %v2785 = vmul.f32 %v2724, %v2766
        %v2786 = vmul.f32 %v2725, %v2766
        %v2787 = vmul.f32 %v2726, %v2766
        %v2788 = vmul.f32 %v2727, %v2766
        %v2789 = vmul.f32 %v2728, %v2766
        %v2790 = vmul.f32 %v2729, %v2766
        %v2791 = vmul.f32 %v2730, %v2766
        %v2792 = vmul.f32 %v2731, %v2766
        %v2793 = vmul.f32 %v2732, %v2766
        %v2794 = vmul.f32 %v2733, %v2766
        %v2795 = vmul.f32 %v2734, %v2766
        %v2796 = vmul.f32 %v2735, %v2766
        %v2797 = vmul.f32 %v2736, %v2766
        %v2798 = vmul.f32 %v2737, %v2766
        %v2799 = vmul.f32 %v2738, %v2766
        %v2800 = vmul.f32 %v2739, %v2766
        %v2801 = vmul.f32 %v2740, %v2766
        %v2802 = vmul.f32 %v2741, %v2766
        %v2803 = vmul.f32 %v2742, %v2766
        %v2804 = vmul.f32 %v2743, %v2766
        %v2805 = vmul.f32 %v2744, %v2766
        %v2806 = vmul.f32 %v2745, %v2766
        %v2807 = vmul.f32 %v2746, %v2766
        %v2808 = vmul.f32 %v2747, %v2766
        %v2809 = vmul.f32 %v2748, %v2766
        %v2810 = vmul.f32 %v2749, %v2766
        %v2811 = vmul.f32 %v2750, %v2766
        %v2812 = vmul.f32 %v2751, %v2766
        %v2813 = vmul.f32 %v2752, %v2766
        %v2814 = vmul.f32 %v2753, %v2766
        %v2815 = vmul.f32 %v2754, %v2766
        %v2816 = vmul.f32 %v2755, %v2766
        %v2817 = vmul.f32 %v2756, %v2766
        %v2818 = vmul.f32 %v2757, %v2766
        %v2819 = vmul.f32 %v2758, %v2766
        %v2820 = vmul.f32 %v2759, %v2766
        %v2821 = vmul.f32 %v2760, %v2766
        %v2822 = vld [vmem:[%s6] sm:$0x1]
        %v2824 = vlaneseq
        %v2825 = vshrl.u32 %v2824, 7
        %v2826 = vsub.s32 0, %v2825
        %v2827 = vrot.slane %v2822, %v2826
        %v2829 = vadd.f32 %v2768, %v2827
        %v2830 = vadd.f32 %v2769, %v2827
        %v2831 = vadd.f32 %v2770, %v2827
        %v2832 = vadd.f32 %v2771, %v2827
        %v2833 = vadd.f32 %v2772, %v2827
        %v2834 = vadd.f32 %v2773, %v2827
        %v2835 = vadd.f32 %v2774, %v2827
        %v2836 = vadd.f32 %v2775, %v2827
        %v2837 = vadd.f32 %v2776, %v2827
        %v2838 = vadd.f32 %v2777, %v2827
        %v2839 = vadd.f32 %v2778, %v2827
        %v2840 = vadd.f32 %v2779, %v2827
        %v2841 = vadd.f32 %v2780, %v2827
        %v2842 = vadd.f32 %v2781, %v2827
        %v2843 = vadd.f32 %v2782, %v2827
        %v2844 = vadd.f32 %v2783, %v2827
        %v2845 = vadd.f32 %v2784, %v2827
        %v2846 = vadd.f32 %v2785, %v2827
        %v2847 = vadd.f32 %v2786, %v2827
        %v2848 = vadd.f32 %v2787, %v2827
        %v2849 = vadd.f32 %v2788, %v2827
        %v2850 = vadd.f32 %v2789, %v2827
        %v2851 = vadd.f32 %v2790, %v2827
        %v2852 = vadd.f32 %v2791, %v2827
        %v2853 = vadd.f32 %v2792, %v2827
        %v2854 = vadd.f32 %v2793, %v2827
        %v2855 = vadd.f32 %v2794, %v2827
        %v2856 = vadd.f32 %v2795, %v2827
        %v2857 = vadd.f32 %v2796, %v2827
        %v2858 = vadd.f32 %v2797, %v2827
        %v2859 = vadd.f32 %v2798, %v2827
        %v2860 = vadd.f32 %v2799, %v2827
        %v2861 = vadd.f32 %v2800, %v2827
        %v2862 = vadd.f32 %v2801, %v2827
        %v2863 = vadd.f32 %v2802, %v2827
        %v2864 = vadd.f32 %v2803, %v2827
        %v2865 = vadd.f32 %v2804, %v2827
        %v2866 = vadd.f32 %v2805, %v2827
        %v2867 = vadd.f32 %v2806, %v2827
        %v2868 = vadd.f32 %v2807, %v2827
        %v2869 = vadd.f32 %v2808, %v2827
        %v2870 = vadd.f32 %v2809, %v2827
        %v2871 = vadd.f32 %v2810, %v2827
        %v2872 = vadd.f32 %v2811, %v2827
        %v2873 = vadd.f32 %v2812, %v2827
        %v2874 = vadd.f32 %v2813, %v2827
        %v2875 = vadd.f32 %v2814, %v2827
        %v2876 = vadd.f32 %v2815, %v2827
        %v2877 = vadd.f32 %v2816, %v2827
        %v2878 = vadd.f32 %v2817, %v2827
        %v2879 = vadd.f32 %v2818, %v2827
        %v2880 = vadd.f32 %v2819, %v2827
        %v2881 = vadd.f32 %v2820, %v2827
        %v2882 = vadd.f32 %v2821, %v2827
        %v2883 = vmax.f32 %v2829, 0.0
        %v2884 = vmax.f32 %v2830, 0.0
        %v2885 = vmax.f32 %v2831, 0.0
        %v2886 = vmax.f32 %v2832, 0.0
        %v2887 = vmax.f32 %v2833, 0.0
        %v2888 = vmax.f32 %v2834, 0.0
        %v2889 = vmax.f32 %v2835, 0.0
        %v2890 = vmax.f32 %v2836, 0.0
        %v2891 = vmax.f32 %v2837, 0.0
        %v2892 = vmax.f32 %v2838, 0.0
        %v2893 = vmax.f32 %v2839, 0.0
        %v2894 = vmax.f32 %v2840, 0.0
        %v2895 = vmax.f32 %v2841, 0.0
        %v2896 = vmax.f32 %v2842, 0.0
        %v2897 = vmax.f32 %v2843, 0.0
        %v2898 = vmax.f32 %v2844, 0.0
        %v2899 = vmax.f32 %v2845, 0.0
        %v2900 = vmax.f32 %v2846, 0.0
        %v2901 = vmax.f32 %v2847, 0.0
        %v2902 = vmax.f32 %v2848, 0.0
        %v2903 = vmax.f32 %v2849, 0.0
        %v2904 = vmax.f32 %v2850, 0.0
        %v2905 = vmax.f32 %v2851, 0.0
        %v2906 = vmax.f32 %v2852, 0.0
        %v2907 = vmax.f32 %v2853, 0.0
        %v2908 = vmax.f32 %v2854, 0.0
        %v2909 = vmax.f32 %v2855, 0.0
        %v2910 = vmax.f32 %v2856, 0.0
        %v2911 = vmax.f32 %v2857, 0.0
        %v2912 = vmax.f32 %v2858, 0.0
        %v2913 = vmax.f32 %v2859, 0.0
        %v2914 = vmax.f32 %v2860, 0.0
        %v2915 = vmax.f32 %v2861, 0.0
        %v2916 = vmax.f32 %v2862, 0.0
        %v2917 = vmax.f32 %v2863, 0.0
        %v2918 = vmax.f32 %v2864, 0.0
        %v2919 = vmax.f32 %v2865, 0.0
        %v2920 = vmax.f32 %v2866, 0.0
        %v2921 = vmax.f32 %v2867, 0.0
        %v2922 = vmax.f32 %v2868, 0.0
        %v2923 = vmax.f32 %v2869, 0.0
        %v2924 = vmax.f32 %v2870, 0.0
        %v2925 = vmax.f32 %v2871, 0.0
        %v2926 = vmax.f32 %v2872, 0.0
        %v2927 = vmax.f32 %v2873, 0.0
        %v2928 = vmax.f32 %v2874, 0.0
        %v2929 = vmax.f32 %v2875, 0.0
        %v2930 = vmax.f32 %v2876, 0.0
        %v2931 = vmax.f32 %v2877, 0.0
        %v2932 = vmax.f32 %v2878, 0.0
        %v2933 = vmax.f32 %v2879, 0.0
        %v2934 = vmax.f32 %v2880, 0.0
        %v2935 = vmax.f32 %v2881, 0.0
        %v2936 = vmax.f32 %v2882, 0.0
        %v2937 = vsel %vm1035, %v2883, 0.0
        %v2938 = vsel %vm1036, %v2884, 0.0
        %v2939 = vsel %vm1037, %v2885, 0.0
        %v2940 = vsel %vm1038, %v2886, 0.0
        %v2941 = vsel %vm1039, %v2887, 0.0
        %v2942 = vsel %vm1040, %v2888, 0.0
        %v2943 = vsel %vm1038, %v2889, 0.0
        %v2944 = vsel %vm1039, %v2890, 0.0
        %v2945 = vsel %vm1040, %v2891, 0.0
        %v2946 = vsel %vm1038, %v2892, 0.0
        %v2947 = vsel %vm1039, %v2893, 0.0
        %v2948 = vsel %vm1040, %v2894, 0.0
        %v2949 = vsel %vm1038, %v2895, 0.0
        %v2950 = vsel %vm1039, %v2896, 0.0
        %v2951 = vsel %vm1040, %v2897, 0.0
        %v2952 = vsel %vm1038, %v2898, 0.0
        %v2953 = vsel %vm1039, %v2899, 0.0
        %v2954 = vsel %vm1040, %v2900, 0.0
        %v2955 = vsel %vm1038, %v2901, 0.0
        %v2956 = vsel %vm1039, %v2902, 0.0
        %v2957 = vsel %vm1040, %v2903, 0.0
        %v2958 = vsel %vm1038, %v2904, 0.0
        %v2959 = vsel %vm1039, %v2905, 0.0
        %v2960 = vsel %vm1040, %v2906, 0.0
        %v2961 = vsel %vm1038, %v2907, 0.0
        %v2962 = vsel %vm1039, %v2908, 0.0
        %v2963 = vsel %vm1040, %v2909, 0.0
        %v2964 = vsel %vm1038, %v2910, 0.0
        %v2965 = vsel %vm1039, %v2911, 0.0
        %v2966 = vsel %vm1040, %v2912, 0.0
        %v2967 = vsel %vm1038, %v2913, 0.0
        %v2968 = vsel %vm1039, %v2914, 0.0
        %v2969 = vsel %vm1040, %v2915, 0.0
        %v2970 = vsel %vm1038, %v2916, 0.0
        %v2971 = vsel %vm1039, %v2917, 0.0
        %v2972 = vsel %vm1040, %v2918, 0.0
        %v2973 = vsel %vm1038, %v2919, 0.0
        %v2974 = vsel %vm1039, %v2920, 0.0
        %v2975 = vsel %vm1040, %v2921, 0.0
        %v2976 = vsel %vm1038, %v2922, 0.0
        %v2977 = vsel %vm1039, %v2923, 0.0
        %v2978 = vsel %vm1040, %v2924, 0.0
        %v2979 = vsel %vm1038, %v2925, 0.0
        %v2980 = vsel %vm1039, %v2926, 0.0
        %v2981 = vsel %vm1040, %v2927, 0.0
        %v2982 = vsel %vm1038, %v2928, 0.0
        %v2983 = vsel %vm1039, %v2929, 0.0
        %v2984 = vsel %vm1040, %v2930, 0.0
        %v2985 = vsel %vm1038, %v2931, 0.0
        %v2986 = vsel %vm1039, %v2932, 0.0
        %v2987 = vsel %vm1040, %v2933, 0.0
        %v2988 = vsel %vm1035, %v2934, 0.0
        %v2989 = vsel %vm1036, %v2935, 0.0
        %v2990 = vsel %vm1037, %v2936, 0.0
        %v3039 = vrot.slane %v2937, 1
        %v3040 = vrot.slane %v2938, 1
        %v3041 = vsel %vm1143, %v3039, %v3040
        %v3042 = vrot.slane %v2939, 1
        %v3043 = vsel %vm1143, %v3040, %v3042
        %v3044 = vrot.slane %v2940, 1
        %v3045 = vrot.slane %v2941, 1
        %v3046 = vsel %vm1143, %v3044, %v3045
        %v3047 = vrot.slane %v2942, 1
        %v3048 = vsel %vm1143, %v3045, %v3047
        %v3049 = vrot.slane %v2943, 1
        %v3050 = vrot.slane %v2944, 1
        %v3051 = vsel %vm1143, %v3049, %v3050
        %v3052 = vrot.slane %v2945, 1
        %v3053 = vsel %vm1143, %v3050, %v3052
        %v3054 = vrot.slane %v2946, 1
        %v3055 = vrot.slane %v2947, 1
        %v3056 = vsel %vm1143, %v3054, %v3055
        %v3057 = vrot.slane %v2948, 1
        %v3058 = vsel %vm1143, %v3055, %v3057
        %v3059 = vrot.slane %v2949, 1
        %v3060 = vrot.slane %v2950, 1
        %v3061 = vsel %vm1143, %v3059, %v3060
        %v3062 = vrot.slane %v2951, 1
        %v3063 = vsel %vm1143, %v3060, %v3062
        %v3064 = vrot.slane %v2952, 1
        %v3065 = vrot.slane %v2953, 1
        %v3066 = vsel %vm1143, %v3064, %v3065
        %v3067 = vrot.slane %v2954, 1
        %v3068 = vsel %vm1143, %v3065, %v3067
        %v3069 = vrot.slane %v2955, 1
        %v3070 = vrot.slane %v2956, 1
        %v3071 = vsel %vm1143, %v3069, %v3070
        %v3072 = vrot.slane %v2957, 1
        %v3073 = vsel %vm1143, %v3070, %v3072
        %v3074 = vrot.slane %v2958, 1
        %v3075 = vrot.slane %v2959, 1
        %v3076 = vsel %vm1143, %v3074, %v3075
        %v3077 = vrot.slane %v2960, 1
        %v3078 = vsel %vm1143, %v3075, %v3077
        %v3079 = vrot.slane %v2961, 1
        %v3080 = vrot.slane %v2962, 1
        %v3081 = vsel %vm1143, %v3079, %v3080
        %v3082 = vrot.slane %v2963, 1
        %v3083 = vsel %vm1143, %v3080, %v3082
        %v3084 = vrot.slane %v2964, 1
        %v3085 = vrot.slane %v2965, 1
        %v3086 = vsel %vm1143, %v3084, %v3085
        %v3087 = vrot.slane %v2966, 1
        %v3088 = vsel %vm1143, %v3085, %v3087
        %v3089 = vrot.slane %v2967, 1
        %v3090 = vrot.slane %v2968, 1
        %v3091 = vsel %vm1143, %v3089, %v3090
        %v3092 = vrot.slane %v2969, 1
        %v3093 = vsel %vm1143, %v3090, %v3092
        %v3094 = vrot.slane %v2970, 1
        %v3095 = vrot.slane %v2971, 1
        %v3096 = vsel %vm1143, %v3094, %v3095
        %v3097 = vrot.slane %v2972, 1
        %v3098 = vsel %vm1143, %v3095, %v3097
        %v3099 = vrot.slane %v2973, 1
        %v3100 = vrot.slane %v2974, 1
        %v3101 = vsel %vm1143, %v3099, %v3100
        %v3102 = vrot.slane %v2975, 1
        %v3103 = vsel %vm1143, %v3100, %v3102
        %v3104 = vrot.slane %v2976, 1
        %v3105 = vrot.slane %v2977, 1
        %v3106 = vsel %vm1143, %v3104, %v3105
        %v3107 = vrot.slane %v2978, 1
        %v3108 = vsel %vm1143, %v3105, %v3107
        %v3109 = vrot.slane %v2979, 1
        %v3110 = vrot.slane %v2980, 1
        %v3111 = vsel %vm1143, %v3109, %v3110
        %v3112 = vrot.slane %v2981, 1
        %v3113 = vsel %vm1143, %v3110, %v3112
        %v3114 = vrot.slane %v2982, 1
        %v3115 = vrot.slane %v2983, 1
        %v3116 = vsel %vm1143, %v3114, %v3115
        %v3117 = vrot.slane %v2984, 1
        %v3118 = vsel %vm1143, %v3115, %v3117
        %3119 = vrot.lane.b32.xlu0 %v3041, 24
        %v3120 = vpop.permute.xlu0 %3119
        %3121 = vrot.lane.b32.xlu0 %v3043, 24
        %v3122 = vpop.permute.xlu0 %3121
        %3123 = vrot.lane.b32.xlu0 %v3046, 24
        %v3124 = vpop.permute.xlu0 %3123
        %3125 = vrot.lane.b32.xlu0 %v3048, 24
        %v3126 = vpop.permute.xlu0 %3125
        %3127 = vrot.lane.b32.xlu0 %v3051, 24
        %v3128 = vpop.permute.xlu0 %3127
        %3129 = vrot.lane.b32.xlu0 %v3053, 24
        %v3130 = vpop.permute.xlu0 %3129
        %3131 = vrot.lane.b32.xlu0 %v3056, 24
        %v3132 = vpop.permute.xlu0 %3131
        %3133 = vrot.lane.b32.xlu0 %v3058, 24
        %v3134 = vpop.permute.xlu0 %3133
        %3135 = vrot.lane.b32.xlu0 %v3061, 24
        %v3136 = vpop.permute.xlu0 %3135
        %3137 = vrot.lane.b32.xlu0 %v3063, 24
        %v3138 = vpop.permute.xlu0 %3137
        %3139 = vrot.lane.b32.xlu0 %v3066, 24
        %v3140 = vpop.permute.xlu0 %3139
        %3141 = vrot.lane.b32.xlu0 %v3068, 24
        %v3142 = vpop.permute.xlu0 %3141
        %3143 = vrot.lane.b32.xlu0 %v3071, 24
        %v3144 = vpop.permute.xlu0 %3143
        %3145 = vrot.lane.b32.xlu0 %v3073, 24
        %v3146 = vpop.permute.xlu0 %3145
        %3147 = vrot.lane.b32.xlu0 %v3076, 24
        %v3148 = vpop.permute.xlu0 %3147
        %3149 = vrot.lane.b32.xlu0 %v3078, 24
        %v3150 = vpop.permute.xlu0 %3149
        %3151 = vrot.lane.b32.xlu0 %v3081, 24
        %v3152 = vpop.permute.xlu0 %3151
        %3153 = vrot.lane.b32.xlu0 %v3083, 24
        %v3154 = vpop.permute.xlu0 %3153
        %3155 = vrot.lane.b32.xlu0 %v3086, 24
        %v3156 = vpop.permute.xlu0 %3155
        %3157 = vrot.lane.b32.xlu0 %v3088, 24
        %v3158 = vpop.permute.xlu0 %3157
        %3159 = vrot.lane.b32.xlu0 %v3091, 24
        %v3160 = vpop.permute.xlu0 %3159
        %3161 = vrot.lane.b32.xlu0 %v3093, 24
        %v3162 = vpop.permute.xlu0 %3161
        %3163 = vrot.lane.b32.xlu0 %v3096, 24
        %v3164 = vpop.permute.xlu0 %3163
        %3165 = vrot.lane.b32.xlu0 %v3098, 24
        %v3166 = vpop.permute.xlu0 %3165
        %3167 = vrot.lane.b32.xlu0 %v3101, 24
        %v3168 = vpop.permute.xlu0 %3167
        %3169 = vrot.lane.b32.xlu0 %v3103, 24
        %v3170 = vpop.permute.xlu0 %3169
        %3171 = vrot.lane.b32.xlu0 %v3106, 24
        %v3172 = vpop.permute.xlu0 %3171
        %3173 = vrot.lane.b32.xlu0 %v3108, 24
        %v3174 = vpop.permute.xlu0 %3173
        %3175 = vrot.lane.b32.xlu0 %v3111, 24
        %v3176 = vpop.permute.xlu0 %3175
        %3177 = vrot.lane.b32.xlu0 %v3113, 24
        %v3178 = vpop.permute.xlu0 %3177
        %3179 = vrot.lane.b32.xlu0 %v3116, 24
        %v3180 = vpop.permute.xlu0 %3179
        %3181 = vrot.lane.b32.xlu0 %v3118, 24
        %v3182 = vpop.permute.xlu0 %3181
        %v3215 = vrot.slane %v2937, 2
        %v3216 = vrot.slane %v2938, 2
        %v3217 = vsel %vm1320, %v3215, %v3216
        %v3218 = vrot.slane %v2939, 2
        %v3219 = vsel %vm1320, %v3216, %v3218
        %v3220 = vrot.slane %v2940, 2
        %v3221 = vrot.slane %v2941, 2
        %v3222 = vsel %vm1320, %v3220, %v3221
        %v3223 = vrot.slane %v2942, 2
        %v3224 = vsel %vm1320, %v3221, %v3223
        %v3225 = vrot.slane %v2943, 2
        %v3226 = vrot.slane %v2944, 2
        %v3227 = vsel %vm1320, %v3225, %v3226
        %v3228 = vrot.slane %v2945, 2
        %v3229 = vsel %vm1320, %v3226, %v3228
        %v3230 = vrot.slane %v2946, 2
        %v3231 = vrot.slane %v2947, 2
        %v3232 = vsel %vm1320, %v3230, %v3231
        %v3233 = vrot.slane %v2948, 2
        %v3234 = vsel %vm1320, %v3231, %v3233
        %v3235 = vrot.slane %v2949, 2
        %v3236 = vrot.slane %v2950, 2
        %v3237 = vsel %vm1320, %v3235, %v3236
        %v3238 = vrot.slane %v2951, 2
        %v3239 = vsel %vm1320, %v3236, %v3238
        %v3240 = vrot.slane %v2952, 2
        %v3241 = vrot.slane %v2953, 2
        %v3242 = vsel %vm1320, %v3240, %v3241
        %v3243 = vrot.slane %v2954, 2
        %v3244 = vsel %vm1320, %v3241, %v3243
        %v3245 = vrot.slane %v2955, 2
        %v3246 = vrot.slane %v2956, 2
        %v3247 = vsel %vm1320, %v3245, %v3246
        %v3248 = vrot.slane %v2957, 2
        %v3249 = vsel %vm1320, %v3246, %v3248
        %v3250 = vrot.slane %v2958, 2
        %v3251 = vrot.slane %v2959, 2
        %v3252 = vsel %vm1320, %v3250, %v3251
        %v3253 = vrot.slane %v2960, 2
        %v3254 = vsel %vm1320, %v3251, %v3253
        %v3255 = vrot.slane %v2961, 2
        %v3256 = vrot.slane %v2962, 2
        %v3257 = vsel %vm1320, %v3255, %v3256
        %v3258 = vrot.slane %v2963, 2
        %v3259 = vsel %vm1320, %v3256, %v3258
        %v3260 = vrot.slane %v2964, 2
        %v3261 = vrot.slane %v2965, 2
        %v3262 = vsel %vm1320, %v3260, %v3261
        %v3263 = vrot.slane %v2966, 2
        %v3264 = vsel %vm1320, %v3261, %v3263
        %v3265 = vrot.slane %v2967, 2
        %v3266 = vrot.slane %v2968, 2
        %v3267 = vsel %vm1320, %v3265, %v3266
        %v3268 = vrot.slane %v2969, 2
        %v3269 = vsel %vm1320, %v3266, %v3268
        %v3270 = vrot.slane %v2970, 2
        %v3271 = vrot.slane %v2971, 2
        %v3272 = vsel %vm1320, %v3270, %v3271
        %v3273 = vrot.slane %v2972, 2
        %v3274 = vsel %vm1320, %v3271, %v3273
        %v3275 = vrot.slane %v2973, 2
        %v3276 = vrot.slane %v2974, 2
        %v3277 = vsel %vm1320, %v3275, %v3276
        %v3278 = vrot.slane %v2975, 2
        %v3279 = vsel %vm1320, %v3276, %v3278
        %v3280 = vrot.slane %v2976, 2
        %v3281 = vrot.slane %v2977, 2
        %v3282 = vsel %vm1320, %v3280, %v3281
        %v3283 = vrot.slane %v2978, 2
        %v3284 = vsel %vm1320, %v3281, %v3283
        %v3285 = vrot.slane %v2979, 2
        %v3286 = vrot.slane %v2980, 2
        %v3287 = vsel %vm1320, %v3285, %v3286
        %v3288 = vrot.slane %v2981, 2
        %v3289 = vsel %vm1320, %v3286, %v3288
        %v3290 = vrot.slane %v2982, 2
        %v3291 = vrot.slane %v2983, 2
        %v3292 = vsel %vm1320, %v3290, %v3291
        %v3293 = vrot.slane %v2984, 2
        %v3294 = vsel %vm1320, %v3291, %v3293
        %3295 = vrot.lane.b32.xlu0 %v3217, 48
        %v3296 = vpop.permute.xlu0 %3295
        %3297 = vrot.lane.b32.xlu0 %v3219, 48
        %v3298 = vpop.permute.xlu0 %3297
        %3299 = vrot.lane.b32.xlu0 %v3222, 48
        %v3300 = vpop.permute.xlu0 %3299
        %3301 = vrot.lane.b32.xlu0 %v3224, 48
        %v3302 = vpop.permute.xlu0 %3301
        %3303 = vrot.lane.b32.xlu0 %v3227, 48
        %v3304 = vpop.permute.xlu0 %3303
        %3305 = vrot.lane.b32.xlu0 %v3229, 48
        %v3306 = vpop.permute.xlu0 %3305
        %3307 = vrot.lane.b32.xlu0 %v3232, 48
        %v3308 = vpop.permute.xlu0 %3307
        %3309 = vrot.lane.b32.xlu0 %v3234, 48
        %v3310 = vpop.permute.xlu0 %3309
        %3311 = vrot.lane.b32.xlu0 %v3237, 48
        %v3312 = vpop.permute.xlu0 %3311
        %3313 = vrot.lane.b32.xlu0 %v3239, 48
        %v3314 = vpop.permute.xlu0 %3313
        %3315 = vrot.lane.b32.xlu0 %v3242, 48
        %v3316 = vpop.permute.xlu0 %3315
        %3317 = vrot.lane.b32.xlu0 %v3244, 48
        %v3318 = vpop.permute.xlu0 %3317
        %3319 = vrot.lane.b32.xlu0 %v3247, 48
        %v3320 = vpop.permute.xlu0 %3319
        %3321 = vrot.lane.b32.xlu0 %v3249, 48
        %v3322 = vpop.permute.xlu0 %3321
        %3323 = vrot.lane.b32.xlu0 %v3252, 48
        %v3324 = vpop.permute.xlu0 %3323
        %3325 = vrot.lane.b32.xlu0 %v3254, 48
        %v3326 = vpop.permute.xlu0 %3325
        %3327 = vrot.lane.b32.xlu0 %v3257, 48
        %v3328 = vpop.permute.xlu0 %3327
        %3329 = vrot.lane.b32.xlu0 %v3259, 48
        %v3330 = vpop.permute.xlu0 %3329
        %3331 = vrot.lane.b32.xlu0 %v3262, 48
        %v3332 = vpop.permute.xlu0 %3331
        %3333 = vrot.lane.b32.xlu0 %v3264, 48
        %v3334 = vpop.permute.xlu0 %3333
        %3335 = vrot.lane.b32.xlu0 %v3267, 48
        %v3336 = vpop.permute.xlu0 %3335
        %3337 = vrot.lane.b32.xlu0 %v3269, 48
        %v3338 = vpop.permute.xlu0 %3337
        %3339 = vrot.lane.b32.xlu0 %v3272, 48
        %v3340 = vpop.permute.xlu0 %3339
        %3341 = vrot.lane.b32.xlu0 %v3274, 48
        %v3342 = vpop.permute.xlu0 %3341
        %3343 = vrot.lane.b32.xlu0 %v3277, 48
        %v3344 = vpop.permute.xlu0 %3343
        %3345 = vrot.lane.b32.xlu0 %v3279, 48
        %v3346 = vpop.permute.xlu0 %3345
        %3347 = vrot.lane.b32.xlu0 %v3282, 48
        %v3348 = vpop.permute.xlu0 %3347
        %3349 = vrot.lane.b32.xlu0 %v3284, 48
        %v3350 = vpop.permute.xlu0 %3349
        %3351 = vrot.lane.b32.xlu0 %v3287, 48
        %v3352 = vpop.permute.xlu0 %3351
        %3353 = vrot.lane.b32.xlu0 %v3289, 48
        %v3354 = vpop.permute.xlu0 %3353
        %3355 = vrot.lane.b32.xlu0 %v3292, 48
        %v3356 = vpop.permute.xlu0 %3355
        %3357 = vrot.lane.b32.xlu0 %v3294, 48
        %v3358 = vpop.permute.xlu0 %3357
        %3393 = vrot.lane.b32.xlu0 %v2940, 72
        %v3394 = vpop.permute.xlu0 %3393
        %3395 = vrot.lane.b32.xlu0 %v2941, 72
        %v3396 = vpop.permute.xlu0 %3395
        %3397 = vrot.lane.b32.xlu0 %v2943, 72
        %v3398 = vpop.permute.xlu0 %3397
        %3399 = vrot.lane.b32.xlu0 %v2944, 72
        %v3400 = vpop.permute.xlu0 %3399
        %3401 = vrot.lane.b32.xlu0 %v2946, 72
        %v3402 = vpop.permute.xlu0 %3401
        %3403 = vrot.lane.b32.xlu0 %v2947, 72
        %v3404 = vpop.permute.xlu0 %3403
        %3405 = vrot.lane.b32.xlu0 %v2949, 72
        %v3406 = vpop.permute.xlu0 %3405
        %3407 = vrot.lane.b32.xlu0 %v2950, 72
        %v3408 = vpop.permute.xlu0 %3407
        %3409 = vrot.lane.b32.xlu0 %v2952, 72
        %v3410 = vpop.permute.xlu0 %3409
        %3411 = vrot.lane.b32.xlu0 %v2953, 72
        %v3412 = vpop.permute.xlu0 %3411
        %3413 = vrot.lane.b32.xlu0 %v2955, 72
        %v3414 = vpop.permute.xlu0 %3413
        %3415 = vrot.lane.b32.xlu0 %v2956, 72
        %v3416 = vpop.permute.xlu0 %3415
        %3417 = vrot.lane.b32.xlu0 %v2958, 72
        %v3418 = vpop.permute.xlu0 %3417
        %3419 = vrot.lane.b32.xlu0 %v2959, 72
        %v3420 = vpop.permute.xlu0 %3419
        %3421 = vrot.lane.b32.xlu0 %v2961, 72
        %v3422 = vpop.permute.xlu0 %3421
        %3423 = vrot.lane.b32.xlu0 %v2962, 72
        %v3424 = vpop.permute.xlu0 %3423
        %3425 = vrot.lane.b32.xlu0 %v2964, 72
        %v3426 = vpop.permute.xlu0 %3425
        %3427 = vrot.lane.b32.xlu0 %v2965, 72
        %v3428 = vpop.permute.xlu0 %3427
        %3429 = vrot.lane.b32.xlu0 %v2967, 72
        %v3430 = vpop.permute.xlu0 %3429
        %3431 = vrot.lane.b32.xlu0 %v2968, 72
        %v3432 = vpop.permute.xlu0 %3431
        %3433 = vrot.lane.b32.xlu0 %v2970, 72
        %v3434 = vpop.permute.xlu0 %3433
        %3435 = vrot.lane.b32.xlu0 %v2971, 72
        %v3436 = vpop.permute.xlu0 %3435
        %3437 = vrot.lane.b32.xlu0 %v2973, 72
        %v3438 = vpop.permute.xlu0 %3437
        %3439 = vrot.lane.b32.xlu0 %v2974, 72
        %v3440 = vpop.permute.xlu0 %3439
        %3441 = vrot.lane.b32.xlu0 %v2976, 72
        %v3442 = vpop.permute.xlu0 %3441
        %3443 = vrot.lane.b32.xlu0 %v2977, 72
        %v3444 = vpop.permute.xlu0 %3443
        %3445 = vrot.lane.b32.xlu0 %v2979, 72
        %v3446 = vpop.permute.xlu0 %3445
        %3447 = vrot.lane.b32.xlu0 %v2980, 72
        %v3448 = vpop.permute.xlu0 %3447
        %3449 = vrot.lane.b32.xlu0 %v2982, 72
        %v3450 = vpop.permute.xlu0 %3449
        %3451 = vrot.lane.b32.xlu0 %v2983, 72
        %v3452 = vpop.permute.xlu0 %3451
        %3453 = vrot.lane.b32.xlu0 %v2985, 72
        %v3454 = vpop.permute.xlu0 %3453
        %3455 = vrot.lane.b32.xlu0 %v2986, 72
        %v3456 = vpop.permute.xlu0 %3455
        %v3490 = vrot.slane %v2985, 1
        %v3491 = vrot.slane %v2986, 1
        %v3492 = vsel %vm1143, %v3490, %v3491
        %v3493 = vrot.slane %v2987, 1
        %v3494 = vsel %vm1143, %v3491, %v3493
        %3495 = vrot.lane.b32.xlu0 %v3046, 96
        %v3496 = vpop.permute.xlu0 %3495
        %3497 = vrot.lane.b32.xlu0 %v3048, 96
        %v3498 = vpop.permute.xlu0 %3497
        %3499 = vrot.lane.b32.xlu0 %v3051, 96
        %v3500 = vpop.permute.xlu0 %3499
        %3501 = vrot.lane.b32.xlu0 %v3053, 96
        %v3502 = vpop.permute.xlu0 %3501
        %3503 = vrot.lane.b32.xlu0 %v3056, 96
        %v3504 = vpop.permute.xlu0 %3503
        %3505 = vrot.lane.b32.xlu0 %v3058, 96
        %v3506 = vpop.permute.xlu0 %3505
        %3507 = vrot.lane.b32.xlu0 %v3061, 96
        %v3508 = vpop.permute.xlu0 %3507
        %3509 = vrot.lane.b32.xlu0 %v3063, 96
        %v3510 = vpop.permute.xlu0 %3509
        %3511 = vrot.lane.b32.xlu0 %v3066, 96
        %v3512 = vpop.permute.xlu0 %3511
        %3513 = vrot.lane.b32.xlu0 %v3068, 96
        %v3514 = vpop.permute.xlu0 %3513
        %3515 = vrot.lane.b32.xlu0 %v3071, 96
        %v3516 = vpop.permute.xlu0 %3515
        %3517 = vrot.lane.b32.xlu0 %v3073, 96
        %v3518 = vpop.permute.xlu0 %3517
        %3519 = vrot.lane.b32.xlu0 %v3076, 96
        %v3520 = vpop.permute.xlu0 %3519
        %3521 = vrot.lane.b32.xlu0 %v3078, 96
        %v3522 = vpop.permute.xlu0 %3521
        %3523 = vrot.lane.b32.xlu0 %v3081, 96
        %v3524 = vpop.permute.xlu0 %3523
        %3525 = vrot.lane.b32.xlu0 %v3083, 96
        %v3526 = vpop.permute.xlu0 %3525
        %3527 = vrot.lane.b32.xlu0 %v3086, 96
        %v3528 = vpop.permute.xlu0 %3527
        %3529 = vrot.lane.b32.xlu0 %v3088, 96
        %v3530 = vpop.permute.xlu0 %3529
        %3531 = vrot.lane.b32.xlu0 %v3091, 96
        %v3532 = vpop.permute.xlu0 %3531
        %3533 = vrot.lane.b32.xlu0 %v3093, 96
        %v3534 = vpop.permute.xlu0 %3533
        %3535 = vrot.lane.b32.xlu0 %v3096, 96
        %v3536 = vpop.permute.xlu0 %3535
        %3537 = vrot.lane.b32.xlu0 %v3098, 96
        %v3538 = vpop.permute.xlu0 %3537
        %3539 = vrot.lane.b32.xlu0 %v3101, 96
        %v3540 = vpop.permute.xlu0 %3539
        %3541 = vrot.lane.b32.xlu0 %v3103, 96
        %v3542 = vpop.permute.xlu0 %3541
        %3543 = vrot.lane.b32.xlu0 %v3106, 96
        %v3544 = vpop.permute.xlu0 %3543
        %3545 = vrot.lane.b32.xlu0 %v3108, 96
        %v3546 = vpop.permute.xlu0 %3545
        %3547 = vrot.lane.b32.xlu0 %v3111, 96
        %v3548 = vpop.permute.xlu0 %3547
        %3549 = vrot.lane.b32.xlu0 %v3113, 96
        %v3550 = vpop.permute.xlu0 %3549
        %3551 = vrot.lane.b32.xlu0 %v3116, 96
        %v3552 = vpop.permute.xlu0 %3551
        %3553 = vrot.lane.b32.xlu0 %v3118, 96
        %v3554 = vpop.permute.xlu0 %3553
        %3555 = vrot.lane.b32.xlu0 %v3492, 96
        %v3556 = vpop.permute.xlu0 %3555
        %3557 = vrot.lane.b32.xlu0 %v3494, 96
        %v3558 = vpop.permute.xlu0 %3557
        %v3591 = vrot.slane %v2985, 2
        %v3592 = vrot.slane %v2986, 2
        %v3593 = vsel %vm1320, %v3591, %v3592
        %v3594 = vrot.slane %v2987, 2
        %v3595 = vsel %vm1320, %v3592, %v3594
        %3596 = vrot.lane.b32.xlu0 %v3222, 120
        %v3597 = vpop.permute.xlu0 %3596
        %3598 = vrot.lane.b32.xlu0 %v3224, 120
        %v3599 = vpop.permute.xlu0 %3598
        %3600 = vrot.lane.b32.xlu0 %v3227, 120
        %v3601 = vpop.permute.xlu0 %3600
        %3602 = vrot.lane.b32.xlu0 %v3229, 120
        %v3603 = vpop.permute.xlu0 %3602
        %3604 = vrot.lane.b32.xlu0 %v3232, 120
        %v3605 = vpop.permute.xlu0 %3604
        %3606 = vrot.lane.b32.xlu0 %v3234, 120
        %v3607 = vpop.permute.xlu0 %3606
        %3608 = vrot.lane.b32.xlu0 %v3237, 120
        %v3609 = vpop.permute.xlu0 %3608
        %3610 = vrot.lane.b32.xlu0 %v3239, 120
        %v3611 = vpop.permute.xlu0 %3610
        %3612 = vrot.lane.b32.xlu0 %v3242, 120
        %v3613 = vpop.permute.xlu0 %3612
        %3614 = vrot.lane.b32.xlu0 %v3244, 120
        %v3615 = vpop.permute.xlu0 %3614
        %3616 = vrot.lane.b32.xlu0 %v3247, 120
        %v3617 = vpop.permute.xlu0 %3616
        %3618 = vrot.lane.b32.xlu0 %v3249, 120
        %v3619 = vpop.permute.xlu0 %3618
        %3620 = vrot.lane.b32.xlu0 %v3252, 120
        %v3621 = vpop.permute.xlu0 %3620
        %3622 = vrot.lane.b32.xlu0 %v3254, 120
        %v3623 = vpop.permute.xlu0 %3622
        %3624 = vrot.lane.b32.xlu0 %v3257, 120
        %v3625 = vpop.permute.xlu0 %3624
        %3626 = vrot.lane.b32.xlu0 %v3259, 120
        %v3627 = vpop.permute.xlu0 %3626
        %3628 = vrot.lane.b32.xlu0 %v3262, 120
        %v3629 = vpop.permute.xlu0 %3628
        %3630 = vrot.lane.b32.xlu0 %v3264, 120
        %v3631 = vpop.permute.xlu0 %3630
        %3632 = vrot.lane.b32.xlu0 %v3267, 120
        %v3633 = vpop.permute.xlu0 %3632
        %3634 = vrot.lane.b32.xlu0 %v3269, 120
        %v3635 = vpop.permute.xlu0 %3634
        %3636 = vrot.lane.b32.xlu0 %v3272, 120
        %v3637 = vpop.permute.xlu0 %3636
        %3638 = vrot.lane.b32.xlu0 %v3274, 120
        %v3639 = vpop.permute.xlu0 %3638
        %3640 = vrot.lane.b32.xlu0 %v3277, 120
        %v3641 = vpop.permute.xlu0 %3640
        %3642 = vrot.lane.b32.xlu0 %v3279, 120
        %v3643 = vpop.permute.xlu0 %3642
        %3644 = vrot.lane.b32.xlu0 %v3282, 120
        %v3645 = vpop.permute.xlu0 %3644
        %3646 = vrot.lane.b32.xlu0 %v3284, 120
        %v3647 = vpop.permute.xlu0 %3646
        %3648 = vrot.lane.b32.xlu0 %v3287, 120
        %v3649 = vpop.permute.xlu0 %3648
        %3650 = vrot.lane.b32.xlu0 %v3289, 120
        %v3651 = vpop.permute.xlu0 %3650
        %3652 = vrot.lane.b32.xlu0 %v3292, 120
        %v3653 = vpop.permute.xlu0 %3652
        %3654 = vrot.lane.b32.xlu0 %v3294, 120
        %v3655 = vpop.permute.xlu0 %3654
        %3656 = vrot.lane.b32.xlu0 %v3593, 120
        %v3657 = vpop.permute.xlu0 %3656
        %3658 = vrot.lane.b32.xlu0 %v3595, 120
        %v3659 = vpop.permute.xlu0 %3658
        %3694 = vrot.lane.b32.xlu0 %v2943, 16
        %v3695 = vpop.permute.xlu0 %3694
        %3696 = vrot.lane.b32.xlu0 %v2944, 16
        %v3697 = vpop.permute.xlu0 %3696
        %3698 = vrot.lane.b32.xlu0 %v2946, 16
        %v3699 = vpop.permute.xlu0 %3698
        %3700 = vrot.lane.b32.xlu0 %v2947, 16
        %v3701 = vpop.permute.xlu0 %3700
        %3702 = vrot.lane.b32.xlu0 %v2949, 16
        %v3703 = vpop.permute.xlu0 %3702
        %3704 = vrot.lane.b32.xlu0 %v2950, 16
        %v3705 = vpop.permute.xlu0 %3704
        %3706 = vrot.lane.b32.xlu0 %v2952, 16
        %v3707 = vpop.permute.xlu0 %3706
        %3708 = vrot.lane.b32.xlu0 %v2953, 16
        %v3709 = vpop.permute.xlu0 %3708
        %3710 = vrot.lane.b32.xlu0 %v2955, 16
        %v3711 = vpop.permute.xlu0 %3710
        %3712 = vrot.lane.b32.xlu0 %v2956, 16
        %v3713 = vpop.permute.xlu0 %3712
        %3714 = vrot.lane.b32.xlu0 %v2958, 16
        %v3715 = vpop.permute.xlu0 %3714
        %3716 = vrot.lane.b32.xlu0 %v2959, 16
        %v3717 = vpop.permute.xlu0 %3716
        %3718 = vrot.lane.b32.xlu0 %v2961, 16
        %v3719 = vpop.permute.xlu0 %3718
        %3720 = vrot.lane.b32.xlu0 %v2962, 16
        %v3721 = vpop.permute.xlu0 %3720
        %3722 = vrot.lane.b32.xlu0 %v2964, 16
        %v3723 = vpop.permute.xlu0 %3722
        %3724 = vrot.lane.b32.xlu0 %v2965, 16
        %v3725 = vpop.permute.xlu0 %3724
        %3726 = vrot.lane.b32.xlu0 %v2967, 16
        %v3727 = vpop.permute.xlu0 %3726
        %3728 = vrot.lane.b32.xlu0 %v2968, 16
        %v3729 = vpop.permute.xlu0 %3728
        %3730 = vrot.lane.b32.xlu0 %v2970, 16
        %v3731 = vpop.permute.xlu0 %3730
        %3732 = vrot.lane.b32.xlu0 %v2971, 16
        %v3733 = vpop.permute.xlu0 %3732
        %3734 = vrot.lane.b32.xlu0 %v2973, 16
        %v3735 = vpop.permute.xlu0 %3734
        %3736 = vrot.lane.b32.xlu0 %v2974, 16
        %v3737 = vpop.permute.xlu0 %3736
        %3738 = vrot.lane.b32.xlu0 %v2976, 16
        %v3739 = vpop.permute.xlu0 %3738
        %3740 = vrot.lane.b32.xlu0 %v2977, 16
        %v3741 = vpop.permute.xlu0 %3740
        %3742 = vrot.lane.b32.xlu0 %v2979, 16
        %v3743 = vpop.permute.xlu0 %3742
        %3744 = vrot.lane.b32.xlu0 %v2980, 16
        %v3745 = vpop.permute.xlu0 %3744
        %3746 = vrot.lane.b32.xlu0 %v2982, 16
        %v3747 = vpop.permute.xlu0 %3746
        %3748 = vrot.lane.b32.xlu0 %v2983, 16
        %v3749 = vpop.permute.xlu0 %3748
        %3750 = vrot.lane.b32.xlu0 %v2985, 16
        %v3751 = vpop.permute.xlu0 %3750
        %3752 = vrot.lane.b32.xlu0 %v2986, 16
        %v3753 = vpop.permute.xlu0 %3752
        %3754 = vrot.lane.b32.xlu0 %v2988, 16
        %v3755 = vpop.permute.xlu0 %3754
        %3756 = vrot.lane.b32.xlu0 %v2989, 16
        %v3757 = vpop.permute.xlu0 %3756
        %v3791 = vrot.slane %v2988, 1
        %v3792 = vrot.slane %v2989, 1
        %v3793 = vsel %vm1143, %v3791, %v3792
        %v3794 = vrot.slane %v2990, 1
        %v3795 = vsel %vm1143, %v3792, %v3794
        %3796 = vrot.lane.b32.xlu0 %v3051, 40
        %v3797 = vpop.permute.xlu0 %3796
        %3798 = vrot.lane.b32.xlu0 %v3053, 40
        %v3799 = vpop.permute.xlu0 %3798
        %3800 = vrot.lane.b32.xlu0 %v3056, 40
        %v3801 = vpop.permute.xlu0 %3800
        %3802 = vrot.lane.b32.xlu0 %v3058, 40
        %v3803 = vpop.permute.xlu0 %3802
        %3804 = vrot.lane.b32.xlu0 %v3061, 40
        %v3805 = vpop.permute.xlu0 %3804
        %3806 = vrot.lane.b32.xlu0 %v3063, 40
        %v3807 = vpop.permute.xlu0 %3806
        %3808 = vrot.lane.b32.xlu0 %v3066, 40
        %v3809 = vpop.permute.xlu0 %3808
        %3810 = vrot.lane.b32.xlu0 %v3068, 40
        %v3811 = vpop.permute.xlu0 %3810
        %3812 = vrot.lane.b32.xlu0 %v3071, 40
        %v3813 = vpop.permute.xlu0 %3812
        %3814 = vrot.lane.b32.xlu0 %v3073, 40
        %v3815 = vpop.permute.xlu0 %3814
        %3816 = vrot.lane.b32.xlu0 %v3076, 40
        %v3817 = vpop.permute.xlu0 %3816
        %3818 = vrot.lane.b32.xlu0 %v3078, 40
        %v3819 = vpop.permute.xlu0 %3818
        %3820 = vrot.lane.b32.xlu0 %v3081, 40
        %v3821 = vpop.permute.xlu0 %3820
        %3822 = vrot.lane.b32.xlu0 %v3083, 40
        %v3823 = vpop.permute.xlu0 %3822
        %3824 = vrot.lane.b32.xlu0 %v3086, 40
        %v3825 = vpop.permute.xlu0 %3824
        %3826 = vrot.lane.b32.xlu0 %v3088, 40
        %v3827 = vpop.permute.xlu0 %3826
        %3828 = vrot.lane.b32.xlu0 %v3091, 40
        %v3829 = vpop.permute.xlu0 %3828
        %3830 = vrot.lane.b32.xlu0 %v3093, 40
        %v3831 = vpop.permute.xlu0 %3830
        %3832 = vrot.lane.b32.xlu0 %v3096, 40
        %v3833 = vpop.permute.xlu0 %3832
        %3834 = vrot.lane.b32.xlu0 %v3098, 40
        %v3835 = vpop.permute.xlu0 %3834
        %3836 = vrot.lane.b32.xlu0 %v3101, 40
        %v3837 = vpop.permute.xlu0 %3836
        %3838 = vrot.lane.b32.xlu0 %v3103, 40
        %v3839 = vpop.permute.xlu0 %3838
        %3840 = vrot.lane.b32.xlu0 %v3106, 40
        %v3841 = vpop.permute.xlu0 %3840
        %3842 = vrot.lane.b32.xlu0 %v3108, 40
        %v3843 = vpop.permute.xlu0 %3842
        %3844 = vrot.lane.b32.xlu0 %v3111, 40
        %v3845 = vpop.permute.xlu0 %3844
        %3846 = vrot.lane.b32.xlu0 %v3113, 40
        %v3847 = vpop.permute.xlu0 %3846
        %3848 = vrot.lane.b32.xlu0 %v3116, 40
        %v3849 = vpop.permute.xlu0 %3848
        %3850 = vrot.lane.b32.xlu0 %v3118, 40
        %v3851 = vpop.permute.xlu0 %3850
        %3852 = vrot.lane.b32.xlu0 %v3492, 40
        %v3853 = vpop.permute.xlu0 %3852
        %3854 = vrot.lane.b32.xlu0 %v3494, 40
        %v3855 = vpop.permute.xlu0 %3854
        %3856 = vrot.lane.b32.xlu0 %v3793, 40
        %v3857 = vpop.permute.xlu0 %3856
        %3858 = vrot.lane.b32.xlu0 %v3795, 40
        %v3859 = vpop.permute.xlu0 %3858
        %v3892 = vrot.slane %v2988, 2
        %v3893 = vrot.slane %v2989, 2
        %v3894 = vsel %vm1320, %v3892, %v3893
        %v3895 = vrot.slane %v2990, 2
        %v3896 = vsel %vm1320, %v3893, %v3895
        %3897 = vrot.lane.b32.xlu0 %v3227, 64
        %v3898 = vpop.permute.xlu0 %3897
        %3899 = vrot.lane.b32.xlu0 %v3229, 64
        %v3900 = vpop.permute.xlu0 %3899
        %3901 = vrot.lane.b32.xlu0 %v3232, 64
        %v3902 = vpop.permute.xlu0 %3901
        %3903 = vrot.lane.b32.xlu0 %v3234, 64
        %v3904 = vpop.permute.xlu0 %3903
        %3905 = vrot.lane.b32.xlu0 %v3237, 64
        %v3906 = vpop.permute.xlu0 %3905
        %3907 = vrot.lane.b32.xlu0 %v3239, 64
        %v3908 = vpop.permute.xlu0 %3907
        %3909 = vrot.lane.b32.xlu0 %v3242, 64
        %v3910 = vpop.permute.xlu0 %3909
        %3911 = vrot.lane.b32.xlu0 %v3244, 64
        %v3912 = vpop.permute.xlu0 %3911
        %3913 = vrot.lane.b32.xlu0 %v3247, 64
        %v3914 = vpop.permute.xlu0 %3913
        %3915 = vrot.lane.b32.xlu0 %v3249, 64
        %v3916 = vpop.permute.xlu0 %3915
        %3917 = vrot.lane.b32.xlu0 %v3252, 64
        %v3918 = vpop.permute.xlu0 %3917
        %3919 = vrot.lane.b32.xlu0 %v3254, 64
        %v3920 = vpop.permute.xlu0 %3919
        %3921 = vrot.lane.b32.xlu0 %v3257, 64
        %v3922 = vpop.permute.xlu0 %3921
        %3923 = vrot.lane.b32.xlu0 %v3259, 64
        %v3924 = vpop.permute.xlu0 %3923
        %3925 = vrot.lane.b32.xlu0 %v3262, 64
        %v3926 = vpop.permute.xlu0 %3925
        %3927 = vrot.lane.b32.xlu0 %v3264, 64
        %v3928 = vpop.permute.xlu0 %3927
        %3929 = vrot.lane.b32.xlu0 %v3267, 64
        %v3930 = vpop.permute.xlu0 %3929
        %3931 = vrot.lane.b32.xlu0 %v3269, 64
        %v3932 = vpop.permute.xlu0 %3931
        %3933 = vrot.lane.b32.xlu0 %v3272, 64
        %v3934 = vpop.permute.xlu0 %3933
        %3935 = vrot.lane.b32.xlu0 %v3274, 64
        %v3936 = vpop.permute.xlu0 %3935
        %3937 = vrot.lane.b32.xlu0 %v3277, 64
        %v3938 = vpop.permute.xlu0 %3937
        %3939 = vrot.lane.b32.xlu0 %v3279, 64
        %v3940 = vpop.permute.xlu0 %3939
        %3941 = vrot.lane.b32.xlu0 %v3282, 64
        %v3942 = vpop.permute.xlu0 %3941
        %3943 = vrot.lane.b32.xlu0 %v3284, 64
        %v3944 = vpop.permute.xlu0 %3943
        %3945 = vrot.lane.b32.xlu0 %v3287, 64
        %v3946 = vpop.permute.xlu0 %3945
        %3947 = vrot.lane.b32.xlu0 %v3289, 64
        %v3948 = vpop.permute.xlu0 %3947
        %3949 = vrot.lane.b32.xlu0 %v3292, 64
        %v3950 = vpop.permute.xlu0 %3949
        %3951 = vrot.lane.b32.xlu0 %v3294, 64
        %v3952 = vpop.permute.xlu0 %3951
        %3953 = vrot.lane.b32.xlu0 %v3593, 64
        %v3954 = vpop.permute.xlu0 %3953
        %3955 = vrot.lane.b32.xlu0 %v3595, 64
        %v3956 = vpop.permute.xlu0 %3955
        %3957 = vrot.lane.b32.xlu0 %v3894, 64
        %v3958 = vpop.permute.xlu0 %3957
        %3959 = vrot.lane.b32.xlu0 %v3896, 64
        %v3960 = vpop.permute.xlu0 %3959
        %vm3993 = vcmask 195584
        %v3994 = vsel %vm3993, %v2937, %v3120
        %v3995 = vsel %vm3993, %v2938, %v3122
        %v3996 = vsel %vm3993, %v2940, %v3124
        %v3997 = vsel %vm3993, %v2941, %v3126
        %v3998 = vsel %vm3993, %v2943, %v3128
        %v3999 = vsel %vm3993, %v2944, %v3130
        %v4000 = vsel %vm3993, %v2946, %v3132
        %v4001 = vsel %vm3993, %v2947, %v3134
        %v4002 = vsel %vm3993, %v2949, %v3136
        %v4003 = vsel %vm3993, %v2950, %v3138
        %v4004 = vsel %vm3993, %v2952, %v3140
        %v4005 = vsel %vm3993, %v2953, %v3142
        %v4006 = vsel %vm3993, %v2955, %v3144
        %v4007 = vsel %vm3993, %v2956, %v3146
        %v4008 = vsel %vm3993, %v2958, %v3148
        %v4009 = vsel %vm3993, %v2959, %v3150
        %v4010 = vsel %vm3993, %v2961, %v3152
        %v4011 = vsel %vm3993, %v2962, %v3154
        %v4012 = vsel %vm3993, %v2964, %v3156
        %v4013 = vsel %vm3993, %v2965, %v3158
        %v4014 = vsel %vm3993, %v2967, %v3160
        %v4015 = vsel %vm3993, %v2968, %v3162
        %v4016 = vsel %vm3993, %v2970, %v3164
        %v4017 = vsel %vm3993, %v2971, %v3166
        %v4018 = vsel %vm3993, %v2973, %v3168
        %v4019 = vsel %vm3993, %v2974, %v3170
        %v4020 = vsel %vm3993, %v2976, %v3172
        %v4021 = vsel %vm3993, %v2977, %v3174
        %v4022 = vsel %vm3993, %v2979, %v3176
        %v4023 = vsel %vm3993, %v2980, %v3178
        %v4024 = vsel %vm3993, %v2982, %v3180
        %v4025 = vsel %vm3993, %v2983, %v3182
        %v4026 = vsel %vm677, %v3994, %v3296
        %v4027 = vsel %vm677, %v3995, %v3298
        %v4028 = vsel %vm677, %v3996, %v3300
        %v4029 = vsel %vm677, %v3997, %v3302
        %v4030 = vsel %vm677, %v3998, %v3304
        %v4031 = vsel %vm677, %v3999, %v3306
        %v4032 = vsel %vm677, %v4000, %v3308
        %v4033 = vsel %vm677, %v4001, %v3310
        %v4034 = vsel %vm677, %v4002, %v3312
        %v4035 = vsel %vm677, %v4003, %v3314
        %v4036 = vsel %vm677, %v4004, %v3316
        %v4037 = vsel %vm677, %v4005, %v3318
        %v4038 = vsel %vm677, %v4006, %v3320
        %v4039 = vsel %vm677, %v4007, %v3322
        %v4040 = vsel %vm677, %v4008, %v3324
        %v4041 = vsel %vm677, %v4009, %v3326
        %v4042 = vsel %vm677, %v4010, %v3328
        %v4043 = vsel %vm677, %v4011, %v3330
        %v4044 = vsel %vm677, %v4012, %v3332
        %v4045 = vsel %vm677, %v4013, %v3334
        %v4046 = vsel %vm677, %v4014, %v3336
        %v4047 = vsel %vm677, %v4015, %v3338
        %v4048 = vsel %vm677, %v4016, %v3340
        %v4049 = vsel %vm677, %v4017, %v3342
        %v4050 = vsel %vm677, %v4018, %v3344
        %v4051 = vsel %vm677, %v4019, %v3346
        %v4052 = vsel %vm677, %v4020, %v3348
        %v4053 = vsel %vm677, %v4021, %v3350
        %v4054 = vsel %vm677, %v4022, %v3352
        %v4055 = vsel %vm677, %v4023, %v3354
        %v4056 = vsel %vm677, %v4024, %v3356
        %v4057 = vsel %vm677, %v4025, %v3358
        %vm4058 = vcmask 588800
        %v4059 = vsel %vm4058, %v4026, %v3394
        %v4060 = vsel %vm4058, %v4027, %v3396
        %v4061 = vsel %vm4058, %v4028, %v3398
        %v4062 = vsel %vm4058, %v4029, %v3400
        %v4063 = vsel %vm4058, %v4030, %v3402
        %v4064 = vsel %vm4058, %v4031, %v3404
        %v4065 = vsel %vm4058, %v4032, %v3406
        %v4066 = vsel %vm4058, %v4033, %v3408
        %v4067 = vsel %vm4058, %v4034, %v3410
        %v4068 = vsel %vm4058, %v4035, %v3412
        %v4069 = vsel %vm4058, %v4036, %v3414
        %v4070 = vsel %vm4058, %v4037, %v3416
        %v4071 = vsel %vm4058, %v4038, %v3418
        %v4072 = vsel %vm4058, %v4039, %v3420
        %v4073 = vsel %vm4058, %v4040, %v3422
        %v4074 = vsel %vm4058, %v4041, %v3424
        %v4075 = vsel %vm4058, %v4042, %v3426
        %v4076 = vsel %vm4058, %v4043, %v3428
        %v4077 = vsel %vm4058, %v4044, %v3430
        %v4078 = vsel %vm4058, %v4045, %v3432
        %v4079 = vsel %vm4058, %v4046, %v3434
        %v4080 = vsel %vm4058, %v4047, %v3436
        %v4081 = vsel %vm4058, %v4048, %v3438
        %v4082 = vsel %vm4058, %v4049, %v3440
        %v4083 = vsel %vm4058, %v4050, %v3442
        %v4084 = vsel %vm4058, %v4051, %v3444
        %v4085 = vsel %vm4058, %v4052, %v3446
        %v4086 = vsel %vm4058, %v4053, %v3448
        %v4087 = vsel %vm4058, %v4054, %v3450
        %v4088 = vsel %vm4058, %v4055, %v3452
        %v4089 = vsel %vm4058, %v4056, %v3454
        %v4090 = vsel %vm4058, %v4057, %v3456
        %v4091 = vsel %vm2166, %v4059, %v3496
        %v4092 = vsel %vm2166, %v4060, %v3498
        %v4093 = vsel %vm2166, %v4061, %v3500
        %v4094 = vsel %vm2166, %v4062, %v3502
        %v4095 = vsel %vm2166, %v4063, %v3504
        %v4096 = vsel %vm2166, %v4064, %v3506
        %v4097 = vsel %vm2166, %v4065, %v3508
        %v4098 = vsel %vm2166, %v4066, %v3510
        %v4099 = vsel %vm2166, %v4067, %v3512
        %v4100 = vsel %vm2166, %v4068, %v3514
        %v4101 = vsel %vm2166, %v4069, %v3516
        %v4102 = vsel %vm2166, %v4070, %v3518
        %v4103 = vsel %vm2166, %v4071, %v3520
        %v4104 = vsel %vm2166, %v4072, %v3522
        %v4105 = vsel %vm2166, %v4073, %v3524
        %v4106 = vsel %vm2166, %v4074, %v3526
        %v4107 = vsel %vm2166, %v4075, %v3528
        %v4108 = vsel %vm2166, %v4076, %v3530
        %v4109 = vsel %vm2166, %v4077, %v3532
        %v4110 = vsel %vm2166, %v4078, %v3534
        %v4111 = vsel %vm2166, %v4079, %v3536
        %v4112 = vsel %vm2166, %v4080, %v3538
        %v4113 = vsel %vm2166, %v4081, %v3540
        %v4114 = vsel %vm2166, %v4082, %v3542
        %v4115 = vsel %vm2166, %v4083, %v3544
        %v4116 = vsel %vm2166, %v4084, %v3546
        %v4117 = vsel %vm2166, %v4085, %v3548
        %v4118 = vsel %vm2166, %v4086, %v3550
        %v4119 = vsel %vm2166, %v4087, %v3552
        %v4120 = vsel %vm2166, %v4088, %v3554
        %v4121 = vsel %vm2166, %v4089, %v3556
        %v4122 = vsel %vm2166, %v4090, %v3558
        %vm4123 = vcmask 982016
        %v4124 = vsel %vm4123, %v4091, %v3597
        %v4125 = vsel %vm4123, %v4092, %v3599
        %v4126 = vsel %vm4123, %v4093, %v3601
        %v4127 = vsel %vm4123, %v4094, %v3603
        %v4128 = vsel %vm4123, %v4095, %v3605
        %v4129 = vsel %vm4123, %v4096, %v3607
        %v4130 = vsel %vm4123, %v4097, %v3609
        %v4131 = vsel %vm4123, %v4098, %v3611
        %v4132 = vsel %vm4123, %v4099, %v3613
        %v4133 = vsel %vm4123, %v4100, %v3615
        %v4134 = vsel %vm4123, %v4101, %v3617
        %v4135 = vsel %vm4123, %v4102, %v3619
        %v4136 = vsel %vm4123, %v4103, %v3621
        %v4137 = vsel %vm4123, %v4104, %v3623
        %v4138 = vsel %vm4123, %v4105, %v3625
        %v4139 = vsel %vm4123, %v4106, %v3627
        %v4140 = vsel %vm4123, %v4107, %v3629
        %v4141 = vsel %vm4123, %v4108, %v3631
        %v4142 = vsel %vm4123, %v4109, %v3633
        %v4143 = vsel %vm4123, %v4110, %v3635
        %v4144 = vsel %vm4123, %v4111, %v3637
        %v4145 = vsel %vm4123, %v4112, %v3639
        %v4146 = vsel %vm4123, %v4113, %v3641
        %v4147 = vsel %vm4123, %v4114, %v3643
        %v4148 = vsel %vm4123, %v4115, %v3645
        %v4149 = vsel %vm4123, %v4116, %v3647
        %v4150 = vsel %vm4123, %v4117, %v3649
        %v4151 = vsel %vm4123, %v4118, %v3651
        %v4152 = vsel %vm4123, %v4119, %v3653
        %v4153 = vsel %vm4123, %v4120, %v3655
        %v4154 = vsel %vm4123, %v4121, %v3657
        %v4155 = vsel %vm4123, %v4122, %v3659
        %v4156 = vsel %vm766, %v3597, %v3695
        %v4157 = vsel %vm766, %v3599, %v3697
        %v4158 = vsel %vm766, %v3601, %v3699
        %v4159 = vsel %vm766, %v3603, %v3701
        %v4160 = vsel %vm766, %v3605, %v3703
        %v4161 = vsel %vm766, %v3607, %v3705
        %v4162 = vsel %vm766, %v3609, %v3707
        %v4163 = vsel %vm766, %v3611, %v3709
        %v4164 = vsel %vm766, %v3613, %v3711
        %v4165 = vsel %vm766, %v3615, %v3713
        %v4166 = vsel %vm766, %v3617, %v3715
        %v4167 = vsel %vm766, %v3619, %v3717
        %v4168 = vsel %vm766, %v3621, %v3719
        %v4169 = vsel %vm766, %v3623, %v3721
        %v4170 = vsel %vm766, %v3625, %v3723
        %v4171 = vsel %vm766, %v3627, %v3725
        %v4172 = vsel %vm766, %v3629, %v3727
        %v4173 = vsel %vm766, %v3631, %v3729
        %v4174 = vsel %vm766, %v3633, %v3731
        %v4175 = vsel %vm766, %v3635, %v3733
        %v4176 = vsel %vm766, %v3637, %v3735
        %v4177 = vsel %vm766, %v3639, %v3737
        %v4178 = vsel %vm766, %v3641, %v3739
        %v4179 = vsel %vm766, %v3643, %v3741
        %v4180 = vsel %vm766, %v3645, %v3743
        %v4181 = vsel %vm766, %v3647, %v3745
        %v4182 = vsel %vm766, %v3649, %v3747
        %v4183 = vsel %vm766, %v3651, %v3749
        %v4184 = vsel %vm766, %v3653, %v3751
        %v4185 = vsel %vm766, %v3655, %v3753
        %v4186 = vsel %vm766, %v3657, %v3755
        %v4187 = vsel %vm766, %v3659, %v3757
        %vm4188 = vcmask 326656
        %v4189 = vsel %vm4188, %v4156, %v3797
        %v4190 = vsel %vm4188, %v4157, %v3799
        %v4191 = vsel %vm4188, %v4158, %v3801
        %v4192 = vsel %vm4188, %v4159, %v3803
        %v4193 = vsel %vm4188, %v4160, %v3805
        %v4194 = vsel %vm4188, %v4161, %v3807
        %v4195 = vsel %vm4188, %v4162, %v3809
        %v4196 = vsel %vm4188, %v4163, %v3811
        %v4197 = vsel %vm4188, %v4164, %v3813
        %v4198 = vsel %vm4188, %v4165, %v3815
        %v4199 = vsel %vm4188, %v4166, %v3817
        %v4200 = vsel %vm4188, %v4167, %v3819
        %v4201 = vsel %vm4188, %v4168, %v3821
        %v4202 = vsel %vm4188, %v4169, %v3823
        %v4203 = vsel %vm4188, %v4170, %v3825
        %v4204 = vsel %vm4188, %v4171, %v3827
        %v4205 = vsel %vm4188, %v4172, %v3829
        %v4206 = vsel %vm4188, %v4173, %v3831
        %v4207 = vsel %vm4188, %v4174, %v3833
        %v4208 = vsel %vm4188, %v4175, %v3835
        %v4209 = vsel %vm4188, %v4176, %v3837
        %v4210 = vsel %vm4188, %v4177, %v3839
        %v4211 = vsel %vm4188, %v4178, %v3841
        %v4212 = vsel %vm4188, %v4179, %v3843
        %v4213 = vsel %vm4188, %v4180, %v3845
        %v4214 = vsel %vm4188, %v4181, %v3847
        %v4215 = vsel %vm4188, %v4182, %v3849
        %v4216 = vsel %vm4188, %v4183, %v3851
        %v4217 = vsel %vm4188, %v4184, %v3853
        %v4218 = vsel %vm4188, %v4185, %v3855
        %v4219 = vsel %vm4188, %v4186, %v3857
        %v4220 = vsel %vm4188, %v4187, %v3859
        %v4221 = vsel %vm2100, %v4189, %v3898
        %v4222 = vsel %vm2100, %v4190, %v3900
        %v4223 = vsel %vm2100, %v4191, %v3902
        %v4224 = vsel %vm2100, %v4192, %v3904
        %v4225 = vsel %vm2100, %v4193, %v3906
        %v4226 = vsel %vm2100, %v4194, %v3908
        %v4227 = vsel %vm2100, %v4195, %v3910
        %v4228 = vsel %vm2100, %v4196, %v3912
        %v4229 = vsel %vm2100, %v4197, %v3914
        %v4230 = vsel %vm2100, %v4198, %v3916
        %v4231 = vsel %vm2100, %v4199, %v3918
        %v4232 = vsel %vm2100, %v4200, %v3920
        %v4233 = vsel %vm2100, %v4201, %v3922
        %v4234 = vsel %vm2100, %v4202, %v3924
        %v4235 = vsel %vm2100, %v4203, %v3926
        %v4236 = vsel %vm2100, %v4204, %v3928
        %v4237 = vsel %vm2100, %v4205, %v3930
        %v4238 = vsel %vm2100, %v4206, %v3932
        %v4239 = vsel %vm2100, %v4207, %v3934
        %v4240 = vsel %vm2100, %v4208, %v3936
        %v4241 = vsel %vm2100, %v4209, %v3938
        %v4242 = vsel %vm2100, %v4210, %v3940
        %v4243 = vsel %vm2100, %v4211, %v3942
        %v4244 = vsel %vm2100, %v4212, %v3944
        %v4245 = vsel %vm2100, %v4213, %v3946
        %v4246 = vsel %vm2100, %v4214, %v3948
        %v4247 = vsel %vm2100, %v4215, %v3950
        %v4248 = vsel %vm2100, %v4216, %v3952
        %v4249 = vsel %vm2100, %v4217, %v3954
        %v4250 = vsel %vm2100, %v4218, %v3956
        %v4251 = vsel %vm2100, %v4219, %v3958
        %v4252 = vsel %vm2100, %v4220, %v3960
        %v4253 = vld [vmem:[%s7] sm:$0xff]
        %v4254 = vld [vmem:[%s7 + $0x8] sm:$0xff]
        %v4255 = vld [vmem:[%s7 + $0x10] sm:$0xff]
        %v4256 = vld [vmem:[%s7 + $0x18] sm:$0xff]
        %v4257 = vld [vmem:[%s7 + $0x20] sm:$0xff]
        %v4258 = vld [vmem:[%s7 + $0x28] sm:$0xff]
        %v4259 = vld [vmem:[%s7 + $0x30] sm:$0xff]
        %v4260 = vld [vmem:[%s7 + $0x38] sm:$0xff]
        %v4261 = vld [vmem:[%s7 + $0x40] sm:$0xff]
        %v4262 = vld [vmem:[%s7 + $0x48] sm:$0xff]
        %v4263 = vld [vmem:[%s7 + $0x50] sm:$0xff]
        %v4264 = vld [vmem:[%s7 + $0x58] sm:$0xff]
        %v4265 = vld [vmem:[%s7 + $0x60] sm:$0xff]
        %v4266 = vld [vmem:[%s7 + $0x68] sm:$0xff]
        %v4267 = vld [vmem:[%s7 + $0x70] sm:$0xff]
        %v4268 = vld [vmem:[%s7 + $0x78] sm:$0xff]
        %v4269 = vld [vmem:[%s7 + $0x80] sm:$0xff]
        %v4270 = vld [vmem:[%s7 + $0x88] sm:$0xff]
        %v4271 = vld [vmem:[%s7 + $0x90] sm:$0xff]
        %v4272 = vld [vmem:[%s7 + $0x98] sm:$0xff]
        %v4273 = vld [vmem:[%s7 + $0xa0] sm:$0xff]
        %v4274 = vld [vmem:[%s7 + $0xa8] sm:$0xff]
        %v4275 = vld [vmem:[%s7 + $0xb0] sm:$0xff]
        %v4276 = vld [vmem:[%s7 + $0xb8] sm:$0xff]
        %v4277 = vld [vmem:[%s7 + $0xc0] sm:$0xff]
        %v4278 = vld [vmem:[%s7 + $0xc8] sm:$0xff]
        %v4279 = vld [vmem:[%s7 + $0xd0] sm:$0xff]
        %v4280 = vld [vmem:[%s8] sm:$0x1]
        %v4282 = vlaneseq
        %v4283 = vshrl.u32 %v4282, 7
        %v4284 = vsub.s32 0, %v4283
        %v4285 = vrot.slane %v4280, %v4284
        %vm4287 = vcmask 719872
        %v4289 = vsel %vm4287, %v4221, 0
        %v4292 = vsel %vm4287, %v4222, 0
        %v4295 = vsel %vm4287, %v4223, 0
        %v4298 = vsel %vm4287, %v4224, 0
        %v4301 = vsel %vm4287, %v4225, 0
        %v4304 = vsel %vm4287, %v4226, 0
        %v4307 = vsel %vm4287, %v4227, 0
        %v4310 = vsel %vm4287, %v4228, 0
        %v4313 = vsel %vm4287, %v4229, 0
        %v4316 = vsel %vm4287, %v4230, 0
        %v4319 = vsel %vm4287, %v4231, 0
        %v4322 = vsel %vm4287, %v4232, 0
        %v4325 = vsel %vm4287, %v4233, 0
        %v4328 = vsel %vm4287, %v4234, 0
        %v4331 = vsel %vm4287, %v4235, 0
        %v4334 = vsel %vm4287, %v4236, 0
        %v4337 = vsel %vm4287, %v4237, 0
        %v4340 = vsel %vm4287, %v4238, 0
        %v4343 = vsel %vm4287, %v4239, 0
        %v4346 = vsel %vm4287, %v4240, 0
        %v4349 = vsel %vm4287, %v4241, 0
        %v4352 = vsel %vm4287, %v4242, 0
        %v4355 = vsel %vm4287, %v4243, 0
        %v4358 = vsel %vm4287, %v4244, 0
        %v4361 = vsel %vm4287, %v4245, 0
        %v4364 = vsel %vm4287, %v4246, 0
        %v4367 = vsel %vm4287, %v4247, 0
        %v4370 = vsel %vm4287, %v4248, 0
        %v4373 = vsel %vm4287, %v4249, 0
        %v4376 = vsel %vm4287, %v4250, 0
        %v4379 = vsel %vm4287, %v4251, 0
        %v4382 = vsel %vm4287, %v4252, 0
        %4384 = vmatprep.subr.mxu0 0.0
        %4385 = vmatpush1.msra.mxu0 %v4253
        %4386 = vmatprep.subr.mxu0 0.0
        %4387 = vmatpush1.msra.mxu0 %v4254
        %4388 = vmatprep.subr.mxu0 0.0
        %4389 = vmatpush1.msra.mxu0 %v4255
        %4390 = vmatprep.subr.mxu0 0.0
        %4391 = vmatpush1.msra.mxu0 %v4256
        %4392 = vmatprep.subr.mxu0 0.0
        %4393 = vmatpush1.msra.mxu0 %v4257
        %4394 = vmatprep.subr.mxu0 0.0
        %4395 = vmatpush1.msra.mxu0 %v4258
        %4396 = vmatprep.subr.mxu0 0.0
        %4397 = vmatpush1.msra.mxu0 %v4259
        %4398 = vmatprep.subr.mxu0 0.0
        %4399 = vmatpush1.msra.mxu0 %v4260
        %4400 = vmatprep.subr.mxu0 0.0
        %4401 = vmatpush1.msra.mxu0 %v4261
        %4402 = vmatprep.subr.mxu0 0.0
        %4403 = vmatpush1.msra.mxu0 %v4262
        %4404 = vmatprep.subr.mxu0 0.0
        %4405 = vmatpush1.msra.mxu0 %v4263
        %4406 = vmatprep.subr.mxu0 0.0
        %4407 = vmatpush1.msra.mxu0 %v4264
        %4408 = vmatprep.subr.mxu0 0.0
        %4409 = vmatpush1.msra.mxu0 %v4265
        %4410 = vmatprep.subr.mxu0 0.0
        %4411 = vmatpush1.msra.mxu0 %v4266
        %4412 = vmatprep.subr.mxu0 0.0
        %4413 = vmatpush1.msra.mxu0 %v4267
        %4414 = vmatprep.subr.mxu0 0.0
        %4415 = vmatpush1.msra.mxu0 %v4268
        %4416 = vmatprep.subr.mxu0 0.0
        %4417 = vmatpush1.msra.mxu0 %v4269
        %4418 = vmatprep.subr.mxu0 0.0
        %4419 = vmatpush1.msra.mxu0 %v4270
        %4420 = vmatprep.subr.mxu0 0.0
        %4421 = vmatpush1.msra.mxu0 %v4271
        %4422 = vmatprep.subr.mxu0 0.0
        %4423 = vmatpush1.msra.mxu0 %v4272
        %4424 = vmatprep.subr.mxu0 0.0
        %4425 = vmatpush1.msra.mxu0 %v4273
        %4426 = vmatprep.subr.mxu0 0.0
        %4427 = vmatpush1.msra.mxu0 %v4274
        %4428 = vmatprep.subr.mxu0 0.0
        %4429 = vmatpush1.msra.mxu0 %v4275
        %4430 = vmatprep.subr.mxu0 0.0
        %4431 = vmatpush1.msra.mxu0 %v4276
        %4432 = vmatprep.subr.mxu0 0.0
        %4433 = vmatpush1.msra.mxu0 %v4277
        %4434 = vmatprep.subr.mxu0 0.0
        %4435 = vmatpush1.msra.mxu0 %v4278
        %4436 = vmatprep.subr.mxu0 0.0
        %4437 = vmatpush1.msra.mxu0 %v4279
        %4438 = vmatprep.subr.mxu0 0.0
        %4439 = vmatpush1.msra.mxu0 0.0
        %4440 = vmatprep.subr.mxu0 0.0
        %4441 = vmatpush1.msra.mxu0 0.0
        %4442 = vmatprep.subr.mxu0 0.0
        %4443 = vmatpush1.msra.mxu0 0.0
        %4444 = vmatprep.subr.mxu0 0.0
        %4445 = vmatpush1.msra.mxu0 0.0
        %4446 = vmatprep.subr.mxu0 0.0
        %4447 = vmatpush1.msra.mxu0 0.0
        %4448 = vmatprep.mubr.f32.mxu0 %v4289
        %4449 = vmatmul.mubr.f32.gmra.mrb[0].mxu0 %v4124
        %v4450 = vpop.f32.mrb[0].mxu0
        %v4451 = vadd.f32 %v4285, %v4450
        %v4452 = vpop.f32.mrb[0].mxu0
        %4453 = vmatprep.mubr.f32.mxu0 %v4292
        %4454 = vmatmul.mubr.f32.gmra.mrb[0].mxu0 %v4125
        %v4455 = vpop.f32.mrb[0].mxu0
        %v4456 = vadd.f32 %v4285, %v4455
        %v4457 = vpop.f32.mrb[0].mxu0
        %4458 = vmatprep.mubr.f32.mxu0 %v4295
        %4459 = vmatmul.mubr.f32.gmra.mrb[0].mxu0 %v4126
        %v4460 = vpop.f32.mrb[0].mxu0
        %v4461 = vadd.f32 %v4285, %v4460
        %v4462 = vpop.f32.mrb[0].mxu0
        %4463 = vmatprep.mubr.f32.mxu0 %v4298
        %4464 = vmatmul.mubr.f32.gmra.mrb[0].mxu0 %v4127
        %v4465 = vpop.f32.mrb[0].mxu0
        %v4466 = vadd.f32 %v4285, %v4465
        %v4467 = vpop.f32.mrb[0].mxu0
        %4468 = vmatprep.mubr.f32.mxu0 %v4301
        %4469 = vmatmul.mubr.f32.gmra.mrb[0].mxu0 %v4128
        %v4470 = vpop.f32.mrb[0].mxu0
        %v4471 = vadd.f32 %v4285, %v4470
        %v4472 = vpop.f32.mrb[0].mxu0
        %4473 = vmatprep.mubr.f32.mxu0 %v4304
        %4474 = vmatmul.mubr.f32.gmra.mrb[0].mxu0 %v4129
        %v4475 = vpop.f32.mrb[0].mxu0
        %v4476 = vadd.f32 %v4285, %v4475
        %v4477 = vpop.f32.mrb[0].mxu0
        %4478 = vmatprep.mubr.f32.mxu0 %v4307
        %4479 = vmatmul.mubr.f32.gmra.mrb[0].mxu0 %v4130
        %v4480 = vpop.f32.mrb[0].mxu0
        %v4481 = vadd.f32 %v4285, %v4480
        %v4482 = vpop.f32.mrb[0].mxu0
        %4483 = vmatprep.mubr.f32.mxu0 %v4310
        %4484 = vmatmul.mubr.f32.gmra.mrb[0].mxu0 %v4131
        %v4485 = vpop.f32.mrb[0].mxu0
        %v4486 = vadd.f32 %v4285, %v4485
        %v4487 = vpop.f32.mrb[0].mxu0
        %4488 = vmatprep.mubr.f32.mxu0 %v4313
        %4489 = vmatmul.mubr.f32.gmra.mrb[0].mxu0 %v4132
        %v4490 = vpop.f32.mrb[0].mxu0
        %v4491 = vadd.f32 %v4285, %v4490
        %v4492 = vpop.f32.mrb[0].mxu0
        %4493 = vmatprep.mubr.f32.mxu0 %v4316
        %4494 = vmatmul.mubr.f32.gmra.mrb[0].mxu0 %v4133
        %v4495 = vpop.f32.mrb[0].mxu0
        %v4496 = vadd.f32 %v4285, %v4495
        %v4497 = vpop.f32.mrb[0].mxu0
        %4498 = vmatprep.mubr.f32.mxu0 %v4319
        %4499 = vmatmul.mubr.f32.gmra.mrb[0].mxu0 %v4134
        %v4500 = vpop.f32.mrb[0].mxu0
        %v4501 = vadd.f32 %v4285, %v4500
        %v4502 = vpop.f32.mrb[0].mxu0
        %4503 = vmatprep.mubr.f32.mxu0 %v4322
        %4504 = vmatmul.mubr.f32.gmra.mrb[0].mxu0 %v4135
        %v4505 = vpop.f32.mrb[0].mxu0
        %v4506 = vadd.f32 %v4285, %v4505
        %v4507 = vpop.f32.mrb[0].mxu0
        %4508 = vmatprep.mubr.f32.mxu0 %v4325
        %4509 = vmatmul.mubr.f32.gmra.mrb[0].mxu0 %v4136
        %v4510 = vpop.f32.mrb[0].mxu0
        %v4511 = vadd.f32 %v4285, %v4510
        %v4512 = vpop.f32.mrb[0].mxu0
        %4513 = vmatprep.mubr.f32.mxu0 %v4328
        %4514 = vmatmul.mubr.f32.gmra.mrb[0].mxu0 %v4137
        %v4515 = vpop.f32.mrb[0].mxu0
        %v4516 = vadd.f32 %v4285, %v4515
        %v4517 = vpop.f32.mrb[0].mxu0
        %4518 = vmatprep.mubr.f32.mxu0 %v4331
        %4519 = vmatmul.mubr.f32.gmra.mrb[0].mxu0 %v4138
        %v4520 = vpop.f32.mrb[0].mxu0
        %v4521 = vadd.f32 %v4285, %v4520
        %v4522 = vpop.f32.mrb[0].mxu0
        %4523 = vmatprep.mubr.f32.mxu0 %v4334
        %4524 = vmatmul.mubr.f32.gmra.mrb[0].mxu0 %v4139
        %v4525 = vpop.f32.mrb[0].mxu0
        %v4526 = vadd.f32 %v4285, %v4525
        %v4527 = vpop.f32.mrb[0].mxu0
        %4528 = vmatprep.mubr.f32.mxu0 %v4337
        %4529 = vmatmul.mubr.f32.gmra.mrb[0].mxu0 %v4140
        %v4530 = vpop.f32.mrb[0].mxu0
        %v4531 = vadd.f32 %v4285, %v4530
        %v4532 = vpop.f32.mrb[0].mxu0
        %4533 = vmatprep.mubr.f32.mxu0 %v4340
        %4534 = vmatmul.mubr.f32.gmra.mrb[0].mxu0 %v4141
        %v4535 = vpop.f32.mrb[0].mxu0
        %v4536 = vadd.f32 %v4285, %v4535
        %v4537 = vpop.f32.mrb[0].mxu0
        %4538 = vmatprep.mubr.f32.mxu0 %v4343
        %4539 = vmatmul.mubr.f32.gmra.mrb[0].mxu0 %v4142
        %v4540 = vpop.f32.mrb[0].mxu0
        %v4541 = vadd.f32 %v4285, %v4540
        %v4542 = vpop.f32.mrb[0].mxu0
        %4543 = vmatprep.mubr.f32.mxu0 %v4346
        %4544 = vmatmul.mubr.f32.gmra.mrb[0].mxu0 %v4143
        %v4545 = vpop.f32.mrb[0].mxu0
        %v4546 = vadd.f32 %v4285, %v4545
        %v4547 = vpop.f32.mrb[0].mxu0
        %4548 = vmatprep.mubr.f32.mxu0 %v4349
        %4549 = vmatmul.mubr.f32.gmra.mrb[0].mxu0 %v4144
        %v4550 = vpop.f32.mrb[0].mxu0
        %v4551 = vadd.f32 %v4285, %v4550
        %v4552 = vpop.f32.mrb[0].mxu0
        %4553 = vmatprep.mubr.f32.mxu0 %v4352
        %4554 = vmatmul.mubr.f32.gmra.mrb[0].mxu0 %v4145
        %v4555 = vpop.f32.mrb[0].mxu0
        %v4556 = vadd.f32 %v4285, %v4555
        %v4557 = vpop.f32.mrb[0].mxu0
        %4558 = vmatprep.mubr.f32.mxu0 %v4355
        %4559 = vmatmul.mubr.f32.gmra.mrb[0].mxu0 %v4146
        %v4560 = vpop.f32.mrb[0].mxu0
        %v4561 = vadd.f32 %v4285, %v4560
        %v4562 = vpop.f32.mrb[0].mxu0
        %4563 = vmatprep.mubr.f32.mxu0 %v4358
        %4564 = vmatmul.mubr.f32.gmra.mrb[0].mxu0 %v4147
        %v4565 = vpop.f32.mrb[0].mxu0
        %v4566 = vadd.f32 %v4285, %v4565
        %v4567 = vpop.f32.mrb[0].mxu0
        %4568 = vmatprep.mubr.f32.mxu0 %v4361
        %4569 = vmatmul.mubr.f32.gmra.mrb[0].mxu0 %v4148
        %v4570 = vpop.f32.mrb[0].mxu0
        %v4571 = vadd.f32 %v4285, %v4570
        %v4572 = vpop.f32.mrb[0].mxu0
        %4573 = vmatprep.mubr.f32.mxu0 %v4364
        %4574 = vmatmul.mubr.f32.gmra.mrb[0].mxu0 %v4149
        %v4575 = vpop.f32.mrb[0].mxu0
        %v4576 = vadd.f32 %v4285, %v4575
        %v4577 = vpop.f32.mrb[0].mxu0
        %4578 = vmatprep.mubr.f32.mxu0 %v4367
        %4579 = vmatmul.mubr.f32.gmra.mrb[0].mxu0 %v4150
        %v4580 = vpop.f32.mrb[0].mxu0
        %v4581 = vadd.f32 %v4285, %v4580
        %v4582 = vpop.f32.mrb[0].mxu0
        %4583 = vmatprep.mubr.f32.mxu0 %v4370
        %4584 = vmatmul.mubr.f32.gmra.mrb[0].mxu0 %v4151
        %v4585 = vpop.f32.mrb[0].mxu0
        %v4586 = vadd.f32 %v4285, %v4585
        %v4587 = vpop.f32.mrb[0].mxu0
        %4588 = vmatprep.mubr.f32.mxu0 %v4373
        %4589 = vmatmul.mubr.f32.gmra.mrb[0].mxu0 %v4152
        %v4590 = vpop.f32.mrb[0].mxu0
        %v4591 = vadd.f32 %v4285, %v4590
        %v4592 = vpop.f32.mrb[0].mxu0
        %4593 = vmatprep.mubr.f32.mxu0 %v4376
        %4594 = vmatmul.mubr.f32.gmra.mrb[0].mxu0 %v4153
        %v4595 = vpop.f32.mrb[0].mxu0
        %v4596 = vadd.f32 %v4285, %v4595
        %v4597 = vpop.f32.mrb[0].mxu0
        %4598 = vmatprep.mubr.f32.mxu0 %v4379
        %4599 = vmatmul.mubr.f32.gmra.mrb[0].mxu0 %v4154
        %v4600 = vpop.f32.mrb[0].mxu0
        %v4601 = vadd.f32 %v4285, %v4600
        %v4602 = vpop.f32.mrb[0].mxu0
        %4603 = vmatprep.mubr.f32.mxu0 %v4382
        %4604 = vmatmul.mubr.f32.gmra.mrb[0].mxu0 %v4155
        %v4605 = vpop.f32.mrb[0].mxu0
        %v4606 = vadd.f32 %v4285, %v4605
        %v4607 = vpop.f32.mrb[0].mxu0
        %4608 = vdwg.mxu0
        %4641 = vrot.lane.b32.xlu0 %v4451, 24
        %v4642 = vpop.permute.xlu0 %4641
        %4643 = vrot.lane.b32.xlu0 %v4456, 24
        %v4644 = vpop.permute.xlu0 %4643
        %4645 = vrot.lane.b32.xlu0 %v4461, 24
        %v4646 = vpop.permute.xlu0 %4645
        %4647 = vrot.lane.b32.xlu0 %v4466, 24
        %v4648 = vpop.permute.xlu0 %4647
        %4649 = vrot.lane.b32.xlu0 %v4471, 24
        %v4650 = vpop.permute.xlu0 %4649
        %4651 = vrot.lane.b32.xlu0 %v4476, 24
        %v4652 = vpop.permute.xlu0 %4651
        %4653 = vrot.lane.b32.xlu0 %v4481, 24
        %v4654 = vpop.permute.xlu0 %4653
        %4655 = vrot.lane.b32.xlu0 %v4486, 24
        %v4656 = vpop.permute.xlu0 %4655
        %4657 = vrot.lane.b32.xlu0 %v4491, 24
        %v4658 = vpop.permute.xlu0 %4657
        %4659 = vrot.lane.b32.xlu0 %v4496, 24
        %v4660 = vpop.permute.xlu0 %4659
        %4661 = vrot.lane.b32.xlu0 %v4501, 24
        %v4662 = vpop.permute.xlu0 %4661
        %4663 = vrot.lane.b32.xlu0 %v4506, 24
        %v4664 = vpop.permute.xlu0 %4663
        %4665 = vrot.lane.b32.xlu0 %v4511, 24
        %v4666 = vpop.permute.xlu0 %4665
        %4667 = vrot.lane.b32.xlu0 %v4516, 24
        %v4668 = vpop.permute.xlu0 %4667
        %4669 = vrot.lane.b32.xlu0 %v4521, 24
        %v4670 = vpop.permute.xlu0 %4669
        %4671 = vrot.lane.b32.xlu0 %v4526, 24
        %v4672 = vpop.permute.xlu0 %4671
        %4673 = vrot.lane.b32.xlu0 %v4531, 24
        %v4674 = vpop.permute.xlu0 %4673
        %4675 = vrot.lane.b32.xlu0 %v4536, 24
        %v4676 = vpop.permute.xlu0 %4675
        %4677 = vrot.lane.b32.xlu0 %v4541, 24
        %v4678 = vpop.permute.xlu0 %4677
        %4679 = vrot.lane.b32.xlu0 %v4546, 24
        %v4680 = vpop.permute.xlu0 %4679
        %4681 = vrot.lane.b32.xlu0 %v4551, 24
        %v4682 = vpop.permute.xlu0 %4681
        %4683 = vrot.lane.b32.xlu0 %v4556, 24
        %v4684 = vpop.permute.xlu0 %4683
        %4685 = vrot.lane.b32.xlu0 %v4561, 24
        %v4686 = vpop.permute.xlu0 %4685
        %4687 = vrot.lane.b32.xlu0 %v4566, 24
        %v4688 = vpop.permute.xlu0 %4687
        %4689 = vrot.lane.b32.xlu0 %v4571, 24
        %v4690 = vpop.permute.xlu0 %4689
        %4691 = vrot.lane.b32.xlu0 %v4576, 24
        %v4692 = vpop.permute.xlu0 %4691
        %4693 = vrot.lane.b32.xlu0 %v4581, 24
        %v4694 = vpop.permute.xlu0 %4693
        %4695 = vrot.lane.b32.xlu0 %v4586, 24
        %v4696 = vpop.permute.xlu0 %4695
        %4697 = vrot.lane.b32.xlu0 %v4591, 24
        %v4698 = vpop.permute.xlu0 %4697
        %4699 = vrot.lane.b32.xlu0 %v4596, 24
        %v4700 = vpop.permute.xlu0 %4699
        %4701 = vrot.lane.b32.xlu0 %v4601, 24
        %v4702 = vpop.permute.xlu0 %4701
        %4703 = vrot.lane.b32.xlu0 %v4606, 24
        %v4704 = vpop.permute.xlu0 %4703
        %vm4737 = vcmask 261312
        %4738 = vst.msk [vmem:[%s765 + $0x1] sm:$0xff] %vm4737, %v4642
        %4739 = vst.msk [vmem:[%s765 + $0x9] sm:$0xff] %vm4737, %v4644
        %4740 = vst.msk [vmem:[%s765 + $0x19] sm:$0xff] %vm4737, %v4646
        %4741 = vst.msk [vmem:[%s765 + $0x21] sm:$0xff] %vm4737, %v4648
        %4742 = vst.msk [vmem:[%s765 + $0x31] sm:$0xff] %vm4737, %v4650
        %4743 = vst.msk [vmem:[%s765 + $0x39] sm:$0xff] %vm4737, %v4652
        %4744 = vst.msk [vmem:[%s765 + $0x49] sm:$0xff] %vm4737, %v4654
        %4745 = vst.msk [vmem:[%s765 + $0x51] sm:$0xff] %vm4737, %v4656
        %4746 = vst.msk [vmem:[%s765 + $0x61] sm:$0xff] %vm4737, %v4658
        %4747 = vst.msk [vmem:[%s765 + $0x69] sm:$0xff] %vm4737, %v4660
        %4748 = vst.msk [vmem:[%s765 + $0x79] sm:$0xff] %vm4737, %v4662
        %4749 = vst.msk [vmem:[%s765 + $0x81] sm:$0xff] %vm4737, %v4664
        %4750 = vst.msk [vmem:[%s765 + $0x91] sm:$0xff] %vm4737, %v4666
        %4751 = vst.msk [vmem:[%s765 + $0x99] sm:$0xff] %vm4737, %v4668
        %4752 = vst.msk [vmem:[%s765 + $0xa9] sm:$0xff] %vm4737, %v4670
        %4753 = vst.msk [vmem:[%s765 + $0xb1] sm:$0xff] %vm4737, %v4672
        %4754 = vst.msk [vmem:[%s765 + $0xc1] sm:$0xff] %vm4737, %v4674
        %4755 = vst.msk [vmem:[%s765 + $0xc9] sm:$0xff] %vm4737, %v4676
        %4756 = vst.msk [vmem:[%s765 + $0xd9] sm:$0xff] %vm4737, %v4678
        %4757 = vst.msk [vmem:[%s765 + $0xe1] sm:$0xff] %vm4737, %v4680
        %4758 = vst.msk [vmem:[%s765 + $0xf1] sm:$0xff] %vm4737, %v4682
        %4759 = vst.msk [vmem:[%s765 + $0xf9] sm:$0xff] %vm4737, %v4684
        %4760 = vst.msk [vmem:[%s765 + $0x109] sm:$0xff] %vm4737, %v4686
        %4761 = vst.msk [vmem:[%s765 + $0x111] sm:$0xff] %vm4737, %v4688
        %4762 = vst.msk [vmem:[%s765 + $0x121] sm:$0xff] %vm4737, %v4690
        %4763 = vst.msk [vmem:[%s765 + $0x129] sm:$0xff] %vm4737, %v4692
        %4764 = vst.msk [vmem:[%s765 + $0x139] sm:$0xff] %vm4737, %v4694
        %4765 = vst.msk [vmem:[%s765 + $0x141] sm:$0xff] %vm4737, %v4696
        %4766 = vst.msk [vmem:[%s765 + $0x151] sm:$0xff] %vm4737, %v4698
        %4767 = vst.msk [vmem:[%s765 + $0x159] sm:$0xff] %vm4737, %v4700
        %4768 = vst.msk [vmem:[%s765 + $0x169] sm:$0xff] %vm4737, %v4702
        %4769 = vst.msk [vmem:[%s765 + $0x171] sm:$0xff] %vm4737, %v4704
        %v4770 = vld [vmem:[#allocation2] sm:$0xff]
        %v4771 = vld [vmem:[#allocation2 + $0x8] sm:$0xff]
        %v4772 = vld [vmem:[#allocation2 + $0x10] sm:$0x3]
        %v4773 = vld [vmem:[#allocation2 + $0x18] sm:$0xff]
        %v4774 = vld [vmem:[#allocation2 + $0x20] sm:$0xff]
        %v4775 = vld [vmem:[#allocation2 + $0x28] sm:$0x3]
        %v4776 = vld [vmem:[#allocation2 + $0x30] sm:$0xff]
        %v4777 = vld [vmem:[#allocation2 + $0x38] sm:$0xff]
        %v4778 = vld [vmem:[#allocation2 + $0x40] sm:$0x3]
        %v4779 = vld [vmem:[#allocation2 + $0x48] sm:$0xff]
        %v4780 = vld [vmem:[#allocation2 + $0x50] sm:$0xff]
        %v4781 = vld [vmem:[#allocation2 + $0x58] sm:$0x3]
        %v4782 = vld [vmem:[#allocation2 + $0x60] sm:$0xff]
        %v4783 = vld [vmem:[#allocation2 + $0x68] sm:$0xff]
        %v4784 = vld [vmem:[#allocation2 + $0x70] sm:$0x3]
        %v4785 = vld [vmem:[#allocation2 + $0x78] sm:$0xff]
        %v4786 = vld [vmem:[#allocation2 + $0x80] sm:$0xff]
        %v4787 = vld [vmem:[#allocation2 + $0x88] sm:$0x3]
        %v4788 = vld [vmem:[#allocation2 + $0x90] sm:$0xff]
        %v4789 = vld [vmem:[#allocation2 + $0x98] sm:$0xff]
        %v4790 = vld [vmem:[#allocation2 + $0xa0] sm:$0x3]
        %v4791 = vld [vmem:[#allocation2 + $0xa8] sm:$0xff]
        %v4792 = vld [vmem:[#allocation2 + $0xb0] sm:$0xff]
        %v4793 = vld [vmem:[#allocation2 + $0xb8] sm:$0x3]
        %v4794 = vld [vmem:[#allocation2 + $0xc0] sm:$0xff]
        %v4795 = vld [vmem:[#allocation2 + $0xc8] sm:$0xff]
        %v4796 = vld [vmem:[#allocation2 + $0xd0] sm:$0x3]
        %v4797 = vld [vmem:[#allocation2 + $0xd8] sm:$0xff]
        %v4798 = vld [vmem:[#allocation2 + $0xe0] sm:$0xff]
        %v4799 = vld [vmem:[#allocation2 + $0xe8] sm:$0x3]
        %v4800 = vld [vmem:[#allocation2 + $0xf0] sm:$0xff]
        %v4801 = vld [vmem:[#allocation2 + $0xf8] sm:$0xff]
        %v4802 = vld [vmem:[#allocation2 + $0x100] sm:$0x3]
        %v4803 = vld [vmem:[#allocation2 + $0x108] sm:$0xff]
        %v4804 = vld [vmem:[#allocation2 + $0x110] sm:$0xff]
        %v4805 = vld [vmem:[#allocation2 + $0x118] sm:$0x3]
        %v4806 = vld [vmem:[#allocation2 + $0x120] sm:$0xff]
        %v4807 = vld [vmem:[#allocation2 + $0x128] sm:$0xff]
        %v4808 = vld [vmem:[#allocation2 + $0x130] sm:$0x3]
        %v4809 = vld [vmem:[#allocation2 + $0x138] sm:$0xff]
        %v4810 = vld [vmem:[#allocation2 + $0x140] sm:$0xff]
        %v4811 = vld [vmem:[#allocation2 + $0x148] sm:$0x3]
        %v4812 = vld [vmem:[#allocation2 + $0x150] sm:$0xff]
        %v4813 = vld [vmem:[#allocation2 + $0x158] sm:$0xff]
        %v4814 = vld [vmem:[#allocation2 + $0x160] sm:$0x3]
        %v4815 = vld [vmem:[#allocation2 + $0x168] sm:$0xff]
        %v4816 = vld [vmem:[#allocation2 + $0x170] sm:$0xff]
        %v4817 = vld [vmem:[#allocation2 + $0x178] sm:$0x3]
        %v4818 = vld [vmem:[#allocation2 + $0x180] sm:$0xff]
        %v4819 = vld [vmem:[#allocation2 + $0x188] sm:$0xff]
        %v4820 = vld [vmem:[#allocation2 + $0x190] sm:$0x3]
        %v4821 = vld [vmem:[#allocation2 + $0x198] sm:$0xff]
        %v4822 = vld [vmem:[#allocation2 + $0x1a0] sm:$0xff]
        %v4823 = vld [vmem:[#allocation2 + $0x1a8] sm:$0x3]
        %v4824 = vld [vmem:[%s9] sm:$0x1]
        %v4826 = vlaneseq
        %v4827 = vshrl.u32 %v4826, 7
        %v4828 = vsub.s32 0, %v4827
        %v4829 = vrot.slane %v4824, %v4828
        %v4831 = vmul.f32 %v4770, %v4829
        %v4832 = vmul.f32 %v4771, %v4829
        %v4833 = vmul.f32 %v4772, %v4829
        %v4834 = vmul.f32 %v4773, %v4829
        %v4835 = vmul.f32 %v4774, %v4829
        %v4836 = vmul.f32 %v4775, %v4829
        %v4837 = vmul.f32 %v4776, %v4829
        %v4838 = vmul.f32 %v4777, %v4829
        %v4839 = vmul.f32 %v4778, %v4829
        %v4840 = vmul.f32 %v4779, %v4829
        %v4841 = vmul.f32 %v4780, %v4829
        %v4842 = vmul.f32 %v4781, %v4829
        %v4843 = vmul.f32 %v4782, %v4829
        %v4844 = vmul.f32 %v4783, %v4829
        %v4845 = vmul.f32 %v4784, %v4829
        %v4846 = vmul.f32 %v4785, %v4829
        %v4847 = vmul.f32 %v4786, %v4829
        %v4848 = vmul.f32 %v4787, %v4829
        %v4849 = vmul.f32 %v4788, %v4829
        %v4850 = vmul.f32 %v4789, %v4829
        %v4851 = vmul.f32 %v4790, %v4829
        %v4852 = vmul.f32 %v4791, %v4829
        %v4853 = vmul.f32 %v4792, %v4829
        %v4854 = vmul.f32 %v4793, %v4829
        %v4855 = vmul.f32 %v4794, %v4829
        %v4856 = vmul.f32 %v4795, %v4829
        %v4857 = vmul.f32 %v4796, %v4829
        %v4858 = vmul.f32 %v4797, %v4829
        %v4859 = vmul.f32 %v4798, %v4829
        %v4860 = vmul.f32 %v4799, %v4829
        %v4861 = vmul.f32 %v4800, %v4829
        %v4862 = vmul.f32 %v4801, %v4829
        %v4863 = vmul.f32 %v4802, %v4829
        %v4864 = vmul.f32 %v4803, %v4829
        %v4865 = vmul.f32 %v4804, %v4829
        %v4866 = vmul.f32 %v4805, %v4829
        %v4867 = vmul.f32 %v4806, %v4829
        %v4868 = vmul.f32 %v4807, %v4829
        %v4869 = vmul.f32 %v4808, %v4829
        %v4870 = vmul.f32 %v4809, %v4829
        %v4871 = vmul.f32 %v4810, %v4829
        %v4872 = vmul.f32 %v4811, %v4829
        %v4873 = vmul.f32 %v4812, %v4829
        %v4874 = vmul.f32 %v4813, %v4829
        %v4875 = vmul.f32 %v4814, %v4829
        %v4876 = vmul.f32 %v4815, %v4829
        %v4877 = vmul.f32 %v4816, %v4829
        %v4878 = vmul.f32 %v4817, %v4829
        %v4879 = vmul.f32 %v4818, %v4829
        %v4880 = vmul.f32 %v4819, %v4829
        %v4881 = vmul.f32 %v4820, %v4829
        %v4882 = vmul.f32 %v4821, %v4829
        %v4883 = vmul.f32 %v4822, %v4829
        %v4884 = vmul.f32 %v4823, %v4829
        %v4885 = vld [vmem:[%s10] sm:$0x1]
        %v4887 = vlaneseq
        %v4888 = vshrl.u32 %v4887, 7
        %v4889 = vsub.s32 0, %v4888
        %v4890 = vrot.slane %v4885, %v4889
        %v4892 = vadd.f32 %v4831, %v4890
        %v4893 = vadd.f32 %v4832, %v4890
        %v4894 = vadd.f32 %v4833, %v4890
        %v4895 = vadd.f32 %v4834, %v4890
        %v4896 = vadd.f32 %v4835, %v4890
        %v4897 = vadd.f32 %v4836, %v4890
        %v4898 = vadd.f32 %v4837, %v4890
        %v4899 = vadd.f32 %v4838, %v4890
        %v4900 = vadd.f32 %v4839, %v4890
        %v4901 = vadd.f32 %v4840, %v4890
        %v4902 = vadd.f32 %v4841, %v4890
        %v4903 = vadd.f32 %v4842, %v4890
        %v4904 = vadd.f32 %v4843, %v4890
        %v4905 = vadd.f32 %v4844, %v4890
        %v4906 = vadd.f32 %v4845, %v4890
        %v4907 = vadd.f32 %v4846, %v4890
        %v4908 = vadd.f32 %v4847, %v4890
        %v4909 = vadd.f32 %v4848, %v4890
        %v4910 = vadd.f32 %v4849, %v4890
        %v4911 = vadd.f32 %v4850, %v4890
        %v4912 = vadd.f32 %v4851, %v4890
        %v4913 = vadd.f32 %v4852, %v4890
        %v4914 = vadd.f32 %v4853, %v4890
        %v4915 = vadd.f32 %v4854, %v4890
        %v4916 = vadd.f32 %v4855, %v4890
        %v4917 = vadd.f32 %v4856, %v4890
        %v4918 = vadd.f32 %v4857, %v4890
        %v4919 = vadd.f32 %v4858, %v4890
        %v4920 = vadd.f32 %v4859, %v4890
        %v4921 = vadd.f32 %v4860, %v4890
        %v4922 = vadd.f32 %v4861, %v4890
        %v4923 = vadd.f32 %v4862, %v4890
        %v4924 = vadd.f32 %v4863, %v4890
        %v4925 = vadd.f32 %v4864, %v4890
        %v4926 = vadd.f32 %v4865, %v4890
        %v4927 = vadd.f32 %v4866, %v4890
        %v4928 = vadd.f32 %v4867, %v4890
        %v4929 = vadd.f32 %v4868, %v4890
        %v4930 = vadd.f32 %v4869, %v4890
        %v4931 = vadd.f32 %v4870, %v4890
        %v4932 = vadd.f32 %v4871, %v4890
        %v4933 = vadd.f32 %v4872, %v4890
        %v4934 = vadd.f32 %v4873, %v4890
        %v4935 = vadd.f32 %v4874, %v4890
        %v4936 = vadd.f32 %v4875, %v4890
        %v4937 = vadd.f32 %v4876, %v4890
        %v4938 = vadd.f32 %v4877, %v4890
        %v4939 = vadd.f32 %v4878, %v4890
        %v4940 = vadd.f32 %v4879, %v4890
        %v4941 = vadd.f32 %v4880, %v4890
        %v4942 = vadd.f32 %v4881, %v4890
        %v4943 = vadd.f32 %v4882, %v4890
        %v4944 = vadd.f32 %v4883, %v4890
        %v4945 = vadd.f32 %v4884, %v4890
        %v4946 = vmax.f32 %v4892, 0.0
        %v4947 = vmax.f32 %v4893, 0.0
        %v4948 = vmax.f32 %v4894, 0.0
        %v4949 = vmax.f32 %v4895, 0.0
        %v4950 = vmax.f32 %v4896, 0.0
        %v4951 = vmax.f32 %v4897, 0.0
        %v4952 = vmax.f32 %v4898, 0.0
        %v4953 = vmax.f32 %v4899, 0.0
        %v4954 = vmax.f32 %v4900, 0.0
        %v4955 = vmax.f32 %v4901, 0.0
        %v4956 = vmax.f32 %v4902, 0.0
        %v4957 = vmax.f32 %v4903, 0.0
        %v4958 = vmax.f32 %v4904, 0.0
        %v4959 = vmax.f32 %v4905, 0.0
        %v4960 = vmax.f32 %v4906, 0.0
        %v4961 = vmax.f32 %v4907, 0.0
        %v4962 = vmax.f32 %v4908, 0.0
        %v4963 = vmax.f32 %v4909, 0.0
        %v4964 = vmax.f32 %v4910, 0.0
        %v4965 = vmax.f32 %v4911, 0.0
        %v4966 = vmax.f32 %v4912, 0.0
        %v4967 = vmax.f32 %v4913, 0.0
        %v4968 = vmax.f32 %v4914, 0.0
        %v4969 = vmax.f32 %v4915, 0.0
        %v4970 = vmax.f32 %v4916, 0.0
        %v4971 = vmax.f32 %v4917, 0.0
        %v4972 = vmax.f32 %v4918, 0.0
        %v4973 = vmax.f32 %v4919, 0.0
        %v4974 = vmax.f32 %v4920, 0.0
        %v4975 = vmax.f32 %v4921, 0.0
        %v4976 = vmax.f32 %v4922, 0.0
        %v4977 = vmax.f32 %v4923, 0.0
        %v4978 = vmax.f32 %v4924, 0.0
        %v4979 = vmax.f32 %v4925, 0.0
        %v4980 = vmax.f32 %v4926, 0.0
        %v4981 = vmax.f32 %v4927, 0.0
        %v4982 = vmax.f32 %v4928, 0.0
        %v4983 = vmax.f32 %v4929, 0.0
        %v4984 = vmax.f32 %v4930, 0.0
        %v4985 = vmax.f32 %v4931, 0.0
        %v4986 = vmax.f32 %v4932, 0.0
        %v4987 = vmax.f32 %v4933, 0.0
        %v4988 = vmax.f32 %v4934, 0.0
        %v4989 = vmax.f32 %v4935, 0.0
        %v4990 = vmax.f32 %v4936, 0.0
        %v4991 = vmax.f32 %v4937, 0.0
        %v4992 = vmax.f32 %v4938, 0.0
        %v4993 = vmax.f32 %v4939, 0.0
        %v4994 = vmax.f32 %v4940, 0.0
        %v4995 = vmax.f32 %v4941, 0.0
        %v4996 = vmax.f32 %v4942, 0.0
        %v4997 = vmax.f32 %v4943, 0.0
        %v4998 = vmax.f32 %v4944, 0.0
        %v4999 = vmax.f32 %v4945, 0.0
        %v5000 = vsel %vm1035, %v4946, 0.0
        %v5001 = vsel %vm1036, %v4947, 0.0
        %v5002 = vsel %vm1037, %v4948, 0.0
        %v5003 = vsel %vm1038, %v4949, 0.0
        %v5004 = vsel %vm1039, %v4950, 0.0
        %v5005 = vsel %vm1040, %v4951, 0.0
        %v5006 = vsel %vm1038, %v4952, 0.0
        %v5007 = vsel %vm1039, %v4953, 0.0
        %v5008 = vsel %vm1040, %v4954, 0.0
        %v5009 = vsel %vm1038, %v4955, 0.0
        %v5010 = vsel %vm1039, %v4956, 0.0
        %v5011 = vsel %vm1040, %v4957, 0.0
        %v5012 = vsel %vm1038, %v4958, 0.0
        %v5013 = vsel %vm1039, %v4959, 0.0
        %v5014 = vsel %vm1040, %v4960, 0.0
        %v5015 = vsel %vm1038, %v4961, 0.0
        %v5016 = vsel %vm1039, %v4962, 0.0
        %v5017 = vsel %vm1040, %v4963, 0.0
        %v5018 = vsel %vm1038, %v4964, 0.0
        %v5019 = vsel %vm1039, %v4965, 0.0
        %v5020 = vsel %vm1040, %v4966, 0.0
        %v5021 = vsel %vm1038, %v4967, 0.0
        %v5022 = vsel %vm1039, %v4968, 0.0
        %v5023 = vsel %vm1040, %v4969, 0.0
        %v5024 = vsel %vm1038, %v4970, 0.0
        %v5025 = vsel %vm1039, %v4971, 0.0
        %v5026 = vsel %vm1040, %v4972, 0.0
        %v5027 = vsel %vm1038, %v4973, 0.0
        %v5028 = vsel %vm1039, %v4974, 0.0
        %v5029 = vsel %vm1040, %v4975, 0.0
        %v5030 = vsel %vm1038, %v4976, 0.0
        %v5031 = vsel %vm1039, %v4977, 0.0
        %v5032 = vsel %vm1040, %v4978, 0.0
        %v5033 = vsel %vm1038, %v4979, 0.0
        %v5034 = vsel %vm1039, %v4980, 0.0
        %v5035 = vsel %vm1040, %v4981, 0.0
        %v5036 = vsel %vm1038, %v4982, 0.0
        %v5037 = vsel %vm1039, %v4983, 0.0
        %v5038 = vsel %vm1040, %v4984, 0.0
        %v5039 = vsel %vm1038, %v4985, 0.0
        %v5040 = vsel %vm1039, %v4986, 0.0
        %v5041 = vsel %vm1040, %v4987, 0.0
        %v5042 = vsel %vm1038, %v4988, 0.0
        %v5043 = vsel %vm1039, %v4989, 0.0
        %v5044 = vsel %vm1040, %v4990, 0.0
        %v5045 = vsel %vm1038, %v4991, 0.0
        %v5046 = vsel %vm1039, %v4992, 0.0
        %v5047 = vsel %vm1040, %v4993, 0.0
        %v5048 = vsel %vm1038, %v4994, 0.0
        %v5049 = vsel %vm1039, %v4995, 0.0
        %v5050 = vsel %vm1040, %v4996, 0.0
        %v5051 = vsel %vm1035, %v4997, 0.0
        %v5052 = vsel %vm1036, %v4998, 0.0
        %v5053 = vsel %vm1037, %v4999, 0.0
        %v5102 = vrot.slane %v5000, 1
        %v5103 = vrot.slane %v5001, 1
        %v5104 = vsel %vm1143, %v5102, %v5103
        %v5105 = vrot.slane %v5002, 1
        %v5106 = vsel %vm1143, %v5103, %v5105
        %v5107 = vrot.slane %v5003, 1
        %v5108 = vrot.slane %v5004, 1
        %v5109 = vsel %vm1143, %v5107, %v5108
        %v5110 = vrot.slane %v5005, 1
        %v5111 = vsel %vm1143, %v5108, %v5110
        %v5112 = vrot.slane %v5006, 1
        %v5113 = vrot.slane %v5007, 1
        %v5114 = vsel %vm1143, %v5112, %v5113
        %v5115 = vrot.slane %v5008, 1
        %v5116 = vsel %vm1143, %v5113, %v5115
        %v5117 = vrot.slane %v5009, 1
        %v5118 = vrot.slane %v5010, 1
        %v5119 = vsel %vm1143, %v5117, %v5118
        %v5120 = vrot.slane %v5011, 1
        %v5121 = vsel %vm1143, %v5118, %v5120
        %v5122 = vrot.slane %v5012, 1
        %v5123 = vrot.slane %v5013, 1
        %v5124 = vsel %vm1143, %v5122, %v5123
        %v5125 = vrot.slane %v5014, 1
        %v5126 = vsel %vm1143, %v5123, %v5125
        %v5127 = vrot.slane %v5015, 1
        %v5128 = vrot.slane %v5016, 1
        %v5129 = vsel %vm1143, %v5127, %v5128
        %v5130 = vrot.slane %v5017, 1
        %v5131 = vsel %vm1143, %v5128, %v5130
        %v5132 = vrot.slane %v5018, 1
        %v5133 = vrot.slane %v5019, 1
        %v5134 = vsel %vm1143, %v5132, %v5133
        %v5135 = vrot.slane %v5020, 1
        %v5136 = vsel %vm1143, %v5133, %v5135
        %v5137 = vrot.slane %v5021, 1
        %v5138 = vrot.slane %v5022, 1
        %v5139 = vsel %vm1143, %v5137, %v5138
        %v5140 = vrot.slane %v5023, 1
        %v5141 = vsel %vm1143, %v5138, %v5140
        %v5142 = vrot.slane %v5024, 1
        %v5143 = vrot.slane %v5025, 1
        %v5144 = vsel %vm1143, %v5142, %v5143
        %v5145 = vrot.slane %v5026, 1
        %v5146 = vsel %vm1143, %v5143, %v5145
        %v5147 = vrot.slane %v5027, 1
        %v5148 = vrot.slane %v5028, 1
        %v5149 = vsel %vm1143, %v5147, %v5148
        %v5150 = vrot.slane %v5029, 1
        %v5151 = vsel %vm1143, %v5148, %v5150
        %v5152 = vrot.slane %v5030, 1
        %v5153 = vrot.slane %v5031, 1
        %v5154 = vsel %vm1143, %v5152, %v5153
        %v5155 = vrot.slane %v5032, 1
        %v5156 = vsel %vm1143, %v5153, %v5155
        %v5157 = vrot.slane %v5033, 1
        %v5158 = vrot.slane %v5034, 1
        %v5159 = vsel %vm1143, %v5157, %v5158
        %v5160 = vrot.slane %v5035, 1
        %v5161 = vsel %vm1143, %v5158, %v5160
        %v5162 = vrot.slane %v5036, 1
        %v5163 = vrot.slane %v5037, 1
        %v5164 = vsel %vm1143, %v5162, %v5163
        %v5165 = vrot.slane %v5038, 1
        %v5166 = vsel %vm1143, %v5163, %v5165
        %v5167 = vrot.slane %v5039, 1
        %v5168 = vrot.slane %v5040, 1
        %v5169 = vsel %vm1143, %v5167, %v5168
        %v5170 = vrot.slane %v5041, 1
        %v5171 = vsel %vm1143, %v5168, %v5170
        %v5172 = vrot.slane %v5042, 1
        %v5173 = vrot.slane %v5043, 1
        %v5174 = vsel %vm1143, %v5172, %v5173
        %v5175 = vrot.slane %v5044, 1
        %v5176 = vsel %vm1143, %v5173, %v5175
        %v5177 = vrot.slane %v5045, 1
        %v5178 = vrot.slane %v5046, 1
        %v5179 = vsel %vm1143, %v5177, %v5178
        %v5180 = vrot.slane %v5047, 1
        %v5181 = vsel %vm1143, %v5178, %v5180
        %5182 = vrot.lane.b32.xlu0 %v5104, 32
        %v5183 = vpop.permute.xlu0 %5182
        %5184 = vrot.lane.b32.xlu0 %v5106, 32
        %v5185 = vpop.permute.xlu0 %5184
        %5186 = vrot.lane.b32.xlu0 %v5109, 32
        %v5187 = vpop.permute.xlu0 %5186
        %5188 = vrot.lane.b32.xlu0 %v5111, 32
        %v5189 = vpop.permute.xlu0 %5188
        %5190 = vrot.lane.b32.xlu0 %v5114, 32
        %v5191 = vpop.permute.xlu0 %5190
        %5192 = vrot.lane.b32.xlu0 %v5116, 32
        %v5193 = vpop.permute.xlu0 %5192
        %5194 = vrot.lane.b32.xlu0 %v5119, 32
        %v5195 = vpop.permute.xlu0 %5194
        %5196 = vrot.lane.b32.xlu0 %v5121, 32
        %v5197 = vpop.permute.xlu0 %5196
        %5198 = vrot.lane.b32.xlu0 %v5124, 32
        %v5199 = vpop.permute.xlu0 %5198
        %5200 = vrot.lane.b32.xlu0 %v5126, 32
        %v5201 = vpop.permute.xlu0 %5200
        %5202 = vrot.lane.b32.xlu0 %v5129, 32
        %v5203 = vpop.permute.xlu0 %5202
        %5204 = vrot.lane.b32.xlu0 %v5131, 32
        %v5205 = vpop.permute.xlu0 %5204
        %5206 = vrot.lane.b32.xlu0 %v5134, 32
        %v5207 = vpop.permute.xlu0 %5206
        %5208 = vrot.lane.b32.xlu0 %v5136, 32
        %v5209 = vpop.permute.xlu0 %5208
        %5210 = vrot.lane.b32.xlu0 %v5139, 32
        %v5211 = vpop.permute.xlu0 %5210
        %5212 = vrot.lane.b32.xlu0 %v5141, 32
        %v5213 = vpop.permute.xlu0 %5212
        %5214 = vrot.lane.b32.xlu0 %v5144, 32
        %v5215 = vpop.permute.xlu0 %5214
        %5216 = vrot.lane.b32.xlu0 %v5146, 32
        %v5217 = vpop.permute.xlu0 %5216
        %5218 = vrot.lane.b32.xlu0 %v5149, 32
        %v5219 = vpop.permute.xlu0 %5218
        %5220 = vrot.lane.b32.xlu0 %v5151, 32
        %v5221 = vpop.permute.xlu0 %5220
        %5222 = vrot.lane.b32.xlu0 %v5154, 32
        %v5223 = vpop.permute.xlu0 %5222
        %5224 = vrot.lane.b32.xlu0 %v5156, 32
        %v5225 = vpop.permute.xlu0 %5224
        %5226 = vrot.lane.b32.xlu0 %v5159, 32
        %v5227 = vpop.permute.xlu0 %5226
        %5228 = vrot.lane.b32.xlu0 %v5161, 32
        %v5229 = vpop.permute.xlu0 %5228
        %5230 = vrot.lane.b32.xlu0 %v5164, 32
        %v5231 = vpop.permute.xlu0 %5230
        %5232 = vrot.lane.b32.xlu0 %v5166, 32
        %v5233 = vpop.permute.xlu0 %5232
        %5234 = vrot.lane.b32.xlu0 %v5169, 32
        %v5235 = vpop.permute.xlu0 %5234
        %5236 = vrot.lane.b32.xlu0 %v5171, 32
        %v5237 = vpop.permute.xlu0 %5236
        %5238 = vrot.lane.b32.xlu0 %v5174, 32
        %v5239 = vpop.permute.xlu0 %5238
        %5240 = vrot.lane.b32.xlu0 %v5176, 32
        %v5241 = vpop.permute.xlu0 %5240
        %5242 = vrot.lane.b32.xlu0 %v5179, 32
        %v5243 = vpop.permute.xlu0 %5242
        %5244 = vrot.lane.b32.xlu0 %v5181, 32
        %v5245 = vpop.permute.xlu0 %5244
        %v5278 = vrot.slane %v5000, 2
        %v5279 = vrot.slane %v5001, 2
        %v5280 = vsel %vm1320, %v5278, %v5279
        %v5281 = vrot.slane %v5002, 2
        %v5282 = vsel %vm1320, %v5279, %v5281
        %v5283 = vrot.slane %v5003, 2
        %v5284 = vrot.slane %v5004, 2
        %v5285 = vsel %vm1320, %v5283, %v5284
        %v5286 = vrot.slane %v5005, 2
        %v5287 = vsel %vm1320, %v5284, %v5286
        %v5288 = vrot.slane %v5006, 2
        %v5289 = vrot.slane %v5007, 2
        %v5290 = vsel %vm1320, %v5288, %v5289
        %v5291 = vrot.slane %v5008, 2
        %v5292 = vsel %vm1320, %v5289, %v5291
        %v5293 = vrot.slane %v5009, 2
        %v5294 = vrot.slane %v5010, 2
        %v5295 = vsel %vm1320, %v5293, %v5294
        %v5296 = vrot.slane %v5011, 2
        %v5297 = vsel %vm1320, %v5294, %v5296
        %v5298 = vrot.slane %v5012, 2
        %v5299 = vrot.slane %v5013, 2
        %v5300 = vsel %vm1320, %v5298, %v5299
        %v5301 = vrot.slane %v5014, 2
        %v5302 = vsel %vm1320, %v5299, %v5301
        %v5303 = vrot.slane %v5015, 2
        %v5304 = vrot.slane %v5016, 2
        %v5305 = vsel %vm1320, %v5303, %v5304
        %v5306 = vrot.slane %v5017, 2
        %v5307 = vsel %vm1320, %v5304, %v5306
        %v5308 = vrot.slane %v5018, 2
        %v5309 = vrot.slane %v5019, 2
        %v5310 = vsel %vm1320, %v5308, %v5309
        %v5311 = vrot.slane %v5020, 2
        %v5312 = vsel %vm1320, %v5309, %v5311
        %v5313 = vrot.slane %v5021, 2
        %v5314 = vrot.slane %v5022, 2
        %v5315 = vsel %vm1320, %v5313, %v5314
        %v5316 = vrot.slane %v5023, 2
        %v5317 = vsel %vm1320, %v5314, %v5316
        %v5318 = vrot.slane %v5024, 2
        %v5319 = vrot.slane %v5025, 2
        %v5320 = vsel %vm1320, %v5318, %v5319
        %v5321 = vrot.slane %v5026, 2
        %v5322 = vsel %vm1320, %v5319, %v5321
        %v5323 = vrot.slane %v5027, 2
        %v5324 = vrot.slane %v5028, 2
        %v5325 = vsel %vm1320, %v5323, %v5324
        %v5326 = vrot.slane %v5029, 2
        %v5327 = vsel %vm1320, %v5324, %v5326
        %v5328 = vrot.slane %v5030, 2
        %v5329 = vrot.slane %v5031, 2
        %v5330 = vsel %vm1320, %v5328, %v5329
        %v5331 = vrot.slane %v5032, 2
        %v5332 = vsel %vm1320, %v5329, %v5331
        %v5333 = vrot.slane %v5033, 2
        %v5334 = vrot.slane %v5034, 2
        %v5335 = vsel %vm1320, %v5333, %v5334
        %v5336 = vrot.slane %v5035, 2
        %v5337 = vsel %vm1320, %v5334, %v5336
        %v5338 = vrot.slane %v5036, 2
        %v5339 = vrot.slane %v5037, 2
        %v5340 = vsel %vm1320, %v5338, %v5339
        %v5341 = vrot.slane %v5038, 2
        %v5342 = vsel %vm1320, %v5339, %v5341
        %v5343 = vrot.slane %v5039, 2
        %v5344 = vrot.slane %v5040, 2
        %v5345 = vsel %vm1320, %v5343, %v5344
        %v5346 = vrot.slane %v5041, 2
        %v5347 = vsel %vm1320, %v5344, %v5346
        %v5348 = vrot.slane %v5042, 2
        %v5349 = vrot.slane %v5043, 2
        %v5350 = vsel %vm1320, %v5348, %v5349
        %v5351 = vrot.slane %v5044, 2
        %v5352 = vsel %vm1320, %v5349, %v5351
        %v5353 = vrot.slane %v5045, 2
        %v5354 = vrot.slane %v5046, 2
        %v5355 = vsel %vm1320, %v5353, %v5354
        %v5356 = vrot.slane %v5047, 2
        %v5357 = vsel %vm1320, %v5354, %v5356
        %5358 = vrot.lane.b32.xlu0 %v5280, 64
        %v5359 = vpop.permute.xlu0 %5358
        %5360 = vrot.lane.b32.xlu0 %v5282, 64
        %v5361 = vpop.permute.xlu0 %5360
        %5362 = vrot.lane.b32.xlu0 %v5285, 64
        %v5363 = vpop.permute.xlu0 %5362
        %5364 = vrot.lane.b32.xlu0 %v5287, 64
        %v5365 = vpop.permute.xlu0 %5364
        %5366 = vrot.lane.b32.xlu0 %v5290, 64
        %v5367 = vpop.permute.xlu0 %5366
        %5368 = vrot.lane.b32.xlu0 %v5292, 64
        %v5369 = vpop.permute.xlu0 %5368
        %5370 = vrot.lane.b32.xlu0 %v5295, 64
        %v5371 = vpop.permute.xlu0 %5370
        %5372 = vrot.lane.b32.xlu0 %v5297, 64
        %v5373 = vpop.permute.xlu0 %5372
        %5374 = vrot.lane.b32.xlu0 %v5300, 64
        %v5375 = vpop.permute.xlu0 %5374
        %5376 = vrot.lane.b32.xlu0 %v5302, 64
        %v5377 = vpop.permute.xlu0 %5376
        %5378 = vrot.lane.b32.xlu0 %v5305, 64
        %v5379 = vpop.permute.xlu0 %5378
        %5380 = vrot.lane.b32.xlu0 %v5307, 64
        %v5381 = vpop.permute.xlu0 %5380
        %5382 = vrot.lane.b32.xlu0 %v5310, 64
        %v5383 = vpop.permute.xlu0 %5382
        %5384 = vrot.lane.b32.xlu0 %v5312, 64
        %v5385 = vpop.permute.xlu0 %5384
        %5386 = vrot.lane.b32.xlu0 %v5315, 64
        %v5387 = vpop.permute.xlu0 %5386
        %5388 = vrot.lane.b32.xlu0 %v5317, 64
        %v5389 = vpop.permute.xlu0 %5388
        %5390 = vrot.lane.b32.xlu0 %v5320, 64
        %v5391 = vpop.permute.xlu0 %5390
        %5392 = vrot.lane.b32.xlu0 %v5322, 64
        %v5393 = vpop.permute.xlu0 %5392
        %5394 = vrot.lane.b32.xlu0 %v5325, 64
        %v5395 = vpop.permute.xlu0 %5394
        %5396 = vrot.lane.b32.xlu0 %v5327, 64
        %v5397 = vpop.permute.xlu0 %5396
        %5398 = vrot.lane.b32.xlu0 %v5330, 64
        %v5399 = vpop.permute.xlu0 %5398
        %5400 = vrot.lane.b32.xlu0 %v5332, 64
        %v5401 = vpop.permute.xlu0 %5400
        %5402 = vrot.lane.b32.xlu0 %v5335, 64
        %v5403 = vpop.permute.xlu0 %5402
        %5404 = vrot.lane.b32.xlu0 %v5337, 64
        %v5405 = vpop.permute.xlu0 %5404
        %5406 = vrot.lane.b32.xlu0 %v5340, 64
        %v5407 = vpop.permute.xlu0 %5406
        %5408 = vrot.lane.b32.xlu0 %v5342, 64
        %v5409 = vpop.permute.xlu0 %5408
        %5410 = vrot.lane.b32.xlu0 %v5345, 64
        %v5411 = vpop.permute.xlu0 %5410
        %5412 = vrot.lane.b32.xlu0 %v5347, 64
        %v5413 = vpop.permute.xlu0 %5412
        %5414 = vrot.lane.b32.xlu0 %v5350, 64
        %v5415 = vpop.permute.xlu0 %5414
        %5416 = vrot.lane.b32.xlu0 %v5352, 64
        %v5417 = vpop.permute.xlu0 %5416
        %5418 = vrot.lane.b32.xlu0 %v5355, 64
        %v5419 = vpop.permute.xlu0 %5418
        %5420 = vrot.lane.b32.xlu0 %v5357, 64
        %v5421 = vpop.permute.xlu0 %5420
        %5456 = vrot.lane.b32.xlu0 %v5003, 96
        %v5457 = vpop.permute.xlu0 %5456
        %5458 = vrot.lane.b32.xlu0 %v5004, 96
        %v5459 = vpop.permute.xlu0 %5458
        %5460 = vrot.lane.b32.xlu0 %v5006, 96
        %v5461 = vpop.permute.xlu0 %5460
        %5462 = vrot.lane.b32.xlu0 %v5007, 96
        %v5463 = vpop.permute.xlu0 %5462
        %5464 = vrot.lane.b32.xlu0 %v5009, 96
        %v5465 = vpop.permute.xlu0 %5464
        %5466 = vrot.lane.b32.xlu0 %v5010, 96
        %v5467 = vpop.permute.xlu0 %5466
        %5468 = vrot.lane.b32.xlu0 %v5012, 96
        %v5469 = vpop.permute.xlu0 %5468
        %5470 = vrot.lane.b32.xlu0 %v5013, 96
        %v5471 = vpop.permute.xlu0 %5470
        %5472 = vrot.lane.b32.xlu0 %v5015, 96
        %v5473 = vpop.permute.xlu0 %5472
        %5474 = vrot.lane.b32.xlu0 %v5016, 96
        %v5475 = vpop.permute.xlu0 %5474
        %5476 = vrot.lane.b32.xlu0 %v5018, 96
        %v5477 = vpop.permute.xlu0 %5476
        %5478 = vrot.lane.b32.xlu0 %v5019, 96
        %v5479 = vpop.permute.xlu0 %5478
        %5480 = vrot.lane.b32.xlu0 %v5021, 96
        %v5481 = vpop.permute.xlu0 %5480
        %5482 = vrot.lane.b32.xlu0 %v5022, 96
        %v5483 = vpop.permute.xlu0 %5482
        %5484 = vrot.lane.b32.xlu0 %v5024, 96
        %v5485 = vpop.permute.xlu0 %5484
        %5486 = vrot.lane.b32.xlu0 %v5025, 96
        %v5487 = vpop.permute.xlu0 %5486
        %5488 = vrot.lane.b32.xlu0 %v5027, 96
        %v5489 = vpop.permute.xlu0 %5488
        %5490 = vrot.lane.b32.xlu0 %v5028, 96
        %v5491 = vpop.permute.xlu0 %5490
        %5492 = vrot.lane.b32.xlu0 %v5030, 96
        %v5493 = vpop.permute.xlu0 %5492
        %5494 = vrot.lane.b32.xlu0 %v5031, 96
        %v5495 = vpop.permute.xlu0 %5494
        %5496 = vrot.lane.b32.xlu0 %v5033, 96
        %v5497 = vpop.permute.xlu0 %5496
        %5498 = vrot.lane.b32.xlu0 %v5034, 96
        %v5499 = vpop.permute.xlu0 %5498
        %5500 = vrot.lane.b32.xlu0 %v5036, 96
        %v5501 = vpop.permute.xlu0 %5500
        %5502 = vrot.lane.b32.xlu0 %v5037, 96
        %v5503 = vpop.permute.xlu0 %5502
        %5504 = vrot.lane.b32.xlu0 %v5039, 96
        %v5505 = vpop.permute.xlu0 %5504
        %5506 = vrot.lane.b32.xlu0 %v5040, 96
        %v5507 = vpop.permute.xlu0 %5506
        %5508 = vrot.lane.b32.xlu0 %v5042, 96
        %v5509 = vpop.permute.xlu0 %5508
        %5510 = vrot.lane.b32.xlu0 %v5043, 96
        %v5511 = vpop.permute.xlu0 %5510
        %5512 = vrot.lane.b32.xlu0 %v5045, 96
        %v5513 = vpop.permute.xlu0 %5512
        %5514 = vrot.lane.b32.xlu0 %v5046, 96
        %v5515 = vpop.permute.xlu0 %5514
        %5516 = vrot.lane.b32.xlu0 %v5048, 96
        %v5517 = vpop.permute.xlu0 %5516
        %5518 = vrot.lane.b32.xlu0 %v5049, 96
        %v5519 = vpop.permute.xlu0 %5518
        %v5553 = vrot.slane %v5048, 1
        %v5554 = vrot.slane %v5049, 1
        %v5555 = vsel %vm1143, %v5553, %v5554
        %v5556 = vrot.slane %v5050, 1
        %v5557 = vsel %vm1143, %v5554, %v5556
        %v5590 = vrot.slane %v5048, 2
        %v5591 = vrot.slane %v5049, 2
        %v5592 = vsel %vm1320, %v5590, %v5591
        %v5593 = vrot.slane %v5050, 2
        %v5594 = vsel %vm1320, %v5591, %v5593
        %5595 = vrot.lane.b32.xlu0 %v5285, 32
        %v5596 = vpop.permute.xlu0 %5595
        %5597 = vrot.lane.b32.xlu0 %v5287, 32
        %v5598 = vpop.permute.xlu0 %5597
        %5599 = vrot.lane.b32.xlu0 %v5290, 32
        %v5600 = vpop.permute.xlu0 %5599
        %5601 = vrot.lane.b32.xlu0 %v5292, 32
        %v5602 = vpop.permute.xlu0 %5601
        %5603 = vrot.lane.b32.xlu0 %v5295, 32
        %v5604 = vpop.permute.xlu0 %5603
        %5605 = vrot.lane.b32.xlu0 %v5297, 32
        %v5606 = vpop.permute.xlu0 %5605
        %5607 = vrot.lane.b32.xlu0 %v5300, 32
        %v5608 = vpop.permute.xlu0 %5607
        %5609 = vrot.lane.b32.xlu0 %v5302, 32
        %v5610 = vpop.permute.xlu0 %5609
        %5611 = vrot.lane.b32.xlu0 %v5305, 32
        %v5612 = vpop.permute.xlu0 %5611
        %5613 = vrot.lane.b32.xlu0 %v5307, 32
        %v5614 = vpop.permute.xlu0 %5613
        %5615 = vrot.lane.b32.xlu0 %v5310, 32
        %v5616 = vpop.permute.xlu0 %5615
        %5617 = vrot.lane.b32.xlu0 %v5312, 32
        %v5618 = vpop.permute.xlu0 %5617
        %5619 = vrot.lane.b32.xlu0 %v5315, 32
        %v5620 = vpop.permute.xlu0 %5619
        %5621 = vrot.lane.b32.xlu0 %v5317, 32
        %v5622 = vpop.permute.xlu0 %5621
        %5623 = vrot.lane.b32.xlu0 %v5320, 32
        %v5624 = vpop.permute.xlu0 %5623
        %5625 = vrot.lane.b32.xlu0 %v5322, 32
        %v5626 = vpop.permute.xlu0 %5625
        %5627 = vrot.lane.b32.xlu0 %v5325, 32
        %v5628 = vpop.permute.xlu0 %5627
        %5629 = vrot.lane.b32.xlu0 %v5327, 32
        %v5630 = vpop.permute.xlu0 %5629
        %5631 = vrot.lane.b32.xlu0 %v5330, 32
        %v5632 = vpop.permute.xlu0 %5631
        %5633 = vrot.lane.b32.xlu0 %v5332, 32
        %v5634 = vpop.permute.xlu0 %5633
        %5635 = vrot.lane.b32.xlu0 %v5335, 32
        %v5636 = vpop.permute.xlu0 %5635
        %5637 = vrot.lane.b32.xlu0 %v5337, 32
        %v5638 = vpop.permute.xlu0 %5637
        %5639 = vrot.lane.b32.xlu0 %v5340, 32
        %v5640 = vpop.permute.xlu0 %5639
        %5641 = vrot.lane.b32.xlu0 %v5342, 32
        %v5642 = vpop.permute.xlu0 %5641
        %5643 = vrot.lane.b32.xlu0 %v5345, 32
        %v5644 = vpop.permute.xlu0 %5643
        %5645 = vrot.lane.b32.xlu0 %v5347, 32
        %v5646 = vpop.permute.xlu0 %5645
        %5647 = vrot.lane.b32.xlu0 %v5350, 32
        %v5648 = vpop.permute.xlu0 %5647
        %5649 = vrot.lane.b32.xlu0 %v5352, 32
        %v5650 = vpop.permute.xlu0 %5649
        %5651 = vrot.lane.b32.xlu0 %v5355, 32
        %v5652 = vpop.permute.xlu0 %5651
        %5653 = vrot.lane.b32.xlu0 %v5357, 32
        %v5654 = vpop.permute.xlu0 %5653
        %5655 = vrot.lane.b32.xlu0 %v5592, 32
        %v5656 = vpop.permute.xlu0 %5655
        %5657 = vrot.lane.b32.xlu0 %v5594, 32
        %v5658 = vpop.permute.xlu0 %5657
        %5693 = vrot.lane.b32.xlu0 %v5006, 64
        %v5694 = vpop.permute.xlu0 %5693
        %5695 = vrot.lane.b32.xlu0 %v5007, 64
        %v5696 = vpop.permute.xlu0 %5695
        %5697 = vrot.lane.b32.xlu0 %v5009, 64
        %v5698 = vpop.permute.xlu0 %5697
        %5699 = vrot.lane.b32.xlu0 %v5010, 64
        %v5700 = vpop.permute.xlu0 %5699
        %5701 = vrot.lane.b32.xlu0 %v5012, 64
        %v5702 = vpop.permute.xlu0 %5701
        %5703 = vrot.lane.b32.xlu0 %v5013, 64
        %v5704 = vpop.permute.xlu0 %5703
        %5705 = vrot.lane.b32.xlu0 %v5015, 64
        %v5706 = vpop.permute.xlu0 %5705
        %5707 = vrot.lane.b32.xlu0 %v5016, 64
        %v5708 = vpop.permute.xlu0 %5707
        %5709 = vrot.lane.b32.xlu0 %v5018, 64
        %v5710 = vpop.permute.xlu0 %5709
        %5711 = vrot.lane.b32.xlu0 %v5019, 64
        %v5712 = vpop.permute.xlu0 %5711
        %5713 = vrot.lane.b32.xlu0 %v5021, 64
        %v5714 = vpop.permute.xlu0 %5713
        %5715 = vrot.lane.b32.xlu0 %v5022, 64
        %v5716 = vpop.permute.xlu0 %5715
        %5717 = vrot.lane.b32.xlu0 %v5024, 64
        %v5718 = vpop.permute.xlu0 %5717
        %5719 = vrot.lane.b32.xlu0 %v5025, 64
        %v5720 = vpop.permute.xlu0 %5719
        %5721 = vrot.lane.b32.xlu0 %v5027, 64
        %v5722 = vpop.permute.xlu0 %5721
        %5723 = vrot.lane.b32.xlu0 %v5028, 64
        %v5724 = vpop.permute.xlu0 %5723
        %5725 = vrot.lane.b32.xlu0 %v5030, 64
        %v5726 = vpop.permute.xlu0 %5725
        %5727 = vrot.lane.b32.xlu0 %v5031, 64
        %v5728 = vpop.permute.xlu0 %5727
        %5729 = vrot.lane.b32.xlu0 %v5033, 64
        %v5730 = vpop.permute.xlu0 %5729
        %5731 = vrot.lane.b32.xlu0 %v5034, 64
        %v5732 = vpop.permute.xlu0 %5731
        %5733 = vrot.lane.b32.xlu0 %v5036, 64
        %v5734 = vpop.permute.xlu0 %5733
        %5735 = vrot.lane.b32.xlu0 %v5037, 64
        %v5736 = vpop.permute.xlu0 %5735
        %5737 = vrot.lane.b32.xlu0 %v5039, 64
        %v5738 = vpop.permute.xlu0 %5737
        %5739 = vrot.lane.b32.xlu0 %v5040, 64
        %v5740 = vpop.permute.xlu0 %5739
        %5741 = vrot.lane.b32.xlu0 %v5042, 64
        %v5742 = vpop.permute.xlu0 %5741
        %5743 = vrot.lane.b32.xlu0 %v5043, 64
        %v5744 = vpop.permute.xlu0 %5743
        %5745 = vrot.lane.b32.xlu0 %v5045, 64
        %v5746 = vpop.permute.xlu0 %5745
        %5747 = vrot.lane.b32.xlu0 %v5046, 64
        %v5748 = vpop.permute.xlu0 %5747
        %5749 = vrot.lane.b32.xlu0 %v5048, 64
        %v5750 = vpop.permute.xlu0 %5749
        %5751 = vrot.lane.b32.xlu0 %v5049, 64
        %v5752 = vpop.permute.xlu0 %5751
        %5753 = vrot.lane.b32.xlu0 %v5051, 64
        %v5754 = vpop.permute.xlu0 %5753
        %5755 = vrot.lane.b32.xlu0 %v5052, 64
        %v5756 = vpop.permute.xlu0 %5755
        %v5790 = vrot.slane %v5051, 1
        %v5791 = vrot.slane %v5052, 1
        %v5792 = vsel %vm1143, %v5790, %v5791
        %v5793 = vrot.slane %v5053, 1
        %v5794 = vsel %vm1143, %v5791, %v5793
        %5795 = vrot.lane.b32.xlu0 %v5114, 96
        %v5796 = vpop.permute.xlu0 %5795
        %5797 = vrot.lane.b32.xlu0 %v5116, 96
        %v5798 = vpop.permute.xlu0 %5797
        %5799 = vrot.lane.b32.xlu0 %v5119, 96
        %v5800 = vpop.permute.xlu0 %5799
        %5801 = vrot.lane.b32.xlu0 %v5121, 96
        %v5802 = vpop.permute.xlu0 %5801
        %5803 = vrot.lane.b32.xlu0 %v5124, 96
        %v5804 = vpop.permute.xlu0 %5803
        %5805 = vrot.lane.b32.xlu0 %v5126, 96
        %v5806 = vpop.permute.xlu0 %5805
        %5807 = vrot.lane.b32.xlu0 %v5129, 96
        %v5808 = vpop.permute.xlu0 %5807
        %5809 = vrot.lane.b32.xlu0 %v5131, 96
        %v5810 = vpop.permute.xlu0 %5809
        %5811 = vrot.lane.b32.xlu0 %v5134, 96
        %v5812 = vpop.permute.xlu0 %5811
        %5813 = vrot.lane.b32.xlu0 %v5136, 96
        %v5814 = vpop.permute.xlu0 %5813
        %5815 = vrot.lane.b32.xlu0 %v5139, 96
        %v5816 = vpop.permute.xlu0 %5815
        %5817 = vrot.lane.b32.xlu0 %v5141, 96
        %v5818 = vpop.permute.xlu0 %5817
        %5819 = vrot.lane.b32.xlu0 %v5144, 96
        %v5820 = vpop.permute.xlu0 %5819
        %5821 = vrot.lane.b32.xlu0 %v5146, 96
        %v5822 = vpop.permute.xlu0 %5821
        %5823 = vrot.lane.b32.xlu0 %v5149, 96
        %v5824 = vpop.permute.xlu0 %5823
        %5825 = vrot.lane.b32.xlu0 %v5151, 96
        %v5826 = vpop.permute.xlu0 %5825
        %5827 = vrot.lane.b32.xlu0 %v5154, 96
        %v5828 = vpop.permute.xlu0 %5827
        %5829 = vrot.lane.b32.xlu0 %v5156, 96
        %v5830 = vpop.permute.xlu0 %5829
        %5831 = vrot.lane.b32.xlu0 %v5159, 96
        %v5832 = vpop.permute.xlu0 %5831
        %5833 = vrot.lane.b32.xlu0 %v5161, 96
        %v5834 = vpop.permute.xlu0 %5833
        %5835 = vrot.lane.b32.xlu0 %v5164, 96
        %v5836 = vpop.permute.xlu0 %5835
        %5837 = vrot.lane.b32.xlu0 %v5166, 96
        %v5838 = vpop.permute.xlu0 %5837
        %5839 = vrot.lane.b32.xlu0 %v5169, 96
        %v5840 = vpop.permute.xlu0 %5839
        %5841 = vrot.lane.b32.xlu0 %v5171, 96
        %v5842 = vpop.permute.xlu0 %5841
        %5843 = vrot.lane.b32.xlu0 %v5174, 96
        %v5844 = vpop.permute.xlu0 %5843
        %5845 = vrot.lane.b32.xlu0 %v5176, 96
        %v5846 = vpop.permute.xlu0 %5845
        %5847 = vrot.lane.b32.xlu0 %v5179, 96
        %v5848 = vpop.permute.xlu0 %5847
        %5849 = vrot.lane.b32.xlu0 %v5181, 96
        %v5850 = vpop.permute.xlu0 %5849
        %5851 = vrot.lane.b32.xlu0 %v5555, 96
        %v5852 = vpop.permute.xlu0 %5851
        %5853 = vrot.lane.b32.xlu0 %v5557, 96
        %v5854 = vpop.permute.xlu0 %5853
        %5855 = vrot.lane.b32.xlu0 %v5792, 96
        %v5856 = vpop.permute.xlu0 %5855
        %5857 = vrot.lane.b32.xlu0 %v5794, 96
        %v5858 = vpop.permute.xlu0 %5857
        %v5891 = vrot.slane %v5051, 2
        %v5892 = vrot.slane %v5052, 2
        %v5893 = vsel %vm1320, %v5891, %v5892
        %v5894 = vrot.slane %v5053, 2
        %v5895 = vsel %vm1320, %v5892, %v5894
        %v5896 = vsel %vm2035, %v5000, %v5183
        %v5897 = vsel %vm2035, %v5001, %v5185
        %v5898 = vsel %vm2035, %v5003, %v5187
        %v5899 = vsel %vm2035, %v5004, %v5189
        %v5900 = vsel %vm2035, %v5006, %v5191
        %v5901 = vsel %vm2035, %v5007, %v5193
        %v5902 = vsel %vm2035, %v5009, %v5195
        %v5903 = vsel %vm2035, %v5010, %v5197
        %v5904 = vsel %vm2035, %v5012, %v5199
        %v5905 = vsel %vm2035, %v5013, %v5201
        %v5906 = vsel %vm2035, %v5015, %v5203
        %v5907 = vsel %vm2035, %v5016, %v5205
        %v5908 = vsel %vm2035, %v5018, %v5207
        %v5909 = vsel %vm2035, %v5019, %v5209
        %v5910 = vsel %vm2035, %v5021, %v5211
        %v5911 = vsel %vm2035, %v5022, %v5213
        %v5912 = vsel %vm2035, %v5024, %v5215
        %v5913 = vsel %vm2035, %v5025, %v5217
        %v5914 = vsel %vm2035, %v5027, %v5219
        %v5915 = vsel %vm2035, %v5028, %v5221
        %v5916 = vsel %vm2035, %v5030, %v5223
        %v5917 = vsel %vm2035, %v5031, %v5225
        %v5918 = vsel %vm2035, %v5033, %v5227
        %v5919 = vsel %vm2035, %v5034, %v5229
        %v5920 = vsel %vm2035, %v5036, %v5231
        %v5921 = vsel %vm2035, %v5037, %v5233
        %v5922 = vsel %vm2035, %v5039, %v5235
        %v5923 = vsel %vm2035, %v5040, %v5237
        %v5924 = vsel %vm2035, %v5042, %v5239
        %v5925 = vsel %vm2035, %v5043, %v5241
        %v5926 = vsel %vm2035, %v5045, %v5243
        %v5927 = vsel %vm2035, %v5046, %v5245
        %v5928 = vsel %vm2100, %v5896, %v5359
        %v5929 = vsel %vm2100, %v5897, %v5361
        %v5930 = vsel %vm2100, %v5898, %v5363
        %v5931 = vsel %vm2100, %v5899, %v5365
        %v5932 = vsel %vm2100, %v5900, %v5367
        %v5933 = vsel %vm2100, %v5901, %v5369
        %v5934 = vsel %vm2100, %v5902, %v5371
        %v5935 = vsel %vm2100, %v5903, %v5373
        %v5936 = vsel %vm2100, %v5904, %v5375
        %v5937 = vsel %vm2100, %v5905, %v5377
        %v5938 = vsel %vm2100, %v5906, %v5379
        %v5939 = vsel %vm2100, %v5907, %v5381
        %v5940 = vsel %vm2100, %v5908, %v5383
        %v5941 = vsel %vm2100, %v5909, %v5385
        %v5942 = vsel %vm2100, %v5910, %v5387
        %v5943 = vsel %vm2100, %v5911, %v5389
        %v5944 = vsel %vm2100, %v5912, %v5391
        %v5945 = vsel %vm2100, %v5913, %v5393
        %v5946 = vsel %vm2100, %v5914, %v5395
        %v5947 = vsel %vm2100, %v5915, %v5397
        %v5948 = vsel %vm2100, %v5916, %v5399
        %v5949 = vsel %vm2100, %v5917, %v5401
        %v5950 = vsel %vm2100, %v5918, %v5403
        %v5951 = vsel %vm2100, %v5919, %v5405
        %v5952 = vsel %vm2100, %v5920, %v5407
        %v5953 = vsel %vm2100, %v5921, %v5409
        %v5954 = vsel %vm2100, %v5922, %v5411
        %v5955 = vsel %vm2100, %v5923, %v5413
        %v5956 = vsel %vm2100, %v5924, %v5415
        %v5957 = vsel %vm2100, %v5925, %v5417
        %v5958 = vsel %vm2100, %v5926, %v5419
        %v5959 = vsel %vm2100, %v5927, %v5421
        %v5960 = vsel %vm2166, %v5928, %v5457
        %v5961 = vsel %vm2166, %v5929, %v5459
        %v5962 = vsel %vm2166, %v5930, %v5461
        %v5963 = vsel %vm2166, %v5931, %v5463
        %v5964 = vsel %vm2166, %v5932, %v5465
        %v5965 = vsel %vm2166, %v5933, %v5467
        %v5966 = vsel %vm2166, %v5934, %v5469
        %v5967 = vsel %vm2166, %v5935, %v5471
        %v5968 = vsel %vm2166, %v5936, %v5473
        %v5969 = vsel %vm2166, %v5937, %v5475
        %v5970 = vsel %vm2166, %v5938, %v5477
        %v5971 = vsel %vm2166, %v5939, %v5479
        %v5972 = vsel %vm2166, %v5940, %v5481
        %v5973 = vsel %vm2166, %v5941, %v5483
        %v5974 = vsel %vm2166, %v5942, %v5485
        %v5975 = vsel %vm2166, %v5943, %v5487
        %v5976 = vsel %vm2166, %v5944, %v5489
        %v5977 = vsel %vm2166, %v5945, %v5491
        %v5978 = vsel %vm2166, %v5946, %v5493
        %v5979 = vsel %vm2166, %v5947, %v5495
        %v5980 = vsel %vm2166, %v5948, %v5497
        %v5981 = vsel %vm2166, %v5949, %v5499
        %v5982 = vsel %vm2166, %v5950, %v5501
        %v5983 = vsel %vm2166, %v5951, %v5503
        %v5984 = vsel %vm2166, %v5952, %v5505
        %v5985 = vsel %vm2166, %v5953, %v5507
        %v5986 = vsel %vm2166, %v5954, %v5509
        %v5987 = vsel %vm2166, %v5955, %v5511
        %v5988 = vsel %vm2166, %v5956, %v5513
        %v5989 = vsel %vm2166, %v5957, %v5515
        %v5990 = vsel %vm2166, %v5958, %v5517
        %v5991 = vsel %vm2166, %v5959, %v5519
        %v5992 = vsel %vm2035, %v5109, %v5596
        %v5993 = vsel %vm2035, %v5111, %v5598
        %v5994 = vsel %vm2035, %v5114, %v5600
        %v5995 = vsel %vm2035, %v5116, %v5602
        %v5996 = vsel %vm2035, %v5119, %v5604
        %v5997 = vsel %vm2035, %v5121, %v5606
        %v5998 = vsel %vm2035, %v5124, %v5608
        %v5999 = vsel %vm2035, %v5126, %v5610
        %v6000 = vsel %vm2035, %v5129, %v5612
        %v6001 = vsel %vm2035, %v5131, %v5614
        %v6002 = vsel %vm2035, %v5134, %v5616
        %v6003 = vsel %vm2035, %v5136, %v5618
        %v6004 = vsel %vm2035, %v5139, %v5620
        %v6005 = vsel %vm2035, %v5141, %v5622
        %v6006 = vsel %vm2035, %v5144, %v5624
        %v6007 = vsel %vm2035, %v5146, %v5626
        %v6008 = vsel %vm2035, %v5149, %v5628
        %v6009 = vsel %vm2035, %v5151, %v5630
        %v6010 = vsel %vm2035, %v5154, %v5632
        %v6011 = vsel %vm2035, %v5156, %v5634
        %v6012 = vsel %vm2035, %v5159, %v5636
        %v6013 = vsel %vm2035, %v5161, %v5638
        %v6014 = vsel %vm2035, %v5164, %v5640
        %v6015 = vsel %vm2035, %v5166, %v5642
        %v6016 = vsel %vm2035, %v5169, %v5644
        %v6017 = vsel %vm2035, %v5171, %v5646
        %v6018 = vsel %vm2035, %v5174, %v5648
        %v6019 = vsel %vm2035, %v5176, %v5650
        %v6020 = vsel %vm2035, %v5179, %v5652
        %v6021 = vsel %vm2035, %v5181, %v5654
        %v6022 = vsel %vm2035, %v5555, %v5656
        %v6023 = vsel %vm2035, %v5557, %v5658
        %v6024 = vsel %vm2100, %v5992, %v5694
        %v6025 = vsel %vm2100, %v5993, %v5696
        %v6026 = vsel %vm2100, %v5994, %v5698
        %v6027 = vsel %vm2100, %v5995, %v5700
        %v6028 = vsel %vm2100, %v5996, %v5702
        %v6029 = vsel %vm2100, %v5997, %v5704
        %v6030 = vsel %vm2100, %v5998, %v5706
        %v6031 = vsel %vm2100, %v5999, %v5708
        %v6032 = vsel %vm2100, %v6000, %v5710
        %v6033 = vsel %vm2100, %v6001, %v5712
        %v6034 = vsel %vm2100, %v6002, %v5714
        %v6035 = vsel %vm2100, %v6003, %v5716
        %v6036 = vsel %vm2100, %v6004, %v5718
        %v6037 = vsel %vm2100, %v6005, %v5720
        %v6038 = vsel %vm2100, %v6006, %v5722
        %v6039 = vsel %vm2100, %v6007, %v5724
        %v6040 = vsel %vm2100, %v6008, %v5726
        %v6041 = vsel %vm2100, %v6009, %v5728
        %v6042 = vsel %vm2100, %v6010, %v5730
        %v6043 = vsel %vm2100, %v6011, %v5732
        %v6044 = vsel %vm2100, %v6012, %v5734
        %v6045 = vsel %vm2100, %v6013, %v5736
        %v6046 = vsel %vm2100, %v6014, %v5738
        %v6047 = vsel %vm2100, %v6015, %v5740
        %v6048 = vsel %vm2100, %v6016, %v5742
        %v6049 = vsel %vm2100, %v6017, %v5744
        %v6050 = vsel %vm2100, %v6018, %v5746
        %v6051 = vsel %vm2100, %v6019, %v5748
        %v6052 = vsel %vm2100, %v6020, %v5750
        %v6053 = vsel %vm2100, %v6021, %v5752
        %v6054 = vsel %vm2100, %v6022, %v5754
        %v6055 = vsel %vm2100, %v6023, %v5756
        %v6056 = vsel %vm2166, %v6024, %v5796
        %v6057 = vsel %vm2166, %v6025, %v5798
        %v6058 = vsel %vm2166, %v6026, %v5800
        %v6059 = vsel %vm2166, %v6027, %v5802
        %v6060 = vsel %vm2166, %v6028, %v5804
        %v6061 = vsel %vm2166, %v6029, %v5806
        %v6062 = vsel %vm2166, %v6030, %v5808
        %v6063 = vsel %vm2166, %v6031, %v5810
        %v6064 = vsel %vm2166, %v6032, %v5812
        %v6065 = vsel %vm2166, %v6033, %v5814
        %v6066 = vsel %vm2166, %v6034, %v5816
        %v6067 = vsel %vm2166, %v6035, %v5818
        %v6068 = vsel %vm2166, %v6036, %v5820
        %v6069 = vsel %vm2166, %v6037, %v5822
        %v6070 = vsel %vm2166, %v6038, %v5824
        %v6071 = vsel %vm2166, %v6039, %v5826
        %v6072 = vsel %vm2166, %v6040, %v5828
        %v6073 = vsel %vm2166, %v6041, %v5830
        %v6074 = vsel %vm2166, %v6042, %v5832
        %v6075 = vsel %vm2166, %v6043, %v5834
        %v6076 = vsel %vm2166, %v6044, %v5836
        %v6077 = vsel %vm2166, %v6045, %v5838
        %v6078 = vsel %vm2166, %v6046, %v5840
        %v6079 = vsel %vm2166, %v6047, %v5842
        %v6080 = vsel %vm2166, %v6048, %v5844
        %v6081 = vsel %vm2166, %v6049, %v5846
        %v6082 = vsel %vm2166, %v6050, %v5848
        %v6083 = vsel %vm2166, %v6051, %v5850
        %v6084 = vsel %vm2166, %v6052, %v5852
        %v6085 = vsel %vm2166, %v6053, %v5854
        %v6086 = vsel %vm2166, %v6054, %v5856
        %v6087 = vsel %vm2166, %v6055, %v5858
        %v6088 = vld [vmem:[%s11] sm:$0xff]
        %v6089 = vld [vmem:[%s11 + $0x8] sm:$0xff]
        %v6090 = vld [vmem:[%s11 + $0x10] sm:$0xff]
        %v6091 = vld [vmem:[%s11 + $0x18] sm:$0xff]
        %v6092 = vld [vmem:[%s11 + $0x20] sm:$0xff]
        %v6093 = vld [vmem:[%s11 + $0x28] sm:$0xff]
        %v6094 = vld [vmem:[%s11 + $0x30] sm:$0xff]
        %v6095 = vld [vmem:[%s11 + $0x38] sm:$0xff]
        %v6096 = vld [vmem:[%s11 + $0x40] sm:$0xff]
        %v6097 = vld [vmem:[%s11 + $0x48] sm:$0xff]
        %v6098 = vld [vmem:[%s11 + $0x50] sm:$0xff]
        %v6099 = vld [vmem:[%s11 + $0x58] sm:$0xff]
        %v6100 = vld [vmem:[%s11 + $0x60] sm:$0xff]
        %v6101 = vld [vmem:[%s11 + $0x68] sm:$0xff]
        %v6102 = vld [vmem:[%s11 + $0x70] sm:$0xff]
        %v6103 = vld [vmem:[%s11 + $0x78] sm:$0xff]
        %v6104 = vld [vmem:[%s11 + $0x80] sm:$0xff]
        %v6105 = vld [vmem:[%s11 + $0x88] sm:$0xff]
        %v6106 = vld [vmem:[%s11 + $0x90] sm:$0xff]
        %v6107 = vld [vmem:[%s11 + $0x98] sm:$0xff]
        %v6108 = vld [vmem:[%s11 + $0xa0] sm:$0xff]
        %v6109 = vld [vmem:[%s11 + $0xa8] sm:$0xff]
        %v6110 = vld [vmem:[%s11 + $0xb0] sm:$0xff]
        %v6111 = vld [vmem:[%s11 + $0xb8] sm:$0xff]
        %v6112 = vld [vmem:[%s11 + $0xc0] sm:$0xff]
        %v6113 = vld [vmem:[%s11 + $0xc8] sm:$0xff]
        %v6114 = vld [vmem:[%s11 + $0xd0] sm:$0xff]
        %v6115 = vld [vmem:[%s11 + $0xd8] sm:$0xff]
        %v6116 = vld [vmem:[%s11 + $0xe0] sm:$0xff]
        %v6117 = vld [vmem:[%s11 + $0xe8] sm:$0xff]
        %v6118 = vld [vmem:[%s11 + $0xf0] sm:$0xff]
        %v6119 = vld [vmem:[%s11 + $0xf8] sm:$0xff]
        %v6120 = vld [vmem:[%s11 + $0x100] sm:$0xff]
        %v6121 = vld [vmem:[%s11 + $0x108] sm:$0xff]
        %v6122 = vld [vmem:[%s11 + $0x110] sm:$0xff]
        %v6123 = vld [vmem:[%s11 + $0x118] sm:$0xff]
        %v6124 = vld [vmem:[%s12] sm:$0x1]
        %v6126 = vlaneseq
        %v6127 = vshrl.u32 %v6126, 7
        %v6128 = vsub.s32 0, %v6127
        %v6129 = vrot.slane %v6124, %v6128
        %v6131 = vsel %vm2035, %v5290, 0
        %v6133 = vsel %vm2035, %v5292, 0
        %v6135 = vsel %vm2035, %v5295, 0
        %v6137 = vsel %vm2035, %v5297, 0
        %v6139 = vsel %vm2035, %v5300, 0
        %v6141 = vsel %vm2035, %v5302, 0
        %v6143 = vsel %vm2035, %v5305, 0
        %v6145 = vsel %vm2035, %v5307, 0
        %v6147 = vsel %vm2035, %v5310, 0
        %v6149 = vsel %vm2035, %v5312, 0
        %v6151 = vsel %vm2035, %v5315, 0
        %v6153 = vsel %vm2035, %v5317, 0
        %v6155 = vsel %vm2035, %v5320, 0
        %v6157 = vsel %vm2035, %v5322, 0
        %v6159 = vsel %vm2035, %v5325, 0
        %v6161 = vsel %vm2035, %v5327, 0
        %v6163 = vsel %vm2035, %v5330, 0
        %v6165 = vsel %vm2035, %v5332, 0
        %v6167 = vsel %vm2035, %v5335, 0
        %v6169 = vsel %vm2035, %v5337, 0
        %v6171 = vsel %vm2035, %v5340, 0
        %v6173 = vsel %vm2035, %v5342, 0
        %v6175 = vsel %vm2035, %v5345, 0
        %v6177 = vsel %vm2035, %v5347, 0
        %v6179 = vsel %vm2035, %v5350, 0
        %v6181 = vsel %vm2035, %v5352, 0
        %v6183 = vsel %vm2035, %v5355, 0
        %v6185 = vsel %vm2035, %v5357, 0
        %v6187 = vsel %vm2035, %v5592, 0
        %v6189 = vsel %vm2035, %v5594, 0
        %v6191 = vsel %vm2035, %v5893, 0
        %v6193 = vsel %vm2035, %v5895, 0
        %6195 = vmatprep.subr.mxu0 0.0
        %6196 = vmatpush1.msra.mxu0 %v6088
        %6197 = vmatprep.subr.mxu0 0.0
        %6198 = vmatpush1.msra.mxu0 %v6089
        %6199 = vmatprep.subr.mxu0 0.0
        %6200 = vmatpush1.msra.mxu0 %v6090
        %6201 = vmatprep.subr.mxu0 0.0
        %6202 = vmatpush1.msra.mxu0 %v6091
        %6203 = vmatprep.subr.mxu0 0.0
        %6204 = vmatpush1.msra.mxu0 %v6092
        %6205 = vmatprep.subr.mxu0 0.0
        %6206 = vmatpush1.msra.mxu0 %v6093
        %6207 = vmatprep.subr.mxu0 0.0
        %6208 = vmatpush1.msra.mxu0 %v6094
        %6209 = vmatprep.subr.mxu0 0.0
        %6210 = vmatpush1.msra.mxu0 %v6095
        %6211 = vmatprep.subr.mxu0 0.0
        %6212 = vmatpush1.msra.mxu0 %v6096
        %6213 = vmatprep.subr.mxu0 0.0
        %6214 = vmatpush1.msra.mxu0 %v6097
        %6215 = vmatprep.subr.mxu0 0.0
        %6216 = vmatpush1.msra.mxu0 %v6098
        %6217 = vmatprep.subr.mxu0 0.0
        %6218 = vmatpush1.msra.mxu0 %v6099
        %6219 = vmatprep.subr.mxu0 0.0
        %6220 = vmatpush1.msra.mxu0 %v6100
        %6221 = vmatprep.subr.mxu0 0.0
        %6222 = vmatpush1.msra.mxu0 %v6101
        %6223 = vmatprep.subr.mxu0 0.0
        %6224 = vmatpush1.msra.mxu0 %v6102
        %6225 = vmatprep.subr.mxu0 0.0
        %6226 = vmatpush1.msra.mxu0 %v6103
        %6227 = vmatprep.subr.mxu0 0.0
        %6228 = vmatpush1.msra.mxu0 %v6104
        %6229 = vmatprep.subr.mxu0 0.0
        %6230 = vmatpush1.msra.mxu0 %v6105
        %6231 = vmatprep.subr.mxu0 0.0
        %6232 = vmatpush1.msra.mxu0 %v6106
        %6233 = vmatprep.subr.mxu0 0.0
        %6234 = vmatpush1.msra.mxu0 %v6107
        %6235 = vmatprep.subr.mxu0 0.0
        %6236 = vmatpush1.msra.mxu0 %v6108
        %6237 = vmatprep.subr.mxu0 0.0
        %6238 = vmatpush1.msra.mxu0 %v6109
        %6239 = vmatprep.subr.mxu0 0.0
        %6240 = vmatpush1.msra.mxu0 %v6110
        %6241 = vmatprep.subr.mxu0 0.0
        %6242 = vmatpush1.msra.mxu0 %v6111
        %6243 = vmatprep.subr.mxu0 0.0
        %6244 = vmatpush1.msra.mxu0 %v6112
        %6245 = vmatprep.subr.mxu0 0.0
        %6246 = vmatpush1.msra.mxu0 %v6113
        %6247 = vmatprep.subr.mxu0 0.0
        %6248 = vmatpush1.msra.mxu0 %v6114
        %6249 = vmatprep.subr.mxu0 0.0
        %6250 = vmatpush1.msra.mxu0 %v6115
        %6251 = vmatprep.subr.mxu0 0.0
        %6252 = vmatpush1.msra.mxu0 %v6116
        %6253 = vmatprep.subr.mxu0 0.0
        %6254 = vmatpush1.msra.mxu0 %v6117
        %6255 = vmatprep.subr.mxu0 0.0
        %6256 = vmatpush1.msra.mxu0 %v6118
        %6257 = vmatprep.subr.mxu0 0.0
        %6258 = vmatpush1.msra.mxu0 %v6119
        %6259 = vmatprep.mubr.f32.mxu0 %v6056
        %6260 = vmatmul.mubr.f32.gmra.mrb[0].mxu0 %v5960
        %v6261 = vpop.f32.mrb[0].mxu0
        %v6262 = vadd.f32 %v6129, %v6261
        %v6263 = vpop.f32.mrb[0].mxu0
        %6264 = vmatprep.mubr.f32.mxu0 %v6057
        %6265 = vmatmul.mubr.f32.gmra.mrb[0].mxu0 %v5961
        %v6266 = vpop.f32.mrb[0].mxu0
        %v6267 = vadd.f32 %v6129, %v6266
        %v6268 = vpop.f32.mrb[0].mxu0
        %6269 = vmatprep.mubr.f32.mxu0 %v6058
        %6270 = vmatmul.mubr.f32.gmra.mrb[0].mxu0 %v5962
        %v6271 = vpop.f32.mrb[0].mxu0
        %v6272 = vadd.f32 %v6129, %v6271
        %v6273 = vpop.f32.mrb[0].mxu0
        %6274 = vmatprep.mubr.f32.mxu0 %v6059
        %6275 = vmatmul.mubr.f32.gmra.mrb[0].mxu0 %v5963
        %v6276 = vpop.f32.mrb[0].mxu0
        %v6277 = vadd.f32 %v6129, %v6276
        %v6278 = vpop.f32.mrb[0].mxu0
        %6279 = vmatprep.mubr.f32.mxu0 %v6060
        %6280 = vmatmul.mubr.f32.gmra.mrb[0].mxu0 %v5964
        %v6281 = vpop.f32.mrb[0].mxu0
        %v6282 = vadd.f32 %v6129, %v6281
        %v6283 = vpop.f32.mrb[0].mxu0
        %6284 = vmatprep.mubr.f32.mxu0 %v6061
        %6285 = vmatmul.mubr.f32.gmra.mrb[0].mxu0 %v5965
        %v6286 = vpop.f32.mrb[0].mxu0
        %v6287 = vadd.f32 %v6129, %v6286
        %v6288 = vpop.f32.mrb[0].mxu0
        %6289 = vmatprep.mubr.f32.mxu0 %v6062
        %6290 = vmatmul.mubr.f32.gmra.mrb[0].mxu0 %v5966
        %v6291 = vpop.f32.mrb[0].mxu0
        %v6292 = vadd.f32 %v6129, %v6291
        %v6293 = vpop.f32.mrb[0].mxu0
        %6294 = vmatprep.mubr.f32.mxu0 %v6063
        %6295 = vmatmul.mubr.f32.gmra.mrb[0].mxu0 %v5967
        %v6296 = vpop.f32.mrb[0].mxu0
        %v6297 = vadd.f32 %v6129, %v6296
        %v6298 = vpop.f32.mrb[0].mxu0
        %6299 = vmatprep.mubr.f32.mxu0 %v6064
        %6300 = vmatmul.mubr.f32.gmra.mrb[0].mxu0 %v5968
        %v6301 = vpop.f32.mrb[0].mxu0
        %v6302 = vadd.f32 %v6129, %v6301
        %v6303 = vpop.f32.mrb[0].mxu0
        %6304 = vmatprep.mubr.f32.mxu0 %v6065
        %6305 = vmatmul.mubr.f32.gmra.mrb[0].mxu0 %v5969
        %v6306 = vpop.f32.mrb[0].mxu0
        %v6307 = vadd.f32 %v6129, %v6306
        %v6308 = vpop.f32.mrb[0].mxu0
        %6309 = vmatprep.mubr.f32.mxu0 %v6066
        %6310 = vmatmul.mubr.f32.gmra.mrb[0].mxu0 %v5970
        %v6311 = vpop.f32.mrb[0].mxu0
        %v6312 = vadd.f32 %v6129, %v6311
        %v6313 = vpop.f32.mrb[0].mxu0
        %6314 = vmatprep.mubr.f32.mxu0 %v6067
        %6315 = vmatmul.mubr.f32.gmra.mrb[0].mxu0 %v5971
        %v6316 = vpop.f32.mrb[0].mxu0
        %v6317 = vadd.f32 %v6129, %v6316
        %v6318 = vpop.f32.mrb[0].mxu0
        %6319 = vmatprep.mubr.f32.mxu0 %v6068
        %6320 = vmatmul.mubr.f32.gmra.mrb[0].mxu0 %v5972
        %v6321 = vpop.f32.mrb[0].mxu0
        %v6322 = vadd.f32 %v6129, %v6321
        %v6323 = vpop.f32.mrb[0].mxu0
        %6324 = vmatprep.mubr.f32.mxu0 %v6069
        %6325 = vmatmul.mubr.f32.gmra.mrb[0].mxu0 %v5973
        %v6326 = vpop.f32.mrb[0].mxu0
        %v6327 = vadd.f32 %v6129, %v6326
        %v6328 = vpop.f32.mrb[0].mxu0
        %6329 = vmatprep.mubr.f32.mxu0 %v6070
        %6330 = vmatmul.mubr.f32.gmra.mrb[0].mxu0 %v5974
        %v6331 = vpop.f32.mrb[0].mxu0
        %v6332 = vadd.f32 %v6129, %v6331
        %v6333 = vpop.f32.mrb[0].mxu0
        %6334 = vmatprep.mubr.f32.mxu0 %v6071
        %6335 = vmatmul.mubr.f32.gmra.mrb[0].mxu0 %v5975
        %v6336 = vpop.f32.mrb[0].mxu0
        %v6337 = vadd.f32 %v6129, %v6336
        %v6338 = vpop.f32.mrb[0].mxu0
        %6339 = vmatprep.mubr.f32.mxu0 %v6072
        %6340 = vmatmul.mubr.f32.gmra.mrb[0].mxu0 %v5976
        %v6341 = vpop.f32.mrb[0].mxu0
        %v6342 = vadd.f32 %v6129, %v6341
        %v6343 = vpop.f32.mrb[0].mxu0
        %6344 = vmatprep.mubr.f32.mxu0 %v6073
        %6345 = vmatmul.mubr.f32.gmra.mrb[0].mxu0 %v5977
        %v6346 = vpop.f32.mrb[0].mxu0
        %v6347 = vadd.f32 %v6129, %v6346
        %v6348 = vpop.f32.mrb[0].mxu0
        %6349 = vmatprep.mubr.f32.mxu0 %v6074
        %6350 = vmatmul.mubr.f32.gmra.mrb[0].mxu0 %v5978
        %v6351 = vpop.f32.mrb[0].mxu0
        %v6352 = vadd.f32 %v6129, %v6351
        %v6353 = vpop.f32.mrb[0].mxu0
        %6354 = vmatprep.mubr.f32.mxu0 %v6075
        %6355 = vmatmul.mubr.f32.gmra.mrb[0].mxu0 %v5979
        %v6356 = vpop.f32.mrb[0].mxu0
        %v6357 = vadd.f32 %v6129, %v6356
        %v6358 = vpop.f32.mrb[0].mxu0
        %6359 = vmatprep.mubr.f32.mxu0 %v6076
        %6360 = vmatmul.mubr.f32.gmra.mrb[0].mxu0 %v5980
        %v6361 = vpop.f32.mrb[0].mxu0
        %v6362 = vadd.f32 %v6129, %v6361
        %v6363 = vpop.f32.mrb[0].mxu0
        %6364 = vmatprep.mubr.f32.mxu0 %v6077
        %6365 = vmatmul.mubr.f32.gmra.mrb[0].mxu0 %v5981
        %v6366 = vpop.f32.mrb[0].mxu0
        %v6367 = vadd.f32 %v6129, %v6366
        %v6368 = vpop.f32.mrb[0].mxu0
        %6369 = vmatprep.mubr.f32.mxu0 %v6078
        %6370 = vmatmul.mubr.f32.gmra.mrb[0].mxu0 %v5982
        %v6371 = vpop.f32.mrb[0].mxu0
        %v6372 = vadd.f32 %v6129, %v6371
        %v6373 = vpop.f32.mrb[0].mxu0
        %6374 = vmatprep.mubr.f32.mxu0 %v6079
        %6375 = vmatmul.mubr.f32.gmra.mrb[0].mxu0 %v5983
        %v6376 = vpop.f32.mrb[0].mxu0
        %v6377 = vadd.f32 %v6129, %v6376
        %v6378 = vpop.f32.mrb[0].mxu0
        %6379 = vmatprep.mubr.f32.mxu0 %v6080
        %6380 = vmatmul.mubr.f32.gmra.mrb[0].mxu0 %v5984
        %v6381 = vpop.f32.mrb[0].mxu0
        %v6382 = vadd.f32 %v6129, %v6381
        %v6383 = vpop.f32.mrb[0].mxu0
        %6384 = vmatprep.mubr.f32.mxu0 %v6081
        %6385 = vmatmul.mubr.f32.gmra.mrb[0].mxu0 %v5985
        %v6386 = vpop.f32.mrb[0].mxu0
        %v6387 = vadd.f32 %v6129, %v6386
        %v6388 = vpop.f32.mrb[0].mxu0
        %6389 = vmatprep.mubr.f32.mxu0 %v6082
        %6390 = vmatmul.mubr.f32.gmra.mrb[0].mxu0 %v5986
        %v6391 = vpop.f32.mrb[0].mxu0
        %v6392 = vadd.f32 %v6129, %v6391
        %v6393 = vpop.f32.mrb[0].mxu0
        %6394 = vmatprep.mubr.f32.mxu0 %v6083
        %6395 = vmatmul.mubr.f32.gmra.mrb[0].mxu0 %v5987
        %v6396 = vpop.f32.mrb[0].mxu0
        %v6397 = vadd.f32 %v6129, %v6396
        %v6398 = vpop.f32.mrb[0].mxu0
        %6399 = vmatprep.mubr.f32.mxu0 %v6084
        %6400 = vmatmul.mubr.f32.gmra.mrb[0].mxu0 %v5988
        %v6401 = vpop.f32.mrb[0].mxu0
        %v6402 = vadd.f32 %v6129, %v6401
        %v6403 = vpop.f32.mrb[0].mxu0
        %6404 = vmatprep.mubr.f32.mxu0 %v6085
        %6405 = vmatmul.mubr.f32.gmra.mrb[0].mxu0 %v5989
        %v6406 = vpop.f32.mrb[0].mxu0
        %v6407 = vadd.f32 %v6129, %v6406
        %v6408 = vpop.f32.mrb[0].mxu0
        %6409 = vmatprep.mubr.f32.mxu0 %v6086
        %6410 = vmatmul.mubr.f32.gmra.mrb[0].mxu0 %v5990
        %v6411 = vpop.f32.mrb[0].mxu0
        %v6412 = vadd.f32 %v6129, %v6411
        %v6413 = vpop.f32.mrb[0].mxu0
        %6414 = vmatprep.mubr.f32.mxu0 %v6087
        %6415 = vmatmul.mubr.f32.gmra.mrb[0].mxu0 %v5991
        %v6416 = vpop.f32.mrb[0].mxu0
        %v6417 = vadd.f32 %v6129, %v6416
        %v6418 = vpop.f32.mrb[0].mxu0
        %6419 = vdwg.mxu0
        %6420 = vmatprep.subr.mxu0 0.0
        %6421 = vmatpush1.msra.mxu0 %v6120
        %6422 = vmatprep.subr.mxu0 0.0
        %6423 = vmatpush1.msra.mxu0 %v6121
        %6424 = vmatprep.subr.mxu0 0.0
        %6425 = vmatpush1.msra.mxu0 %v6122
        %6426 = vmatprep.subr.mxu0 0.0
        %6427 = vmatpush1.msra.mxu0 %v6123
        %6428 = vmatprep.subr.mxu0 0.0
        %6429 = vmatpush1.msra.mxu0 0.0
        %6430 = vmatprep.subr.mxu0 0.0
        %6431 = vmatpush1.msra.mxu0 0.0
        %6432 = vmatprep.subr.mxu0 0.0
        %6433 = vmatpush1.msra.mxu0 0.0
        %6434 = vmatprep.subr.mxu0 0.0
        %6435 = vmatpush1.msra.mxu0 0.0
        %6436 = vmatprep.subr.mxu0 0.0
        %6437 = vmatpush1.msra.mxu0 0.0
        %6438 = vmatprep.subr.mxu0 0.0
        %6439 = vmatpush1.msra.mxu0 0.0
        %6440 = vmatprep.subr.mxu0 0.0
        %6441 = vmatpush1.msra.mxu0 0.0
        %6442 = vmatprep.subr.mxu0 0.0
        %6443 = vmatpush1.msra.mxu0 0.0
        %6444 = vmatprep.subr.mxu0 0.0
        %6445 = vmatpush1.msra.mxu0 0.0
        %6446 = vmatprep.subr.mxu0 0.0
        %6447 = vmatpush1.msra.mxu0 0.0
        %6448 = vmatprep.subr.mxu0 0.0
        %6449 = vmatpush1.msra.mxu0 0.0
        %6450 = vmatprep.subr.mxu0 0.0
        %6451 = vmatpush1.msra.mxu0 0.0
        %6452 = vmatprep.subr.mxu0 0.0
        %6453 = vmatpush1.msra.mxu0 0.0
        %6454 = vmatprep.subr.mxu0 0.0
        %6455 = vmatpush1.msra.mxu0 0.0
        %6456 = vmatprep.subr.mxu0 0.0
        %6457 = vmatpush1.msra.mxu0 0.0
        %6458 = vmatprep.subr.mxu0 0.0
        %6459 = vmatpush1.msra.mxu0 0.0
        %6460 = vmatprep.subr.mxu0 0.0
        %6461 = vmatpush1.msra.mxu0 0.0
        %6462 = vmatprep.subr.mxu0 0.0
        %6463 = vmatpush1.msra.mxu0 0.0
        %6464 = vmatprep.subr.mxu0 0.0
        %6465 = vmatpush1.msra.mxu0 0.0
        %6466 = vmatprep.subr.mxu0 0.0
        %6467 = vmatpush1.msra.mxu0 0.0
        %6468 = vmatprep.subr.mxu0 0.0
        %6469 = vmatpush1.msra.mxu0 0.0
        %6470 = vmatprep.subr.mxu0 0.0
        %6471 = vmatpush1.msra.mxu0 0.0
        %6472 = vmatprep.subr.mxu0 0.0
        %6473 = vmatpush1.msra.mxu0 0.0
        %6474 = vmatprep.subr.mxu0 0.0
        %6475 = vmatpush1.msra.mxu0 0.0
        %6476 = vmatprep.subr.mxu0 0.0
        %6477 = vmatpush1.msra.mxu0 0.0
        %6478 = vmatprep.subr.mxu0 0.0
        %6479 = vmatpush1.msra.mxu0 0.0
        %6480 = vmatprep.subr.mxu0 0.0
        %6481 = vmatpush1.msra.mxu0 0.0
        %6482 = vmatprep.subr.mxu0 0.0
        %6483 = vmatpush1.msra.mxu0 0.0
        %6484 = vmatprep.mubr.f32.mxu0 0.0
        %6485 = vmatmul.mubr.f32.gmra.mrb[0].mxu0 %v6131
        %v6486 = vpop.f32.mrb[0].mxu0
        %v6487 = vadd.f32 %v6262, %v6486
        %v6488 = vpop.f32.mrb[0].mxu0
        %6489 = vmatprep.mubr.f32.mxu0 0.0
        %6490 = vmatmul.mubr.f32.gmra.mrb[0].mxu0 %v6133
        %v6491 = vpop.f32.mrb[0].mxu0
        %v6492 = vadd.f32 %v6267, %v6491
        %v6493 = vpop.f32.mrb[0].mxu0
        %6494 = vmatprep.mubr.f32.mxu0 0.0
        %6495 = vmatmul.mubr.f32.gmra.mrb[0].mxu0 %v6135
        %v6496 = vpop.f32.mrb[0].mxu0
        %v6497 = vadd.f32 %v6272, %v6496
        %v6498 = vpop.f32.mrb[0].mxu0
        %6499 = vmatprep.mubr.f32.mxu0 0.0
        %6500 = vmatmul.mubr.f32.gmra.mrb[0].mxu0 %v6137
        %v6501 = vpop.f32.mrb[0].mxu0
        %v6502 = vadd.f32 %v6277, %v6501
        %v6503 = vpop.f32.mrb[0].mxu0
        %6504 = vmatprep.mubr.f32.mxu0 0.0
        %6505 = vmatmul.mubr.f32.gmra.mrb[0].mxu0 %v6139
        %v6506 = vpop.f32.mrb[0].mxu0
        %v6507 = vadd.f32 %v6282, %v6506
        %v6508 = vpop.f32.mrb[0].mxu0
        %6509 = vmatprep.mubr.f32.mxu0 0.0
        %6510 = vmatmul.mubr.f32.gmra.mrb[0].mxu0 %v6141
        %v6511 = vpop.f32.mrb[0].mxu0
        %v6512 = vadd.f32 %v6287, %v6511
        %v6513 = vpop.f32.mrb[0].mxu0
        %6514 = vmatprep.mubr.f32.mxu0 0.0
        %6515 = vmatmul.mubr.f32.gmra.mrb[0].mxu0 %v6143
        %v6516 = vpop.f32.mrb[0].mxu0
        %v6517 = vadd.f32 %v6292, %v6516
        %v6518 = vpop.f32.mrb[0].mxu0
        %6519 = vmatprep.mubr.f32.mxu0 0.0
        %6520 = vmatmul.mubr.f32.gmra.mrb[0].mxu0 %v6145
        %v6521 = vpop.f32.mrb[0].mxu0
        %v6522 = vadd.f32 %v6297, %v6521
        %v6523 = vpop.f32.mrb[0].mxu0
        %6524 = vmatprep.mubr.f32.mxu0 0.0
        %6525 = vmatmul.mubr.f32.gmra.mrb[0].mxu0 %v6147
        %v6526 = vpop.f32.mrb[0].mxu0
        %v6527 = vadd.f32 %v6302, %v6526
        %v6528 = vpop.f32.mrb[0].mxu0
        %6529 = vmatprep.mubr.f32.mxu0 0.0
        %6530 = vmatmul.mubr.f32.gmra.mrb[0].mxu0 %v6149
        %v6531 = vpop.f32.mrb[0].mxu0
        %v6532 = vadd.f32 %v6307, %v6531
        %v6533 = vpop.f32.mrb[0].mxu0
        %6534 = vmatprep.mubr.f32.mxu0 0.0
        %6535 = vmatmul.mubr.f32.gmra.mrb[0].mxu0 %v6151
        %v6536 = vpop.f32.mrb[0].mxu0
        %v6537 = vadd.f32 %v6312, %v6536
        %v6538 = vpop.f32.mrb[0].mxu0
        %6539 = vmatprep.mubr.f32.mxu0 0.0
        %6540 = vmatmul.mubr.f32.gmra.mrb[0].mxu0 %v6153
        %v6541 = vpop.f32.mrb[0].mxu0
        %v6542 = vadd.f32 %v6317, %v6541
        %v6543 = vpop.f32.mrb[0].mxu0
        %6544 = vmatprep.mubr.f32.mxu0 0.0
        %6545 = vmatmul.mubr.f32.gmra.mrb[0].mxu0 %v6155
        %v6546 = vpop.f32.mrb[0].mxu0
        %v6547 = vadd.f32 %v6322, %v6546
        %v6548 = vpop.f32.mrb[0].mxu0
        %6549 = vmatprep.mubr.f32.mxu0 0.0
        %6550 = vmatmul.mubr.f32.gmra.mrb[0].mxu0 %v6157
        %v6551 = vpop.f32.mrb[0].mxu0
        %v6552 = vadd.f32 %v6327, %v6551
        %v6553 = vpop.f32.mrb[0].mxu0
        %6554 = vmatprep.mubr.f32.mxu0 0.0
        %6555 = vmatmul.mubr.f32.gmra.mrb[0].mxu0 %v6159
        %v6556 = vpop.f32.mrb[0].mxu0
        %v6557 = vadd.f32 %v6332, %v6556
        %v6558 = vpop.f32.mrb[0].mxu0
        %6559 = vmatprep.mubr.f32.mxu0 0.0
        %6560 = vmatmul.mubr.f32.gmra.mrb[0].mxu0 %v6161
        %v6561 = vpop.f32.mrb[0].mxu0
        %v6562 = vadd.f32 %v6337, %v6561
        %v6563 = vpop.f32.mrb[0].mxu0
        %6564 = vmatprep.mubr.f32.mxu0 0.0
        %6565 = vmatmul.mubr.f32.gmra.mrb[0].mxu0 %v6163
        %v6566 = vpop.f32.mrb[0].mxu0
        %v6567 = vadd.f32 %v6342, %v6566
        %v6568 = vpop.f32.mrb[0].mxu0
        %6569 = vmatprep.mubr.f32.mxu0 0.0
        %6570 = vmatmul.mubr.f32.gmra.mrb[0].mxu0 %v6165
        %v6571 = vpop.f32.mrb[0].mxu0
        %v6572 = vadd.f32 %v6347, %v6571
        %v6573 = vpop.f32.mrb[0].mxu0
        %6574 = vmatprep.mubr.f32.mxu0 0.0
        %6575 = vmatmul.mubr.f32.gmra.mrb[0].mxu0 %v6167
        %v6576 = vpop.f32.mrb[0].mxu0
        %v6577 = vadd.f32 %v6352, %v6576
        %v6578 = vpop.f32.mrb[0].mxu0
        %6579 = vmatprep.mubr.f32.mxu0 0.0
        %6580 = vmatmul.mubr.f32.gmra.mrb[0].mxu0 %v6169
        %v6581 = vpop.f32.mrb[0].mxu0
        %v6582 = vadd.f32 %v6357, %v6581
        %v6583 = vpop.f32.mrb[0].mxu0
        %6584 = vmatprep.mubr.f32.mxu0 0.0
        %6585 = vmatmul.mubr.f32.gmra.mrb[0].mxu0 %v6171
        %v6586 = vpop.f32.mrb[0].mxu0
        %v6587 = vadd.f32 %v6362, %v6586
        %v6588 = vpop.f32.mrb[0].mxu0
        %6589 = vmatprep.mubr.f32.mxu0 0.0
        %6590 = vmatmul.mubr.f32.gmra.mrb[0].mxu0 %v6173
        %v6591 = vpop.f32.mrb[0].mxu0
        %v6592 = vadd.f32 %v6367, %v6591
        %v6593 = vpop.f32.mrb[0].mxu0
        %6594 = vmatprep.mubr.f32.mxu0 0.0
        %6595 = vmatmul.mubr.f32.gmra.mrb[0].mxu0 %v6175
        %v6596 = vpop.f32.mrb[0].mxu0
        %v6597 = vadd.f32 %v6372, %v6596
        %v6598 = vpop.f32.mrb[0].mxu0
        %6599 = vmatprep.mubr.f32.mxu0 0.0
        %6600 = vmatmul.mubr.f32.gmra.mrb[0].mxu0 %v6177
        %v6601 = vpop.f32.mrb[0].mxu0
        %v6602 = vadd.f32 %v6377, %v6601
        %v6603 = vpop.f32.mrb[0].mxu0
        %6604 = vmatprep.mubr.f32.mxu0 0.0
        %6605 = vmatmul.mubr.f32.gmra.mrb[0].mxu0 %v6179
        %v6606 = vpop.f32.mrb[0].mxu0
        %v6607 = vadd.f32 %v6382, %v6606
        %v6608 = vpop.f32.mrb[0].mxu0
        %6609 = vmatprep.mubr.f32.mxu0 0.0
        %6610 = vmatmul.mubr.f32.gmra.mrb[0].mxu0 %v6181
        %v6611 = vpop.f32.mrb[0].mxu0
        %v6612 = vadd.f32 %v6387, %v6611
        %v6613 = vpop.f32.mrb[0].mxu0
        %6614 = vmatprep.mubr.f32.mxu0 0.0
        %6615 = vmatmul.mubr.f32.gmra.mrb[0].mxu0 %v6183
        %v6616 = vpop.f32.mrb[0].mxu0
        %v6617 = vadd.f32 %v6392, %v6616
        %v6618 = vpop.f32.mrb[0].mxu0
        %6619 = vmatprep.mubr.f32.mxu0 0.0
        %6620 = vmatmul.mubr.f32.gmra.mrb[0].mxu0 %v6185
        %v6621 = vpop.f32.mrb[0].mxu0
        %v6622 = vadd.f32 %v6397, %v6621
        %v6623 = vpop.f32.mrb[0].mxu0
        %6624 = vmatprep.mubr.f32.mxu0 0.0
        %6625 = vmatmul.mubr.f32.gmra.mrb[0].mxu0 %v6187
        %v6626 = vpop.f32.mrb[0].mxu0
        %v6627 = vadd.f32 %v6402, %v6626
        %v6628 = vpop.f32.mrb[0].mxu0
        %6629 = vmatprep.mubr.f32.mxu0 0.0
        %6630 = vmatmul.mubr.f32.gmra.mrb[0].mxu0 %v6189
        %v6631 = vpop.f32.mrb[0].mxu0
        %v6632 = vadd.f32 %v6407, %v6631
        %v6633 = vpop.f32.mrb[0].mxu0
        %6634 = vmatprep.mubr.f32.mxu0 0.0
        %6635 = vmatmul.mubr.f32.gmra.mrb[0].mxu0 %v6191
        %v6636 = vpop.f32.mrb[0].mxu0
        %v6637 = vadd.f32 %v6412, %v6636
        %v6638 = vpop.f32.mrb[0].mxu0
        %6639 = vmatprep.mubr.f32.mxu0 0.0
        %6640 = vmatmul.mubr.f32.gmra.mrb[0].mxu0 %v6193
        %v6641 = vpop.f32.mrb[0].mxu0
        %v6642 = vadd.f32 %v6417, %v6641
        %v6643 = vpop.f32.mrb[0].mxu0
        %6644 = vdwg.mxu0
        %6677 = vrot.lane.b32.xlu0 %v6487, 32
        %v6678 = vpop.permute.xlu0 %6677
        %6679 = vrot.lane.b32.xlu0 %v6492, 32
        %v6680 = vpop.permute.xlu0 %6679
        %6681 = vrot.lane.b32.xlu0 %v6497, 32
        %v6682 = vpop.permute.xlu0 %6681
        %6683 = vrot.lane.b32.xlu0 %v6502, 32
        %v6684 = vpop.permute.xlu0 %6683
        %6685 = vrot.lane.b32.xlu0 %v6507, 32
        %v6686 = vpop.permute.xlu0 %6685
        %6687 = vrot.lane.b32.xlu0 %v6512, 32
        %v6688 = vpop.permute.xlu0 %6687
        %6689 = vrot.lane.b32.xlu0 %v6517, 32
        %v6690 = vpop.permute.xlu0 %6689
        %6691 = vrot.lane.b32.xlu0 %v6522, 32
        %v6692 = vpop.permute.xlu0 %6691
        %6693 = vrot.lane.b32.xlu0 %v6527, 32
        %v6694 = vpop.permute.xlu0 %6693
        %6695 = vrot.lane.b32.xlu0 %v6532, 32
        %v6696 = vpop.permute.xlu0 %6695
        %6697 = vrot.lane.b32.xlu0 %v6537, 32
        %v6698 = vpop.permute.xlu0 %6697
        %6699 = vrot.lane.b32.xlu0 %v6542, 32
        %v6700 = vpop.permute.xlu0 %6699
        %6701 = vrot.lane.b32.xlu0 %v6547, 32
        %v6702 = vpop.permute.xlu0 %6701
        %6703 = vrot.lane.b32.xlu0 %v6552, 32
        %v6704 = vpop.permute.xlu0 %6703
        %6705 = vrot.lane.b32.xlu0 %v6557, 32
        %v6706 = vpop.permute.xlu0 %6705
        %6707 = vrot.lane.b32.xlu0 %v6562, 32
        %v6708 = vpop.permute.xlu0 %6707
        %6709 = vrot.lane.b32.xlu0 %v6567, 32
        %v6710 = vpop.permute.xlu0 %6709
        %6711 = vrot.lane.b32.xlu0 %v6572, 32
        %v6712 = vpop.permute.xlu0 %6711
        %6713 = vrot.lane.b32.xlu0 %v6577, 32
        %v6714 = vpop.permute.xlu0 %6713
        %6715 = vrot.lane.b32.xlu0 %v6582, 32
        %v6716 = vpop.permute.xlu0 %6715
        %6717 = vrot.lane.b32.xlu0 %v6587, 32
        %v6718 = vpop.permute.xlu0 %6717
        %6719 = vrot.lane.b32.xlu0 %v6592, 32
        %v6720 = vpop.permute.xlu0 %6719
        %6721 = vrot.lane.b32.xlu0 %v6597, 32
        %v6722 = vpop.permute.xlu0 %6721
        %6723 = vrot.lane.b32.xlu0 %v6602, 32
        %v6724 = vpop.permute.xlu0 %6723
        %6725 = vrot.lane.b32.xlu0 %v6607, 32
        %v6726 = vpop.permute.xlu0 %6725
        %6727 = vrot.lane.b32.xlu0 %v6612, 32
        %v6728 = vpop.permute.xlu0 %6727
        %6729 = vrot.lane.b32.xlu0 %v6617, 32
        %v6730 = vpop.permute.xlu0 %6729
        %6731 = vrot.lane.b32.xlu0 %v6622, 32
        %v6732 = vpop.permute.xlu0 %6731
        %6733 = vrot.lane.b32.xlu0 %v6627, 32
        %v6734 = vpop.permute.xlu0 %6733
        %6735 = vrot.lane.b32.xlu0 %v6632, 32
        %v6736 = vpop.permute.xlu0 %6735
        %6737 = vrot.lane.b32.xlu0 %v6637, 32
        %v6738 = vpop.permute.xlu0 %6737
        %6739 = vrot.lane.b32.xlu0 %v6642, 32
        %v6740 = vpop.permute.xlu0 %6739
        %vm6773 = vcmask 326912
        %6774 = vst.msk [vmem:[%s765 + $0x1] sm:$0xff] %vm6773, %v6678
        %6775 = vst.msk [vmem:[%s765 + $0x9] sm:$0xff] %vm6773, %v6680
        %6776 = vst.msk [vmem:[%s765 + $0x19] sm:$0xff] %vm6773, %v6682
        %6777 = vst.msk [vmem:[%s765 + $0x21] sm:$0xff] %vm6773, %v6684
        %6778 = vst.msk [vmem:[%s765 + $0x31] sm:$0xff] %vm6773, %v6686
        %6779 = vst.msk [vmem:[%s765 + $0x39] sm:$0xff] %vm6773, %v6688
        %6780 = vst.msk [vmem:[%s765 + $0x49] sm:$0xff] %vm6773, %v6690
        %6781 = vst.msk [vmem:[%s765 + $0x51] sm:$0xff] %vm6773, %v6692
        %6782 = vst.msk [vmem:[%s765 + $0x61] sm:$0xff] %vm6773, %v6694
        %6783 = vst.msk [vmem:[%s765 + $0x69] sm:$0xff] %vm6773, %v6696
        %6784 = vst.msk [vmem:[%s765 + $0x79] sm:$0xff] %vm6773, %v6698
        %6785 = vst.msk [vmem:[%s765 + $0x81] sm:$0xff] %vm6773, %v6700
        %6786 = vst.msk [vmem:[%s765 + $0x91] sm:$0xff] %vm6773, %v6702
        %6787 = vst.msk [vmem:[%s765 + $0x99] sm:$0xff] %vm6773, %v6704
        %6788 = vst.msk [vmem:[%s765 + $0xa9] sm:$0xff] %vm6773, %v6706
        %6789 = vst.msk [vmem:[%s765 + $0xb1] sm:$0xff] %vm6773, %v6708
        %6790 = vst.msk [vmem:[%s765 + $0xc1] sm:$0xff] %vm6773, %v6710
        %6791 = vst.msk [vmem:[%s765 + $0xc9] sm:$0xff] %vm6773, %v6712
        %6792 = vst.msk [vmem:[%s765 + $0xd9] sm:$0xff] %vm6773, %v6714
        %6793 = vst.msk [vmem:[%s765 + $0xe1] sm:$0xff] %vm6773, %v6716
        %6794 = vst.msk [vmem:[%s765 + $0xf1] sm:$0xff] %vm6773, %v6718
        %6795 = vst.msk [vmem:[%s765 + $0xf9] sm:$0xff] %vm6773, %v6720
        %6796 = vst.msk [vmem:[%s765 + $0x109] sm:$0xff] %vm6773, %v6722
        %6797 = vst.msk [vmem:[%s765 + $0x111] sm:$0xff] %vm6773, %v6724
        %6798 = vst.msk [vmem:[%s765 + $0x121] sm:$0xff] %vm6773, %v6726
        %6799 = vst.msk [vmem:[%s765 + $0x129] sm:$0xff] %vm6773, %v6728
        %6800 = vst.msk [vmem:[%s765 + $0x139] sm:$0xff] %vm6773, %v6730
        %6801 = vst.msk [vmem:[%s765 + $0x141] sm:$0xff] %vm6773, %v6732
        %6802 = vst.msk [vmem:[%s765 + $0x151] sm:$0xff] %vm6773, %v6734
        %6803 = vst.msk [vmem:[%s765 + $0x159] sm:$0xff] %vm6773, %v6736
        %6804 = vst.msk [vmem:[%s765 + $0x169] sm:$0xff] %vm6773, %v6738
        %6805 = vst.msk [vmem:[%s765 + $0x171] sm:$0xff] %vm6773, %v6740
        %v6806 = vld [vmem:[#allocation2] sm:$0xff]
        %v6807 = vld [vmem:[#allocation2 + $0x8] sm:$0xff]
        %v6808 = vld [vmem:[#allocation2 + $0x10] sm:$0x3]
        %v6809 = vld [vmem:[#allocation2 + $0x18] sm:$0xff]
        %v6810 = vld [vmem:[#allocation2 + $0x20] sm:$0xff]
        %v6811 = vld [vmem:[#allocation2 + $0x28] sm:$0x3]
        %v6812 = vld [vmem:[#allocation2 + $0x30] sm:$0xff]
        %v6813 = vld [vmem:[#allocation2 + $0x38] sm:$0xff]
        %v6814 = vld [vmem:[#allocation2 + $0x40] sm:$0x3]
        %v6815 = vld [vmem:[#allocation2 + $0x48] sm:$0xff]
        %v6816 = vld [vmem:[#allocation2 + $0x50] sm:$0xff]
        %v6817 = vld [vmem:[#allocation2 + $0x58] sm:$0x3]
        %v6818 = vld [vmem:[#allocation2 + $0x60] sm:$0xff]
        %v6819 = vld [vmem:[#allocation2 + $0x68] sm:$0xff]
        %v6820 = vld [vmem:[#allocation2 + $0x70] sm:$0x3]
        %v6821 = vld [vmem:[#allocation2 + $0x78] sm:$0xff]
        %v6822 = vld [vmem:[#allocation2 + $0x80] sm:$0xff]
        %v6823 = vld [vmem:[#allocation2 + $0x88] sm:$0x3]
        %v6824 = vld [vmem:[#allocation2 + $0x90] sm:$0xff]
        %v6825 = vld [vmem:[#allocation2 + $0x98] sm:$0xff]
        %v6826 = vld [vmem:[#allocation2 + $0xa0] sm:$0x3]
        %v6827 = vld [vmem:[#allocation2 + $0xa8] sm:$0xff]
        %v6828 = vld [vmem:[#allocation2 + $0xb0] sm:$0xff]
        %v6829 = vld [vmem:[#allocation2 + $0xb8] sm:$0x3]
        %v6830 = vld [vmem:[#allocation2 + $0xc0] sm:$0xff]
        %v6831 = vld [vmem:[#allocation2 + $0xc8] sm:$0xff]
        %v6832 = vld [vmem:[#allocation2 + $0xd0] sm:$0x3]
        %v6833 = vld [vmem:[#allocation2 + $0xd8] sm:$0xff]
        %v6834 = vld [vmem:[#allocation2 + $0xe0] sm:$0xff]
        %v6835 = vld [vmem:[#allocation2 + $0xe8] sm:$0x3]
        %v6836 = vld [vmem:[#allocation2 + $0xf0] sm:$0xff]
        %v6837 = vld [vmem:[#allocation2 + $0xf8] sm:$0xff]
        %v6838 = vld [vmem:[#allocation2 + $0x100] sm:$0x3]
        %v6839 = vld [vmem:[#allocation2 + $0x108] sm:$0xff]
        %v6840 = vld [vmem:[#allocation2 + $0x110] sm:$0xff]
        %v6841 = vld [vmem:[#allocation2 + $0x118] sm:$0x3]
        %v6842 = vld [vmem:[#allocation2 + $0x120] sm:$0xff]
        %v6843 = vld [vmem:[#allocation2 + $0x128] sm:$0xff]
        %v6844 = vld [vmem:[#allocation2 + $0x130] sm:$0x3]
        %v6845 = vld [vmem:[#allocation2 + $0x138] sm:$0xff]
        %v6846 = vld [vmem:[#allocation2 + $0x140] sm:$0xff]
        %v6847 = vld [vmem:[#allocation2 + $0x148] sm:$0x3]
        %v6848 = vld [vmem:[#allocation2 + $0x150] sm:$0xff]
        %v6849 = vld [vmem:[#allocation2 + $0x158] sm:$0xff]
        %v6850 = vld [vmem:[#allocation2 + $0x160] sm:$0x3]
        %v6851 = vld [vmem:[#allocation2 + $0x168] sm:$0xff]
        %v6852 = vld [vmem:[#allocation2 + $0x170] sm:$0xff]
        %v6853 = vld [vmem:[#allocation2 + $0x178] sm:$0x3]
        %v6854 = vld [vmem:[#allocation2 + $0x180] sm:$0xff]
        %v6855 = vld [vmem:[#allocation2 + $0x188] sm:$0xff]
        %v6856 = vld [vmem:[#allocation2 + $0x190] sm:$0x3]
        %v6857 = vld [vmem:[#allocation2 + $0x198] sm:$0xff]
        %v6858 = vld [vmem:[#allocation2 + $0x1a0] sm:$0xff]
        %v6859 = vld [vmem:[#allocation2 + $0x1a8] sm:$0x3]
        %v6860 = vld [vmem:[%s13] sm:$0x1]
        %v6862 = vlaneseq
        %v6863 = vshrl.u32 %v6862, 7
        %v6864 = vsub.s32 0, %v6863
        %v6865 = vrot.slane %v6860, %v6864
        %v6867 = vmul.f32 %v6806, %v6865
        %v6868 = vmul.f32 %v6807, %v6865
        %v6869 = vmul.f32 %v6808, %v6865
        %v6870 = vmul.f32 %v6809, %v6865
        %v6871 = vmul.f32 %v6810, %v6865
        %v6872 = vmul.f32 %v6811, %v6865
        %v6873 = vmul.f32 %v6812, %v6865
        %v6874 = vmul.f32 %v6813, %v6865
        %v6875 = vmul.f32 %v6814, %v6865
        %v6876 = vmul.f32 %v6815, %v6865
        %v6877 = vmul.f32 %v6816, %v6865
        %v6878 = vmul.f32 %v6817, %v6865
        %v6879 = vmul.f32 %v6818, %v6865
        %v6880 = vmul.f32 %v6819, %v6865
        %v6881 = vmul.f32 %v6820, %v6865
        %v6882 = vmul.f32 %v6821, %v6865
        %v6883 = vmul.f32 %v6822, %v6865
        %v6884 = vmul.f32 %v6823, %v6865
        %v6885 = vmul.f32 %v6824, %v6865
        %v6886 = vmul.f32 %v6825, %v6865
        %v6887 = vmul.f32 %v6826, %v6865
        %v6888 = vmul.f32 %v6827, %v6865
        %v6889 = vmul.f32 %v6828, %v6865
        %v6890 = vmul.f32 %v6829, %v6865
        %v6891 = vmul.f32 %v6830, %v6865
        %v6892 = vmul.f32 %v6831, %v6865
        %v6893 = vmul.f32 %v6832, %v6865
        %v6894 = vmul.f32 %v6833, %v6865
        %v6895 = vmul.f32 %v6834, %v6865
        %v6896 = vmul.f32 %v6835, %v6865
        %v6897 = vmul.f32 %v6836, %v6865
        %v6898 = vmul.f32 %v6837, %v6865
        %v6899 = vmul.f32 %v6838, %v6865
        %v6900 = vmul.f32 %v6839, %v6865
        %v6901 = vmul.f32 %v6840, %v6865
        %v6902 = vmul.f32 %v6841, %v6865
        %v6903 = vmul.f32 %v6842, %v6865
        %v6904 = vmul.f32 %v6843, %v6865
        %v6905 = vmul.f32 %v6844, %v6865
        %v6906 = vmul.f32 %v6845, %v6865
        %v6907 = vmul.f32 %v6846, %v6865
        %v6908 = vmul.f32 %v6847, %v6865
        %v6909 = vmul.f32 %v6848, %v6865
        %v6910 = vmul.f32 %v6849, %v6865
        %v6911 = vmul.f32 %v6850, %v6865
        %v6912 = vmul.f32 %v6851, %v6865
        %v6913 = vmul.f32 %v6852, %v6865
        %v6914 = vmul.f32 %v6853, %v6865
        %v6915 = vmul.f32 %v6854, %v6865
        %v6916 = vmul.f32 %v6855, %v6865
        %v6917 = vmul.f32 %v6856, %v6865
        %v6918 = vmul.f32 %v6857, %v6865
        %v6919 = vmul.f32 %v6858, %v6865
        %v6920 = vmul.f32 %v6859, %v6865
        %v6921 = vld [vmem:[%s14] sm:$0x1]
        %v6923 = vlaneseq
        %v6924 = vshrl.u32 %v6923, 7
        %v6925 = vsub.s32 0, %v6924
        %v6926 = vrot.slane %v6921, %v6925
        %v6928 = vadd.f32 %v6867, %v6926
        %v6929 = vadd.f32 %v6868, %v6926
        %v6930 = vadd.f32 %v6869, %v6926
        %v6931 = vadd.f32 %v6870, %v6926
        %v6932 = vadd.f32 %v6871, %v6926
        %v6933 = vadd.f32 %v6872, %v6926
        %v6934 = vadd.f32 %v6873, %v6926
        %v6935 = vadd.f32 %v6874, %v6926
        %v6936 = vadd.f32 %v6875, %v6926
        %v6937 = vadd.f32 %v6876, %v6926
        %v6938 = vadd.f32 %v6877, %v6926
        %v6939 = vadd.f32 %v6878, %v6926
        %v6940 = vadd.f32 %v6879, %v6926
        %v6941 = vadd.f32 %v6880, %v6926
        %v6942 = vadd.f32 %v6881, %v6926
        %v6943 = vadd.f32 %v6882, %v6926
        %v6944 = vadd.f32 %v6883, %v6926
        %v6945 = vadd.f32 %v6884, %v6926
        %v6946 = vadd.f32 %v6885, %v6926
        %v6947 = vadd.f32 %v6886, %v6926
        %v6948 = vadd.f32 %v6887, %v6926
        %v6949 = vadd.f32 %v6888, %v6926
        %v6950 = vadd.f32 %v6889, %v6926
        %v6951 = vadd.f32 %v6890, %v6926
        %v6952 = vadd.f32 %v6891, %v6926
        %v6953 = vadd.f32 %v6892, %v6926
        %v6954 = vadd.f32 %v6893, %v6926
        %v6955 = vadd.f32 %v6894, %v6926
        %v6956 = vadd.f32 %v6895, %v6926
        %v6957 = vadd.f32 %v6896, %v6926
        %v6958 = vadd.f32 %v6897, %v6926
        %v6959 = vadd.f32 %v6898, %v6926
        %v6960 = vadd.f32 %v6899, %v6926
        %v6961 = vadd.f32 %v6900, %v6926
        %v6962 = vadd.f32 %v6901, %v6926
        %v6963 = vadd.f32 %v6902, %v6926
        %v6964 = vadd.f32 %v6903, %v6926
        %v6965 = vadd.f32 %v6904, %v6926
        %v6966 = vadd.f32 %v6905, %v6926
        %v6967 = vadd.f32 %v6906, %v6926
        %v6968 = vadd.f32 %v6907, %v6926
        %v6969 = vadd.f32 %v6908, %v6926
        %v6970 = vadd.f32 %v6909, %v6926
        %v6971 = vadd.f32 %v6910, %v6926
        %v6972 = vadd.f32 %v6911, %v6926
        %v6973 = vadd.f32 %v6912, %v6926
        %v6974 = vadd.f32 %v6913, %v6926
        %v6975 = vadd.f32 %v6914, %v6926
        %v6976 = vadd.f32 %v6915, %v6926
        %v6977 = vadd.f32 %v6916, %v6926
        %v6978 = vadd.f32 %v6917, %v6926
        %v6979 = vadd.f32 %v6918, %v6926
        %v6980 = vadd.f32 %v6919, %v6926
        %v6981 = vadd.f32 %v6920, %v6926
        %v6982 = vmax.f32 %v6928, 0.0
        %v6983 = vmax.f32 %v6929, 0.0
        %v6984 = vmax.f32 %v6930, 0.0
        %v6985 = vmax.f32 %v6931, 0.0
        %v6986 = vmax.f32 %v6932, 0.0
        %v6987 = vmax.f32 %v6933, 0.0
        %v6988 = vmax.f32 %v6934, 0.0
        %v6989 = vmax.f32 %v6935, 0.0
        %v6990 = vmax.f32 %v6936, 0.0
        %v6991 = vmax.f32 %v6937, 0.0
        %v6992 = vmax.f32 %v6938, 0.0
        %v6993 = vmax.f32 %v6939, 0.0
        %v6994 = vmax.f32 %v6940, 0.0
        %v6995 = vmax.f32 %v6941, 0.0
        %v6996 = vmax.f32 %v6942, 0.0
        %v6997 = vmax.f32 %v6943, 0.0
        %v6998 = vmax.f32 %v6944, 0.0
        %v6999 = vmax.f32 %v6945, 0.0
        %v7000 = vmax.f32 %v6946, 0.0
        %v7001 = vmax.f32 %v6947, 0.0
        %v7002 = vmax.f32 %v6948, 0.0
        %v7003 = vmax.f32 %v6949, 0.0
        %v7004 = vmax.f32 %v6950, 0.0
        %v7005 = vmax.f32 %v6951, 0.0
        %v7006 = vmax.f32 %v6952, 0.0
        %v7007 = vmax.f32 %v6953, 0.0
        %v7008 = vmax.f32 %v6954, 0.0
        %v7009 = vmax.f32 %v6955, 0.0
        %v7010 = vmax.f32 %v6956, 0.0
        %v7011 = vmax.f32 %v6957, 0.0
        %v7012 = vmax.f32 %v6958, 0.0
        %v7013 = vmax.f32 %v6959, 0.0
        %v7014 = vmax.f32 %v6960, 0.0
        %v7015 = vmax.f32 %v6961, 0.0
        %v7016 = vmax.f32 %v6962, 0.0
        %v7017 = vmax.f32 %v6963, 0.0
        %v7018 = vmax.f32 %v6964, 0.0
        %v7019 = vmax.f32 %v6965, 0.0
        %v7020 = vmax.f32 %v6966, 0.0
        %v7021 = vmax.f32 %v6967, 0.0
        %v7022 = vmax.f32 %v6968, 0.0
        %v7023 = vmax.f32 %v6969, 0.0
        %v7024 = vmax.f32 %v6970, 0.0
        %v7025 = vmax.f32 %v6971, 0.0
        %v7026 = vmax.f32 %v6972, 0.0
        %v7027 = vmax.f32 %v6973, 0.0
        %v7028 = vmax.f32 %v6974, 0.0
        %v7029 = vmax.f32 %v6975, 0.0
        %v7030 = vmax.f32 %v6976, 0.0
        %v7031 = vmax.f32 %v6977, 0.0
        %v7032 = vmax.f32 %v6978, 0.0
        %v7033 = vmax.f32 %v6979, 0.0
        %v7034 = vmax.f32 %v6980, 0.0
        %v7035 = vmax.f32 %v6981, 0.0
        %v7036 = vsel %vm1035, %v6982, 0.0
        %v7037 = vsel %vm1036, %v6983, 0.0
        %v7038 = vsel %vm1037, %v6984, 0.0
        %v7039 = vsel %vm1038, %v6985, 0.0
        %v7040 = vsel %vm1039, %v6986, 0.0
        %v7041 = vsel %vm1040, %v6987, 0.0
        %v7042 = vsel %vm1038, %v6988, 0.0
        %v7043 = vsel %vm1039, %v6989, 0.0
        %v7044 = vsel %vm1040, %v6990, 0.0
        %v7045 = vsel %vm1038, %v6991, 0.0
        %v7046 = vsel %vm1039, %v6992, 0.0
        %v7047 = vsel %vm1040, %v6993, 0.0
        %v7048 = vsel %vm1038, %v6994, 0.0
        %v7049 = vsel %vm1039, %v6995, 0.0
        %v7050 = vsel %vm1040, %v6996, 0.0
        %v7051 = vsel %vm1038, %v6997, 0.0
        %v7052 = vsel %vm1039, %v6998, 0.0
        %v7053 = vsel %vm1040, %v6999, 0.0
        %v7054 = vsel %vm1038, %v7000, 0.0
        %v7055 = vsel %vm1039, %v7001, 0.0
        %v7056 = vsel %vm1040, %v7002, 0.0
        %v7057 = vsel %vm1038, %v7003, 0.0
        %v7058 = vsel %vm1039, %v7004, 0.0
        %v7059 = vsel %vm1040, %v7005, 0.0
        %v7060 = vsel %vm1038, %v7006, 0.0
        %v7061 = vsel %vm1039, %v7007, 0.0
        %v7062 = vsel %vm1040, %v7008, 0.0
        %v7063 = vsel %vm1038, %v7009, 0.0
        %v7064 = vsel %vm1039, %v7010, 0.0
        %v7065 = vsel %vm1040, %v7011, 0.0
        %v7066 = vsel %vm1038, %v7012, 0.0
        %v7067 = vsel %vm1039, %v7013, 0.0
        %v7068 = vsel %vm1040, %v7014, 0.0
        %v7069 = vsel %vm1038, %v7015, 0.0
        %v7070 = vsel %vm1039, %v7016, 0.0
        %v7071 = vsel %vm1040, %v7017, 0.0
        %v7072 = vsel %vm1038, %v7018, 0.0
        %v7073 = vsel %vm1039, %v7019, 0.0
        %v7074 = vsel %vm1040, %v7020, 0.0
        %v7075 = vsel %vm1038, %v7021, 0.0
        %v7076 = vsel %vm1039, %v7022, 0.0
        %v7077 = vsel %vm1040, %v7023, 0.0
        %v7078 = vsel %vm1038, %v7024, 0.0
        %v7079 = vsel %vm1039, %v7025, 0.0
        %v7080 = vsel %vm1040, %v7026, 0.0
        %v7081 = vsel %vm1038, %v7027, 0.0
        %v7082 = vsel %vm1039, %v7028, 0.0
        %v7083 = vsel %vm1040, %v7029, 0.0
        %v7084 = vsel %vm1038, %v7030, 0.0
        %v7085 = vsel %vm1039, %v7031, 0.0
        %v7086 = vsel %vm1040, %v7032, 0.0
        %v7087 = vsel %vm1035, %v7033, 0.0
        %v7088 = vsel %vm1036, %v7034, 0.0
        %v7089 = vsel %vm1037, %v7035, 0.0
        %v7138 = vrot.slane %v7036, 1
        %v7139 = vrot.slane %v7037, 1
        %v7140 = vsel %vm1143, %v7138, %v7139
        %v7141 = vrot.slane %v7038, 1
        %v7142 = vsel %vm1143, %v7139, %v7141
        %v7143 = vrot.slane %v7039, 1
        %v7144 = vrot.slane %v7040, 1
        %v7145 = vsel %vm1143, %v7143, %v7144
        %v7146 = vrot.slane %v7041, 1
        %v7147 = vsel %vm1143, %v7144, %v7146
        %v7148 = vrot.slane %v7042, 1
        %v7149 = vrot.slane %v7043, 1
        %v7150 = vsel %vm1143, %v7148, %v7149
        %v7151 = vrot.slane %v7044, 1
        %v7152 = vsel %vm1143, %v7149, %v7151
        %v7153 = vrot.slane %v7045, 1
        %v7154 = vrot.slane %v7046, 1
        %v7155 = vsel %vm1143, %v7153, %v7154
        %v7156 = vrot.slane %v7047, 1
        %v7157 = vsel %vm1143, %v7154, %v7156
        %v7158 = vrot.slane %v7048, 1
        %v7159 = vrot.slane %v7049, 1
        %v7160 = vsel %vm1143, %v7158, %v7159
        %v7161 = vrot.slane %v7050, 1
        %v7162 = vsel %vm1143, %v7159, %v7161
        %v7163 = vrot.slane %v7051, 1
        %v7164 = vrot.slane %v7052, 1
        %v7165 = vsel %vm1143, %v7163, %v7164
        %v7166 = vrot.slane %v7053, 1
        %v7167 = vsel %vm1143, %v7164, %v7166
        %v7168 = vrot.slane %v7054, 1
        %v7169 = vrot.slane %v7055, 1
        %v7170 = vsel %vm1143, %v7168, %v7169
        %v7171 = vrot.slane %v7056, 1
        %v7172 = vsel %vm1143, %v7169, %v7171
        %v7173 = vrot.slane %v7057, 1
        %v7174 = vrot.slane %v7058, 1
        %v7175 = vsel %vm1143, %v7173, %v7174
        %v7176 = vrot.slane %v7059, 1
        %v7177 = vsel %vm1143, %v7174, %v7176
        %v7178 = vrot.slane %v7060, 1
        %v7179 = vrot.slane %v7061, 1
        %v7180 = vsel %vm1143, %v7178, %v7179
        %v7181 = vrot.slane %v7062, 1
        %v7182 = vsel %vm1143, %v7179, %v7181
        %v7183 = vrot.slane %v7063, 1
        %v7184 = vrot.slane %v7064, 1
        %v7185 = vsel %vm1143, %v7183, %v7184
        %v7186 = vrot.slane %v7065, 1
        %v7187 = vsel %vm1143, %v7184, %v7186
        %v7188 = vrot.slane %v7066, 1
        %v7189 = vrot.slane %v7067, 1
        %v7190 = vsel %vm1143, %v7188, %v7189
        %v7191 = vrot.slane %v7068, 1
        %v7192 = vsel %vm1143, %v7189, %v7191
        %v7193 = vrot.slane %v7069, 1
        %v7194 = vrot.slane %v7070, 1
        %v7195 = vsel %vm1143, %v7193, %v7194
        %v7196 = vrot.slane %v7071, 1
        %v7197 = vsel %vm1143, %v7194, %v7196
        %v7198 = vrot.slane %v7072, 1
        %v7199 = vrot.slane %v7073, 1
        %v7200 = vsel %vm1143, %v7198, %v7199
        %v7201 = vrot.slane %v7074, 1
        %v7202 = vsel %vm1143, %v7199, %v7201
        %v7203 = vrot.slane %v7075, 1
        %v7204 = vrot.slane %v7076, 1
        %v7205 = vsel %vm1143, %v7203, %v7204
        %v7206 = vrot.slane %v7077, 1
        %v7207 = vsel %vm1143, %v7204, %v7206
        %v7208 = vrot.slane %v7078, 1
        %v7209 = vrot.slane %v7079, 1
        %v7210 = vsel %vm1143, %v7208, %v7209
        %v7211 = vrot.slane %v7080, 1
        %v7212 = vsel %vm1143, %v7209, %v7211
        %v7213 = vrot.slane %v7081, 1
        %v7214 = vrot.slane %v7082, 1
        %v7215 = vsel %vm1143, %v7213, %v7214
        %v7216 = vrot.slane %v7083, 1
        %v7217 = vsel %vm1143, %v7214, %v7216
        %7218 = vrot.lane.b32.xlu0 %v7140, 40
        %v7219 = vpop.permute.xlu0 %7218
        %7220 = vrot.lane.b32.xlu0 %v7142, 40
        %v7221 = vpop.permute.xlu0 %7220
        %7222 = vrot.lane.b32.xlu0 %v7145, 40
        %v7223 = vpop.permute.xlu0 %7222
        %7224 = vrot.lane.b32.xlu0 %v7147, 40
        %v7225 = vpop.permute.xlu0 %7224
        %7226 = vrot.lane.b32.xlu0 %v7150, 40
        %v7227 = vpop.permute.xlu0 %7226
        %7228 = vrot.lane.b32.xlu0 %v7152, 40
        %v7229 = vpop.permute.xlu0 %7228
        %7230 = vrot.lane.b32.xlu0 %v7155, 40
        %v7231 = vpop.permute.xlu0 %7230
        %7232 = vrot.lane.b32.xlu0 %v7157, 40
        %v7233 = vpop.permute.xlu0 %7232
        %7234 = vrot.lane.b32.xlu0 %v7160, 40
        %v7235 = vpop.permute.xlu0 %7234
        %7236 = vrot.lane.b32.xlu0 %v7162, 40
        %v7237 = vpop.permute.xlu0 %7236
        %7238 = vrot.lane.b32.xlu0 %v7165, 40
        %v7239 = vpop.permute.xlu0 %7238
        %7240 = vrot.lane.b32.xlu0 %v7167, 40
        %v7241 = vpop.permute.xlu0 %7240
        %7242 = vrot.lane.b32.xlu0 %v7170, 40
        %v7243 = vpop.permute.xlu0 %7242
        %7244 = vrot.lane.b32.xlu0 %v7172, 40
        %v7245 = vpop.permute.xlu0 %7244
        %7246 = vrot.lane.b32.xlu0 %v7175, 40
        %v7247 = vpop.permute.xlu0 %7246
        %7248 = vrot.lane.b32.xlu0 %v7177, 40
        %v7249 = vpop.permute.xlu0 %7248
        %7250 = vrot.lane.b32.xlu0 %v7180, 40
        %v7251 = vpop.permute.xlu0 %7250
        %7252 = vrot.lane.b32.xlu0 %v7182, 40
        %v7253 = vpop.permute.xlu0 %7252
        %7254 = vrot.lane.b32.xlu0 %v7185, 40
        %v7255 = vpop.permute.xlu0 %7254
        %7256 = vrot.lane.b32.xlu0 %v7187, 40
        %v7257 = vpop.permute.xlu0 %7256
        %7258 = vrot.lane.b32.xlu0 %v7190, 40
        %v7259 = vpop.permute.xlu0 %7258
        %7260 = vrot.lane.b32.xlu0 %v7192, 40
        %v7261 = vpop.permute.xlu0 %7260
        %7262 = vrot.lane.b32.xlu0 %v7195, 40
        %v7263 = vpop.permute.xlu0 %7262
        %7264 = vrot.lane.b32.xlu0 %v7197, 40
        %v7265 = vpop.permute.xlu0 %7264
        %7266 = vrot.lane.b32.xlu0 %v7200, 40
        %v7267 = vpop.permute.xlu0 %7266
        %7268 = vrot.lane.b32.xlu0 %v7202, 40
        %v7269 = vpop.permute.xlu0 %7268
        %7270 = vrot.lane.b32.xlu0 %v7205, 40
        %v7271 = vpop.permute.xlu0 %7270
        %7272 = vrot.lane.b32.xlu0 %v7207, 40
        %v7273 = vpop.permute.xlu0 %7272
        %7274 = vrot.lane.b32.xlu0 %v7210, 40
        %v7275 = vpop.permute.xlu0 %7274
        %7276 = vrot.lane.b32.xlu0 %v7212, 40
        %v7277 = vpop.permute.xlu0 %7276
        %7278 = vrot.lane.b32.xlu0 %v7215, 40
        %v7279 = vpop.permute.xlu0 %7278
        %7280 = vrot.lane.b32.xlu0 %v7217, 40
        %v7281 = vpop.permute.xlu0 %7280
        %v7314 = vrot.slane %v7036, 2
        %v7315 = vrot.slane %v7037, 2
        %v7316 = vsel %vm1320, %v7314, %v7315
        %v7317 = vrot.slane %v7038, 2
        %v7318 = vsel %vm1320, %v7315, %v7317
        %v7319 = vrot.slane %v7039, 2
        %v7320 = vrot.slane %v7040, 2
        %v7321 = vsel %vm1320, %v7319, %v7320
        %v7322 = vrot.slane %v7041, 2
        %v7323 = vsel %vm1320, %v7320, %v7322
        %v7324 = vrot.slane %v7042, 2
        %v7325 = vrot.slane %v7043, 2
        %v7326 = vsel %vm1320, %v7324, %v7325
        %v7327 = vrot.slane %v7044, 2
        %v7328 = vsel %vm1320, %v7325, %v7327
        %v7329 = vrot.slane %v7045, 2
        %v7330 = vrot.slane %v7046, 2
        %v7331 = vsel %vm1320, %v7329, %v7330
        %v7332 = vrot.slane %v7047, 2
        %v7333 = vsel %vm1320, %v7330, %v7332
        %v7334 = vrot.slane %v7048, 2
        %v7335 = vrot.slane %v7049, 2
        %v7336 = vsel %vm1320, %v7334, %v7335
        %v7337 = vrot.slane %v7050, 2
        %v7338 = vsel %vm1320, %v7335, %v7337
        %v7339 = vrot.slane %v7051, 2
        %v7340 = vrot.slane %v7052, 2
        %v7341 = vsel %vm1320, %v7339, %v7340
        %v7342 = vrot.slane %v7053, 2
        %v7343 = vsel %vm1320, %v7340, %v7342
        %v7344 = vrot.slane %v7054, 2
        %v7345 = vrot.slane %v7055, 2
        %v7346 = vsel %vm1320, %v7344, %v7345
        %v7347 = vrot.slane %v7056, 2
        %v7348 = vsel %vm1320, %v7345, %v7347
        %v7349 = vrot.slane %v7057, 2
        %v7350 = vrot.slane %v7058, 2
        %v7351 = vsel %vm1320, %v7349, %v7350
        %v7352 = vrot.slane %v7059, 2
        %v7353 = vsel %vm1320, %v7350, %v7352
        %v7354 = vrot.slane %v7060, 2
        %v7355 = vrot.slane %v7061, 2
        %v7356 = vsel %vm1320, %v7354, %v7355
        %v7357 = vrot.slane %v7062, 2
        %v7358 = vsel %vm1320, %v7355, %v7357
        %v7359 = vrot.slane %v7063, 2
        %v7360 = vrot.slane %v7064, 2
        %v7361 = vsel %vm1320, %v7359, %v7360
        %v7362 = vrot.slane %v7065, 2
        %v7363 = vsel %vm1320, %v7360, %v7362
        %v7364 = vrot.slane %v7066, 2
        %v7365 = vrot.slane %v7067, 2
        %v7366 = vsel %vm1320, %v7364, %v7365
        %v7367 = vrot.slane %v7068, 2
        %v7368 = vsel %vm1320, %v7365, %v7367
        %v7369 = vrot.slane %v7069, 2
        %v7370 = vrot.slane %v7070, 2
        %v7371 = vsel %vm1320, %v7369, %v7370
        %v7372 = vrot.slane %v7071, 2
        %v7373 = vsel %vm1320, %v7370, %v7372
        %v7374 = vrot.slane %v7072, 2
        %v7375 = vrot.slane %v7073, 2
        %v7376 = vsel %vm1320, %v7374, %v7375
        %v7377 = vrot.slane %v7074, 2
        %v7378 = vsel %vm1320, %v7375, %v7377
        %v7379 = vrot.slane %v7075, 2
        %v7380 = vrot.slane %v7076, 2
        %v7381 = vsel %vm1320, %v7379, %v7380
        %v7382 = vrot.slane %v7077, 2
        %v7383 = vsel %vm1320, %v7380, %v7382
        %v7384 = vrot.slane %v7078, 2
        %v7385 = vrot.slane %v7079, 2
        %v7386 = vsel %vm1320, %v7384, %v7385
        %v7387 = vrot.slane %v7080, 2
        %v7388 = vsel %vm1320, %v7385, %v7387
        %v7389 = vrot.slane %v7081, 2
        %v7390 = vrot.slane %v7082, 2
        %v7391 = vsel %vm1320, %v7389, %v7390
        %v7392 = vrot.slane %v7083, 2
        %v7393 = vsel %vm1320, %v7390, %v7392
        %7394 = vrot.lane.b32.xlu0 %v7316, 80
        %v7395 = vpop.permute.xlu0 %7394
        %7396 = vrot.lane.b32.xlu0 %v7318, 80
        %v7397 = vpop.permute.xlu0 %7396
        %7398 = vrot.lane.b32.xlu0 %v7321, 80
        %v7399 = vpop.permute.xlu0 %7398
        %7400 = vrot.lane.b32.xlu0 %v7323, 80
        %v7401 = vpop.permute.xlu0 %7400
        %7402 = vrot.lane.b32.xlu0 %v7326, 80
        %v7403 = vpop.permute.xlu0 %7402
        %7404 = vrot.lane.b32.xlu0 %v7328, 80
        %v7405 = vpop.permute.xlu0 %7404
        %7406 = vrot.lane.b32.xlu0 %v7331, 80
        %v7407 = vpop.permute.xlu0 %7406
        %7408 = vrot.lane.b32.xlu0 %v7333, 80
        %v7409 = vpop.permute.xlu0 %7408
        %7410 = vrot.lane.b32.xlu0 %v7336, 80
        %v7411 = vpop.permute.xlu0 %7410
        %7412 = vrot.lane.b32.xlu0 %v7338, 80
        %v7413 = vpop.permute.xlu0 %7412
        %7414 = vrot.lane.b32.xlu0 %v7341, 80
        %v7415 = vpop.permute.xlu0 %7414
        %7416 = vrot.lane.b32.xlu0 %v7343, 80
        %v7417 = vpop.permute.xlu0 %7416
        %7418 = vrot.lane.b32.xlu0 %v7346, 80
        %v7419 = vpop.permute.xlu0 %7418
        %7420 = vrot.lane.b32.xlu0 %v7348, 80
        %v7421 = vpop.permute.xlu0 %7420
        %7422 = vrot.lane.b32.xlu0 %v7351, 80
        %v7423 = vpop.permute.xlu0 %7422
        %7424 = vrot.lane.b32.xlu0 %v7353, 80
        %v7425 = vpop.permute.xlu0 %7424
        %7426 = vrot.lane.b32.xlu0 %v7356, 80
        %v7427 = vpop.permute.xlu0 %7426
        %7428 = vrot.lane.b32.xlu0 %v7358, 80
        %v7429 = vpop.permute.xlu0 %7428
        %7430 = vrot.lane.b32.xlu0 %v7361, 80
        %v7431 = vpop.permute.xlu0 %7430
        %7432 = vrot.lane.b32.xlu0 %v7363, 80
        %v7433 = vpop.permute.xlu0 %7432
        %7434 = vrot.lane.b32.xlu0 %v7366, 80
        %v7435 = vpop.permute.xlu0 %7434
        %7436 = vrot.lane.b32.xlu0 %v7368, 80
        %v7437 = vpop.permute.xlu0 %7436
        %7438 = vrot.lane.b32.xlu0 %v7371, 80
        %v7439 = vpop.permute.xlu0 %7438
        %7440 = vrot.lane.b32.xlu0 %v7373, 80
        %v7441 = vpop.permute.xlu0 %7440
        %7442 = vrot.lane.b32.xlu0 %v7376, 80
        %v7443 = vpop.permute.xlu0 %7442
        %7444 = vrot.lane.b32.xlu0 %v7378, 80
        %v7445 = vpop.permute.xlu0 %7444
        %7446 = vrot.lane.b32.xlu0 %v7381, 80
        %v7447 = vpop.permute.xlu0 %7446
        %7448 = vrot.lane.b32.xlu0 %v7383, 80
        %v7449 = vpop.permute.xlu0 %7448
        %7450 = vrot.lane.b32.xlu0 %v7386, 80
        %v7451 = vpop.permute.xlu0 %7450
        %7452 = vrot.lane.b32.xlu0 %v7388, 80
        %v7453 = vpop.permute.xlu0 %7452
        %7454 = vrot.lane.b32.xlu0 %v7391, 80
        %v7455 = vpop.permute.xlu0 %7454
        %7456 = vrot.lane.b32.xlu0 %v7393, 80
        %v7457 = vpop.permute.xlu0 %7456
        %7492 = vrot.lane.b32.xlu0 %v7039, 120
        %v7493 = vpop.permute.xlu0 %7492
        %7494 = vrot.lane.b32.xlu0 %v7040, 120
        %v7495 = vpop.permute.xlu0 %7494
        %7496 = vrot.lane.b32.xlu0 %v7042, 120
        %v7497 = vpop.permute.xlu0 %7496
        %7498 = vrot.lane.b32.xlu0 %v7043, 120
        %v7499 = vpop.permute.xlu0 %7498
        %7500 = vrot.lane.b32.xlu0 %v7045, 120
        %v7501 = vpop.permute.xlu0 %7500
        %7502 = vrot.lane.b32.xlu0 %v7046, 120
        %v7503 = vpop.permute.xlu0 %7502
        %7504 = vrot.lane.b32.xlu0 %v7048, 120
        %v7505 = vpop.permute.xlu0 %7504
        %7506 = vrot.lane.b32.xlu0 %v7049, 120
        %v7507 = vpop.permute.xlu0 %7506
        %7508 = vrot.lane.b32.xlu0 %v7051, 120
        %v7509 = vpop.permute.xlu0 %7508
        %7510 = vrot.lane.b32.xlu0 %v7052, 120
        %v7511 = vpop.permute.xlu0 %7510
        %7512 = vrot.lane.b32.xlu0 %v7054, 120
        %v7513 = vpop.permute.xlu0 %7512
        %7514 = vrot.lane.b32.xlu0 %v7055, 120
        %v7515 = vpop.permute.xlu0 %7514
        %7516 = vrot.lane.b32.xlu0 %v7057, 120
        %v7517 = vpop.permute.xlu0 %7516
        %7518 = vrot.lane.b32.xlu0 %v7058, 120
        %v7519 = vpop.permute.xlu0 %7518
        %7520 = vrot.lane.b32.xlu0 %v7060, 120
        %v7521 = vpop.permute.xlu0 %7520
        %7522 = vrot.lane.b32.xlu0 %v7061, 120
        %v7523 = vpop.permute.xlu0 %7522
        %7524 = vrot.lane.b32.xlu0 %v7063, 120
        %v7525 = vpop.permute.xlu0 %7524
        %7526 = vrot.lane.b32.xlu0 %v7064, 120
        %v7527 = vpop.permute.xlu0 %7526
        %7528 = vrot.lane.b32.xlu0 %v7066, 120
        %v7529 = vpop.permute.xlu0 %7528
        %7530 = vrot.lane.b32.xlu0 %v7067, 120
        %v7531 = vpop.permute.xlu0 %7530
        %7532 = vrot.lane.b32.xlu0 %v7069, 120
        %v7533 = vpop.permute.xlu0 %7532
        %7534 = vrot.lane.b32.xlu0 %v7070, 120
        %v7535 = vpop.permute.xlu0 %7534
        %7536 = vrot.lane.b32.xlu0 %v7072, 120
        %v7537 = vpop.permute.xlu0 %7536
        %7538 = vrot.lane.b32.xlu0 %v7073, 120
        %v7539 = vpop.permute.xlu0 %7538
        %7540 = vrot.lane.b32.xlu0 %v7075, 120
        %v7541 = vpop.permute.xlu0 %7540
        %7542 = vrot.lane.b32.xlu0 %v7076, 120
        %v7543 = vpop.permute.xlu0 %7542
        %7544 = vrot.lane.b32.xlu0 %v7078, 120
        %v7545 = vpop.permute.xlu0 %7544
        %7546 = vrot.lane.b32.xlu0 %v7079, 120
        %v7547 = vpop.permute.xlu0 %7546
        %7548 = vrot.lane.b32.xlu0 %v7081, 120
        %v7549 = vpop.permute.xlu0 %7548
        %7550 = vrot.lane.b32.xlu0 %v7082, 120
        %v7551 = vpop.permute.xlu0 %7550
        %7552 = vrot.lane.b32.xlu0 %v7084, 120
        %v7553 = vpop.permute.xlu0 %7552
        %7554 = vrot.lane.b32.xlu0 %v7085, 120
        %v7555 = vpop.permute.xlu0 %7554
        %v7589 = vrot.slane %v7084, 1
        %v7590 = vrot.slane %v7085, 1
        %v7591 = vsel %vm1143, %v7589, %v7590
        %v7592 = vrot.slane %v7086, 1
        %v7593 = vsel %vm1143, %v7590, %v7592
        %7594 = vrot.lane.b32.xlu0 %v7145, 32
        %v7595 = vpop.permute.xlu0 %7594
        %7596 = vrot.lane.b32.xlu0 %v7147, 32
        %v7597 = vpop.permute.xlu0 %7596
        %7598 = vrot.lane.b32.xlu0 %v7150, 32
        %v7599 = vpop.permute.xlu0 %7598
        %7600 = vrot.lane.b32.xlu0 %v7152, 32
        %v7601 = vpop.permute.xlu0 %7600
        %7602 = vrot.lane.b32.xlu0 %v7155, 32
        %v7603 = vpop.permute.xlu0 %7602
        %7604 = vrot.lane.b32.xlu0 %v7157, 32
        %v7605 = vpop.permute.xlu0 %7604
        %7606 = vrot.lane.b32.xlu0 %v7160, 32
        %v7607 = vpop.permute.xlu0 %7606
        %7608 = vrot.lane.b32.xlu0 %v7162, 32
        %v7609 = vpop.permute.xlu0 %7608
        %7610 = vrot.lane.b32.xlu0 %v7165, 32
        %v7611 = vpop.permute.xlu0 %7610
        %7612 = vrot.lane.b32.xlu0 %v7167, 32
        %v7613 = vpop.permute.xlu0 %7612
        %7614 = vrot.lane.b32.xlu0 %v7170, 32
        %v7615 = vpop.permute.xlu0 %7614
        %7616 = vrot.lane.b32.xlu0 %v7172, 32
        %v7617 = vpop.permute.xlu0 %7616
        %7618 = vrot.lane.b32.xlu0 %v7175, 32
        %v7619 = vpop.permute.xlu0 %7618
        %7620 = vrot.lane.b32.xlu0 %v7177, 32
        %v7621 = vpop.permute.xlu0 %7620
        %7622 = vrot.lane.b32.xlu0 %v7180, 32
        %v7623 = vpop.permute.xlu0 %7622
        %7624 = vrot.lane.b32.xlu0 %v7182, 32
        %v7625 = vpop.permute.xlu0 %7624
        %7626 = vrot.lane.b32.xlu0 %v7185, 32
        %v7627 = vpop.permute.xlu0 %7626
        %7628 = vrot.lane.b32.xlu0 %v7187, 32
        %v7629 = vpop.permute.xlu0 %7628
        %7630 = vrot.lane.b32.xlu0 %v7190, 32
        %v7631 = vpop.permute.xlu0 %7630
        %7632 = vrot.lane.b32.xlu0 %v7192, 32
        %v7633 = vpop.permute.xlu0 %7632
        %7634 = vrot.lane.b32.xlu0 %v7195, 32
        %v7635 = vpop.permute.xlu0 %7634
        %7636 = vrot.lane.b32.xlu0 %v7197, 32
        %v7637 = vpop.permute.xlu0 %7636
        %7638 = vrot.lane.b32.xlu0 %v7200, 32
        %v7639 = vpop.permute.xlu0 %7638
        %7640 = vrot.lane.b32.xlu0 %v7202, 32
        %v7641 = vpop.permute.xlu0 %7640
        %7642 = vrot.lane.b32.xlu0 %v7205, 32
        %v7643 = vpop.permute.xlu0 %7642
        %7644 = vrot.lane.b32.xlu0 %v7207, 32
        %v7645 = vpop.permute.xlu0 %7644
        %7646 = vrot.lane.b32.xlu0 %v7210, 32
        %v7647 = vpop.permute.xlu0 %7646
        %7648 = vrot.lane.b32.xlu0 %v7212, 32
        %v7649 = vpop.permute.xlu0 %7648
        %7650 = vrot.lane.b32.xlu0 %v7215, 32
        %v7651 = vpop.permute.xlu0 %7650
        %7652 = vrot.lane.b32.xlu0 %v7217, 32
        %v7653 = vpop.permute.xlu0 %7652
        %7654 = vrot.lane.b32.xlu0 %v7591, 32
        %v7655 = vpop.permute.xlu0 %7654
        %7656 = vrot.lane.b32.xlu0 %v7593, 32
        %v7657 = vpop.permute.xlu0 %7656
        %v7690 = vrot.slane %v7084, 2
        %v7691 = vrot.slane %v7085, 2
        %v7692 = vsel %vm1320, %v7690, %v7691
        %v7693 = vrot.slane %v7086, 2
        %v7694 = vsel %vm1320, %v7691, %v7693
        %7695 = vrot.lane.b32.xlu0 %v7321, 72
        %v7696 = vpop.permute.xlu0 %7695
        %7697 = vrot.lane.b32.xlu0 %v7323, 72
        %v7698 = vpop.permute.xlu0 %7697
        %7699 = vrot.lane.b32.xlu0 %v7326, 72
        %v7700 = vpop.permute.xlu0 %7699
        %7701 = vrot.lane.b32.xlu0 %v7328, 72
        %v7702 = vpop.permute.xlu0 %7701
        %7703 = vrot.lane.b32.xlu0 %v7331, 72
        %v7704 = vpop.permute.xlu0 %7703
        %7705 = vrot.lane.b32.xlu0 %v7333, 72
        %v7706 = vpop.permute.xlu0 %7705
        %7707 = vrot.lane.b32.xlu0 %v7336, 72
        %v7708 = vpop.permute.xlu0 %7707
        %7709 = vrot.lane.b32.xlu0 %v7338, 72
        %v7710 = vpop.permute.xlu0 %7709
        %7711 = vrot.lane.b32.xlu0 %v7341, 72
        %v7712 = vpop.permute.xlu0 %7711
        %7713 = vrot.lane.b32.xlu0 %v7343, 72
        %v7714 = vpop.permute.xlu0 %7713
        %7715 = vrot.lane.b32.xlu0 %v7346, 72
        %v7716 = vpop.permute.xlu0 %7715
        %7717 = vrot.lane.b32.xlu0 %v7348, 72
        %v7718 = vpop.permute.xlu0 %7717
        %7719 = vrot.lane.b32.xlu0 %v7351, 72
        %v7720 = vpop.permute.xlu0 %7719
        %7721 = vrot.lane.b32.xlu0 %v7353, 72
        %v7722 = vpop.permute.xlu0 %7721
        %7723 = vrot.lane.b32.xlu0 %v7356, 72
        %v7724 = vpop.permute.xlu0 %7723
        %7725 = vrot.lane.b32.xlu0 %v7358, 72
        %v7726 = vpop.permute.xlu0 %7725
        %7727 = vrot.lane.b32.xlu0 %v7361, 72
        %v7728 = vpop.permute.xlu0 %7727
        %7729 = vrot.lane.b32.xlu0 %v7363, 72
        %v7730 = vpop.permute.xlu0 %7729
        %7731 = vrot.lane.b32.xlu0 %v7366, 72
        %v7732 = vpop.permute.xlu0 %7731
        %7733 = vrot.lane.b32.xlu0 %v7368, 72
        %v7734 = vpop.permute.xlu0 %7733
        %7735 = vrot.lane.b32.xlu0 %v7371, 72
        %v7736 = vpop.permute.xlu0 %7735
        %7737 = vrot.lane.b32.xlu0 %v7373, 72
        %v7738 = vpop.permute.xlu0 %7737
        %7739 = vrot.lane.b32.xlu0 %v7376, 72
        %v7740 = vpop.permute.xlu0 %7739
        %7741 = vrot.lane.b32.xlu0 %v7378, 72
        %v7742 = vpop.permute.xlu0 %7741
        %7743 = vrot.lane.b32.xlu0 %v7381, 72
        %v7744 = vpop.permute.xlu0 %7743
        %7745 = vrot.lane.b32.xlu0 %v7383, 72
        %v7746 = vpop.permute.xlu0 %7745
        %7747 = vrot.lane.b32.xlu0 %v7386, 72
        %v7748 = vpop.permute.xlu0 %7747
        %7749 = vrot.lane.b32.xlu0 %v7388, 72
        %v7750 = vpop.permute.xlu0 %7749
        %7751 = vrot.lane.b32.xlu0 %v7391, 72
        %v7752 = vpop.permute.xlu0 %7751
        %7753 = vrot.lane.b32.xlu0 %v7393, 72
        %v7754 = vpop.permute.xlu0 %7753
        %7755 = vrot.lane.b32.xlu0 %v7692, 72
        %v7756 = vpop.permute.xlu0 %7755
        %7757 = vrot.lane.b32.xlu0 %v7694, 72
        %v7758 = vpop.permute.xlu0 %7757
        %7793 = vrot.lane.b32.xlu0 %v7042, 112
        %v7794 = vpop.permute.xlu0 %7793
        %7795 = vrot.lane.b32.xlu0 %v7043, 112
        %v7796 = vpop.permute.xlu0 %7795
        %7797 = vrot.lane.b32.xlu0 %v7045, 112
        %v7798 = vpop.permute.xlu0 %7797
        %7799 = vrot.lane.b32.xlu0 %v7046, 112
        %v7800 = vpop.permute.xlu0 %7799
        %7801 = vrot.lane.b32.xlu0 %v7048, 112
        %v7802 = vpop.permute.xlu0 %7801
        %7803 = vrot.lane.b32.xlu0 %v7049, 112
        %v7804 = vpop.permute.xlu0 %7803
        %7805 = vrot.lane.b32.xlu0 %v7051, 112
        %v7806 = vpop.permute.xlu0 %7805
        %7807 = vrot.lane.b32.xlu0 %v7052, 112
        %v7808 = vpop.permute.xlu0 %7807
        %7809 = vrot.lane.b32.xlu0 %v7054, 112
        %v7810 = vpop.permute.xlu0 %7809
        %7811 = vrot.lane.b32.xlu0 %v7055, 112
        %v7812 = vpop.permute.xlu0 %7811
        %7813 = vrot.lane.b32.xlu0 %v7057, 112
        %v7814 = vpop.permute.xlu0 %7813
        %7815 = vrot.lane.b32.xlu0 %v7058, 112
        %v7816 = vpop.permute.xlu0 %7815
        %7817 = vrot.lane.b32.xlu0 %v7060, 112
        %v7818 = vpop.permute.xlu0 %7817
        %7819 = vrot.lane.b32.xlu0 %v7061, 112
        %v7820 = vpop.permute.xlu0 %7819
        %7821 = vrot.lane.b32.xlu0 %v7063, 112
        %v7822 = vpop.permute.xlu0 %7821
        %7823 = vrot.lane.b32.xlu0 %v7064, 112
        %v7824 = vpop.permute.xlu0 %7823
        %7825 = vrot.lane.b32.xlu0 %v7066, 112
        %v7826 = vpop.permute.xlu0 %7825
        %7827 = vrot.lane.b32.xlu0 %v7067, 112
        %v7828 = vpop.permute.xlu0 %7827
        %7829 = vrot.lane.b32.xlu0 %v7069, 112
        %v7830 = vpop.permute.xlu0 %7829
        %7831 = vrot.lane.b32.xlu0 %v7070, 112
        %v7832 = vpop.permute.xlu0 %7831
        %7833 = vrot.lane.b32.xlu0 %v7072, 112
        %v7834 = vpop.permute.xlu0 %7833
        %7835 = vrot.lane.b32.xlu0 %v7073, 112
        %v7836 = vpop.permute.xlu0 %7835
        %7837 = vrot.lane.b32.xlu0 %v7075, 112
        %v7838 = vpop.permute.xlu0 %7837
        %7839 = vrot.lane.b32.xlu0 %v7076, 112
        %v7840 = vpop.permute.xlu0 %7839
        %7841 = vrot.lane.b32.xlu0 %v7078, 112
        %v7842 = vpop.permute.xlu0 %7841
        %7843 = vrot.lane.b32.xlu0 %v7079, 112
        %v7844 = vpop.permute.xlu0 %7843
        %7845 = vrot.lane.b32.xlu0 %v7081, 112
        %v7846 = vpop.permute.xlu0 %7845
        %7847 = vrot.lane.b32.xlu0 %v7082, 112
        %v7848 = vpop.permute.xlu0 %7847
        %7849 = vrot.lane.b32.xlu0 %v7084, 112
        %v7850 = vpop.permute.xlu0 %7849
        %7851 = vrot.lane.b32.xlu0 %v7085, 112
        %v7852 = vpop.permute.xlu0 %7851
        %7853 = vrot.lane.b32.xlu0 %v7087, 112
        %v7854 = vpop.permute.xlu0 %7853
        %7855 = vrot.lane.b32.xlu0 %v7088, 112
        %v7856 = vpop.permute.xlu0 %7855
        %v7890 = vrot.slane %v7087, 1
        %v7891 = vrot.slane %v7088, 1
        %v7892 = vsel %vm1143, %v7890, %v7891
        %v7893 = vrot.slane %v7089, 1
        %v7894 = vsel %vm1143, %v7891, %v7893
        %7895 = vrot.lane.b32.xlu0 %v7150, 24
        %v7896 = vpop.permute.xlu0 %7895
        %7897 = vrot.lane.b32.xlu0 %v7152, 24
        %v7898 = vpop.permute.xlu0 %7897
        %7899 = vrot.lane.b32.xlu0 %v7155, 24
        %v7900 = vpop.permute.xlu0 %7899
        %7901 = vrot.lane.b32.xlu0 %v7157, 24
        %v7902 = vpop.permute.xlu0 %7901
        %7903 = vrot.lane.b32.xlu0 %v7160, 24
        %v7904 = vpop.permute.xlu0 %7903
        %7905 = vrot.lane.b32.xlu0 %v7162, 24
        %v7906 = vpop.permute.xlu0 %7905
        %7907 = vrot.lane.b32.xlu0 %v7165, 24
        %v7908 = vpop.permute.xlu0 %7907
        %7909 = vrot.lane.b32.xlu0 %v7167, 24
        %v7910 = vpop.permute.xlu0 %7909
        %7911 = vrot.lane.b32.xlu0 %v7170, 24
        %v7912 = vpop.permute.xlu0 %7911
        %7913 = vrot.lane.b32.xlu0 %v7172, 24
        %v7914 = vpop.permute.xlu0 %7913
        %7915 = vrot.lane.b32.xlu0 %v7175, 24
        %v7916 = vpop.permute.xlu0 %7915
        %7917 = vrot.lane.b32.xlu0 %v7177, 24
        %v7918 = vpop.permute.xlu0 %7917
        %7919 = vrot.lane.b32.xlu0 %v7180, 24
        %v7920 = vpop.permute.xlu0 %7919
        %7921 = vrot.lane.b32.xlu0 %v7182, 24
        %v7922 = vpop.permute.xlu0 %7921
        %7923 = vrot.lane.b32.xlu0 %v7185, 24
        %v7924 = vpop.permute.xlu0 %7923
        %7925 = vrot.lane.b32.xlu0 %v7187, 24
        %v7926 = vpop.permute.xlu0 %7925
        %7927 = vrot.lane.b32.xlu0 %v7190, 24
        %v7928 = vpop.permute.xlu0 %7927
        %7929 = vrot.lane.b32.xlu0 %v7192, 24
        %v7930 = vpop.permute.xlu0 %7929
        %7931 = vrot.lane.b32.xlu0 %v7195, 24
        %v7932 = vpop.permute.xlu0 %7931
        %7933 = vrot.lane.b32.xlu0 %v7197, 24
        %v7934 = vpop.permute.xlu0 %7933
        %7935 = vrot.lane.b32.xlu0 %v7200, 24
        %v7936 = vpop.permute.xlu0 %7935
        %7937 = vrot.lane.b32.xlu0 %v7202, 24
        %v7938 = vpop.permute.xlu0 %7937
        %7939 = vrot.lane.b32.xlu0 %v7205, 24
        %v7940 = vpop.permute.xlu0 %7939
        %7941 = vrot.lane.b32.xlu0 %v7207, 24
        %v7942 = vpop.permute.xlu0 %7941
        %7943 = vrot.lane.b32.xlu0 %v7210, 24
        %v7944 = vpop.permute.xlu0 %7943
        %7945 = vrot.lane.b32.xlu0 %v7212, 24
        %v7946 = vpop.permute.xlu0 %7945
        %7947 = vrot.lane.b32.xlu0 %v7215, 24
        %v7948 = vpop.permute.xlu0 %7947
        %7949 = vrot.lane.b32.xlu0 %v7217, 24
        %v7950 = vpop.permute.xlu0 %7949
        %7951 = vrot.lane.b32.xlu0 %v7591, 24
        %v7952 = vpop.permute.xlu0 %7951
        %7953 = vrot.lane.b32.xlu0 %v7593, 24
        %v7954 = vpop.permute.xlu0 %7953
        %7955 = vrot.lane.b32.xlu0 %v7892, 24
        %v7956 = vpop.permute.xlu0 %7955
        %7957 = vrot.lane.b32.xlu0 %v7894, 24
        %v7958 = vpop.permute.xlu0 %7957
        %v7991 = vrot.slane %v7087, 2
        %v7992 = vrot.slane %v7088, 2
        %v7993 = vsel %vm1320, %v7991, %v7992
        %v7994 = vrot.slane %v7089, 2
        %v7995 = vsel %vm1320, %v7992, %v7994
        %7996 = vrot.lane.b32.xlu0 %v7326, 64
        %v7997 = vpop.permute.xlu0 %7996
        %7998 = vrot.lane.b32.xlu0 %v7328, 64
        %v7999 = vpop.permute.xlu0 %7998
        %8000 = vrot.lane.b32.xlu0 %v7331, 64
        %v8001 = vpop.permute.xlu0 %8000
        %8002 = vrot.lane.b32.xlu0 %v7333, 64
        %v8003 = vpop.permute.xlu0 %8002
        %8004 = vrot.lane.b32.xlu0 %v7336, 64
        %v8005 = vpop.permute.xlu0 %8004
        %8006 = vrot.lane.b32.xlu0 %v7338, 64
        %v8007 = vpop.permute.xlu0 %8006
        %8008 = vrot.lane.b32.xlu0 %v7341, 64
        %v8009 = vpop.permute.xlu0 %8008
        %8010 = vrot.lane.b32.xlu0 %v7343, 64
        %v8011 = vpop.permute.xlu0 %8010
        %8012 = vrot.lane.b32.xlu0 %v7346, 64
        %v8013 = vpop.permute.xlu0 %8012
        %8014 = vrot.lane.b32.xlu0 %v7348, 64
        %v8015 = vpop.permute.xlu0 %8014
        %8016 = vrot.lane.b32.xlu0 %v7351, 64
        %v8017 = vpop.permute.xlu0 %8016
        %8018 = vrot.lane.b32.xlu0 %v7353, 64
        %v8019 = vpop.permute.xlu0 %8018
        %8020 = vrot.lane.b32.xlu0 %v7356, 64
        %v8021 = vpop.permute.xlu0 %8020
        %8022 = vrot.lane.b32.xlu0 %v7358, 64
        %v8023 = vpop.permute.xlu0 %8022
        %8024 = vrot.lane.b32.xlu0 %v7361, 64
        %v8025 = vpop.permute.xlu0 %8024
        %8026 = vrot.lane.b32.xlu0 %v7363, 64
        %v8027 = vpop.permute.xlu0 %8026
        %8028 = vrot.lane.b32.xlu0 %v7366, 64
        %v8029 = vpop.permute.xlu0 %8028
        %8030 = vrot.lane.b32.xlu0 %v7368, 64
        %v8031 = vpop.permute.xlu0 %8030
        %8032 = vrot.lane.b32.xlu0 %v7371, 64
        %v8033 = vpop.permute.xlu0 %8032
        %8034 = vrot.lane.b32.xlu0 %v7373, 64
        %v8035 = vpop.permute.xlu0 %8034
        %8036 = vrot.lane.b32.xlu0 %v7376, 64
        %v8037 = vpop.permute.xlu0 %8036
        %8038 = vrot.lane.b32.xlu0 %v7378, 64
        %v8039 = vpop.permute.xlu0 %8038
        %8040 = vrot.lane.b32.xlu0 %v7381, 64
        %v8041 = vpop.permute.xlu0 %8040
        %8042 = vrot.lane.b32.xlu0 %v7383, 64
        %v8043 = vpop.permute.xlu0 %8042
        %8044 = vrot.lane.b32.xlu0 %v7386, 64
        %v8045 = vpop.permute.xlu0 %8044
        %8046 = vrot.lane.b32.xlu0 %v7388, 64
        %v8047 = vpop.permute.xlu0 %8046
        %8048 = vrot.lane.b32.xlu0 %v7391, 64
        %v8049 = vpop.permute.xlu0 %8048
        %8050 = vrot.lane.b32.xlu0 %v7393, 64
        %v8051 = vpop.permute.xlu0 %8050
        %8052 = vrot.lane.b32.xlu0 %v7692, 64
        %v8053 = vpop.permute.xlu0 %8052
        %8054 = vrot.lane.b32.xlu0 %v7694, 64
        %v8055 = vpop.permute.xlu0 %8054
        %8056 = vrot.lane.b32.xlu0 %v7993, 64
        %v8057 = vpop.permute.xlu0 %8056
        %8058 = vrot.lane.b32.xlu0 %v7995, 64
        %v8059 = vpop.permute.xlu0 %8058
        %v8092 = vsel %vm4188, %v7036, %v7219
        %v8093 = vsel %vm4188, %v7037, %v7221
        %v8094 = vsel %vm4188, %v7039, %v7223
        %v8095 = vsel %vm4188, %v7040, %v7225
        %v8096 = vsel %vm4188, %v7042, %v7227
        %v8097 = vsel %vm4188, %v7043, %v7229
        %v8098 = vsel %vm4188, %v7045, %v7231
        %v8099 = vsel %vm4188, %v7046, %v7233
        %v8100 = vsel %vm4188, %v7048, %v7235
        %v8101 = vsel %vm4188, %v7049, %v7237
        %v8102 = vsel %vm4188, %v7051, %v7239
        %v8103 = vsel %vm4188, %v7052, %v7241
        %v8104 = vsel %vm4188, %v7054, %v7243
        %v8105 = vsel %vm4188, %v7055, %v7245
        %v8106 = vsel %vm4188, %v7057, %v7247
        %v8107 = vsel %vm4188, %v7058, %v7249
        %v8108 = vsel %vm4188, %v7060, %v7251
        %v8109 = vsel %vm4188, %v7061, %v7253
        %v8110 = vsel %vm4188, %v7063, %v7255
        %v8111 = vsel %vm4188, %v7064, %v7257
        %v8112 = vsel %vm4188, %v7066, %v7259
        %v8113 = vsel %vm4188, %v7067, %v7261
        %v8114 = vsel %vm4188, %v7069, %v7263
        %v8115 = vsel %vm4188, %v7070, %v7265
        %v8116 = vsel %vm4188, %v7072, %v7267
        %v8117 = vsel %vm4188, %v7073, %v7269
        %v8118 = vsel %vm4188, %v7075, %v7271
        %v8119 = vsel %vm4188, %v7076, %v7273
        %v8120 = vsel %vm4188, %v7078, %v7275
        %v8121 = vsel %vm4188, %v7079, %v7277
        %v8122 = vsel %vm4188, %v7081, %v7279
        %v8123 = vsel %vm4188, %v7082, %v7281
        %v8124 = vsel %vm2133, %v8092, %v7395
        %v8125 = vsel %vm2133, %v8093, %v7397
        %v8126 = vsel %vm2133, %v8094, %v7399
        %v8127 = vsel %vm2133, %v8095, %v7401
        %v8128 = vsel %vm2133, %v8096, %v7403
        %v8129 = vsel %vm2133, %v8097, %v7405
        %v8130 = vsel %vm2133, %v8098, %v7407
        %v8131 = vsel %vm2133, %v8099, %v7409
        %v8132 = vsel %vm2133, %v8100, %v7411
        %v8133 = vsel %vm2133, %v8101, %v7413
        %v8134 = vsel %vm2133, %v8102, %v7415
        %v8135 = vsel %vm2133, %v8103, %v7417
        %v8136 = vsel %vm2133, %v8104, %v7419
        %v8137 = vsel %vm2133, %v8105, %v7421
        %v8138 = vsel %vm2133, %v8106, %v7423
        %v8139 = vsel %vm2133, %v8107, %v7425
        %v8140 = vsel %vm2133, %v8108, %v7427
        %v8141 = vsel %vm2133, %v8109, %v7429
        %v8142 = vsel %vm2133, %v8110, %v7431
        %v8143 = vsel %vm2133, %v8111, %v7433
        %v8144 = vsel %vm2133, %v8112, %v7435
        %v8145 = vsel %vm2133, %v8113, %v7437
        %v8146 = vsel %vm2133, %v8114, %v7439
        %v8147 = vsel %vm2133, %v8115, %v7441
        %v8148 = vsel %vm2133, %v8116, %v7443
        %v8149 = vsel %vm2133, %v8117, %v7445
        %v8150 = vsel %vm2133, %v8118, %v7447
        %v8151 = vsel %vm2133, %v8119, %v7449
        %v8152 = vsel %vm2133, %v8120, %v7451
        %v8153 = vsel %vm2133, %v8121, %v7453
        %v8154 = vsel %vm2133, %v8122, %v7455
        %v8155 = vsel %vm2133, %v8123, %v7457
        %v8156 = vsel %vm4123, %v8124, %v7493
        %v8157 = vsel %vm4123, %v8125, %v7495
        %v8158 = vsel %vm4123, %v8126, %v7497
        %v8159 = vsel %vm4123, %v8127, %v7499
        %v8160 = vsel %vm4123, %v8128, %v7501
        %v8161 = vsel %vm4123, %v8129, %v7503
        %v8162 = vsel %vm4123, %v8130, %v7505
        %v8163 = vsel %vm4123, %v8131, %v7507
        %v8164 = vsel %vm4123, %v8132, %v7509
        %v8165 = vsel %vm4123, %v8133, %v7511
        %v8166 = vsel %vm4123, %v8134, %v7513
        %v8167 = vsel %vm4123, %v8135, %v7515
        %v8168 = vsel %vm4123, %v8136, %v7517
        %v8169 = vsel %vm4123, %v8137, %v7519
        %v8170 = vsel %vm4123, %v8138, %v7521
        %v8171 = vsel %vm4123, %v8139, %v7523
        %v8172 = vsel %vm4123, %v8140, %v7525
        %v8173 = vsel %vm4123, %v8141, %v7527
        %v8174 = vsel %vm4123, %v8142, %v7529
        %v8175 = vsel %vm4123, %v8143, %v7531
        %v8176 = vsel %vm4123, %v8144, %v7533
        %v8177 = vsel %vm4123, %v8145, %v7535
        %v8178 = vsel %vm4123, %v8146, %v7537
        %v8179 = vsel %vm4123, %v8147, %v7539
        %v8180 = vsel %vm4123, %v8148, %v7541
        %v8181 = vsel %vm4123, %v8149, %v7543
        %v8182 = vsel %vm4123, %v8150, %v7545
        %v8183 = vsel %vm4123, %v8151, %v7547
        %v8184 = vsel %vm4123, %v8152, %v7549
        %v8185 = vsel %vm4123, %v8153, %v7551
        %v8186 = vsel %vm4123, %v8154, %v7553
        %v8187 = vsel %vm4123, %v8155, %v7555
        %v8188 = vsel %vm2035, %v7493, %v7595
        %v8189 = vsel %vm2035, %v7495, %v7597
        %v8190 = vsel %vm2035, %v7497, %v7599
        %v8191 = vsel %vm2035, %v7499, %v7601
        %v8192 = vsel %vm2035, %v7501, %v7603
        %v8193 = vsel %vm2035, %v7503, %v7605
        %v8194 = vsel %vm2035, %v7505, %v7607
        %v8195 = vsel %vm2035, %v7507, %v7609
        %v8196 = vsel %vm2035, %v7509, %v7611
        %v8197 = vsel %vm2035, %v7511, %v7613
        %v8198 = vsel %vm2035, %v7513, %v7615
        %v8199 = vsel %vm2035, %v7515, %v7617
        %v8200 = vsel %vm2035, %v7517, %v7619
        %v8201 = vsel %vm2035, %v7519, %v7621
        %v8202 = vsel %vm2035, %v7521, %v7623
        %v8203 = vsel %vm2035, %v7523, %v7625
        %v8204 = vsel %vm2035, %v7525, %v7627
        %v8205 = vsel %vm2035, %v7527, %v7629
        %v8206 = vsel %vm2035, %v7529, %v7631
        %v8207 = vsel %vm2035, %v7531, %v7633
        %v8208 = vsel %vm2035, %v7533, %v7635
        %v8209 = vsel %vm2035, %v7535, %v7637
        %v8210 = vsel %vm2035, %v7537, %v7639
        %v8211 = vsel %vm2035, %v7539, %v7641
        %v8212 = vsel %vm2035, %v7541, %v7643
        %v8213 = vsel %vm2035, %v7543, %v7645
        %v8214 = vsel %vm2035, %v7545, %v7647
        %v8215 = vsel %vm2035, %v7547, %v7649
        %v8216 = vsel %vm2035, %v7549, %v7651
        %v8217 = vsel %vm2035, %v7551, %v7653
        %v8218 = vsel %vm2035, %v7553, %v7655
        %v8219 = vsel %vm2035, %v7555, %v7657
        %v8220 = vsel %vm4058, %v8188, %v7696
        %v8221 = vsel %vm4058, %v8189, %v7698
        %v8222 = vsel %vm4058, %v8190, %v7700
        %v8223 = vsel %vm4058, %v8191, %v7702
        %v8224 = vsel %vm4058, %v8192, %v7704
        %v8225 = vsel %vm4058, %v8193, %v7706
        %v8226 = vsel %vm4058, %v8194, %v7708
        %v8227 = vsel %vm4058, %v8195, %v7710
        %v8228 = vsel %vm4058, %v8196, %v7712
        %v8229 = vsel %vm4058, %v8197, %v7714
        %v8230 = vsel %vm4058, %v8198, %v7716
        %v8231 = vsel %vm4058, %v8199, %v7718
        %v8232 = vsel %vm4058, %v8200, %v7720
        %v8233 = vsel %vm4058, %v8201, %v7722
        %v8234 = vsel %vm4058, %v8202, %v7724
        %v8235 = vsel %vm4058, %v8203, %v7726
        %v8236 = vsel %vm4058, %v8204, %v7728
        %v8237 = vsel %vm4058, %v8205, %v7730
        %v8238 = vsel %vm4058, %v8206, %v7732
        %v8239 = vsel %vm4058, %v8207, %v7734
        %v8240 = vsel %vm4058, %v8208, %v7736
        %v8241 = vsel %vm4058, %v8209, %v7738
        %v8242 = vsel %vm4058, %v8210, %v7740
        %v8243 = vsel %vm4058, %v8211, %v7742
        %v8244 = vsel %vm4058, %v8212, %v7744
        %v8245 = vsel %vm4058, %v8213, %v7746
        %v8246 = vsel %vm4058, %v8214, %v7748
        %v8247 = vsel %vm4058, %v8215, %v7750
        %v8248 = vsel %vm4058, %v8216, %v7752
        %v8249 = vsel %vm4058, %v8217, %v7754
        %v8250 = vsel %vm4058, %v8218, %v7756
        %v8251 = vsel %vm4058, %v8219, %v7758
        %v8252 = vsel %vm2199, %v8220, %v7794
        %v8253 = vsel %vm2199, %v8221, %v7796
        %v8254 = vsel %vm2199, %v8222, %v7798
        %v8255 = vsel %vm2199, %v8223, %v7800
        %v8256 = vsel %vm2199, %v8224, %v7802
        %v8257 = vsel %vm2199, %v8225, %v7804
        %v8258 = vsel %vm2199, %v8226, %v7806
        %v8259 = vsel %vm2199, %v8227, %v7808
        %v8260 = vsel %vm2199, %v8228, %v7810
        %v8261 = vsel %vm2199, %v8229, %v7812
        %v8262 = vsel %vm2199, %v8230, %v7814
        %v8263 = vsel %vm2199, %v8231, %v7816
        %v8264 = vsel %vm2199, %v8232, %v7818
        %v8265 = vsel %vm2199, %v8233, %v7820
        %v8266 = vsel %vm2199, %v8234, %v7822
        %v8267 = vsel %vm2199, %v8235, %v7824
        %v8268 = vsel %vm2199, %v8236, %v7826
        %v8269 = vsel %vm2199, %v8237, %v7828
        %v8270 = vsel %vm2199, %v8238, %v7830
        %v8271 = vsel %vm2199, %v8239, %v7832
        %v8272 = vsel %vm2199, %v8240, %v7834
        %v8273 = vsel %vm2199, %v8241, %v7836
        %v8274 = vsel %vm2199, %v8242, %v7838
        %v8275 = vsel %vm2199, %v8243, %v7840
        %v8276 = vsel %vm2199, %v8244, %v7842
        %v8277 = vsel %vm2199, %v8245, %v7844
        %v8278 = vsel %vm2199, %v8246, %v7846
        %v8279 = vsel %vm2199, %v8247, %v7848
        %v8280 = vsel %vm2199, %v8248, %v7850
        %v8281 = vsel %vm2199, %v8249, %v7852
        %v8282 = vsel %vm2199, %v8250, %v7854
        %v8283 = vsel %vm2199, %v8251, %v7856
        %v8284 = vsel %vm3993, %v7794, %v7896
        %v8285 = vsel %vm3993, %v7796, %v7898
        %v8286 = vsel %vm3993, %v7798, %v7900
        %v8287 = vsel %vm3993, %v7800, %v7902
        %v8288 = vsel %vm3993, %v7802, %v7904
        %v8289 = vsel %vm3993, %v7804, %v7906
        %v8290 = vsel %vm3993, %v7806, %v7908
        %v8291 = vsel %vm3993, %v7808, %v7910
        %v8292 = vsel %vm3993, %v7810, %v7912
        %v8293 = vsel %vm3993, %v7812, %v7914
        %v8294 = vsel %vm3993, %v7814, %v7916
        %v8295 = vsel %vm3993, %v7816, %v7918
        %v8296 = vsel %vm3993, %v7818, %v7920
        %v8297 = vsel %vm3993, %v7820, %v7922
        %v8298 = vsel %vm3993, %v7822, %v7924
        %v8299 = vsel %vm3993, %v7824, %v7926
        %v8300 = vsel %vm3993, %v7826, %v7928
        %v8301 = vsel %vm3993, %v7828, %v7930
        %v8302 = vsel %vm3993, %v7830, %v7932
        %v8303 = vsel %vm3993, %v7832, %v7934
        %v8304 = vsel %vm3993, %v7834, %v7936
        %v8305 = vsel %vm3993, %v7836, %v7938
        %v8306 = vsel %vm3993, %v7838, %v7940
        %v8307 = vsel %vm3993, %v7840, %v7942
        %v8308 = vsel %vm3993, %v7842, %v7944
        %v8309 = vsel %vm3993, %v7844, %v7946
        %v8310 = vsel %vm3993, %v7846, %v7948
        %v8311 = vsel %vm3993, %v7848, %v7950
        %v8312 = vsel %vm3993, %v7850, %v7952
        %v8313 = vsel %vm3993, %v7852, %v7954
        %v8314 = vsel %vm3993, %v7854, %v7956
        %v8315 = vsel %vm3993, %v7856, %v7958
        %v8316 = vsel %vm2100, %v8284, %v7997
        %v8317 = vsel %vm2100, %v8285, %v7999
        %v8318 = vsel %vm2100, %v8286, %v8001
        %v8319 = vsel %vm2100, %v8287, %v8003
        %v8320 = vsel %vm2100, %v8288, %v8005
        %v8321 = vsel %vm2100, %v8289, %v8007
        %v8322 = vsel %vm2100, %v8290, %v8009
        %v8323 = vsel %vm2100, %v8291, %v8011
        %v8324 = vsel %vm2100, %v8292, %v8013
        %v8325 = vsel %vm2100, %v8293, %v8015
        %v8326 = vsel %vm2100, %v8294, %v8017
        %v8327 = vsel %vm2100, %v8295, %v8019
        %v8328 = vsel %vm2100, %v8296, %v8021
        %v8329 = vsel %vm2100, %v8297, %v8023
        %v8330 = vsel %vm2100, %v8298, %v8025
        %v8331 = vsel %vm2100, %v8299, %v8027
        %v8332 = vsel %vm2100, %v8300, %v8029
        %v8333 = vsel %vm2100, %v8301, %v8031
        %v8334 = vsel %vm2100, %v8302, %v8033
        %v8335 = vsel %vm2100, %v8303, %v8035
        %v8336 = vsel %vm2100, %v8304, %v8037
        %v8337 = vsel %vm2100, %v8305, %v8039
        %v8338 = vsel %vm2100, %v8306, %v8041
        %v8339 = vsel %vm2100, %v8307, %v8043
        %v8340 = vsel %vm2100, %v8308, %v8045
        %v8341 = vsel %vm2100, %v8309, %v8047
        %v8342 = vsel %vm2100, %v8310, %v8049
        %v8343 = vsel %vm2100, %v8311, %v8051
        %v8344 = vsel %vm2100, %v8312, %v8053
        %v8345 = vsel %vm2100, %v8313, %v8055
        %v8346 = vsel %vm2100, %v8314, %v8057
        %v8347 = vsel %vm2100, %v8315, %v8059
        %v8348 = vld [vmem:[%s15] sm:$0xff]
        %v8349 = vld [vmem:[%s15 + $0x8] sm:$0xff]
        %v8350 = vld [vmem:[%s15 + $0x10] sm:$0xff]
        %v8351 = vld [vmem:[%s15 + $0x18] sm:$0xff]
        %v8352 = vld [vmem:[%s15 + $0x20] sm:$0xff]
        %v8353 = vld [vmem:[%s15 + $0x28] sm:$0xff]
        %v8354 = vld [vmem:[%s15 + $0x30] sm:$0xff]
        %v8355 = vld [vmem:[%s15 + $0x38] sm:$0xff]
        %v8356 = vld [vmem:[%s15 + $0x40] sm:$0xff]
        %v8357 = vld [vmem:[%s15 + $0x48] sm:$0xff]
        %v8358 = vld [vmem:[%s15 + $0x50] sm:$0xff]
        %v8359 = vld [vmem:[%s15 + $0x58] sm:$0xff]
        %v8360 = vld [vmem:[%s15 + $0x60] sm:$0xff]
        %v8361 = vld [vmem:[%s15 + $0x68] sm:$0xff]
        %v8362 = vld [vmem:[%s15 + $0x70] sm:$0xff]
        %v8363 = vld [vmem:[%s15 + $0x78] sm:$0xff]
        %v8364 = vld [vmem:[%s15 + $0x80] sm:$0xff]
        %v8365 = vld [vmem:[%s15 + $0x88] sm:$0xff]
        %v8366 = vld [vmem:[%s15 + $0x90] sm:$0xff]
        %v8367 = vld [vmem:[%s15 + $0x98] sm:$0xff]
        %v8368 = vld [vmem:[%s15 + $0xa0] sm:$0xff]
        %v8369 = vld [vmem:[%s15 + $0xa8] sm:$0xff]
        %v8370 = vld [vmem:[%s15 + $0xb0] sm:$0xff]
        %v8371 = vld [vmem:[%s15 + $0xb8] sm:$0xff]
        %v8372 = vld [vmem:[%s15 + $0xc0] sm:$0xff]
        %v8373 = vld [vmem:[%s15 + $0xc8] sm:$0xff]
        %v8374 = vld [vmem:[%s15 + $0xd0] sm:$0xff]
        %v8375 = vld [vmem:[%s15 + $0xd8] sm:$0xff]
        %v8376 = vld [vmem:[%s15 + $0xe0] sm:$0xff]
        %v8377 = vld [vmem:[%s15 + $0xe8] sm:$0xff]
        %v8378 = vld [vmem:[%s15 + $0xf0] sm:$0xff]
        %v8379 = vld [vmem:[%s15 + $0xf8] sm:$0xff]
        %v8380 = vld [vmem:[%s15 + $0x100] sm:$0xff]
        %v8381 = vld [vmem:[%s15 + $0x108] sm:$0xff]
        %v8382 = vld [vmem:[%s15 + $0x110] sm:$0xff]
        %v8383 = vld [vmem:[%s15 + $0x118] sm:$0xff]
        %v8384 = vld [vmem:[%s15 + $0x120] sm:$0xff]
        %v8385 = vld [vmem:[%s15 + $0x128] sm:$0xff]
        %v8386 = vld [vmem:[%s15 + $0x130] sm:$0xff]
        %v8387 = vld [vmem:[%s15 + $0x138] sm:$0xff]
        %v8388 = vld [vmem:[%s15 + $0x140] sm:$0xff]
        %v8389 = vld [vmem:[%s15 + $0x148] sm:$0xff]
        %v8390 = vld [vmem:[%s15 + $0x150] sm:$0xff]
        %v8391 = vld [vmem:[%s15 + $0x158] sm:$0xff]
        %v8392 = vld [vmem:[%s15 + $0x160] sm:$0xff]
        %v8393 = vld [vmem:[%s16] sm:$0x1]
        %v8395 = vlaneseq
        %v8396 = vshrl.u32 %v8395, 7
        %v8397 = vsub.s32 0, %v8396
        %v8398 = vrot.slane %v8393, %v8397
        %vm8400 = vcmask 850944
        %v8402 = vsel %vm8400, %v8316, 0
        %v8405 = vsel %vm8400, %v8317, 0
        %v8408 = vsel %vm8400, %v8318, 0
        %v8411 = vsel %vm8400, %v8319, 0
        %v8414 = vsel %vm8400, %v8320, 0
        %v8417 = vsel %vm8400, %v8321, 0
        %v8420 = vsel %vm8400, %v8322, 0
        %v8423 = vsel %vm8400, %v8323, 0
        %v8426 = vsel %vm8400, %v8324, 0
        %v8429 = vsel %vm8400, %v8325, 0
        %v8432 = vsel %vm8400, %v8326, 0
        %v8435 = vsel %vm8400, %v8327, 0
        %v8438 = vsel %vm8400, %v8328, 0
        %v8441 = vsel %vm8400, %v8329, 0
        %v8444 = vsel %vm8400, %v8330, 0
        %v8447 = vsel %vm8400, %v8331, 0
        %v8450 = vsel %vm8400, %v8332, 0
        %v8453 = vsel %vm8400, %v8333, 0
        %v8456 = vsel %vm8400, %v8334, 0
        %v8459 = vsel %vm8400, %v8335, 0
        %v8462 = vsel %vm8400, %v8336, 0
        %v8465 = vsel %vm8400, %v8337, 0
        %v8468 = vsel %vm8400, %v8338, 0
        %v8471 = vsel %vm8400, %v8339, 0
        %v8474 = vsel %vm8400, %v8340, 0
        %v8477 = vsel %vm8400, %v8341, 0
        %v8480 = vsel %vm8400, %v8342, 0
        %v8483 = vsel %vm8400, %v8343, 0
        %v8486 = vsel %vm8400, %v8344, 0
        %v8489 = vsel %vm8400, %v8345, 0
        %v8492 = vsel %vm8400, %v8346, 0
        %v8495 = vsel %vm8400, %v8347, 0
        %8497 = vmatprep.subr.mxu0 0.0
        %8498 = vmatpush1.msra.mxu0 %v8348
        %8499 = vmatprep.subr.mxu0 0.0
        %8500 = vmatpush1.msra.mxu0 %v8349
        %8501 = vmatprep.subr.mxu0 0.0
        %8502 = vmatpush1.msra.mxu0 %v8350
        %8503 = vmatprep.subr.mxu0 0.0
        %8504 = vmatpush1.msra.mxu0 %v8351
        %8505 = vmatprep.subr.mxu0 0.0
        %8506 = vmatpush1.msra.mxu0 %v8352
        %8507 = vmatprep.subr.mxu0 0.0
        %8508 = vmatpush1.msra.mxu0 %v8353
        %8509 = vmatprep.subr.mxu0 0.0
        %8510 = vmatpush1.msra.mxu0 %v8354
        %8511 = vmatprep.subr.mxu0 0.0
        %8512 = vmatpush1.msra.mxu0 %v8355
        %8513 = vmatprep.subr.mxu0 0.0
        %8514 = vmatpush1.msra.mxu0 %v8356
        %8515 = vmatprep.subr.mxu0 0.0
        %8516 = vmatpush1.msra.mxu0 %v8357
        %8517 = vmatprep.subr.mxu0 0.0
        %8518 = vmatpush1.msra.mxu0 %v8358
        %8519 = vmatprep.subr.mxu0 0.0
        %8520 = vmatpush1.msra.mxu0 %v8359
        %8521 = vmatprep.subr.mxu0 0.0
        %8522 = vmatpush1.msra.mxu0 %v8360
        %8523 = vmatprep.subr.mxu0 0.0
        %8524 = vmatpush1.msra.mxu0 %v8361
        %8525 = vmatprep.subr.mxu0 0.0
        %8526 = vmatpush1.msra.mxu0 %v8362
        %8527 = vmatprep.subr.mxu0 0.0
        %8528 = vmatpush1.msra.mxu0 %v8363
        %8529 = vmatprep.subr.mxu0 0.0
        %8530 = vmatpush1.msra.mxu0 %v8364
        %8531 = vmatprep.subr.mxu0 0.0
        %8532 = vmatpush1.msra.mxu0 %v8365
        %8533 = vmatprep.subr.mxu0 0.0
        %8534 = vmatpush1.msra.mxu0 %v8366
        %8535 = vmatprep.subr.mxu0 0.0
        %8536 = vmatpush1.msra.mxu0 %v8367
        %8537 = vmatprep.subr.mxu0 0.0
        %8538 = vmatpush1.msra.mxu0 %v8368
        %8539 = vmatprep.subr.mxu0 0.0
        %8540 = vmatpush1.msra.mxu0 %v8369
        %8541 = vmatprep.subr.mxu0 0.0
        %8542 = vmatpush1.msra.mxu0 %v8370
        %8543 = vmatprep.subr.mxu0 0.0
        %8544 = vmatpush1.msra.mxu0 %v8371
        %8545 = vmatprep.subr.mxu0 0.0
        %8546 = vmatpush1.msra.mxu0 %v8372
        %8547 = vmatprep.subr.mxu0 0.0
        %8548 = vmatpush1.msra.mxu0 %v8373
        %8549 = vmatprep.subr.mxu0 0.0
        %8550 = vmatpush1.msra.mxu0 %v8374
        %8551 = vmatprep.subr.mxu0 0.0
        %8552 = vmatpush1.msra.mxu0 %v8375
        %8553 = vmatprep.subr.mxu0 0.0
        %8554 = vmatpush1.msra.mxu0 %v8376
        %8555 = vmatprep.subr.mxu0 0.0
        %8556 = vmatpush1.msra.mxu0 %v8377
        %8557 = vmatprep.subr.mxu0 0.0
        %8558 = vmatpush1.msra.mxu0 %v8378
        %8559 = vmatprep.subr.mxu0 0.0
        %8560 = vmatpush1.msra.mxu0 %v8379
        %8561 = vmatprep.mubr.f32.mxu0 %v8252
        %8562 = vmatmul.mubr.f32.gmra.mrb[0].mxu0 %v8156
        %v8563 = vpop.f32.mrb[0].mxu0
        %v8564 = vadd.f32 %v8398, %v8563
        %v8565 = vpop.f32.mrb[0].mxu0
        %8566 = vmatprep.mubr.f32.mxu0 %v8253
        %8567 = vmatmul.mubr.f32.gmra.mrb[0].mxu0 %v8157
        %v8568 = vpop.f32.mrb[0].mxu0
        %v8569 = vadd.f32 %v8398, %v8568
        %v8570 = vpop.f32.mrb[0].mxu0
        %8571 = vmatprep.mubr.f32.mxu0 %v8254
        %8572 = vmatmul.mubr.f32.gmra.mrb[0].mxu0 %v8158
        %v8573 = vpop.f32.mrb[0].mxu0
        %v8574 = vadd.f32 %v8398, %v8573
        %v8575 = vpop.f32.mrb[0].mxu0
        %8576 = vmatprep.mubr.f32.mxu0 %v8255
        %8577 = vmatmul.mubr.f32.gmra.mrb[0].mxu0 %v8159
        %v8578 = vpop.f32.mrb[0].mxu0
        %v8579 = vadd.f32 %v8398, %v8578
        %v8580 = vpop.f32.mrb[0].mxu0
        %8581 = vmatprep.mubr.f32.mxu0 %v8256
        %8582 = vmatmul.mubr.f32.gmra.mrb[0].mxu0 %v8160
        %v8583 = vpop.f32.mrb[0].mxu0
        %v8584 = vadd.f32 %v8398, %v8583
        %v8585 = vpop.f32.mrb[0].mxu0
        %8586 = vmatprep.mubr.f32.mxu0 %v8257
        %8587 = vmatmul.mubr.f32.gmra.mrb[0].mxu0 %v8161
        %v8588 = vpop.f32.mrb[0].mxu0
        %v8589 = vadd.f32 %v8398, %v8588
        %v8590 = vpop.f32.mrb[0].mxu0
        %8591 = vmatprep.mubr.f32.mxu0 %v8258
        %8592 = vmatmul.mubr.f32.gmra.mrb[0].mxu0 %v8162
        %v8593 = vpop.f32.mrb[0].mxu0
        %v8594 = vadd.f32 %v8398, %v8593
        %v8595 = vpop.f32.mrb[0].mxu0
        %8596 = vmatprep.mubr.f32.mxu0 %v8259
        %8597 = vmatmul.mubr.f32.gmra.mrb[0].mxu0 %v8163
        %v8598 = vpop.f32.mrb[0].mxu0
        %v8599 = vadd.f32 %v8398, %v8598
        %v8600 = vpop.f32.mrb[0].mxu0
        %8601 = vmatprep.mubr.f32.mxu0 %v8260
        %8602 = vmatmul.mubr.f32.gmra.mrb[0].mxu0 %v8164
        %v8603 = vpop.f32.mrb[0].mxu0
        %v8604 = vadd.f32 %v8398, %v8603
        %v8605 = vpop.f32.mrb[0].mxu0
        %8606 = vmatprep.mubr.f32.mxu0 %v8261
        %8607 = vmatmul.mubr.f32.gmra.mrb[0].mxu0 %v8165
        %v8608 = vpop.f32.mrb[0].mxu0
        %v8609 = vadd.f32 %v8398, %v8608
        %v8610 = vpop.f32.mrb[0].mxu0
        %8611 = vmatprep.mubr.f32.mxu0 %v8262
        %8612 = vmatmul.mubr.f32.gmra.mrb[0].mxu0 %v8166
        %v8613 = vpop.f32.mrb[0].mxu0
        %v8614 = vadd.f32 %v8398, %v8613
        %v8615 = vpop.f32.mrb[0].mxu0
        %8616 = vmatprep.mubr.f32.mxu0 %v8263
        %8617 = vmatmul.mubr.f32.gmra.mrb[0].mxu0 %v8167
        %v8618 = vpop.f32.mrb[0].mxu0
        %v8619 = vadd.f32 %v8398, %v8618
        %v8620 = vpop.f32.mrb[0].mxu0
        %8621 = vmatprep.mubr.f32.mxu0 %v8264
        %8622 = vmatmul.mubr.f32.gmra.mrb[0].mxu0 %v8168
        %v8623 = vpop.f32.mrb[0].mxu0
        %v8624 = vadd.f32 %v8398, %v8623
        %v8625 = vpop.f32.mrb[0].mxu0
        %8626 = vmatprep.mubr.f32.mxu0 %v8265
        %8627 = vmatmul.mubr.f32.gmra.mrb[0].mxu0 %v8169
        %v8628 = vpop.f32.mrb[0].mxu0
        %v8629 = vadd.f32 %v8398, %v8628
        %v8630 = vpop.f32.mrb[0].mxu0
        %8631 = vmatprep.mubr.f32.mxu0 %v8266
        %8632 = vmatmul.mubr.f32.gmra.mrb[0].mxu0 %v8170
        %v8633 = vpop.f32.mrb[0].mxu0
        %v8634 = vadd.f32 %v8398, %v8633
        %v8635 = vpop.f32.mrb[0].mxu0
        %8636 = vmatprep.mubr.f32.mxu0 %v8267
        %8637 = vmatmul.mubr.f32.gmra.mrb[0].mxu0 %v8171
        %v8638 = vpop.f32.mrb[0].mxu0
        %v8639 = vadd.f32 %v8398, %v8638
        %v8640 = vpop.f32.mrb[0].mxu0
        %8641 = vmatprep.mubr.f32.mxu0 %v8268
        %8642 = vmatmul.mubr.f32.gmra.mrb[0].mxu0 %v8172
        %v8643 = vpop.f32.mrb[0].mxu0
        %v8644 = vadd.f32 %v8398, %v8643
        %v8645 = vpop.f32.mrb[0].mxu0
        %8646 = vmatprep.mubr.f32.mxu0 %v8269
        %8647 = vmatmul.mubr.f32.gmra.mrb[0].mxu0 %v8173
        %v8648 = vpop.f32.mrb[0].mxu0
        %v8649 = vadd.f32 %v8398, %v8648
        %v8650 = vpop.f32.mrb[0].mxu0
        %8651 = vmatprep.mubr.f32.mxu0 %v8270
        %8652 = vmatmul.mubr.f32.gmra.mrb[0].mxu0 %v8174
        %v8653 = vpop.f32.mrb[0].mxu0
        %v8654 = vadd.f32 %v8398, %v8653
        %v8655 = vpop.f32.mrb[0].mxu0
        %8656 = vmatprep.mubr.f32.mxu0 %v8271
        %8657 = vmatmul.mubr.f32.gmra.mrb[0].mxu0 %v8175
        %v8658 = vpop.f32.mrb[0].mxu0
        %v8659 = vadd.f32 %v8398, %v8658
        %v8660 = vpop.f32.mrb[0].mxu0
        %8661 = vmatprep.mubr.f32.mxu0 %v8272
        %8662 = vmatmul.mubr.f32.gmra.mrb[0].mxu0 %v8176
        %v8663 = vpop.f32.mrb[0].mxu0
        %v8664 = vadd.f32 %v8398, %v8663
        %v8665 = vpop.f32.mrb[0].mxu0
        %8666 = vmatprep.mubr.f32.mxu0 %v8273
        %8667 = vmatmul.mubr.f32.gmra.mrb[0].mxu0 %v8177
        %v8668 = vpop.f32.mrb[0].mxu0
        %v8669 = vadd.f32 %v8398, %v8668
        %v8670 = vpop.f32.mrb[0].mxu0
        %8671 = vmatprep.mubr.f32.mxu0 %v8274
        %8672 = vmatmul.mubr.f32.gmra.mrb[0].mxu0 %v8178
        %v8673 = vpop.f32.mrb[0].mxu0
        %v8674 = vadd.f32 %v8398, %v8673
        %v8675 = vpop.f32.mrb[0].mxu0
        %8676 = vmatprep.mubr.f32.mxu0 %v8275
        %8677 = vmatmul.mubr.f32.gmra.mrb[0].mxu0 %v8179
        %v8678 = vpop.f32.mrb[0].mxu0
        %v8679 = vadd.f32 %v8398, %v8678
        %v8680 = vpop.f32.mrb[0].mxu0
        %8681 = vmatprep.mubr.f32.mxu0 %v8276
        %8682 = vmatmul.mubr.f32.gmra.mrb[0].mxu0 %v8180
        %v8683 = vpop.f32.mrb[0].mxu0
        %v8684 = vadd.f32 %v8398, %v8683
        %v8685 = vpop.f32.mrb[0].mxu0
        %8686 = vmatprep.mubr.f32.mxu0 %v8277
        %8687 = vmatmul.mubr.f32.gmra.mrb[0].mxu0 %v8181
        %v8688 = vpop.f32.mrb[0].mxu0
        %v8689 = vadd.f32 %v8398, %v8688
        %v8690 = vpop.f32.mrb[0].mxu0
        %8691 = vmatprep.mubr.f32.mxu0 %v8278
        %8692 = vmatmul.mubr.f32.gmra.mrb[0].mxu0 %v8182
        %v8693 = vpop.f32.mrb[0].mxu0
        %v8694 = vadd.f32 %v8398, %v8693
        %v8695 = vpop.f32.mrb[0].mxu0
        %8696 = vmatprep.mubr.f32.mxu0 %v8279
        %8697 = vmatmul.mubr.f32.gmra.mrb[0].mxu0 %v8183
        %v8698 = vpop.f32.mrb[0].mxu0
        %v8699 = vadd.f32 %v8398, %v8698
        %v8700 = vpop.f32.mrb[0].mxu0
        %8701 = vmatprep.mubr.f32.mxu0 %v8280
        %8702 = vmatmul.mubr.f32.gmra.mrb[0].mxu0 %v8184
        %v8703 = vpop.f32.mrb[0].mxu0
        %v8704 = vadd.f32 %v8398, %v8703
        %v8705 = vpop.f32.mrb[0].mxu0
        %8706 = vmatprep.mubr.f32.mxu0 %v8281
        %8707 = vmatmul.mubr.f32.gmra.mrb[0].mxu0 %v8185
        %v8708 = vpop.f32.mrb[0].mxu0
        %v8709 = vadd.f32 %v8398, %v8708
        %v8710 = vpop.f32.mrb[0].mxu0
        %8711 = vmatprep.mubr.f32.mxu0 %v8282
        %8712 = vmatmul.mubr.f32.gmra.mrb[0].mxu0 %v8186
        %v8713 = vpop.f32.mrb[0].mxu0
        %v8714 = vadd.f32 %v8398, %v8713
        %v8715 = vpop.f32.mrb[0].mxu0
        %8716 = vmatprep.mubr.f32.mxu0 %v8283
        %8717 = vmatmul.mubr.f32.gmra.mrb[0].mxu0 %v8187
        %v8718 = vpop.f32.mrb[0].mxu0
        %v8719 = vadd.f32 %v8398, %v8718
        %v8720 = vpop.f32.mrb[0].mxu0
        %8721 = vdwg.mxu0
        %8722 = vmatprep.subr.mxu0 0.0
        %8723 = vmatpush1.msra.mxu0 %v8380
        %8724 = vmatprep.subr.mxu0 0.0
        %8725 = vmatpush1.msra.mxu0 %v8381
        %8726 = vmatprep.subr.mxu0 0.0
        %8727 = vmatpush1.msra.mxu0 %v8382
        %8728 = vmatprep.subr.mxu0 0.0
        %8729 = vmatpush1.msra.mxu0 %v8383
        %8730 = vmatprep.subr.mxu0 0.0
        %8731 = vmatpush1.msra.mxu0 %v8384
        %8732 = vmatprep.subr.mxu0 0.0
        %8733 = vmatpush1.msra.mxu0 %v8385
        %8734 = vmatprep.subr.mxu0 0.0
        %8735 = vmatpush1.msra.mxu0 %v8386
        %8736 = vmatprep.subr.mxu0 0.0
        %8737 = vmatpush1.msra.mxu0 %v8387
        %8738 = vmatprep.subr.mxu0 0.0
        %8739 = vmatpush1.msra.mxu0 %v8388
        %8740 = vmatprep.subr.mxu0 0.0
        %8741 = vmatpush1.msra.mxu0 %v8389
        %8742 = vmatprep.subr.mxu0 0.0
        %8743 = vmatpush1.msra.mxu0 %v8390
        %8744 = vmatprep.subr.mxu0 0.0
        %8745 = vmatpush1.msra.mxu0 %v8391
        %8746 = vmatprep.subr.mxu0 0.0
        %8747 = vmatpush1.msra.mxu0 %v8392
        %8748 = vmatprep.subr.mxu0 0.0
        %8749 = vmatpush1.msra.mxu0 0.0
        %8750 = vmatprep.subr.mxu0 0.0
        %8751 = vmatpush1.msra.mxu0 0.0
        %8752 = vmatprep.subr.mxu0 0.0
        %8753 = vmatpush1.msra.mxu0 0.0
        %8754 = vmatprep.subr.mxu0 0.0
        %8755 = vmatpush1.msra.mxu0 0.0
        %8756 = vmatprep.subr.mxu0 0.0
        %8757 = vmatpush1.msra.mxu0 0.0
        %8758 = vmatprep.subr.mxu0 0.0
        %8759 = vmatpush1.msra.mxu0 0.0
        %8760 = vmatprep.subr.mxu0 0.0
        %8761 = vmatpush1.msra.mxu0 0.0
        %8762 = vmatprep.subr.mxu0 0.0
        %8763 = vmatpush1.msra.mxu0 0.0
        %8764 = vmatprep.subr.mxu0 0.0
        %8765 = vmatpush1.msra.mxu0 0.0
        %8766 = vmatprep.subr.mxu0 0.0
        %8767 = vmatpush1.msra.mxu0 0.0
        %8768 = vmatprep.subr.mxu0 0.0
        %8769 = vmatpush1.msra.mxu0 0.0
        %8770 = vmatprep.subr.mxu0 0.0
        %8771 = vmatpush1.msra.mxu0 0.0
        %8772 = vmatprep.subr.mxu0 0.0
        %8773 = vmatpush1.msra.mxu0 0.0
        %8774 = vmatprep.subr.mxu0 0.0
        %8775 = vmatpush1.msra.mxu0 0.0
        %8776 = vmatprep.subr.mxu0 0.0
        %8777 = vmatpush1.msra.mxu0 0.0
        %8778 = vmatprep.subr.mxu0 0.0
        %8779 = vmatpush1.msra.mxu0 0.0
        %8780 = vmatprep.subr.mxu0 0.0
        %8781 = vmatpush1.msra.mxu0 0.0
        %8782 = vmatprep.subr.mxu0 0.0
        %8783 = vmatpush1.msra.mxu0 0.0
        %8784 = vmatprep.subr.mxu0 0.0
        %8785 = vmatpush1.msra.mxu0 0.0
        %8786 = vmatprep.mubr.f32.mxu0 0.0
        %8787 = vmatmul.mubr.f32.gmra.mrb[0].mxu0 %v8402
        %v8788 = vpop.f32.mrb[0].mxu0
        %v8789 = vadd.f32 %v8564, %v8788
        %v8790 = vpop.f32.mrb[0].mxu0
        %8791 = vmatprep.mubr.f32.mxu0 0.0
        %8792 = vmatmul.mubr.f32.gmra.mrb[0].mxu0 %v8405
        %v8793 = vpop.f32.mrb[0].mxu0
        %v8794 = vadd.f32 %v8569, %v8793
        %v8795 = vpop.f32.mrb[0].mxu0
        %8796 = vmatprep.mubr.f32.mxu0 0.0
        %8797 = vmatmul.mubr.f32.gmra.mrb[0].mxu0 %v8408
        %v8798 = vpop.f32.mrb[0].mxu0
        %v8799 = vadd.f32 %v8574, %v8798
        %v8800 = vpop.f32.mrb[0].mxu0
        %8801 = vmatprep.mubr.f32.mxu0 0.0
        %8802 = vmatmul.mubr.f32.gmra.mrb[0].mxu0 %v8411
        %v8803 = vpop.f32.mrb[0].mxu0
        %v8804 = vadd.f32 %v8579, %v8803
        %v8805 = vpop.f32.mrb[0].mxu0
        %8806 = vmatprep.mubr.f32.mxu0 0.0
        %8807 = vmatmul.mubr.f32.gmra.mrb[0].mxu0 %v8414
        %v8808 = vpop.f32.mrb[0].mxu0
        %v8809 = vadd.f32 %v8584, %v8808
        %v8810 = vpop.f32.mrb[0].mxu0
        %8811 = vmatprep.mubr.f32.mxu0 0.0
        %8812 = vmatmul.mubr.f32.gmra.mrb[0].mxu0 %v8417
        %v8813 = vpop.f32.mrb[0].mxu0
        %v8814 = vadd.f32 %v8589, %v8813
        %v8815 = vpop.f32.mrb[0].mxu0
        %8816 = vmatprep.mubr.f32.mxu0 0.0
        %8817 = vmatmul.mubr.f32.gmra.mrb[0].mxu0 %v8420
        %v8818 = vpop.f32.mrb[0].mxu0
        %v8819 = vadd.f32 %v8594, %v8818
        %v8820 = vpop.f32.mrb[0].mxu0
        %8821 = vmatprep.mubr.f32.mxu0 0.0
        %8822 = vmatmul.mubr.f32.gmra.mrb[0].mxu0 %v8423
        %v8823 = vpop.f32.mrb[0].mxu0
        %v8824 = vadd.f32 %v8599, %v8823
        %v8825 = vpop.f32.mrb[0].mxu0
        %8826 = vmatprep.mubr.f32.mxu0 0.0
        %8827 = vmatmul.mubr.f32.gmra.mrb[0].mxu0 %v8426
        %v8828 = vpop.f32.mrb[0].mxu0
        %v8829 = vadd.f32 %v8604, %v8828
        %v8830 = vpop.f32.mrb[0].mxu0
        %8831 = vmatprep.mubr.f32.mxu0 0.0
        %8832 = vmatmul.mubr.f32.gmra.mrb[0].mxu0 %v8429
        %v8833 = vpop.f32.mrb[0].mxu0
        %v8834 = vadd.f32 %v8609, %v8833
        %v8835 = vpop.f32.mrb[0].mxu0
        %8836 = vmatprep.mubr.f32.mxu0 0.0
        %8837 = vmatmul.mubr.f32.gmra.mrb[0].mxu0 %v8432
        %v8838 = vpop.f32.mrb[0].mxu0
        %v8839 = vadd.f32 %v8614, %v8838
        %v8840 = vpop.f32.mrb[0].mxu0
        %8841 = vmatprep.mubr.f32.mxu0 0.0
        %8842 = vmatmul.mubr.f32.gmra.mrb[0].mxu0 %v8435
        %v8843 = vpop.f32.mrb[0].mxu0
        %v8844 = vadd.f32 %v8619, %v8843
        %v8845 = vpop.f32.mrb[0].mxu0
        %8846 = vmatprep.mubr.f32.mxu0 0.0
        %8847 = vmatmul.mubr.f32.gmra.mrb[0].mxu0 %v8438
        %v8848 = vpop.f32.mrb[0].mxu0
        %v8849 = vadd.f32 %v8624, %v8848
        %v8850 = vpop.f32.mrb[0].mxu0
        %8851 = vmatprep.mubr.f32.mxu0 0.0
        %8852 = vmatmul.mubr.f32.gmra.mrb[0].mxu0 %v8441
        %v8853 = vpop.f32.mrb[0].mxu0
        %v8854 = vadd.f32 %v8629, %v8853
        %v8855 = vpop.f32.mrb[0].mxu0
        %8856 = vmatprep.mubr.f32.mxu0 0.0
        %8857 = vmatmul.mubr.f32.gmra.mrb[0].mxu0 %v8444
        %v8858 = vpop.f32.mrb[0].mxu0
        %v8859 = vadd.f32 %v8634, %v8858
        %v8860 = vpop.f32.mrb[0].mxu0
        %8861 = vmatprep.mubr.f32.mxu0 0.0
        %8862 = vmatmul.mubr.f32.gmra.mrb[0].mxu0 %v8447
        %v8863 = vpop.f32.mrb[0].mxu0
        %v8864 = vadd.f32 %v8639, %v8863
        %v8865 = vpop.f32.mrb[0].mxu0
        %8866 = vmatprep.mubr.f32.mxu0 0.0
        %8867 = vmatmul.mubr.f32.gmra.mrb[0].mxu0 %v8450
        %v8868 = vpop.f32.mrb[0].mxu0
        %v8869 = vadd.f32 %v8644, %v8868
        %v8870 = vpop.f32.mrb[0].mxu0
        %8871 = vmatprep.mubr.f32.mxu0 0.0
        %8872 = vmatmul.mubr.f32.gmra.mrb[0].mxu0 %v8453
        %v8873 = vpop.f32.mrb[0].mxu0
        %v8874 = vadd.f32 %v8649, %v8873
        %v8875 = vpop.f32.mrb[0].mxu0
        %8876 = vmatprep.mubr.f32.mxu0 0.0
        %8877 = vmatmul.mubr.f32.gmra.mrb[0].mxu0 %v8456
        %v8878 = vpop.f32.mrb[0].mxu0
        %v8879 = vadd.f32 %v8654, %v8878
        %v8880 = vpop.f32.mrb[0].mxu0
        %8881 = vmatprep.mubr.f32.mxu0 0.0
        %8882 = vmatmul.mubr.f32.gmra.mrb[0].mxu0 %v8459
        %v8883 = vpop.f32.mrb[0].mxu0
        %v8884 = vadd.f32 %v8659, %v8883
        %v8885 = vpop.f32.mrb[0].mxu0
        %8886 = vmatprep.mubr.f32.mxu0 0.0
        %8887 = vmatmul.mubr.f32.gmra.mrb[0].mxu0 %v8462
        %v8888 = vpop.f32.mrb[0].mxu0
        %v8889 = vadd.f32 %v8664, %v8888
        %v8890 = vpop.f32.mrb[0].mxu0
        %8891 = vmatprep.mubr.f32.mxu0 0.0
        %8892 = vmatmul.mubr.f32.gmra.mrb[0].mxu0 %v8465
        %v8893 = vpop.f32.mrb[0].mxu0
        %v8894 = vadd.f32 %v8669, %v8893
        %v8895 = vpop.f32.mrb[0].mxu0
        %8896 = vmatprep.mubr.f32.mxu0 0.0
        %8897 = vmatmul.mubr.f32.gmra.mrb[0].mxu0 %v8468
        %v8898 = vpop.f32.mrb[0].mxu0
        %v8899 = vadd.f32 %v8674, %v8898
        %v8900 = vpop.f32.mrb[0].mxu0
        %8901 = vmatprep.mubr.f32.mxu0 0.0
        %8902 = vmatmul.mubr.f32.gmra.mrb[0].mxu0 %v8471
        %v8903 = vpop.f32.mrb[0].mxu0
        %v8904 = vadd.f32 %v8679, %v8903
        %v8905 = vpop.f32.mrb[0].mxu0
        %8906 = vmatprep.mubr.f32.mxu0 0.0
        %8907 = vmatmul.mubr.f32.gmra.mrb[0].mxu0 %v8474
        %v8908 = vpop.f32.mrb[0].mxu0
        %v8909 = vadd.f32 %v8684, %v8908
        %v8910 = vpop.f32.mrb[0].mxu0
        %8911 = vmatprep.mubr.f32.mxu0 0.0
        %8912 = vmatmul.mubr.f32.gmra.mrb[0].mxu0 %v8477
        %v8913 = vpop.f32.mrb[0].mxu0
        %v8914 = vadd.f32 %v8689, %v8913
        %v8915 = vpop.f32.mrb[0].mxu0
        %8916 = vmatprep.mubr.f32.mxu0 0.0
        %8917 = vmatmul.mubr.f32.gmra.mrb[0].mxu0 %v8480
        %v8918 = vpop.f32.mrb[0].mxu0
        %v8919 = vadd.f32 %v8694, %v8918
        %v8920 = vpop.f32.mrb[0].mxu0
        %8921 = vmatprep.mubr.f32.mxu0 0.0
        %8922 = vmatmul.mubr.f32.gmra.mrb[0].mxu0 %v8483
        %v8923 = vpop.f32.mrb[0].mxu0
        %v8924 = vadd.f32 %v8699, %v8923
        %v8925 = vpop.f32.mrb[0].mxu0
        %8926 = vmatprep.mubr.f32.mxu0 0.0
        %8927 = vmatmul.mubr.f32.gmra.mrb[0].mxu0 %v8486
        %v8928 = vpop.f32.mrb[0].mxu0
        %v8929 = vadd.f32 %v8704, %v8928
        %v8930 = vpop.f32.mrb[0].mxu0
        %8931 = vmatprep.mubr.f32.mxu0 0.0
        %8932 = vmatmul.mubr.f32.gmra.mrb[0].mxu0 %v8489
        %v8933 = vpop.f32.mrb[0].mxu0
        %v8934 = vadd.f32 %v8709, %v8933
        %v8935 = vpop.f32.mrb[0].mxu0
        %8936 = vmatprep.mubr.f32.mxu0 0.0
        %8937 = vmatmul.mubr.f32.gmra.mrb[0].mxu0 %v8492
        %v8938 = vpop.f32.mrb[0].mxu0
        %v8939 = vadd.f32 %v8714, %v8938
        %v8940 = vpop.f32.mrb[0].mxu0
        %8941 = vmatprep.mubr.f32.mxu0 0.0
        %8942 = vmatmul.mubr.f32.gmra.mrb[0].mxu0 %v8495
        %v8943 = vpop.f32.mrb[0].mxu0
        %v8944 = vadd.f32 %v8719, %v8943
        %v8945 = vpop.f32.mrb[0].mxu0
        %8946 = vdwg.mxu0
        %8979 = vrot.lane.b32.xlu0 %v8789, 40
        %v8980 = vpop.permute.xlu0 %8979
        %8981 = vrot.lane.b32.xlu0 %v8794, 40
        %v8982 = vpop.permute.xlu0 %8981
        %8983 = vrot.lane.b32.xlu0 %v8799, 40
        %v8984 = vpop.permute.xlu0 %8983
        %8985 = vrot.lane.b32.xlu0 %v8804, 40
        %v8986 = vpop.permute.xlu0 %8985
        %8987 = vrot.lane.b32.xlu0 %v8809, 40
        %v8988 = vpop.permute.xlu0 %8987
        %8989 = vrot.lane.b32.xlu0 %v8814, 40
        %v8990 = vpop.permute.xlu0 %8989
        %8991 = vrot.lane.b32.xlu0 %v8819, 40
        %v8992 = vpop.permute.xlu0 %8991
        %8993 = vrot.lane.b32.xlu0 %v8824, 40
        %v8994 = vpop.permute.xlu0 %8993
        %8995 = vrot.lane.b32.xlu0 %v8829, 40
        %v8996 = vpop.permute.xlu0 %8995
        %8997 = vrot.lane.b32.xlu0 %v8834, 40
        %v8998 = vpop.permute.xlu0 %8997
        %8999 = vrot.lane.b32.xlu0 %v8839, 40
        %v9000 = vpop.permute.xlu0 %8999
        %9001 = vrot.lane.b32.xlu0 %v8844, 40
        %v9002 = vpop.permute.xlu0 %9001
        %9003 = vrot.lane.b32.xlu0 %v8849, 40
        %v9004 = vpop.permute.xlu0 %9003
        %9005 = vrot.lane.b32.xlu0 %v8854, 40
        %v9006 = vpop.permute.xlu0 %9005
        %9007 = vrot.lane.b32.xlu0 %v8859, 40
        %v9008 = vpop.permute.xlu0 %9007
        %9009 = vrot.lane.b32.xlu0 %v8864, 40
        %v9010 = vpop.permute.xlu0 %9009
        %9011 = vrot.lane.b32.xlu0 %v8869, 40
        %v9012 = vpop.permute.xlu0 %9011
        %9013 = vrot.lane.b32.xlu0 %v8874, 40
        %v9014 = vpop.permute.xlu0 %9013
        %9015 = vrot.lane.b32.xlu0 %v8879, 40
        %v9016 = vpop.permute.xlu0 %9015
        %9017 = vrot.lane.b32.xlu0 %v8884, 40
        %v9018 = vpop.permute.xlu0 %9017
        %9019 = vrot.lane.b32.xlu0 %v8889, 40
        %v9020 = vpop.permute.xlu0 %9019
        %9021 = vrot.lane.b32.xlu0 %v8894, 40
        %v9022 = vpop.permute.xlu0 %9021
        %9023 = vrot.lane.b32.xlu0 %v8899, 40
        %v9024 = vpop.permute.xlu0 %9023
        %9025 = vrot.lane.b32.xlu0 %v8904, 40
        %v9026 = vpop.permute.xlu0 %9025
        %9027 = vrot.lane.b32.xlu0 %v8909, 40
        %v9028 = vpop.permute.xlu0 %9027
        %9029 = vrot.lane.b32.xlu0 %v8914, 40
        %v9030 = vpop.permute.xlu0 %9029
        %9031 = vrot.lane.b32.xlu0 %v8919, 40
        %v9032 = vpop.permute.xlu0 %9031
        %9033 = vrot.lane.b32.xlu0 %v8924, 40
        %v9034 = vpop.permute.xlu0 %9033
        %9035 = vrot.lane.b32.xlu0 %v8929, 40
        %v9036 = vpop.permute.xlu0 %9035
        %9037 = vrot.lane.b32.xlu0 %v8934, 40
        %v9038 = vpop.permute.xlu0 %9037
        %9039 = vrot.lane.b32.xlu0 %v8939, 40
        %v9040 = vpop.permute.xlu0 %9039
        %9041 = vrot.lane.b32.xlu0 %v8944, 40
        %v9042 = vpop.permute.xlu0 %9041
        %vm9075 = vcmask 392512
        %9076 = vst.msk [vmem:[%s765 + $0x1] sm:$0xff] %vm9075, %v8980
        %9077 = vst.msk [vmem:[%s765 + $0x9] sm:$0xff] %vm9075, %v8982
        %9078 = vst.msk [vmem:[%s765 + $0x19] sm:$0xff] %vm9075, %v8984
        %9079 = vst.msk [vmem:[%s765 + $0x21] sm:$0xff] %vm9075, %v8986
        %9080 = vst.msk [vmem:[%s765 + $0x31] sm:$0xff] %vm9075, %v8988
        %9081 = vst.msk [vmem:[%s765 + $0x39] sm:$0xff] %vm9075, %v8990
        %9082 = vst.msk [vmem:[%s765 + $0x49] sm:$0xff] %vm9075, %v8992
        %9083 = vst.msk [vmem:[%s765 + $0x51] sm:$0xff] %vm9075, %v8994
        %9084 = vst.msk [vmem:[%s765 + $0x61] sm:$0xff] %vm9075, %v8996
        %9085 = vst.msk [vmem:[%s765 + $0x69] sm:$0xff] %vm9075, %v8998
        %9086 = vst.msk [vmem:[%s765 + $0x79] sm:$0xff] %vm9075, %v9000
        %9087 = vst.msk [vmem:[%s765 + $0x81] sm:$0xff] %vm9075, %v9002
        %9088 = vst.msk [vmem:[%s765 + $0x91] sm:$0xff] %vm9075, %v9004
        %9089 = vst.msk [vmem:[%s765 + $0x99] sm:$0xff] %vm9075, %v9006
        %9090 = vst.msk [vmem:[%s765 + $0xa9] sm:$0xff] %vm9075, %v9008
        %9091 = vst.msk [vmem:[%s765 + $0xb1] sm:$0xff] %vm9075, %v9010
        %9092 = vst.msk [vmem:[%s765 + $0xc1] sm:$0xff] %vm9075, %v9012
        %9093 = vst.msk [vmem:[%s765 + $0xc9] sm:$0xff] %vm9075, %v9014
        %9094 = vst.msk [vmem:[%s765 + $0xd9] sm:$0xff] %vm9075, %v9016
        %9095 = vst.msk [vmem:[%s765 + $0xe1] sm:$0xff] %vm9075, %v9018
        %9096 = vst.msk [vmem:[%s765 + $0xf1] sm:$0xff] %vm9075, %v9020
        %9097 = vst.msk [vmem:[%s765 + $0xf9] sm:$0xff] %vm9075, %v9022
        %9098 = vst.msk [vmem:[%s765 + $0x109] sm:$0xff] %vm9075, %v9024
        %9099 = vst.msk [vmem:[%s765 + $0x111] sm:$0xff] %vm9075, %v9026
        %9100 = vst.msk [vmem:[%s765 + $0x121] sm:$0xff] %vm9075, %v9028
        %9101 = vst.msk [vmem:[%s765 + $0x129] sm:$0xff] %vm9075, %v9030
        %9102 = vst.msk [vmem:[%s765 + $0x139] sm:$0xff] %vm9075, %v9032
        %9103 = vst.msk [vmem:[%s765 + $0x141] sm:$0xff] %vm9075, %v9034
        %9104 = vst.msk [vmem:[%s765 + $0x151] sm:$0xff] %vm9075, %v9036
        %9105 = vst.msk [vmem:[%s765 + $0x159] sm:$0xff] %vm9075, %v9038
        %9106 = vst.msk [vmem:[%s765 + $0x169] sm:$0xff] %vm9075, %v9040
        %9107 = vst.msk [vmem:[%s765 + $0x171] sm:$0xff] %vm9075, %v9042
        %v9108 = vld [vmem:[%s765 + $0x1] sm:$0xff]
        %v9109 = vld [vmem:[%s765 + $0x9] sm:$0xff]
        %v9110 = vld [vmem:[%s765 + $0x19] sm:$0xff]
        %v9111 = vld [vmem:[%s765 + $0x21] sm:$0xff]
        %v9112 = vld [vmem:[%s765 + $0x31] sm:$0xff]
        %v9113 = vld [vmem:[%s765 + $0x39] sm:$0xff]
        %v9114 = vld [vmem:[%s765 + $0x49] sm:$0xff]
        %v9115 = vld [vmem:[%s765 + $0x51] sm:$0xff]
        %v9116 = vld [vmem:[%s765 + $0x61] sm:$0xff]
        %v9117 = vld [vmem:[%s765 + $0x69] sm:$0xff]
        %v9118 = vld [vmem:[%s765 + $0x79] sm:$0xff]
        %v9119 = vld [vmem:[%s765 + $0x81] sm:$0xff]
        %v9120 = vld [vmem:[%s765 + $0x91] sm:$0xff]
        %v9121 = vld [vmem:[%s765 + $0x99] sm:$0xff]
        %v9122 = vld [vmem:[%s765 + $0xa9] sm:$0xff]
        %v9123 = vld [vmem:[%s765 + $0xb1] sm:$0xff]
        %v9124 = vld [vmem:[%s765 + $0xc1] sm:$0xff]
        %v9125 = vld [vmem:[%s765 + $0xc9] sm:$0xff]
        %v9126 = vld [vmem:[%s765 + $0xd9] sm:$0xff]
        %v9127 = vld [vmem:[%s765 + $0xe1] sm:$0xff]
        %v9128 = vld [vmem:[%s765 + $0xf1] sm:$0xff]
        %v9129 = vld [vmem:[%s765 + $0xf9] sm:$0xff]
        %v9130 = vld [vmem:[%s765 + $0x109] sm:$0xff]
        %v9131 = vld [vmem:[%s765 + $0x111] sm:$0xff]
        %v9132 = vld [vmem:[%s765 + $0x121] sm:$0xff]
        %v9133 = vld [vmem:[%s765 + $0x129] sm:$0xff]
        %v9134 = vld [vmem:[%s765 + $0x139] sm:$0xff]
        %v9135 = vld [vmem:[%s765 + $0x141] sm:$0xff]
        %v9136 = vld [vmem:[%s765 + $0x151] sm:$0xff]
        %v9137 = vld [vmem:[%s765 + $0x159] sm:$0xff]
        %v9138 = vld [vmem:[%s765 + $0x169] sm:$0xff]
        %v9139 = vld [vmem:[%s765 + $0x171] sm:$0xff]
        %v9140 = vsel %vm677, %v9108, 0.0
        %v9141 = vsel %vm677, %v9109, 0.0
        %v9142 = vadd.f32 %v9140, %v9141
        %v9143 = vsel %vm677, %v9110, 0.0
        %v9144 = vadd.f32 %v9142, %v9143
        %v9145 = vsel %vm677, %v9111, 0.0
        %v9146 = vadd.f32 %v9144, %v9145
        %v9147 = vsel %vm677, %v9112, 0.0
        %v9148 = vadd.f32 %v9146, %v9147
        %v9149 = vsel %vm677, %v9113, 0.0
        %v9150 = vadd.f32 %v9148, %v9149
        %v9151 = vsel %vm677, %v9114, 0.0
        %v9152 = vadd.f32 %v9150, %v9151
        %v9153 = vsel %vm677, %v9115, 0.0
        %v9154 = vadd.f32 %v9152, %v9153
        %v9155 = vsel %vm677, %v9116, 0.0
        %v9156 = vadd.f32 %v9154, %v9155
        %v9157 = vsel %vm677, %v9117, 0.0
        %v9158 = vadd.f32 %v9156, %v9157
        %v9159 = vsel %vm677, %v9118, 0.0
        %v9160 = vadd.f32 %v9158, %v9159
        %v9161 = vsel %vm677, %v9119, 0.0
        %v9162 = vadd.f32 %v9160, %v9161
        %v9163 = vsel %vm677, %v9120, 0.0
        %v9164 = vadd.f32 %v9162, %v9163
        %v9165 = vsel %vm677, %v9121, 0.0
        %v9166 = vadd.f32 %v9164, %v9165
        %v9167 = vsel %vm677, %v9122, 0.0
        %v9168 = vadd.f32 %v9166, %v9167
        %v9169 = vsel %vm677, %v9123, 0.0
        %v9170 = vadd.f32 %v9168, %v9169
        %v9171 = vsel %vm677, %v9124, 0.0
        %v9172 = vadd.f32 %v9170, %v9171
        %v9173 = vsel %vm677, %v9125, 0.0
        %v9174 = vadd.f32 %v9172, %v9173
        %v9175 = vsel %vm677, %v9126, 0.0
        %v9176 = vadd.f32 %v9174, %v9175
        %v9177 = vsel %vm677, %v9127, 0.0
        %v9178 = vadd.f32 %v9176, %v9177
        %v9179 = vsel %vm677, %v9128, 0.0
        %v9180 = vadd.f32 %v9178, %v9179
        %v9181 = vsel %vm677, %v9129, 0.0
        %v9182 = vadd.f32 %v9180, %v9181
        %v9183 = vsel %vm677, %v9130, 0.0
        %v9184 = vadd.f32 %v9182, %v9183
        %v9185 = vsel %vm677, %v9131, 0.0
        %v9186 = vadd.f32 %v9184, %v9185
        %v9187 = vsel %vm677, %v9132, 0.0
        %v9188 = vadd.f32 %v9186, %v9187
        %v9189 = vsel %vm677, %v9133, 0.0
        %v9190 = vadd.f32 %v9188, %v9189
        %v9191 = vsel %vm677, %v9134, 0.0
        %v9192 = vadd.f32 %v9190, %v9191
        %v9193 = vsel %vm677, %v9135, 0.0
        %v9194 = vadd.f32 %v9192, %v9193
        %v9195 = vsel %vm677, %v9136, 0.0
        %v9196 = vadd.f32 %v9194, %v9195
        %v9197 = vsel %vm677, %v9137, 0.0
        %v9198 = vadd.f32 %v9196, %v9197
        %v9199 = vsel %vm677, %v9138, 0.0
        %v9200 = vadd.f32 %v9198, %v9199
        %v9201 = vsel %vm677, %v9139, 0.0
        %v9202 = vadd.f32 %v9200, %v9201
        %v9203 = vrot.slane %v9202, 4
        %v9204 = vadd.f32 %v9202, %v9203
        %v9205 = vrot.slane %v9204, 2
        %v9206 = vadd.f32 %v9204, %v9205
        %v9207 = vrot.slane %v9206, 1
        %v9208 = vadd.f32 %v9206, %v9207
        %v9209 = vrcp.pop 256.0
        %v9210 = vmul.f32 %v9208, %v9209
        %v9211 = vld [vmem:[%s17] sm:$0xff]
        %v9212 = vld [vmem:[%s17 + $0x8] sm:$0xff]
        %v9213 = vld [vmem:[%s17 + $0x10] sm:$0xff]
        %v9214 = vld [vmem:[%s17 + $0x18] sm:$0xff]
        %v9215 = vld [vmem:[%s17 + $0x20] sm:$0xff]
        %v9216 = vld [vmem:[%s17 + $0x28] sm:$0xff]
        %v9217 = vld [vmem:[%s18] sm:$0x1]
        %v9219 = vsel %vm677, %v9210, 0
        %9221 = vmatprep.subr.mxu0 0.0
        %9222 = vmatpush1.msra.mxu0 %v9211
        %9223 = vmatprep.subr.mxu0 0.0
        %9224 = vmatpush1.msra.mxu0 %v9212
        %9225 = vmatprep.subr.mxu0 0.0
        %9226 = vmatpush1.msra.mxu0 %v9213
        %9227 = vmatprep.subr.mxu0 0.0
        %9228 = vmatpush1.msra.mxu0 %v9214
        %9229 = vmatprep.subr.mxu0 0.0
        %9230 = vmatpush1.msra.mxu0 %v9215
        %9231 = vmatprep.subr.mxu0 0.0
        %9232 = vmatpush1.msra.mxu0 %v9216
        %9233 = vmatprep.subr.mxu0 0.0
        %9234 = vmatpush1.msra.mxu0 0.0
        %9235 = vmatprep.subr.mxu0 0.0
        %9236 = vmatpush1.msra.mxu0 0.0
        %9237 = vmatprep.subr.mxu0 0.0
        %9238 = vmatpush1.msra.mxu0 0.0
        %9239 = vmatprep.subr.mxu0 0.0
        %9240 = vmatpush1.msra.mxu0 0.0
        %9241 = vmatprep.subr.mxu0 0.0
        %9242 = vmatpush1.msra.mxu0 0.0
        %9243 = vmatprep.subr.mxu0 0.0
        %9244 = vmatpush1.msra.mxu0 0.0
        %9245 = vmatprep.subr.mxu0 0.0
        %9246 = vmatpush1.msra.mxu0 0.0
        %9247 = vmatprep.subr.mxu0 0.0
        %9248 = vmatpush1.msra.mxu0 0.0
        %9249 = vmatprep.subr.mxu0 0.0
        %9250 = vmatpush1.msra.mxu0 0.0
        %9251 = vmatprep.subr.mxu0 0.0
        %9252 = vmatpush1.msra.mxu0 0.0
        %9253 = vmatprep.subr.mxu0 0.0
        %9254 = vmatpush1.msra.mxu0 0.0
        %9255 = vmatprep.subr.mxu0 0.0
        %9256 = vmatpush1.msra.mxu0 0.0
        %9257 = vmatprep.subr.mxu0 0.0
        %9258 = vmatpush1.msra.mxu0 0.0
        %9259 = vmatprep.subr.mxu0 0.0
        %9260 = vmatpush1.msra.mxu0 0.0
        %9261 = vmatprep.subr.mxu0 0.0
        %9262 = vmatpush1.msra.mxu0 0.0
        %9263 = vmatprep.subr.mxu0 0.0
        %9264 = vmatpush1.msra.mxu0 0.0
        %9265 = vmatprep.subr.mxu0 0.0
        %9266 = vmatpush1.msra.mxu0 0.0
        %9267 = vmatprep.subr.mxu0 0.0
        %9268 = vmatpush1.msra.mxu0 0.0
        %9269 = vmatprep.subr.mxu0 0.0
        %9270 = vmatpush1.msra.mxu0 0.0
        %9271 = vmatprep.subr.mxu0 0.0
        %9272 = vmatpush1.msra.mxu0 0.0
        %9273 = vmatprep.subr.mxu0 0.0
        %9274 = vmatpush1.msra.mxu0 0.0
        %9275 = vmatprep.subr.mxu0 0.0
        %9276 = vmatpush1.msra.mxu0 0.0
        %9277 = vmatprep.subr.mxu0 0.0
        %9278 = vmatpush1.msra.mxu0 0.0
        %9279 = vmatprep.subr.mxu0 0.0
        %9280 = vmatpush1.msra.mxu0 0.0
        %9281 = vmatprep.subr.mxu0 0.0
        %9282 = vmatpush1.msra.mxu0 0.0
        %9283 = vmatprep.subr.mxu0 0.0
        %9284 = vmatpush1.msra.mxu0 0.0
        %9285 = vmatprep.mubr.f32.mxu0 0.0
        %9286 = vmatmul.mubr.f32.gmra.mrb[0].mxu0 %v9219
        %v9287 = vpop.f32.mrb[0].mxu0
        %v9288 = vadd.f32 %v9217, %v9287
        %v9289 = vpop.f32.mrb[0].mxu0
        %9290 = vdwg.mxu0
        %v9291 = vmax.f32 %v9288, 0.0
        %v9292 = vld [vmem:[%s19] sm:$0x7]
        %v9293 = vld [vmem:[%s20] sm:$0x1]
        %vm9294 = vcmask 23552
        %v9296 = vsel %vm9294, %v9291, 0
        %vm9298 = vcmask 1042432
        %v9300 = vsel %vm9298, %v9292, 0
        %9302 = vmatprep.subr.mxu0 0.0
        %9303 = vmatpush1.msra.mxu0 %v9300
        %9304 = vmatprep.subr.mxu0 0.0
        %9305 = vmatpush1.msra.mxu0 0.0
        %9306 = vmatprep.subr.mxu0 0.0
        %9307 = vmatpush1.msra.mxu0 0.0
        %9308 = vmatprep.subr.mxu0 0.0
        %9309 = vmatpush1.msra.mxu0 0.0
        %9310 = vmatprep.subr.mxu0 0.0
        %9311 = vmatpush1.msra.mxu0 0.0
        %9312 = vmatprep.subr.mxu0 0.0
        %9313 = vmatpush1.msra.mxu0 0.0
        %9314 = vmatprep.subr.mxu0 0.0
        %9315 = vmatpush1.msra.mxu0 0.0
        %9316 = vmatprep.subr.mxu0 0.0
        %9317 = vmatpush1.msra.mxu0 0.0
        %9318 = vmatprep.subr.mxu0 0.0
        %9319 = vmatpush1.msra.mxu0 0.0
        %9320 = vmatprep.subr.mxu0 0.0
        %9321 = vmatpush1.msra.mxu0 0.0
        %9322 = vmatprep.subr.mxu0 0.0
        %9323 = vmatpush1.msra.mxu0 0.0
        %9324 = vmatprep.subr.mxu0 0.0
        %9325 = vmatpush1.msra.mxu0 0.0
        %9326 = vmatprep.subr.mxu0 0.0
        %9327 = vmatpush1.msra.mxu0 0.0
        %9328 = vmatprep.subr.mxu0 0.0
        %9329 = vmatpush1.msra.mxu0 0.0
        %9330 = vmatprep.subr.mxu0 0.0
        %9331 = vmatpush1.msra.mxu0 0.0
        %9332 = vmatprep.subr.mxu0 0.0
        %9333 = vmatpush1.msra.mxu0 0.0
        %9334 = vmatprep.subr.mxu0 0.0
        %9335 = vmatpush1.msra.mxu0 0.0
        %9336 = vmatprep.subr.mxu0 0.0
        %9337 = vmatpush1.msra.mxu0 0.0
        %9338 = vmatprep.subr.mxu0 0.0
        %9339 = vmatpush1.msra.mxu0 0.0
        %9340 = vmatprep.subr.mxu0 0.0
        %9341 = vmatpush1.msra.mxu0 0.0
        %9342 = vmatprep.subr.mxu0 0.0
        %9343 = vmatpush1.msra.mxu0 0.0
        %9344 = vmatprep.subr.mxu0 0.0
        %9345 = vmatpush1.msra.mxu0 0.0
        %9346 = vmatprep.subr.mxu0 0.0
        %9347 = vmatpush1.msra.mxu0 0.0
        %9348 = vmatprep.subr.mxu0 0.0
        %9349 = vmatpush1.msra.mxu0 0.0
        %9350 = vmatprep.subr.mxu0 0.0
        %9351 = vmatpush1.msra.mxu0 0.0
        %9352 = vmatprep.subr.mxu0 0.0
        %9353 = vmatpush1.msra.mxu0 0.0
        %9354 = vmatprep.subr.mxu0 0.0
        %9355 = vmatpush1.msra.mxu0 0.0
        %9356 = vmatprep.subr.mxu0 0.0
        %9357 = vmatpush1.msra.mxu0 0.0
        %9358 = vmatprep.subr.mxu0 0.0
        %9359 = vmatpush1.msra.mxu0 0.0
        %9360 = vmatprep.subr.mxu0 0.0
        %9361 = vmatpush1.msra.mxu0 0.0
        %9362 = vmatprep.subr.mxu0 0.0
        %9363 = vmatpush1.msra.mxu0 0.0
        %9364 = vmatprep.subr.mxu0 0.0
        %9365 = vmatpush1.msra.mxu0 0.0
        %9366 = vmatprep.mubr.f32.mxu0 0.0
        %9367 = vmatmul.mubr.f32.gmra.mrb[0].mxu0 %v9296
        %v9368 = vpop.f32.mrb[0].mxu0
        %v9369 = vadd.f32 %v9293, %v9368
        %v9370 = vpop.f32.mrb[0].mxu0
        %9371 = vdwg.mxu0
        %v9372 = vxor.u32 %v9369, 2147483648
        %v9373 = vmul.f32 %v9372, 1.442695
        %v9374 = vpow.pop %v9373
        %v9375 = vadd.f32 %v9374, 1.0
        %v9376 = vrcp.pop %v9375
        %v9377 = vmul.f32 1.0, %v9376
        %v9378 = vlaneseq
        %v9379 = vshrl.u32 %v9378, 7
        %v9380 = vsub.s32 0, %v9379
        %v9381 = vrot.slane %v9377, %v9380
        %v9382 = vmul.f32 %v9108, %v9381
        %v9383 = vmul.f32 %v9109, %v9381
        %v9384 = vmul.f32 %v9110, %v9381
        %v9385 = vmul.f32 %v9111, %v9381
        %v9386 = vmul.f32 %v9112, %v9381
        %v9387 = vmul.f32 %v9113, %v9381
        %v9388 = vmul.f32 %v9114, %v9381
        %v9389 = vmul.f32 %v9115, %v9381
        %v9390 = vmul.f32 %v9116, %v9381
        %v9391 = vmul.f32 %v9117, %v9381
        %v9392 = vmul.f32 %v9118, %v9381
        %v9393 = vmul.f32 %v9119, %v9381
        %v9394 = vmul.f32 %v9120, %v9381
        %v9395 = vmul.f32 %v9121, %v9381
        %v9396 = vmul.f32 %v9122, %v9381
        %v9397 = vmul.f32 %v9123, %v9381
        %v9398 = vmul.f32 %v9124, %v9381
        %v9399 = vmul.f32 %v9125, %v9381
        %v9400 = vmul.f32 %v9126, %v9381
        %v9401 = vmul.f32 %v9127, %v9381
        %v9402 = vmul.f32 %v9128, %v9381
        %v9403 = vmul.f32 %v9129, %v9381
        %v9404 = vmul.f32 %v9130, %v9381
        %v9405 = vmul.f32 %v9131, %v9381
        %v9406 = vmul.f32 %v9132, %v9381
        %v9407 = vmul.f32 %v9133, %v9381
        %v9408 = vmul.f32 %v9134, %v9381
        %v9409 = vmul.f32 %v9135, %v9381
        %v9410 = vmul.f32 %v9136, %v9381
        %v9411 = vmul.f32 %v9137, %v9381
        %v9412 = vmul.f32 %v9138, %v9381
        %v9413 = vmul.f32 %v9139, %v9381
        %9414 = vst.msk [vmem:[%s649] sm:$0xff] %vm677, %v9382
        %9415 = vst.msk [vmem:[%s649 + $0x8] sm:$0xff] %vm677, %v9383
        %9416 = vst.msk [vmem:[%s649 + $0x10] sm:$0xff] %vm677, %v9384
        %9417 = vst.msk [vmem:[%s649 + $0x18] sm:$0xff] %vm677, %v9385
        %9418 = vst.msk [vmem:[%s649 + $0x20] sm:$0xff] %vm677, %v9386
        %9419 = vst.msk [vmem:[%s649 + $0x28] sm:$0xff] %vm677, %v9387
        %9420 = vst.msk [vmem:[%s649 + $0x30] sm:$0xff] %vm677, %v9388
        %9421 = vst.msk [vmem:[%s649 + $0x38] sm:$0xff] %vm677, %v9389
        %9422 = vst.msk [vmem:[%s649 + $0x40] sm:$0xff] %vm677, %v9390
        %9423 = vst.msk [vmem:[%s649 + $0x48] sm:$0xff] %vm677, %v9391
        %9424 = vst.msk [vmem:[%s649 + $0x50] sm:$0xff] %vm677, %v9392
        %9425 = vst.msk [vmem:[%s649 + $0x58] sm:$0xff] %vm677, %v9393
        %9426 = vst.msk [vmem:[%s649 + $0x60] sm:$0xff] %vm677, %v9394
        %9427 = vst.msk [vmem:[%s649 + $0x68] sm:$0xff] %vm677, %v9395
        %9428 = vst.msk [vmem:[%s649 + $0x70] sm:$0xff] %vm677, %v9396
        %9429 = vst.msk [vmem:[%s649 + $0x78] sm:$0xff] %vm677, %v9397
        %9430 = vst.msk [vmem:[%s649 + $0x80] sm:$0xff] %vm677, %v9398
        %9431 = vst.msk [vmem:[%s649 + $0x88] sm:$0xff] %vm677, %v9399
        %9432 = vst.msk [vmem:[%s649 + $0x90] sm:$0xff] %vm677, %v9400
        %9433 = vst.msk [vmem:[%s649 + $0x98] sm:$0xff] %vm677, %v9401
        %9434 = vst.msk [vmem:[%s649 + $0xa0] sm:$0xff] %vm677, %v9402
        %9435 = vst.msk [vmem:[%s649 + $0xa8] sm:$0xff] %vm677, %v9403
        %9436 = vst.msk [vmem:[%s649 + $0xb0] sm:$0xff] %vm677, %v9404
        %9437 = vst.msk [vmem:[%s649 + $0xb8] sm:$0xff] %vm677, %v9405
        %9438 = vst.msk [vmem:[%s649 + $0xc0] sm:$0xff] %vm677, %v9406
        %9439 = vst.msk [vmem:[%s649 + $0xc8] sm:$0xff] %vm677, %v9407
        %9440 = vst.msk [vmem:[%s649 + $0xd0] sm:$0xff] %vm677, %v9408
        %9441 = vst.msk [vmem:[%s649 + $0xd8] sm:$0xff] %vm677, %v9409
        %9442 = vst.msk [vmem:[%s649 + $0xe0] sm:$0xff] %vm677, %v9410
        %9443 = vst.msk [vmem:[%s649 + $0xe8] sm:$0xff] %vm677, %v9411
        %9444 = vst.msk [vmem:[%s649 + $0xf0] sm:$0xff] %vm677, %v9412
        %9445 = vst.msk [vmem:[%s649 + $0xf8] sm:$0xff] %vm677, %v9413
        %s9446 = sand.u32 %s489, 1
        %s9447 = scalar_lea.sflag [#allocation4], %s9446
        %s9448 = sand.u32 %s489, 1
        %s9449 = smul.addr %s9448, 256
        %s9450 = scalar_lea.vmem [#allocation3], %s9449
        // Predicated region
        $region105: #{tpu_custom_call.1} parent=103 // pred_check
          %p9451 = pneg %p499
        $region106: #{tpu_custom_call.1} parent=103 // pred_check_branch
          %9453 = sbr.rel (%p9451) target = $region108
        $region107: #{tpu_custom_call.1} parent=103 // pred_region
          %s9455 = ssub.s32 4096, 4096
          %9456 = vsyncadd %s9447, %s9455
          %s9457 = smul.addr %s35, 32
          %s9458 = smul.addr %s9457, 128
          %s9459 = scalar_lea.hbm %s21, %s9458
          %s9460 = sshll.u32 %s9450, 4
          %s9461 = int_to_ptr.vmem [resolvable:$true] %s9460
          %9466 = dma.vmem_to_hbm [thread:$0]  %s9461, 4096, %s9459, %s9447, 128, 128, 8
        $region108: #{tpu_custom_call.1} parent=103 // pred_fallthru
          _
      $region104: #{tpu_custom_call.1} parent=5 // pred_fallthru
        _
      %p9467 = scmp.le.s32.totalorder 2, %s30
      // Predicated region
      $region109: #{tpu_custom_call.1} parent=5 // pred_check
        %p9468 = pneg %p9467
      $region110: #{tpu_custom_call.1} parent=5 // pred_check_branch
        %9470 = sbr.rel (%p9468) target = $region112
      $region111: #{tpu_custom_call.1} parent=5 // pred_region
        %s9471 = ssub.s32 %s30, 2
        // Predicated region
        $region113: #{tpu_custom_call.1} parent=111 // pred_check
          %p9472 = pneg %p505
        $region114: #{tpu_custom_call.1} parent=111 // pred_check_branch
          %9474 = sbr.rel (%p9472) target = $region116
        $region115: #{tpu_custom_call.1} parent=111 // pred_region
          %s9475 = sand.u32 %s490, 1
          %s9476 = scalar_lea.sflag [#allocation4], %s9475
          %s9477 = sand.u32 %s490, 1
          %s9478 = smul.addr %s9477, 256
          %s9479 = scalar_lea.vmem [#allocation3], %s9478
          %9480 = dma.done %s9476, 4096
        $region116: #{tpu_custom_call.1} parent=111 // pred_fallthru
          _
      $region112: #{tpu_custom_call.1} parent=5 // pred_fallthru
        _
    $region6: #{tpu_custom_call.1} parent=1 // loop_footer
      %s34 = sadd.s32 1, %s30
    $region7: #{tpu_custom_call.1} parent=1 // loop_footer_branch
      %29 = sbr.rel target = $region3
    $region8: #{tpu_custom_call.1} parent=1 // loop_exit
      _
    %9481 = vsyncpa [#allocation4], 1
    %s9482 = scalar_lea.sflag [#allocation4], 1
    %9483 = vsyncpa %s9482, 1

</llo_original>
